<compile_context>
chip_gen: v5e
topology: v5e:2x2
jax: 0.10.0
libtpu: 0.0.40
codegen_flags: <defaults>
</compile_context>

<pallas_src>
import functools

import numpy as np

import jax
import jax.numpy as jnp
from jax.experimental import pallas as pl
from jax.experimental.pallas import tpu as pltpu

_EPS = 1e-5


# ----------------------------------------------------------------------------
# Static geometry + host-side (numpy) constants: boundary masks and one-hot
# pool-selection / upsample-scatter matrices.  Built once at trace time and
# passed to the kernel as ordinary VMEM inputs with constant index maps.
# ----------------------------------------------------------------------------

def _round_up(n, m=8):
    return ((n + m - 1) // m) * m


def _level_geoms(H, W, depth):
    """[(h, w, P)] for levels 0..depth; P = per-image lane extent (mult of 128)."""
    geoms, h, w = [], H, W
    for _ in range(depth + 1):
        geoms.append((h, w, ((h * w + 127) // 128) * 128))
        h //= 2
        w //= 2
    return tuple(geoms)


def _make_masks_np(h, w, P, B):
    """(8, 1, B*P) f32 masks for the 8 non-center 3x3 taps (ky-major order)."""
    L = B * P
    q = np.arange(L) % P
    row, col, valid = q // w, q % w, q < h * w

    def ok(dy, dx):
        m = valid.copy()
        if dy == -1:
            m &= row > 0
        if dy == 1:
            m &= row < h - 1
        if dx == -1:
            m &= col > 0
        if dx == 1:
            m &= col < w - 1
        return m

    rows = [ok(ky - 1, kx - 1) for ky in range(3) for kx in range(3)
            if not (ky == 1 and kx == 1)]
    return np.stack(rows, 0).astype(np.float32).reshape(8, 1, L)


def _make_pool_select_np(hp, wp, Pp, hc, wc, Pc, B):
    """One-hot (B*Pp, B*Pc): parent position (2r,2c) -> child position (r,c)."""
    S = np.zeros((B * Pp, B * Pc), np.float32)
    r = np.repeat(np.arange(hc), wc)
    c = np.tile(np.arange(wc), hc)
    for b in range(B):
        S[b * Pp + 2 * r * wp + 2 * c, b * Pc + r * wc + c] = 1.0
    return S


def _make_up_scatter_np(hc, wc, Pc, hp, wp, Pp, B):
    """One-hot (4, B*Pc, B*Pp): child (r,c) -> parent (2r+di, 2c+dj) per tap."""
    S = np.zeros((4, B * Pc, B * Pp), np.float32)
    r = np.repeat(np.arange(hc), wc)
    c = np.tile(np.arange(wc), hc)
    for di in range(2):
        for dj in range(2):
            k = 2 * di + dj
            for b in range(B):
                S[k, b * Pc + r * wc + c,
                  b * Pp + (2 * r + di) * wp + (2 * c + dj)] = 1.0
    return S


# ----------------------------------------------------------------------------
# Fused whole-network kernel.  Activations are in-VMEM f32 values of shape
# (C, B*P): channels on sublanes, (image, flattened-padded-spatial) on lanes.
# ----------------------------------------------------------------------------

def _unet_kernel(treedef, cfg, x_ref, *rest):
    param_refs, o_ref = rest[:-1], rest[-1]
    bundle = jax.tree_util.tree_unflatten(treedef, param_refs)
    p, consts = bundle["params"], bundle["consts"]
    geoms, B, depth = cfg["geoms"], cfg["B"], cfg["depth"]

    def conv_bn_relu(x, level, w_ref, shift_ref):
        # 3x3 conv (pad=1, bias=False) + folded BN + ReLU: 9 roll+mask taps,
        # 9 accumulating bf16 MXU dots with K = Cin.
        _, w, P = geoms[level]
        L = B * P
        masks_ref = consts["masks"][level]          # (8, 1, L) f32
        acc = None
        for ky in range(3):
            for kx in range(3):
                t = ky * 3 + kx
                s = (ky - 1) * w + (kx - 1)
                xt = x if s == 0 else pltpu.roll(x, shift=(-s) % L, axis=1)
                if t != 4:                           # center tap needs no mask
                    xt = xt * masks_ref[t if t < 4 else t - 1]
                part = jnp.dot(w_ref[t], xt.astype(jnp.bfloat16),
                               preferred_element_type=jnp.float32)
                acc = part if acc is None else acc + part
        return jnp.maximum(acc + shift_ref[...], 0.0)

    def maxpool(x, level):
        # 2x2/2 max: 3 rolls + max, then one selection matmul to compact lanes.
        _, w, P = geoms[level]
        L = B * P
        m = x
        for s in (1, w, w + 1):
            m = jnp.maximum(m, pltpu.roll(x, shift=(-s) % L, axis=1))
        sel = consts["pool"][level][...]             # (L, L_child) bf16 one-hot
        return jnp.dot(m.astype(jnp.bfloat16), sel,
                       preferred_element_type=jnp.float32)

    def conv_transpose2x2(x, dec_idx, uw_ref, ub_ref):
        # ConvTranspose2d(k=2, s=2): per (di,dj) one weight matmul + one scatter
        # matmul into the parent-resolution lane layout.  No lane interleave ops.
        sc_ref = consts["up"][dec_idx]               # (4, Lc, Lp) bf16 one-hot
        xb = x.astype(jnp.bfloat16)
        out = None
        for k in range(4):
            z = jnp.dot(uw_ref[k], xb, preferred_element_type=jnp.float32)
            zk = jnp.dot(z.astype(jnp.bfloat16), sc_ref[k],
                         preferred_element_type=jnp.float32)
            out = zk if out is None else out + zk
        return out + ub_ref[...]

    x = x_ref[...]                                   # (Cin_pad, B*P0) f32

    # ---- encoder ----
    skips = []
    for l, blk in enumerate(p["enc"]):
        x = conv_bn_relu(x, l, blk["w1"], blk["b1"])
        x = conv_bn_relu(x, l, blk["w2"], blk["b2"])
        skips.append(x)
        x = maxpool(x, l)

    # ---- bottleneck ----
    bn = p["bottleneck"]
    x = conv_bn_relu(x, depth, bn["w1"], bn["b1"])
    x = conv_bn_relu(x, depth, bn["w2"], bn["b2"])

    # ---- decoder ----
    for i, dec in enumerate(p["dec"]):
        parent = depth - 1 - i
        x = conv_transpose2x2(x, i, dec["uw"], dec["ub"])
        # TODO(synk): nn.functional.interpolate fallback for odd spatial sizes
        # is not implemented; H, W must be divisible by 2**depth (asserted).
        x = jnp.concatenate([skips[parent], x], axis=0)   # cat((skip, up), C)
        x = conv_bn_relu(x, parent, dec["w1"], dec["b1"])
        x = conv_bn_relu(x, parent, dec["w2"], dec["b2"])

    # ---- final 1x1 conv (+bias): lane-dense (Cout_pad, B*P0) store ----
    y = jnp.dot(p["fw"][...], x.astype(jnp.bfloat16),
                preferred_element_type=jnp.float32) + p["fb"][...]
    o_ref[...] = y.astype(o_ref.dtype)


# ----------------------------------------------------------------------------
# Public wrapper: PyTorch-style NCHW in / NCHW out.  Only wrapper-side layout
# plumbing (transpose/pad/reshape) happens outside the kernel.
# ----------------------------------------------------------------------------

def _estimate_flops(features, cin0, cout_pad, L):
    depth = len(features)
    fl, cin = 0, cin0
    for l, f in enumerate(features):
        fl += 2 * 9 * (cin * f + f * f) * L[l]       # two 3x3 convs
        fl += 2 * f * L[l] * L[l + 1]                # pool selection matmul
        cin = f
    fb = 2 * features[-1]
    fl += 2 * 9 * (features[-1] * fb + fb * fb) * L[depth]
    cprev = fb
    for i, f in enumerate(reversed(features)):
        Lc, Lp = L[depth - i], L[depth - 1 - i]
        fl += 2 * 4 * (cprev * f * Lc + f * Lc * Lp)  # conv-transpose + scatter
        fl += 2 * 9 * (2 * f * f + f * f) * Lp        # two 3x3 convs
        cprev = f
    fl += 2 * features[0] * cout_pad * L[0]           # final 1x1 conv
    return fl


def unet_cae_forward(x_nchw, packed, *, out_channels=3, images_per_step=1):
    N, Cin, H, W = x_nchw.shape
    depth = len(packed["enc"])
    assert H % (2 ** depth) == 0 and W % (2 ** depth) == 0, (H, W, depth)
    B = int(images_per_step)
    assert N % B == 0, (N, B)
    steps = N // B

    geoms = _level_geoms(H, W, depth)
    S, P0 = H * W, geoms[0][2]
    cin_pad = int(packed["enc"][0]["w1"].shape[2])
    cout_pad = int(packed["fw"].shape[0])
    features = tuple(int(b["w1"].shape[1]) for b in packed["enc"])

    # trace-time constants (masks + one-hot pool/upsample matrices)
    consts = {
        "masks": [jnp.asarray(_make_masks_np(h, w, P, B)) for (h, w, P) in geoms],
        "pool": [jnp.asarray(_make_pool_select_np(*geoms[l], *geoms[l + 1], B),
                             dtype=jnp.bfloat16) for l in range(depth)],
        "up": [jnp.asarray(_make_up_scatter_np(*geoms[depth - i],
                                               *geoms[depth - 1 - i], B),
                           dtype=jnp.bfloat16) for i in range(depth)],
    }
    bundle = {"params": packed, "consts": consts}
    leaves, treedef = jax.tree_util.tree_flatten(bundle)

    # NCHW -> channel-major, per-image lane-padded layout (wrapper plumbing)
    x = x_nchw.astype(jnp.float32).reshape(N, Cin, S)
    if cin_pad != Cin:
        x = jnp.pad(x, ((0, 0), (0, cin_pad - Cin), (0, 0)))
    if P0 != S:
        x = jnp.pad(x, ((0, 0), (0, 0), (0, P0 - S)))
    x2d = jnp.transpose(x, (1, 0, 2)).reshape(cin_pad, N * P0)

    L = [B * g[2] for g in geoms]
    flops = steps * _estimate_flops(features, cin_pad, cout_pad, L)
    leaf_bytes = sum(int(np.prod(l.shape)) * l.dtype.itemsize for l in leaves)
    bytes_accessed = int(x2d.size) * 4 + cout_pad * N * P0 * 4 + leaf_bytes

    # explicit VMEM budget: params/consts + rough activation working set,
    # clamped to stay safely under v7x's 64 MiB physical VMEM.
    act_bytes = sum(4 * 4 * max(features) * li for li in L)
    vmem_limit = int(min(max(32 * 1024 * 1024, 4 * (leaf_bytes + act_bytes)),
                         56 * 1024 * 1024))

    cfg = {"geoms": geoms, "B": B, "depth": depth}
    kernel = functools.partial(_unet_kernel, treedef, cfg)

    def _const_map(nd):
        return lambda n, _nd=nd: (0,) * _nd

    out2d = pl.pallas_call(
        kernel,
        out_shape=jax.ShapeDtypeStruct((cout_pad, N * P0), jnp.float32),
        grid=(steps,),
        in_specs=[pl.BlockSpec((cin_pad, B * P0), lambda n: (0, n))]
                 + [pl.BlockSpec(tuple(l.shape), _const_map(l.ndim)) for l in leaves],
        out_specs=pl.BlockSpec((cout_pad, B * P0), lambda n: (0, n)),
        compiler_params=pltpu.CompilerParams(
            dimension_semantics=("parallel",),   # batch shards across v7x's 2 TCs
            vmem_limit_bytes=vmem_limit),
        cost_estimate=pl.CostEstimate(flops=int(flops), transcendentals=0,
                                      bytes_accessed=int(bytes_accessed)),
    )(x2d, *leaves)

    out = out2d.reshape(cout_pad, N, P0)[:out_channels, :, :S]
    return jnp.transpose(out, (1, 0, 2)).reshape(N, out_channels, H, W)


# ----------------------------------------------------------------------------
# Parameter init in PyTorch layouts + BN-folding / channel-padding packer.
# ----------------------------------------------------------------------------

def _bn_raw(key, c):
    k1, k2, k3, k4 = jax.random.split(key, 4)
    return {"gamma": 1.0 + 0.1 * jax.random.normal(k1, (c,), jnp.float32),
            "beta": 0.1 * jax.random.normal(k2, (c,), jnp.float32),
            "mean": 0.05 * jax.random.normal(k3, (c,), jnp.float32),
            "var": 0.9 + 0.2 * jax.random.uniform(k4, (c,), jnp.float32)}


def _init_block_raw(key, cin, cout):
    k1, k2, k3, k4 = jax.random.split(key, 4)
    return {"conv1_w": jax.random.normal(k1, (cout, cin, 3, 3), jnp.float32)
                       / np.sqrt(9.0 * cin),
            "bn1": _bn_raw(k2, cout),
            "conv2_w": jax.random.normal(k3, (cout, cout, 3, 3), jnp.float32)
                       / np.sqrt(9.0 * cout),
            "bn2": _bn_raw(k4, cout)}


def init_params(key, in_channels=3, out_channels=3, features=(8, 16)):
    keys = iter(jax.random.split(key, 2 * len(features) + 2))
    enc, cin = [], in_channels
    for f in features:
        enc.append(_init_block_raw(next(keys), cin, f))
        cin = f
    bottleneck = _init_block_raw(next(keys), features[-1], 2 * features[-1])
    dec = []
    for f in reversed(features):
        k1, k2, k3 = jax.random.split(next(keys), 3)
        dec.append({"up_w": jax.random.normal(k1, (2 * f, f, 2, 2), jnp.float32)
                            / np.sqrt(4.0 * 2 * f),
                    "up_b": 0.05 * jax.random.normal(k2, (f,), jnp.float32),
                    "block": _init_block_raw(k3, 2 * f, f)})
    kf1, kf2 = jax.random.split(next(keys), 2)
    final_w = jax.random.normal(kf1, (out_channels, features[0], 1, 1),
                                jnp.float32) / np.sqrt(float(features[0]))
    final_b = 0.05 * jax.random.normal(kf2, (out_channels,), jnp.float32)
    return {"enc": enc, "bottleneck": bottleneck, "dec": dec,
            "final_w": final_w, "final_b": final_b}


def _fold_pack_conv(w, bn):
    """PyTorch Conv2d weight (Cout,Cin,3,3) + eval-mode BN -> (9,Coutp,Cinp) bf16
    with scale folded in, plus f32 shift (Coutp,1)."""
    cout, cin = int(w.shape[0]), int(w.shape[1])
    scale = bn["gamma"] / jnp.sqrt(bn["var"] + _EPS)
    shift = bn["beta"] - scale * bn["mean"]
    wf = w * scale[:, None, None, None]
    coutp, cinp = _round_up(cout), _round_up(cin)
    wk = jnp.transpose(wf, (2, 3, 0, 1)).reshape(9, cout, cin)   # t = ky*3+kx
    packed = jnp.zeros((9, coutp, cinp), jnp.float32).at[:, :cout, :cin].set(wk)
    sh = jnp.zeros((coutp, 1), jnp.float32).at[:cout, 0].set(shift)
    return packed.astype(jnp.bfloat16), sh


def _pack_block(blk):
    w1, b1 = _fold_pack_conv(blk["conv1_w"], blk["bn1"])
    w2, b2 = _fold_pack_conv(blk["conv2_w"], blk["bn2"])
    return {"w1": w1, "b1": b1, "w2": w2, "b2": b2}


def _pack_convT(w, b):
    """PyTorch ConvTranspose2d weight (Cin,Cout,2,2) -> (4,Coutp,Cinp) bf16,
    k = di*2+dj, plus f32 bias (Coutp,1)."""
    cin, cout = int(w.shape[0]), int(w.shape[1])
    cinp, coutp = _round_up(cin), _round_up(cout)
    wk = jnp.transpose(w, (2, 3, 1, 0)).reshape(4, cout, cin)
    packed = jnp.zeros((4, coutp, cinp), jnp.float32).at[:, :cout, :cin].set(wk)
    bia = jnp.zeros((coutp, 1), jnp.float32).at[:cout, 0].set(b)
    return packed.astype(jnp.bfloat16), bia


def pack_params(raw, features=(8, 16)):
    for f in features:
        assert f % 8 == 0, "intermediate feature widths must be multiples of 8"
    enc = [_pack_block(b) for b in raw["enc"]]
    bottleneck = _pack_block(raw["bottleneck"])
    dec = []
    for d in raw["dec"]:
        uw, ub = _pack_convT(d["up_w"], d["up_b"])
        dec.append({"uw": uw, "ub": ub, **_pack_block(d["block"])})
    fw_raw = raw["final_w"][:, :, 0, 0]
    cout, cin = int(fw_raw.shape[0]), int(fw_raw.shape[1])
    coutp, cinp = _round_up(cout), _round_up(cin)
    fw = jnp.zeros((coutp, cinp), jnp.float32).at[:cout, :cin].set(fw_raw)
    fb = jnp.zeros((coutp, 1), jnp.float32).at[:cout, 0].set(raw["final_b"])
    return {"enc": enc, "bottleneck": bottleneck, "dec": dec,
            "fw": fw.astype(jnp.bfloat16), "fb": fb}


# ----------------------------------------------------------------------------
# Main
# ----------------------------------------------------------------------------

if __name__ == "__main__":
    key = jax.random.PRNGKey(0)
    kx, kp = jax.random.split(key)

    # Small shapes consistent with the module: NCHW input, 2 encoder levels.
    N, C, H, W = 2, 3, 16, 16
    features = (8, 16)

    x = jax.random.normal(kx, (N, C, H, W), jnp.float32)
    raw = init_params(kp, in_channels=C, out_channels=3, features=features)
    packed = pack_params(raw, features=features)

    fwd = jax.jit(unet_cae_forward,
                  static_argnames=("out_channels", "images_per_step"))
    out = jax.block_until_ready(fwd(x, packed, out_channels=3, images_per_step=1))

    assert out.shape == (N, 3, H, W), out.shape
    assert bool(jnp.all(jnp.isfinite(out)))
    print("KERNEL_OK")
</pallas_src>

<mosaic_0001>
module attributes {stable_mosaic.version = 11 : i64} {
  func.func @_unet_kernel(%arg0: i32, %arg1: memref<8x256xf32, #tpu.memory_space<vmem>>, %arg2: memref<8x1x256xf32, #tpu.memory_space<vmem>>, %arg3: memref<8x1x128xf32, #tpu.memory_space<vmem>>, %arg4: memref<8x1x128xf32, #tpu.memory_space<vmem>>, %arg5: memref<256x128xbf16, #tpu.memory_space<vmem>>, %arg6: memref<128x128xbf16, #tpu.memory_space<vmem>>, %arg7: memref<4x128x128xbf16, #tpu.memory_space<vmem>>, %arg8: memref<4x128x256xbf16, #tpu.memory_space<vmem>>, %arg9: memref<32x1xf32, #tpu.memory_space<vmem>>, %arg10: memref<32x1xf32, #tpu.memory_space<vmem>>, %arg11: memref<9x32x16xbf16, #tpu.memory_space<vmem>>, %arg12: memref<9x32x32xbf16, #tpu.memory_space<vmem>>, %arg13: memref<16x1xf32, #tpu.memory_space<vmem>>, %arg14: memref<16x1xf32, #tpu.memory_space<vmem>>, %arg15: memref<16x1xf32, #tpu.memory_space<vmem>>, %arg16: memref<4x16x32xbf16, #tpu.memory_space<vmem>>, %arg17: memref<9x16x32xbf16, #tpu.memory_space<vmem>>, %arg18: memref<9x16x16xbf16, #tpu.memory_space<vmem>>, %arg19: memref<8x1xf32, #tpu.memory_space<vmem>>, %arg20: memref<8x1xf32, #tpu.memory_space<vmem>>, %arg21: memref<8x1xf32, #tpu.memory_space<vmem>>, %arg22: memref<4x8x16xbf16, #tpu.memory_space<vmem>>, %arg23: memref<9x8x16xbf16, #tpu.memory_space<vmem>>, %arg24: memref<9x8x8xbf16, #tpu.memory_space<vmem>>, %arg25: memref<8x1xf32, #tpu.memory_space<vmem>>, %arg26: memref<8x1xf32, #tpu.memory_space<vmem>>, %arg27: memref<9x8x8xbf16, #tpu.memory_space<vmem>>, %arg28: memref<9x8x8xbf16, #tpu.memory_space<vmem>>, %arg29: memref<16x1xf32, #tpu.memory_space<vmem>>, %arg30: memref<16x1xf32, #tpu.memory_space<vmem>>, %arg31: memref<9x16x8xbf16, #tpu.memory_space<vmem>>, %arg32: memref<9x16x16xbf16, #tpu.memory_space<vmem>>, %arg33: memref<8x1xf32, #tpu.memory_space<vmem>>, %arg34: memref<8x8xbf16, #tpu.memory_space<vmem>>, %arg35: memref<8x256xf32, #tpu.memory_space<vmem>>) attributes {dimension_semantics = [#tpu.dimension_semantics<parallel>], iteration_bounds = array<i64: 2>, scalar_prefetch = 0 : i64, scratch_operands = 0 : i64, tpu.core_type = #tpu.core_type<tc>, window_params = [{transform_indices = @transform_0, window_bounds = array<i64: 8, 256>}, {pipeline_mode = #tpu.pipeline_mode<synchronous>, transform_indices = @transform_1, window_bounds = array<i64: 8, 1, 256>}, {pipeline_mode = #tpu.pipeline_mode<synchronous>, transform_indices = @transform_2, window_bounds = array<i64: 8, 1, 128>}, {pipeline_mode = #tpu.pipeline_mode<synchronous>, transform_indices = @transform_3, window_bounds = array<i64: 8, 1, 128>}, {pipeline_mode = #tpu.pipeline_mode<synchronous>, transform_indices = @transform_4, window_bounds = array<i64: 256, 128>}, {pipeline_mode = #tpu.pipeline_mode<synchronous>, transform_indices = @transform_5, window_bounds = array<i64: 128, 128>}, {pipeline_mode = #tpu.pipeline_mode<synchronous>, transform_indices = @transform_6, window_bounds = array<i64: 4, 128, 128>}, {pipeline_mode = #tpu.pipeline_mode<synchronous>, transform_indices = @transform_7, window_bounds = array<i64: 4, 128, 256>}, {pipeline_mode = #tpu.pipeline_mode<synchronous>, transform_indices = @transform_8, window_bounds = array<i64: 32, 1>}, {pipeline_mode = #tpu.pipeline_mode<synchronous>, transform_indices = @transform_9, window_bounds = array<i64: 32, 1>}, {pipeline_mode = #tpu.pipeline_mode<synchronous>, transform_indices = @transform_10, window_bounds = array<i64: 9, 32, 16>}, {pipeline_mode = #tpu.pipeline_mode<synchronous>, transform_indices = @transform_11, window_bounds = array<i64: 9, 32, 32>}, {pipeline_mode = #tpu.pipeline_mode<synchronous>, transform_indices = @transform_12, window_bounds = array<i64: 16, 1>}, {pipeline_mode = #tpu.pipeline_mode<synchronous>, transform_indices = @transform_13, window_bounds = array<i64: 16, 1>}, {pipeline_mode = #tpu.pipeline_mode<synchronous>, transform_indices = @transform_14, window_bounds = array<i64: 16, 1>}, {pipeline_mode = #tpu.pipeline_mode<synchronous>, transform_indices = @transform_15, window_bounds = array<i64: 4, 16, 32>}, {pipeline_mode = #tpu.pipeline_mode<synchronous>, transform_indices = @transform_16, window_bounds = array<i64: 9, 16, 32>}, {pipeline_mode = #tpu.pipeline_mode<synchronous>, transform_indices = @transform_17, window_bounds = array<i64: 9, 16, 16>}, {pipeline_mode = #tpu.pipeline_mode<synchronous>, transform_indices = @transform_18, window_bounds = array<i64: 8, 1>}, {pipeline_mode = #tpu.pipeline_mode<synchronous>, transform_indices = @transform_19, window_bounds = array<i64: 8, 1>}, {pipeline_mode = #tpu.pipeline_mode<synchronous>, transform_indices = @transform_20, window_bounds = array<i64: 8, 1>}, {pipeline_mode = #tpu.pipeline_mode<synchronous>, transform_indices = @transform_21, window_bounds = array<i64: 4, 8, 16>}, {pipeline_mode = #tpu.pipeline_mode<synchronous>, transform_indices = @transform_22, window_bounds = array<i64: 9, 8, 16>}, {pipeline_mode = #tpu.pipeline_mode<synchronous>, transform_indices = @transform_23, window_bounds = array<i64: 9, 8, 8>}, {pipeline_mode = #tpu.pipeline_mode<synchronous>, transform_indices = @transform_24, window_bounds = array<i64: 8, 1>}, {pipeline_mode = #tpu.pipeline_mode<synchronous>, transform_indices = @transform_25, window_bounds = array<i64: 8, 1>}, {pipeline_mode = #tpu.pipeline_mode<synchronous>, transform_indices = @transform_26, window_bounds = array<i64: 9, 8, 8>}, {pipeline_mode = #tpu.pipeline_mode<synchronous>, transform_indices = @transform_27, window_bounds = array<i64: 9, 8, 8>}, {pipeline_mode = #tpu.pipeline_mode<synchronous>, transform_indices = @transform_28, window_bounds = array<i64: 16, 1>}, {pipeline_mode = #tpu.pipeline_mode<synchronous>, transform_indices = @transform_29, window_bounds = array<i64: 16, 1>}, {pipeline_mode = #tpu.pipeline_mode<synchronous>, transform_indices = @transform_30, window_bounds = array<i64: 9, 16, 8>}, {pipeline_mode = #tpu.pipeline_mode<synchronous>, transform_indices = @transform_31, window_bounds = array<i64: 9, 16, 16>}, {pipeline_mode = #tpu.pipeline_mode<synchronous>, transform_indices = @transform_32, window_bounds = array<i64: 8, 1>}, {pipeline_mode = #tpu.pipeline_mode<synchronous>, transform_indices = @transform_33, window_bounds = array<i64: 8, 8>}, {transform_indices = @transform_34, window_bounds = array<i64: 8, 256>}]} {
    %c0 = arith.constant 0 : index
    %c0_0 = arith.constant 0 : index
    %0 = vector.load %arg1[%c0, %c0_0] : memref<8x256xf32, #tpu.memory_space<vmem>>, vector<8x256xf32>
    %c17_i32 = arith.constant 17 : i32
    %1 = tpu.dynamic_rotate %0 by %c17_i32 dim 1 : vector<8x256xf32>, i32 -> vector<8x256xf32>
    %c0_1 = arith.constant 0 : index
    %c0_2 = arith.constant 0 : index
    %c0_3 = arith.constant 0 : index
    %2 = vector.load %arg2[%c0_1, %c0_2, %c0_3] : memref<8x1x256xf32, #tpu.memory_space<vmem>>, vector<1x1x256xf32>
    %3 = vector.shape_cast %2 : vector<1x1x256xf32> to vector<1x256xf32>
    %4 = vector.broadcast %3 : vector<1x256xf32> to vector<8x256xf32>
    %5 = arith.mulf %1, %4 : vector<8x256xf32>
    %c0_4 = arith.constant 0 : index
    %c0_5 = arith.constant 0 : index
    %c0_6 = arith.constant 0 : index
    %6 = vector.load %arg27[%c0_4, %c0_5, %c0_6] : memref<9x8x8xbf16, #tpu.memory_space<vmem>>, vector<1x8x8xbf16>
    %7 = vector.shape_cast %6 : vector<1x8x8xbf16> to vector<8x8xbf16>
    %8 = arith.truncf %5 : vector<8x256xf32> to vector<8x256xbf16>
    %cst = arith.constant dense<0.000000e+00> : vector<8x256xf32>
    %9 = tpu.matmul %7, %8, %cst {dimension_numbers = #tpu.dot_dimension_numbers<[1], [0], [0], [1], [0, 0, 1, 1], [], []>} : vector<8x8xbf16>, vector<8x256xbf16>, vector<8x256xf32> -> vector<8x256xf32>
    %c16_i32 = arith.constant 16 : i32
    %10 = tpu.dynamic_rotate %0 by %c16_i32 dim 1 : vector<8x256xf32>, i32 -> vector<8x256xf32>
    %c1 = arith.constant 1 : index
    %c0_7 = arith.constant 0 : index
    %c0_8 = arith.constant 0 : index
    %11 = vector.load %arg2[%c1, %c0_7, %c0_8] : memref<8x1x256xf32, #tpu.memory_space<vmem>>, vector<1x1x256xf32>
    %12 = vector.shape_cast %11 : vector<1x1x256xf32> to vector<1x256xf32>
    %13 = vector.broadcast %12 : vector<1x256xf32> to vector<8x256xf32>
    %14 = arith.mulf %10, %13 : vector<8x256xf32>
    %c1_9 = arith.constant 1 : index
    %c0_10 = arith.constant 0 : index
    %c0_11 = arith.constant 0 : index
    %15 = vector.load %arg27[%c1_9, %c0_10, %c0_11] : memref<9x8x8xbf16, #tpu.memory_space<vmem>>, vector<1x8x8xbf16>
    %16 = vector.shape_cast %15 : vector<1x8x8xbf16> to vector<8x8xbf16>
    %17 = arith.truncf %14 : vector<8x256xf32> to vector<8x256xbf16>
    %cst_12 = arith.constant dense<0.000000e+00> : vector<8x256xf32>
    %18 = tpu.matmul %16, %17, %cst_12 {dimension_numbers = #tpu.dot_dimension_numbers<[1], [0], [0], [1], [0, 0, 1, 1], [], []>} : vector<8x8xbf16>, vector<8x256xbf16>, vector<8x256xf32> -> vector<8x256xf32>
    %19 = arith.addf %9, %18 : vector<8x256xf32>
    %c15_i32 = arith.constant 15 : i32
    %20 = tpu.dynamic_rotate %0 by %c15_i32 dim 1 : vector<8x256xf32>, i32 -> vector<8x256xf32>
    %c2 = arith.constant 2 : index
    %c0_13 = arith.constant 0 : index
    %c0_14 = arith.constant 0 : index
    %21 = vector.load %arg2[%c2, %c0_13, %c0_14] : memref<8x1x256xf32, #tpu.memory_space<vmem>>, vector<1x1x256xf32>
    %22 = vector.shape_cast %21 : vector<1x1x256xf32> to vector<1x256xf32>
    %23 = vector.broadcast %22 : vector<1x256xf32> to vector<8x256xf32>
    %24 = arith.mulf %20, %23 : vector<8x256xf32>
    %c2_15 = arith.constant 2 : index
    %c0_16 = arith.constant 0 : index
    %c0_17 = arith.constant 0 : index
    %25 = vector.load %arg27[%c2_15, %c0_16, %c0_17] : memref<9x8x8xbf16, #tpu.memory_space<vmem>>, vector<1x8x8xbf16>
    %26 = vector.shape_cast %25 : vector<1x8x8xbf16> to vector<8x8xbf16>
    %27 = arith.truncf %24 : vector<8x256xf32> to vector<8x256xbf16>
    %cst_18 = arith.constant dense<0.000000e+00> : vector<8x256xf32>
    %28 = tpu.matmul %26, %27, %cst_18 {dimension_numbers = #tpu.dot_dimension_numbers<[1], [0], [0], [1], [0, 0, 1, 1], [], []>} : vector<8x8xbf16>, vector<8x256xbf16>, vector<8x256xf32> -> vector<8x256xf32>
    %29 = arith.addf %19, %28 : vector<8x256xf32>
    %c1_i32 = arith.constant 1 : i32
    %30 = tpu.dynamic_rotate %0 by %c1_i32 dim 1 : vector<8x256xf32>, i32 -> vector<8x256xf32>
    %c3 = arith.constant 3 : index
    %c0_19 = arith.constant 0 : index
    %c0_20 = arith.constant 0 : index
    %31 = vector.load %arg2[%c3, %c0_19, %c0_20] : memref<8x1x256xf32, #tpu.memory_space<vmem>>, vector<1x1x256xf32>
    %32 = vector.shape_cast %31 : vector<1x1x256xf32> to vector<1x256xf32>
    %33 = vector.broadcast %32 : vector<1x256xf32> to vector<8x256xf32>
    %34 = arith.mulf %30, %33 : vector<8x256xf32>
    %c3_21 = arith.constant 3 : index
    %c0_22 = arith.constant 0 : index
    %c0_23 = arith.constant 0 : index
    %35 = vector.load %arg27[%c3_21, %c0_22, %c0_23] : memref<9x8x8xbf16, #tpu.memory_space<vmem>>, vector<1x8x8xbf16>
    %36 = vector.shape_cast %35 : vector<1x8x8xbf16> to vector<8x8xbf16>
    %37 = arith.truncf %34 : vector<8x256xf32> to vector<8x256xbf16>
    %cst_24 = arith.constant dense<0.000000e+00> : vector<8x256xf32>
    %38 = tpu.matmul %36, %37, %cst_24 {dimension_numbers = #tpu.dot_dimension_numbers<[1], [0], [0], [1], [0, 0, 1, 1], [], []>} : vector<8x8xbf16>, vector<8x256xbf16>, vector<8x256xf32> -> vector<8x256xf32>
    %39 = arith.addf %29, %38 : vector<8x256xf32>
    %c4 = arith.constant 4 : index
    %c0_25 = arith.constant 0 : index
    %c0_26 = arith.constant 0 : index
    %40 = vector.load %arg27[%c4, %c0_25, %c0_26] : memref<9x8x8xbf16, #tpu.memory_space<vmem>>, vector<1x8x8xbf16>
    %41 = vector.shape_cast %40 : vector<1x8x8xbf16> to vector<8x8xbf16>
    %42 = arith.truncf %0 : vector<8x256xf32> to vector<8x256xbf16>
    %cst_27 = arith.constant dense<0.000000e+00> : vector<8x256xf32>
    %43 = tpu.matmul %41, %42, %cst_27 {dimension_numbers = #tpu.dot_dimension_numbers<[1], [0], [0], [1], [0, 0, 1, 1], [], []>} : vector<8x8xbf16>, vector<8x256xbf16>, vector<8x256xf32> -> vector<8x256xf32>
    %44 = arith.addf %39, %43 : vector<8x256xf32>
    %c255_i32 = arith.constant 255 : i32
    %45 = tpu.dynamic_rotate %0 by %c255_i32 dim 1 : vector<8x256xf32>, i32 -> vector<8x256xf32>
    %c4_28 = arith.constant 4 : index
    %c0_29 = arith.constant 0 : index
    %c0_30 = arith.constant 0 : index
    %46 = vector.load %arg2[%c4_28, %c0_29, %c0_30] : memref<8x1x256xf32, #tpu.memory_space<vmem>>, vector<1x1x256xf32>
    %47 = vector.shape_cast %46 : vector<1x1x256xf32> to vector<1x256xf32>
    %48 = vector.broadcast %47 : vector<1x256xf32> to vector<8x256xf32>
    %49 = arith.mulf %45, %48 : vector<8x256xf32>
    %c5 = arith.constant 5 : index
    %c0_31 = arith.constant 0 : index
    %c0_32 = arith.constant 0 : index
    %50 = vector.load %arg27[%c5, %c0_31, %c0_32] : memref<9x8x8xbf16, #tpu.memory_space<vmem>>, vector<1x8x8xbf16>
    %51 = vector.shape_cast %50 : vector<1x8x8xbf16> to vector<8x8xbf16>
    %52 = arith.truncf %49 : vector<8x256xf32> to vector<8x256xbf16>
    %cst_33 = arith.constant dense<0.000000e+00> : vector<8x256xf32>
    %53 = tpu.matmul %51, %52, %cst_33 {dimension_numbers = #tpu.dot_dimension_numbers<[1], [0], [0], [1], [0, 0, 1, 1], [], []>} : vector<8x8xbf16>, vector<8x256xbf16>, vector<8x256xf32> -> vector<8x256xf32>
    %54 = arith.addf %44, %53 : vector<8x256xf32>
    %c241_i32 = arith.constant 241 : i32
    %55 = tpu.dynamic_rotate %0 by %c241_i32 dim 1 : vector<8x256xf32>, i32 -> vector<8x256xf32>
    %c5_34 = arith.constant 5 : index
    %c0_35 = arith.constant 0 : index
    %c0_36 = arith.constant 0 : index
    %56 = vector.load %arg2[%c5_34, %c0_35, %c0_36] : memref<8x1x256xf32, #tpu.memory_space<vmem>>, vector<1x1x256xf32>
    %57 = vector.shape_cast %56 : vector<1x1x256xf32> to vector<1x256xf32>
    %58 = vector.broadcast %57 : vector<1x256xf32> to vector<8x256xf32>
    %59 = arith.mulf %55, %58 : vector<8x256xf32>
    %c6 = arith.constant 6 : index
    %c0_37 = arith.constant 0 : index
    %c0_38 = arith.constant 0 : index
    %60 = vector.load %arg27[%c6, %c0_37, %c0_38] : memref<9x8x8xbf16, #tpu.memory_space<vmem>>, vector<1x8x8xbf16>
    %61 = vector.shape_cast %60 : vector<1x8x8xbf16> to vector<8x8xbf16>
    %62 = arith.truncf %59 : vector<8x256xf32> to vector<8x256xbf16>
    %cst_39 = arith.constant dense<0.000000e+00> : vector<8x256xf32>
    %63 = tpu.matmul %61, %62, %cst_39 {dimension_numbers = #tpu.dot_dimension_numbers<[1], [0], [0], [1], [0, 0, 1, 1], [], []>} : vector<8x8xbf16>, vector<8x256xbf16>, vector<8x256xf32> -> vector<8x256xf32>
    %64 = arith.addf %54, %63 : vector<8x256xf32>
    %c240_i32 = arith.constant 240 : i32
    %65 = tpu.dynamic_rotate %0 by %c240_i32 dim 1 : vector<8x256xf32>, i32 -> vector<8x256xf32>
    %c6_40 = arith.constant 6 : index
    %c0_41 = arith.constant 0 : index
    %c0_42 = arith.constant 0 : index
    %66 = vector.load %arg2[%c6_40, %c0_41, %c0_42] : memref<8x1x256xf32, #tpu.memory_space<vmem>>, vector<1x1x256xf32>
    %67 = vector.shape_cast %66 : vector<1x1x256xf32> to vector<1x256xf32>
    %68 = vector.broadcast %67 : vector<1x256xf32> to vector<8x256xf32>
    %69 = arith.mulf %65, %68 : vector<8x256xf32>
    %c7 = arith.constant 7 : index
    %c0_43 = arith.constant 0 : index
    %c0_44 = arith.constant 0 : index
    %70 = vector.load %arg27[%c7, %c0_43, %c0_44] : memref<9x8x8xbf16, #tpu.memory_space<vmem>>, vector<1x8x8xbf16>
    %71 = vector.shape_cast %70 : vector<1x8x8xbf16> to vector<8x8xbf16>
    %72 = arith.truncf %69 : vector<8x256xf32> to vector<8x256xbf16>
    %cst_45 = arith.constant dense<0.000000e+00> : vector<8x256xf32>
    %73 = tpu.matmul %71, %72, %cst_45 {dimension_numbers = #tpu.dot_dimension_numbers<[1], [0], [0], [1], [0, 0, 1, 1], [], []>} : vector<8x8xbf16>, vector<8x256xbf16>, vector<8x256xf32> -> vector<8x256xf32>
    %74 = arith.addf %64, %73 : vector<8x256xf32>
    %c239_i32 = arith.constant 239 : i32
    %75 = tpu.dynamic_rotate %0 by %c239_i32 dim 1 : vector<8x256xf32>, i32 -> vector<8x256xf32>
    %c7_46 = arith.constant 7 : index
    %c0_47 = arith.constant 0 : index
    %c0_48 = arith.constant 0 : index
    %76 = vector.load %arg2[%c7_46, %c0_47, %c0_48] : memref<8x1x256xf32, #tpu.memory_space<vmem>>, vector<1x1x256xf32>
    %77 = vector.shape_cast %76 : vector<1x1x256xf32> to vector<1x256xf32>
    %78 = vector.broadcast %77 : vector<1x256xf32> to vector<8x256xf32>
    %79 = arith.mulf %75, %78 : vector<8x256xf32>
    %c8 = arith.constant 8 : index
    %c0_49 = arith.constant 0 : index
    %c0_50 = arith.constant 0 : index
    %80 = vector.load %arg27[%c8, %c0_49, %c0_50] : memref<9x8x8xbf16, #tpu.memory_space<vmem>>, vector<1x8x8xbf16>
    %81 = vector.shape_cast %80 : vector<1x8x8xbf16> to vector<8x8xbf16>
    %82 = arith.truncf %79 : vector<8x256xf32> to vector<8x256xbf16>
    %cst_51 = arith.constant dense<0.000000e+00> : vector<8x256xf32>
    %83 = tpu.matmul %81, %82, %cst_51 {dimension_numbers = #tpu.dot_dimension_numbers<[1], [0], [0], [1], [0, 0, 1, 1], [], []>} : vector<8x8xbf16>, vector<8x256xbf16>, vector<8x256xf32> -> vector<8x256xf32>
    %84 = arith.addf %74, %83 : vector<8x256xf32>
    %c0_52 = arith.constant 0 : index
    %c0_53 = arith.constant 0 : index
    %85 = vector.load %arg25[%c0_52, %c0_53] : memref<8x1xf32, #tpu.memory_space<vmem>>, vector<8x1xf32>
    %86 = vector.broadcast %85 : vector<8x1xf32> to vector<8x256xf32>
    %87 = arith.addf %84, %86 : vector<8x256xf32>
    %cst_54 = arith.constant 0.000000e+00 : f32
    %88 = vector.broadcast %cst_54 : f32 to vector<8x256xf32>
    %89 = arith.maximumf %87, %88 : vector<8x256xf32>
    %c17_i32_55 = arith.constant 17 : i32
    %90 = tpu.dynamic_rotate %89 by %c17_i32_55 dim 1 : vector<8x256xf32>, i32 -> vector<8x256xf32>
    %c0_56 = arith.constant 0 : index
    %c0_57 = arith.constant 0 : index
    %c0_58 = arith.constant 0 : index
    %91 = vector.load %arg2[%c0_56, %c0_57, %c0_58] : memref<8x1x256xf32, #tpu.memory_space<vmem>>, vector<1x1x256xf32>
    %92 = vector.shape_cast %91 : vector<1x1x256xf32> to vector<1x256xf32>
    %93 = vector.broadcast %92 : vector<1x256xf32> to vector<8x256xf32>
    %94 = arith.mulf %90, %93 : vector<8x256xf32>
    %c0_59 = arith.constant 0 : index
    %c0_60 = arith.constant 0 : index
    %c0_61 = arith.constant 0 : index
    %95 = vector.load %arg28[%c0_59, %c0_60, %c0_61] : memref<9x8x8xbf16, #tpu.memory_space<vmem>>, vector<1x8x8xbf16>
    %96 = vector.shape_cast %95 : vector<1x8x8xbf16> to vector<8x8xbf16>
    %97 = arith.truncf %94 : vector<8x256xf32> to vector<8x256xbf16>
    %cst_62 = arith.constant dense<0.000000e+00> : vector<8x256xf32>
    %98 = tpu.matmul %96, %97, %cst_62 {dimension_numbers = #tpu.dot_dimension_numbers<[1], [0], [0], [1], [0, 0, 1, 1], [], []>} : vector<8x8xbf16>, vector<8x256xbf16>, vector<8x256xf32> -> vector<8x256xf32>
    %c16_i32_63 = arith.constant 16 : i32
    %99 = tpu.dynamic_rotate %89 by %c16_i32_63 dim 1 : vector<8x256xf32>, i32 -> vector<8x256xf32>
    %c1_64 = arith.constant 1 : index
    %c0_65 = arith.constant 0 : index
    %c0_66 = arith.constant 0 : index
    %100 = vector.load %arg2[%c1_64, %c0_65, %c0_66] : memref<8x1x256xf32, #tpu.memory_space<vmem>>, vector<1x1x256xf32>
    %101 = vector.shape_cast %100 : vector<1x1x256xf32> to vector<1x256xf32>
    %102 = vector.broadcast %101 : vector<1x256xf32> to vector<8x256xf32>
    %103 = arith.mulf %99, %102 : vector<8x256xf32>
    %c1_67 = arith.constant 1 : index
    %c0_68 = arith.constant 0 : index
    %c0_69 = arith.constant 0 : index
    %104 = vector.load %arg28[%c1_67, %c0_68, %c0_69] : memref<9x8x8xbf16, #tpu.memory_space<vmem>>, vector<1x8x8xbf16>
    %105 = vector.shape_cast %104 : vector<1x8x8xbf16> to vector<8x8xbf16>
    %106 = arith.truncf %103 : vector<8x256xf32> to vector<8x256xbf16>
    %cst_70 = arith.constant dense<0.000000e+00> : vector<8x256xf32>
    %107 = tpu.matmul %105, %106, %cst_70 {dimension_numbers = #tpu.dot_dimension_numbers<[1], [0], [0], [1], [0, 0, 1, 1], [], []>} : vector<8x8xbf16>, vector<8x256xbf16>, vector<8x256xf32> -> vector<8x256xf32>
    %108 = arith.addf %98, %107 : vector<8x256xf32>
    %c15_i32_71 = arith.constant 15 : i32
    %109 = tpu.dynamic_rotate %89 by %c15_i32_71 dim 1 : vector<8x256xf32>, i32 -> vector<8x256xf32>
    %c2_72 = arith.constant 2 : index
    %c0_73 = arith.constant 0 : index
    %c0_74 = arith.constant 0 : index
    %110 = vector.load %arg2[%c2_72, %c0_73, %c0_74] : memref<8x1x256xf32, #tpu.memory_space<vmem>>, vector<1x1x256xf32>
    %111 = vector.shape_cast %110 : vector<1x1x256xf32> to vector<1x256xf32>
    %112 = vector.broadcast %111 : vector<1x256xf32> to vector<8x256xf32>
    %113 = arith.mulf %109, %112 : vector<8x256xf32>
    %c2_75 = arith.constant 2 : index
    %c0_76 = arith.constant 0 : index
    %c0_77 = arith.constant 0 : index
    %114 = vector.load %arg28[%c2_75, %c0_76, %c0_77] : memref<9x8x8xbf16, #tpu.memory_space<vmem>>, vector<1x8x8xbf16>
    %115 = vector.shape_cast %114 : vector<1x8x8xbf16> to vector<8x8xbf16>
    %116 = arith.truncf %113 : vector<8x256xf32> to vector<8x256xbf16>
    %cst_78 = arith.constant dense<0.000000e+00> : vector<8x256xf32>
    %117 = tpu.matmul %115, %116, %cst_78 {dimension_numbers = #tpu.dot_dimension_numbers<[1], [0], [0], [1], [0, 0, 1, 1], [], []>} : vector<8x8xbf16>, vector<8x256xbf16>, vector<8x256xf32> -> vector<8x256xf32>
    %118 = arith.addf %108, %117 : vector<8x256xf32>
    %c1_i32_79 = arith.constant 1 : i32
    %119 = tpu.dynamic_rotate %89 by %c1_i32_79 dim 1 : vector<8x256xf32>, i32 -> vector<8x256xf32>
    %c3_80 = arith.constant 3 : index
    %c0_81 = arith.constant 0 : index
    %c0_82 = arith.constant 0 : index
    %120 = vector.load %arg2[%c3_80, %c0_81, %c0_82] : memref<8x1x256xf32, #tpu.memory_space<vmem>>, vector<1x1x256xf32>
    %121 = vector.shape_cast %120 : vector<1x1x256xf32> to vector<1x256xf32>
    %122 = vector.broadcast %121 : vector<1x256xf32> to vector<8x256xf32>
    %123 = arith.mulf %119, %122 : vector<8x256xf32>
    %c3_83 = arith.constant 3 : index
    %c0_84 = arith.constant 0 : index
    %c0_85 = arith.constant 0 : index
    %124 = vector.load %arg28[%c3_83, %c0_84, %c0_85] : memref<9x8x8xbf16, #tpu.memory_space<vmem>>, vector<1x8x8xbf16>
    %125 = vector.shape_cast %124 : vector<1x8x8xbf16> to vector<8x8xbf16>
    %126 = arith.truncf %123 : vector<8x256xf32> to vector<8x256xbf16>
    %cst_86 = arith.constant dense<0.000000e+00> : vector<8x256xf32>
    %127 = tpu.matmul %125, %126, %cst_86 {dimension_numbers = #tpu.dot_dimension_numbers<[1], [0], [0], [1], [0, 0, 1, 1], [], []>} : vector<8x8xbf16>, vector<8x256xbf16>, vector<8x256xf32> -> vector<8x256xf32>
    %128 = arith.addf %118, %127 : vector<8x256xf32>
    %c4_87 = arith.constant 4 : index
    %c0_88 = arith.constant 0 : index
    %c0_89 = arith.constant 0 : index
    %129 = vector.load %arg28[%c4_87, %c0_88, %c0_89] : memref<9x8x8xbf16, #tpu.memory_space<vmem>>, vector<1x8x8xbf16>
    %130 = vector.shape_cast %129 : vector<1x8x8xbf16> to vector<8x8xbf16>
    %131 = arith.truncf %89 : vector<8x256xf32> to vector<8x256xbf16>
    %cst_90 = arith.constant dense<0.000000e+00> : vector<8x256xf32>
    %132 = tpu.matmul %130, %131, %cst_90 {dimension_numbers = #tpu.dot_dimension_numbers<[1], [0], [0], [1], [0, 0, 1, 1], [], []>} : vector<8x8xbf16>, vector<8x256xbf16>, vector<8x256xf32> -> vector<8x256xf32>
    %133 = arith.addf %128, %132 : vector<8x256xf32>
    %c255_i32_91 = arith.constant 255 : i32
    %134 = tpu.dynamic_rotate %89 by %c255_i32_91 dim 1 : vector<8x256xf32>, i32 -> vector<8x256xf32>
    %c4_92 = arith.constant 4 : index
    %c0_93 = arith.constant 0 : index
    %c0_94 = arith.constant 0 : index
    %135 = vector.load %arg2[%c4_92, %c0_93, %c0_94] : memref<8x1x256xf32, #tpu.memory_space<vmem>>, vector<1x1x256xf32>
    %136 = vector.shape_cast %135 : vector<1x1x256xf32> to vector<1x256xf32>
    %137 = vector.broadcast %136 : vector<1x256xf32> to vector<8x256xf32>
    %138 = arith.mulf %134, %137 : vector<8x256xf32>
    %c5_95 = arith.constant 5 : index
    %c0_96 = arith.constant 0 : index
    %c0_97 = arith.constant 0 : index
    %139 = vector.load %arg28[%c5_95, %c0_96, %c0_97] : memref<9x8x8xbf16, #tpu.memory_space<vmem>>, vector<1x8x8xbf16>
    %140 = vector.shape_cast %139 : vector<1x8x8xbf16> to vector<8x8xbf16>
    %141 = arith.truncf %138 : vector<8x256xf32> to vector<8x256xbf16>
    %cst_98 = arith.constant dense<0.000000e+00> : vector<8x256xf32>
    %142 = tpu.matmul %140, %141, %cst_98 {dimension_numbers = #tpu.dot_dimension_numbers<[1], [0], [0], [1], [0, 0, 1, 1], [], []>} : vector<8x8xbf16>, vector<8x256xbf16>, vector<8x256xf32> -> vector<8x256xf32>
    %143 = arith.addf %133, %142 : vector<8x256xf32>
    %c241_i32_99 = arith.constant 241 : i32
    %144 = tpu.dynamic_rotate %89 by %c241_i32_99 dim 1 : vector<8x256xf32>, i32 -> vector<8x256xf32>
    %c5_100 = arith.constant 5 : index
    %c0_101 = arith.constant 0 : index
    %c0_102 = arith.constant 0 : index
    %145 = vector.load %arg2[%c5_100, %c0_101, %c0_102] : memref<8x1x256xf32, #tpu.memory_space<vmem>>, vector<1x1x256xf32>
    %146 = vector.shape_cast %145 : vector<1x1x256xf32> to vector<1x256xf32>
    %147 = vector.broadcast %146 : vector<1x256xf32> to vector<8x256xf32>
    %148 = arith.mulf %144, %147 : vector<8x256xf32>
    %c6_103 = arith.constant 6 : index
    %c0_104 = arith.constant 0 : index
    %c0_105 = arith.constant 0 : index
    %149 = vector.load %arg28[%c6_103, %c0_104, %c0_105] : memref<9x8x8xbf16, #tpu.memory_space<vmem>>, vector<1x8x8xbf16>
    %150 = vector.shape_cast %149 : vector<1x8x8xbf16> to vector<8x8xbf16>
    %151 = arith.truncf %148 : vector<8x256xf32> to vector<8x256xbf16>
    %cst_106 = arith.constant dense<0.000000e+00> : vector<8x256xf32>
    %152 = tpu.matmul %150, %151, %cst_106 {dimension_numbers = #tpu.dot_dimension_numbers<[1], [0], [0], [1], [0, 0, 1, 1], [], []>} : vector<8x8xbf16>, vector<8x256xbf16>, vector<8x256xf32> -> vector<8x256xf32>
    %153 = arith.addf %143, %152 : vector<8x256xf32>
    %c240_i32_107 = arith.constant 240 : i32
    %154 = tpu.dynamic_rotate %89 by %c240_i32_107 dim 1 : vector<8x256xf32>, i32 -> vector<8x256xf32>
    %c6_108 = arith.constant 6 : index
    %c0_109 = arith.constant 0 : index
    %c0_110 = arith.constant 0 : index
    %155 = vector.load %arg2[%c6_108, %c0_109, %c0_110] : memref<8x1x256xf32, #tpu.memory_space<vmem>>, vector<1x1x256xf32>
    %156 = vector.shape_cast %155 : vector<1x1x256xf32> to vector<1x256xf32>
    %157 = vector.broadcast %156 : vector<1x256xf32> to vector<8x256xf32>
    %158 = arith.mulf %154, %157 : vector<8x256xf32>
    %c7_111 = arith.constant 7 : index
    %c0_112 = arith.constant 0 : index
    %c0_113 = arith.constant 0 : index
    %159 = vector.load %arg28[%c7_111, %c0_112, %c0_113] : memref<9x8x8xbf16, #tpu.memory_space<vmem>>, vector<1x8x8xbf16>
    %160 = vector.shape_cast %159 : vector<1x8x8xbf16> to vector<8x8xbf16>
    %161 = arith.truncf %158 : vector<8x256xf32> to vector<8x256xbf16>
    %cst_114 = arith.constant dense<0.000000e+00> : vector<8x256xf32>
    %162 = tpu.matmul %160, %161, %cst_114 {dimension_numbers = #tpu.dot_dimension_numbers<[1], [0], [0], [1], [0, 0, 1, 1], [], []>} : vector<8x8xbf16>, vector<8x256xbf16>, vector<8x256xf32> -> vector<8x256xf32>
    %163 = arith.addf %153, %162 : vector<8x256xf32>
    %c239_i32_115 = arith.constant 239 : i32
    %164 = tpu.dynamic_rotate %89 by %c239_i32_115 dim 1 : vector<8x256xf32>, i32 -> vector<8x256xf32>
    %c7_116 = arith.constant 7 : index
    %c0_117 = arith.constant 0 : index
    %c0_118 = arith.constant 0 : index
    %165 = vector.load %arg2[%c7_116, %c0_117, %c0_118] : memref<8x1x256xf32, #tpu.memory_space<vmem>>, vector<1x1x256xf32>
    %166 = vector.shape_cast %165 : vector<1x1x256xf32> to vector<1x256xf32>
    %167 = vector.broadcast %166 : vector<1x256xf32> to vector<8x256xf32>
    %168 = arith.mulf %164, %167 : vector<8x256xf32>
    %c8_119 = arith.constant 8 : index
    %c0_120 = arith.constant 0 : index
    %c0_121 = arith.constant 0 : index
    %169 = vector.load %arg28[%c8_119, %c0_120, %c0_121] : memref<9x8x8xbf16, #tpu.memory_space<vmem>>, vector<1x8x8xbf16>
    %170 = vector.shape_cast %169 : vector<1x8x8xbf16> to vector<8x8xbf16>
    %171 = arith.truncf %168 : vector<8x256xf32> to vector<8x256xbf16>
    %cst_122 = arith.constant dense<0.000000e+00> : vector<8x256xf32>
    %172 = tpu.matmul %170, %171, %cst_122 {dimension_numbers = #tpu.dot_dimension_numbers<[1], [0], [0], [1], [0, 0, 1, 1], [], []>} : vector<8x8xbf16>, vector<8x256xbf16>, vector<8x256xf32> -> vector<8x256xf32>
    %173 = arith.addf %163, %172 : vector<8x256xf32>
    %c0_123 = arith.constant 0 : index
    %c0_124 = arith.constant 0 : index
    %174 = vector.load %arg26[%c0_123, %c0_124] : memref<8x1xf32, #tpu.memory_space<vmem>>, vector<8x1xf32>
    %175 = vector.broadcast %174 : vector<8x1xf32> to vector<8x256xf32>
    %176 = arith.addf %173, %175 : vector<8x256xf32>
    %cst_125 = arith.constant 0.000000e+00 : f32
    %177 = vector.broadcast %cst_125 : f32 to vector<8x256xf32>
    %178 = arith.maximumf %176, %177 : vector<8x256xf32>
    %c255_i32_126 = arith.constant 255 : i32
    %179 = tpu.dynamic_rotate %178 by %c255_i32_126 dim 1 : vector<8x256xf32>, i32 -> vector<8x256xf32>
    %180 = arith.maximumf %178, %179 : vector<8x256xf32>
    %c240_i32_127 = arith.constant 240 : i32
    %181 = tpu.dynamic_rotate %178 by %c240_i32_127 dim 1 : vector<8x256xf32>, i32 -> vector<8x256xf32>
    %182 = arith.maximumf %180, %181 : vector<8x256xf32>
    %c239_i32_128 = arith.constant 239 : i32
    %183 = tpu.dynamic_rotate %178 by %c239_i32_128 dim 1 : vector<8x256xf32>, i32 -> vector<8x256xf32>
    %184 = arith.maximumf %182, %183 : vector<8x256xf32>
    %c0_129 = arith.constant 0 : index
    %c0_130 = arith.constant 0 : index
    %185 = vector.load %arg5[%c0_129, %c0_130] : memref<256x128xbf16, #tpu.memory_space<vmem>>, vector<256x128xbf16>
    %186 = arith.truncf %184 : vector<8x256xf32> to vector<8x256xbf16>
    %cst_131 = arith.constant dense<0.000000e+00> : vector<8x128xf32>
    %187 = tpu.matmul %186, %185, %cst_131 {dimension_numbers = #tpu.dot_dimension_numbers<[1], [0], [0], [1], [0, 0, 1, 1], [], []>} : vector<8x256xbf16>, vector<256x128xbf16>, vector<8x128xf32> -> vector<8x128xf32>
    %c9_i32 = arith.constant 9 : i32
    %188 = tpu.dynamic_rotate %187 by %c9_i32 dim 1 : vector<8x128xf32>, i32 -> vector<8x128xf32>
    %c0_132 = arith.constant 0 : index
    %c0_133 = arith.constant 0 : index
    %c0_134 = arith.constant 0 : index
    %189 = vector.load %arg3[%c0_132, %c0_133, %c0_134] : memref<8x1x128xf32, #tpu.memory_space<vmem>>, vector<1x1x128xf32>
    %190 = vector.shape_cast %189 : vector<1x1x128xf32> to vector<1x128xf32>
    %191 = vector.broadcast %190 : vector<1x128xf32> to vector<8x128xf32>
    %192 = arith.mulf %188, %191 : vector<8x128xf32>
    %c0_135 = arith.constant 0 : index
    %c0_136 = arith.constant 0 : index
    %c0_137 = arith.constant 0 : index
    %193 = vector.load %arg31[%c0_135, %c0_136, %c0_137] : memref<9x16x8xbf16, #tpu.memory_space<vmem>>, vector<1x16x8xbf16>
    %194 = vector.shape_cast %193 : vector<1x16x8xbf16> to vector<16x8xbf16>
    %195 = arith.truncf %192 : vector<8x128xf32> to vector<8x128xbf16>
    %cst_138 = arith.constant dense<0.000000e+00> : vector<16x128xf32>
    %196 = tpu.matmul %194, %195, %cst_138 {dimension_numbers = #tpu.dot_dimension_numbers<[1], [0], [0], [1], [0, 0, 1, 1], [], []>} : vector<16x8xbf16>, vector<8x128xbf16>, vector<16x128xf32> -> vector<16x128xf32>
    %c8_i32 = arith.constant 8 : i32
    %197 = tpu.dynamic_rotate %187 by %c8_i32 dim 1 : vector<8x128xf32>, i32 -> vector<8x128xf32>
    %c1_139 = arith.constant 1 : index
    %c0_140 = arith.constant 0 : index
    %c0_141 = arith.constant 0 : index
    %198 = vector.load %arg3[%c1_139, %c0_140, %c0_141] : memref<8x1x128xf32, #tpu.memory_space<vmem>>, vector<1x1x128xf32>
    %199 = vector.shape_cast %198 : vector<1x1x128xf32> to vector<1x128xf32>
    %200 = vector.broadcast %199 : vector<1x128xf32> to vector<8x128xf32>
    %201 = arith.mulf %197, %200 : vector<8x128xf32>
    %c1_142 = arith.constant 1 : index
    %c0_143 = arith.constant 0 : index
    %c0_144 = arith.constant 0 : index
    %202 = vector.load %arg31[%c1_142, %c0_143, %c0_144] : memref<9x16x8xbf16, #tpu.memory_space<vmem>>, vector<1x16x8xbf16>
    %203 = vector.shape_cast %202 : vector<1x16x8xbf16> to vector<16x8xbf16>
    %204 = arith.truncf %201 : vector<8x128xf32> to vector<8x128xbf16>
    %cst_145 = arith.constant dense<0.000000e+00> : vector<16x128xf32>
    %205 = tpu.matmul %203, %204, %cst_145 {dimension_numbers = #tpu.dot_dimension_numbers<[1], [0], [0], [1], [0, 0, 1, 1], [], []>} : vector<16x8xbf16>, vector<8x128xbf16>, vector<16x128xf32> -> vector<16x128xf32>
    %206 = arith.addf %196, %205 : vector<16x128xf32>
    %c7_i32 = arith.constant 7 : i32
    %207 = tpu.dynamic_rotate %187 by %c7_i32 dim 1 : vector<8x128xf32>, i32 -> vector<8x128xf32>
    %c2_146 = arith.constant 2 : index
    %c0_147 = arith.constant 0 : index
    %c0_148 = arith.constant 0 : index
    %208 = vector.load %arg3[%c2_146, %c0_147, %c0_148] : memref<8x1x128xf32, #tpu.memory_space<vmem>>, vector<1x1x128xf32>
    %209 = vector.shape_cast %208 : vector<1x1x128xf32> to vector<1x128xf32>
    %210 = vector.broadcast %209 : vector<1x128xf32> to vector<8x128xf32>
    %211 = arith.mulf %207, %210 : vector<8x128xf32>
    %c2_149 = arith.constant 2 : index
    %c0_150 = arith.constant 0 : index
    %c0_151 = arith.constant 0 : index
    %212 = vector.load %arg31[%c2_149, %c0_150, %c0_151] : memref<9x16x8xbf16, #tpu.memory_space<vmem>>, vector<1x16x8xbf16>
    %213 = vector.shape_cast %212 : vector<1x16x8xbf16> to vector<16x8xbf16>
    %214 = arith.truncf %211 : vector<8x128xf32> to vector<8x128xbf16>
    %cst_152 = arith.constant dense<0.000000e+00> : vector<16x128xf32>
    %215 = tpu.matmul %213, %214, %cst_152 {dimension_numbers = #tpu.dot_dimension_numbers<[1], [0], [0], [1], [0, 0, 1, 1], [], []>} : vector<16x8xbf16>, vector<8x128xbf16>, vector<16x128xf32> -> vector<16x128xf32>
    %216 = arith.addf %206, %215 : vector<16x128xf32>
    %c1_i32_153 = arith.constant 1 : i32
    %217 = tpu.dynamic_rotate %187 by %c1_i32_153 dim 1 : vector<8x128xf32>, i32 -> vector<8x128xf32>
    %c3_154 = arith.constant 3 : index
    %c0_155 = arith.constant 0 : index
    %c0_156 = arith.constant 0 : index
    %218 = vector.load %arg3[%c3_154, %c0_155, %c0_156] : memref<8x1x128xf32, #tpu.memory_space<vmem>>, vector<1x1x128xf32>
    %219 = vector.shape_cast %218 : vector<1x1x128xf32> to vector<1x128xf32>
    %220 = vector.broadcast %219 : vector<1x128xf32> to vector<8x128xf32>
    %221 = arith.mulf %217, %220 : vector<8x128xf32>
    %c3_157 = arith.constant 3 : index
    %c0_158 = arith.constant 0 : index
    %c0_159 = arith.constant 0 : index
    %222 = vector.load %arg31[%c3_157, %c0_158, %c0_159] : memref<9x16x8xbf16, #tpu.memory_space<vmem>>, vector<1x16x8xbf16>
    %223 = vector.shape_cast %222 : vector<1x16x8xbf16> to vector<16x8xbf16>
    %224 = arith.truncf %221 : vector<8x128xf32> to vector<8x128xbf16>
    %cst_160 = arith.constant dense<0.000000e+00> : vector<16x128xf32>
    %225 = tpu.matmul %223, %224, %cst_160 {dimension_numbers = #tpu.dot_dimension_numbers<[1], [0], [0], [1], [0, 0, 1, 1], [], []>} : vector<16x8xbf16>, vector<8x128xbf16>, vector<16x128xf32> -> vector<16x128xf32>
    %226 = arith.addf %216, %225 : vector<16x128xf32>
    %c4_161 = arith.constant 4 : index
    %c0_162 = arith.constant 0 : index
    %c0_163 = arith.constant 0 : index
    %227 = vector.load %arg31[%c4_161, %c0_162, %c0_163] : memref<9x16x8xbf16, #tpu.memory_space<vmem>>, vector<1x16x8xbf16>
    %228 = vector.shape_cast %227 : vector<1x16x8xbf16> to vector<16x8xbf16>
    %229 = arith.truncf %187 : vector<8x128xf32> to vector<8x128xbf16>
    %cst_164 = arith.constant dense<0.000000e+00> : vector<16x128xf32>
    %230 = tpu.matmul %228, %229, %cst_164 {dimension_numbers = #tpu.dot_dimension_numbers<[1], [0], [0], [1], [0, 0, 1, 1], [], []>} : vector<16x8xbf16>, vector<8x128xbf16>, vector<16x128xf32> -> vector<16x128xf32>
    %231 = arith.addf %226, %230 : vector<16x128xf32>
    %c127_i32 = arith.constant 127 : i32
    %232 = tpu.dynamic_rotate %187 by %c127_i32 dim 1 : vector<8x128xf32>, i32 -> vector<8x128xf32>
    %c4_165 = arith.constant 4 : index
    %c0_166 = arith.constant 0 : index
    %c0_167 = arith.constant 0 : index
    %233 = vector.load %arg3[%c4_165, %c0_166, %c0_167] : memref<8x1x128xf32, #tpu.memory_space<vmem>>, vector<1x1x128xf32>
    %234 = vector.shape_cast %233 : vector<1x1x128xf32> to vector<1x128xf32>
    %235 = vector.broadcast %234 : vector<1x128xf32> to vector<8x128xf32>
    %236 = arith.mulf %232, %235 : vector<8x128xf32>
    %c5_168 = arith.constant 5 : index
    %c0_169 = arith.constant 0 : index
    %c0_170 = arith.constant 0 : index
    %237 = vector.load %arg31[%c5_168, %c0_169, %c0_170] : memref<9x16x8xbf16, #tpu.memory_space<vmem>>, vector<1x16x8xbf16>
    %238 = vector.shape_cast %237 : vector<1x16x8xbf16> to vector<16x8xbf16>
    %239 = arith.truncf %236 : vector<8x128xf32> to vector<8x128xbf16>
    %cst_171 = arith.constant dense<0.000000e+00> : vector<16x128xf32>
    %240 = tpu.matmul %238, %239, %cst_171 {dimension_numbers = #tpu.dot_dimension_numbers<[1], [0], [0], [1], [0, 0, 1, 1], [], []>} : vector<16x8xbf16>, vector<8x128xbf16>, vector<16x128xf32> -> vector<16x128xf32>
    %241 = arith.addf %231, %240 : vector<16x128xf32>
    %c121_i32 = arith.constant 121 : i32
    %242 = tpu.dynamic_rotate %187 by %c121_i32 dim 1 : vector<8x128xf32>, i32 -> vector<8x128xf32>
    %c5_172 = arith.constant 5 : index
    %c0_173 = arith.constant 0 : index
    %c0_174 = arith.constant 0 : index
    %243 = vector.load %arg3[%c5_172, %c0_173, %c0_174] : memref<8x1x128xf32, #tpu.memory_space<vmem>>, vector<1x1x128xf32>
    %244 = vector.shape_cast %243 : vector<1x1x128xf32> to vector<1x128xf32>
    %245 = vector.broadcast %244 : vector<1x128xf32> to vector<8x128xf32>
    %246 = arith.mulf %242, %245 : vector<8x128xf32>
    %c6_175 = arith.constant 6 : index
    %c0_176 = arith.constant 0 : index
    %c0_177 = arith.constant 0 : index
    %247 = vector.load %arg31[%c6_175, %c0_176, %c0_177] : memref<9x16x8xbf16, #tpu.memory_space<vmem>>, vector<1x16x8xbf16>
    %248 = vector.shape_cast %247 : vector<1x16x8xbf16> to vector<16x8xbf16>
    %249 = arith.truncf %246 : vector<8x128xf32> to vector<8x128xbf16>
    %cst_178 = arith.constant dense<0.000000e+00> : vector<16x128xf32>
    %250 = tpu.matmul %248, %249, %cst_178 {dimension_numbers = #tpu.dot_dimension_numbers<[1], [0], [0], [1], [0, 0, 1, 1], [], []>} : vector<16x8xbf16>, vector<8x128xbf16>, vector<16x128xf32> -> vector<16x128xf32>
    %251 = arith.addf %241, %250 : vector<16x128xf32>
    %c120_i32 = arith.constant 120 : i32
    %252 = tpu.dynamic_rotate %187 by %c120_i32 dim 1 : vector<8x128xf32>, i32 -> vector<8x128xf32>
    %c6_179 = arith.constant 6 : index
    %c0_180 = arith.constant 0 : index
    %c0_181 = arith.constant 0 : index
    %253 = vector.load %arg3[%c6_179, %c0_180, %c0_181] : memref<8x1x128xf32, #tpu.memory_space<vmem>>, vector<1x1x128xf32>
    %254 = vector.shape_cast %253 : vector<1x1x128xf32> to vector<1x128xf32>
    %255 = vector.broadcast %254 : vector<1x128xf32> to vector<8x128xf32>
    %256 = arith.mulf %252, %255 : vector<8x128xf32>
    %c7_182 = arith.constant 7 : index
    %c0_183 = arith.constant 0 : index
    %c0_184 = arith.constant 0 : index
    %257 = vector.load %arg31[%c7_182, %c0_183, %c0_184] : memref<9x16x8xbf16, #tpu.memory_space<vmem>>, vector<1x16x8xbf16>
    %258 = vector.shape_cast %257 : vector<1x16x8xbf16> to vector<16x8xbf16>
    %259 = arith.truncf %256 : vector<8x128xf32> to vector<8x128xbf16>
    %cst_185 = arith.constant dense<0.000000e+00> : vector<16x128xf32>
    %260 = tpu.matmul %258, %259, %cst_185 {dimension_numbers = #tpu.dot_dimension_numbers<[1], [0], [0], [1], [0, 0, 1, 1], [], []>} : vector<16x8xbf16>, vector<8x128xbf16>, vector<16x128xf32> -> vector<16x128xf32>
    %261 = arith.addf %251, %260 : vector<16x128xf32>
    %c119_i32 = arith.constant 119 : i32
    %262 = tpu.dynamic_rotate %187 by %c119_i32 dim 1 : vector<8x128xf32>, i32 -> vector<8x128xf32>
    %c7_186 = arith.constant 7 : index
    %c0_187 = arith.constant 0 : index
    %c0_188 = arith.constant 0 : index
    %263 = vector.load %arg3[%c7_186, %c0_187, %c0_188] : memref<8x1x128xf32, #tpu.memory_space<vmem>>, vector<1x1x128xf32>
    %264 = vector.shape_cast %263 : vector<1x1x128xf32> to vector<1x128xf32>
    %265 = vector.broadcast %264 : vector<1x128xf32> to vector<8x128xf32>
    %266 = arith.mulf %262, %265 : vector<8x128xf32>
    %c8_189 = arith.constant 8 : index
    %c0_190 = arith.constant 0 : index
    %c0_191 = arith.constant 0 : index
    %267 = vector.load %arg31[%c8_189, %c0_190, %c0_191] : memref<9x16x8xbf16, #tpu.memory_space<vmem>>, vector<1x16x8xbf16>
    %268 = vector.shape_cast %267 : vector<1x16x8xbf16> to vector<16x8xbf16>
    %269 = arith.truncf %266 : vector<8x128xf32> to vector<8x128xbf16>
    %cst_192 = arith.constant dense<0.000000e+00> : vector<16x128xf32>
    %270 = tpu.matmul %268, %269, %cst_192 {dimension_numbers = #tpu.dot_dimension_numbers<[1], [0], [0], [1], [0, 0, 1, 1], [], []>} : vector<16x8xbf16>, vector<8x128xbf16>, vector<16x128xf32> -> vector<16x128xf32>
    %271 = arith.addf %261, %270 : vector<16x128xf32>
    %c0_193 = arith.constant 0 : index
    %c0_194 = arith.constant 0 : index
    %272 = vector.load %arg29[%c0_193, %c0_194] : memref<16x1xf32, #tpu.memory_space<vmem>>, vector<16x1xf32>
    %273 = vector.broadcast %272 : vector<16x1xf32> to vector<16x128xf32>
    %274 = arith.addf %271, %273 : vector<16x128xf32>
    %cst_195 = arith.constant 0.000000e+00 : f32
    %275 = vector.broadcast %cst_195 : f32 to vector<16x128xf32>
    %276 = arith.maximumf %274, %275 : vector<16x128xf32>
    %c9_i32_196 = arith.constant 9 : i32
    %277 = tpu.dynamic_rotate %276 by %c9_i32_196 dim 1 : vector<16x128xf32>, i32 -> vector<16x128xf32>
    %c0_197 = arith.constant 0 : index
    %c0_198 = arith.constant 0 : index
    %c0_199 = arith.constant 0 : index
    %278 = vector.load %arg3[%c0_197, %c0_198, %c0_199] : memref<8x1x128xf32, #tpu.memory_space<vmem>>, vector<1x1x128xf32>
    %279 = vector.shape_cast %278 : vector<1x1x128xf32> to vector<1x128xf32>
    %280 = vector.broadcast %279 : vector<1x128xf32> to vector<16x128xf32>
    %281 = arith.mulf %277, %280 : vector<16x128xf32>
    %c0_200 = arith.constant 0 : index
    %c0_201 = arith.constant 0 : index
    %c0_202 = arith.constant 0 : index
    %282 = vector.load %arg32[%c0_200, %c0_201, %c0_202] : memref<9x16x16xbf16, #tpu.memory_space<vmem>>, vector<1x16x16xbf16>
    %283 = vector.shape_cast %282 : vector<1x16x16xbf16> to vector<16x16xbf16>
    %284 = arith.truncf %281 : vector<16x128xf32> to vector<16x128xbf16>
    %cst_203 = arith.constant dense<0.000000e+00> : vector<16x128xf32>
    %285 = tpu.matmul %283, %284, %cst_203 {dimension_numbers = #tpu.dot_dimension_numbers<[1], [0], [0], [1], [0, 0, 1, 1], [], []>} : vector<16x16xbf16>, vector<16x128xbf16>, vector<16x128xf32> -> vector<16x128xf32>
    %c8_i32_204 = arith.constant 8 : i32
    %286 = tpu.dynamic_rotate %276 by %c8_i32_204 dim 1 : vector<16x128xf32>, i32 -> vector<16x128xf32>
    %c1_205 = arith.constant 1 : index
    %c0_206 = arith.constant 0 : index
    %c0_207 = arith.constant 0 : index
    %287 = vector.load %arg3[%c1_205, %c0_206, %c0_207] : memref<8x1x128xf32, #tpu.memory_space<vmem>>, vector<1x1x128xf32>
    %288 = vector.shape_cast %287 : vector<1x1x128xf32> to vector<1x128xf32>
    %289 = vector.broadcast %288 : vector<1x128xf32> to vector<16x128xf32>
    %290 = arith.mulf %286, %289 : vector<16x128xf32>
    %c1_208 = arith.constant 1 : index
    %c0_209 = arith.constant 0 : index
    %c0_210 = arith.constant 0 : index
    %291 = vector.load %arg32[%c1_208, %c0_209, %c0_210] : memref<9x16x16xbf16, #tpu.memory_space<vmem>>, vector<1x16x16xbf16>
    %292 = vector.shape_cast %291 : vector<1x16x16xbf16> to vector<16x16xbf16>
    %293 = arith.truncf %290 : vector<16x128xf32> to vector<16x128xbf16>
    %cst_211 = arith.constant dense<0.000000e+00> : vector<16x128xf32>
    %294 = tpu.matmul %292, %293, %cst_211 {dimension_numbers = #tpu.dot_dimension_numbers<[1], [0], [0], [1], [0, 0, 1, 1], [], []>} : vector<16x16xbf16>, vector<16x128xbf16>, vector<16x128xf32> -> vector<16x128xf32>
    %295 = arith.addf %285, %294 : vector<16x128xf32>
    %c7_i32_212 = arith.constant 7 : i32
    %296 = tpu.dynamic_rotate %276 by %c7_i32_212 dim 1 : vector<16x128xf32>, i32 -> vector<16x128xf32>
    %c2_213 = arith.constant 2 : index
    %c0_214 = arith.constant 0 : index
    %c0_215 = arith.constant 0 : index
    %297 = vector.load %arg3[%c2_213, %c0_214, %c0_215] : memref<8x1x128xf32, #tpu.memory_space<vmem>>, vector<1x1x128xf32>
    %298 = vector.shape_cast %297 : vector<1x1x128xf32> to vector<1x128xf32>
    %299 = vector.broadcast %298 : vector<1x128xf32> to vector<16x128xf32>
    %300 = arith.mulf %296, %299 : vector<16x128xf32>
    %c2_216 = arith.constant 2 : index
    %c0_217 = arith.constant 0 : index
    %c0_218 = arith.constant 0 : index
    %301 = vector.load %arg32[%c2_216, %c0_217, %c0_218] : memref<9x16x16xbf16, #tpu.memory_space<vmem>>, vector<1x16x16xbf16>
    %302 = vector.shape_cast %301 : vector<1x16x16xbf16> to vector<16x16xbf16>
    %303 = arith.truncf %300 : vector<16x128xf32> to vector<16x128xbf16>
    %cst_219 = arith.constant dense<0.000000e+00> : vector<16x128xf32>
    %304 = tpu.matmul %302, %303, %cst_219 {dimension_numbers = #tpu.dot_dimension_numbers<[1], [0], [0], [1], [0, 0, 1, 1], [], []>} : vector<16x16xbf16>, vector<16x128xbf16>, vector<16x128xf32> -> vector<16x128xf32>
    %305 = arith.addf %295, %304 : vector<16x128xf32>
    %c1_i32_220 = arith.constant 1 : i32
    %306 = tpu.dynamic_rotate %276 by %c1_i32_220 dim 1 : vector<16x128xf32>, i32 -> vector<16x128xf32>
    %c3_221 = arith.constant 3 : index
    %c0_222 = arith.constant 0 : index
    %c0_223 = arith.constant 0 : index
    %307 = vector.load %arg3[%c3_221, %c0_222, %c0_223] : memref<8x1x128xf32, #tpu.memory_space<vmem>>, vector<1x1x128xf32>
    %308 = vector.shape_cast %307 : vector<1x1x128xf32> to vector<1x128xf32>
    %309 = vector.broadcast %308 : vector<1x128xf32> to vector<16x128xf32>
    %310 = arith.mulf %306, %309 : vector<16x128xf32>
    %c3_224 = arith.constant 3 : index
    %c0_225 = arith.constant 0 : index
    %c0_226 = arith.constant 0 : index
    %311 = vector.load %arg32[%c3_224, %c0_225, %c0_226] : memref<9x16x16xbf16, #tpu.memory_space<vmem>>, vector<1x16x16xbf16>
    %312 = vector.shape_cast %311 : vector<1x16x16xbf16> to vector<16x16xbf16>
    %313 = arith.truncf %310 : vector<16x128xf32> to vector<16x128xbf16>
    %cst_227 = arith.constant dense<0.000000e+00> : vector<16x128xf32>
    %314 = tpu.matmul %312, %313, %cst_227 {dimension_numbers = #tpu.dot_dimension_numbers<[1], [0], [0], [1], [0, 0, 1, 1], [], []>} : vector<16x16xbf16>, vector<16x128xbf16>, vector<16x128xf32> -> vector<16x128xf32>
    %315 = arith.addf %305, %314 : vector<16x128xf32>
    %c4_228 = arith.constant 4 : index
    %c0_229 = arith.constant 0 : index
    %c0_230 = arith.constant 0 : index
    %316 = vector.load %arg32[%c4_228, %c0_229, %c0_230] : memref<9x16x16xbf16, #tpu.memory_space<vmem>>, vector<1x16x16xbf16>
    %317 = vector.shape_cast %316 : vector<1x16x16xbf16> to vector<16x16xbf16>
    %318 = arith.truncf %276 : vector<16x128xf32> to vector<16x128xbf16>
    %cst_231 = arith.constant dense<0.000000e+00> : vector<16x128xf32>
    %319 = tpu.matmul %317, %318, %cst_231 {dimension_numbers = #tpu.dot_dimension_numbers<[1], [0], [0], [1], [0, 0, 1, 1], [], []>} : vector<16x16xbf16>, vector<16x128xbf16>, vector<16x128xf32> -> vector<16x128xf32>
    %320 = arith.addf %315, %319 : vector<16x128xf32>
    %c127_i32_232 = arith.constant 127 : i32
    %321 = tpu.dynamic_rotate %276 by %c127_i32_232 dim 1 : vector<16x128xf32>, i32 -> vector<16x128xf32>
    %c4_233 = arith.constant 4 : index
    %c0_234 = arith.constant 0 : index
    %c0_235 = arith.constant 0 : index
    %322 = vector.load %arg3[%c4_233, %c0_234, %c0_235] : memref<8x1x128xf32, #tpu.memory_space<vmem>>, vector<1x1x128xf32>
    %323 = vector.shape_cast %322 : vector<1x1x128xf32> to vector<1x128xf32>
    %324 = vector.broadcast %323 : vector<1x128xf32> to vector<16x128xf32>
    %325 = arith.mulf %321, %324 : vector<16x128xf32>
    %c5_236 = arith.constant 5 : index
    %c0_237 = arith.constant 0 : index
    %c0_238 = arith.constant 0 : index
    %326 = vector.load %arg32[%c5_236, %c0_237, %c0_238] : memref<9x16x16xbf16, #tpu.memory_space<vmem>>, vector<1x16x16xbf16>
    %327 = vector.shape_cast %326 : vector<1x16x16xbf16> to vector<16x16xbf16>
    %328 = arith.truncf %325 : vector<16x128xf32> to vector<16x128xbf16>
    %cst_239 = arith.constant dense<0.000000e+00> : vector<16x128xf32>
    %329 = tpu.matmul %327, %328, %cst_239 {dimension_numbers = #tpu.dot_dimension_numbers<[1], [0], [0], [1], [0, 0, 1, 1], [], []>} : vector<16x16xbf16>, vector<16x128xbf16>, vector<16x128xf32> -> vector<16x128xf32>
    %330 = arith.addf %320, %329 : vector<16x128xf32>
    %c121_i32_240 = arith.constant 121 : i32
    %331 = tpu.dynamic_rotate %276 by %c121_i32_240 dim 1 : vector<16x128xf32>, i32 -> vector<16x128xf32>
    %c5_241 = arith.constant 5 : index
    %c0_242 = arith.constant 0 : index
    %c0_243 = arith.constant 0 : index
    %332 = vector.load %arg3[%c5_241, %c0_242, %c0_243] : memref<8x1x128xf32, #tpu.memory_space<vmem>>, vector<1x1x128xf32>
    %333 = vector.shape_cast %332 : vector<1x1x128xf32> to vector<1x128xf32>
    %334 = vector.broadcast %333 : vector<1x128xf32> to vector<16x128xf32>
    %335 = arith.mulf %331, %334 : vector<16x128xf32>
    %c6_244 = arith.constant 6 : index
    %c0_245 = arith.constant 0 : index
    %c0_246 = arith.constant 0 : index
    %336 = vector.load %arg32[%c6_244, %c0_245, %c0_246] : memref<9x16x16xbf16, #tpu.memory_space<vmem>>, vector<1x16x16xbf16>
    %337 = vector.shape_cast %336 : vector<1x16x16xbf16> to vector<16x16xbf16>
    %338 = arith.truncf %335 : vector<16x128xf32> to vector<16x128xbf16>
    %cst_247 = arith.constant dense<0.000000e+00> : vector<16x128xf32>
    %339 = tpu.matmul %337, %338, %cst_247 {dimension_numbers = #tpu.dot_dimension_numbers<[1], [0], [0], [1], [0, 0, 1, 1], [], []>} : vector<16x16xbf16>, vector<16x128xbf16>, vector<16x128xf32> -> vector<16x128xf32>
    %340 = arith.addf %330, %339 : vector<16x128xf32>
    %c120_i32_248 = arith.constant 120 : i32
    %341 = tpu.dynamic_rotate %276 by %c120_i32_248 dim 1 : vector<16x128xf32>, i32 -> vector<16x128xf32>
    %c6_249 = arith.constant 6 : index
    %c0_250 = arith.constant 0 : index
    %c0_251 = arith.constant 0 : index
    %342 = vector.load %arg3[%c6_249, %c0_250, %c0_251] : memref<8x1x128xf32, #tpu.memory_space<vmem>>, vector<1x1x128xf32>
    %343 = vector.shape_cast %342 : vector<1x1x128xf32> to vector<1x128xf32>
    %344 = vector.broadcast %343 : vector<1x128xf32> to vector<16x128xf32>
    %345 = arith.mulf %341, %344 : vector<16x128xf32>
    %c7_252 = arith.constant 7 : index
    %c0_253 = arith.constant 0 : index
    %c0_254 = arith.constant 0 : index
    %346 = vector.load %arg32[%c7_252, %c0_253, %c0_254] : memref<9x16x16xbf16, #tpu.memory_space<vmem>>, vector<1x16x16xbf16>
    %347 = vector.shape_cast %346 : vector<1x16x16xbf16> to vector<16x16xbf16>
    %348 = arith.truncf %345 : vector<16x128xf32> to vector<16x128xbf16>
    %cst_255 = arith.constant dense<0.000000e+00> : vector<16x128xf32>
    %349 = tpu.matmul %347, %348, %cst_255 {dimension_numbers = #tpu.dot_dimension_numbers<[1], [0], [0], [1], [0, 0, 1, 1], [], []>} : vector<16x16xbf16>, vector<16x128xbf16>, vector<16x128xf32> -> vector<16x128xf32>
    %350 = arith.addf %340, %349 : vector<16x128xf32>
    %c119_i32_256 = arith.constant 119 : i32
    %351 = tpu.dynamic_rotate %276 by %c119_i32_256 dim 1 : vector<16x128xf32>, i32 -> vector<16x128xf32>
    %c7_257 = arith.constant 7 : index
    %c0_258 = arith.constant 0 : index
    %c0_259 = arith.constant 0 : index
    %352 = vector.load %arg3[%c7_257, %c0_258, %c0_259] : memref<8x1x128xf32, #tpu.memory_space<vmem>>, vector<1x1x128xf32>
    %353 = vector.shape_cast %352 : vector<1x1x128xf32> to vector<1x128xf32>
    %354 = vector.broadcast %353 : vector<1x128xf32> to vector<16x128xf32>
    %355 = arith.mulf %351, %354 : vector<16x128xf32>
    %c8_260 = arith.constant 8 : index
    %c0_261 = arith.constant 0 : index
    %c0_262 = arith.constant 0 : index
    %356 = vector.load %arg32[%c8_260, %c0_261, %c0_262] : memref<9x16x16xbf16, #tpu.memory_space<vmem>>, vector<1x16x16xbf16>
    %357 = vector.shape_cast %356 : vector<1x16x16xbf16> to vector<16x16xbf16>
    %358 = arith.truncf %355 : vector<16x128xf32> to vector<16x128xbf16>
    %cst_263 = arith.constant dense<0.000000e+00> : vector<16x128xf32>
    %359 = tpu.matmul %357, %358, %cst_263 {dimension_numbers = #tpu.dot_dimension_numbers<[1], [0], [0], [1], [0, 0, 1, 1], [], []>} : vector<16x16xbf16>, vector<16x128xbf16>, vector<16x128xf32> -> vector<16x128xf32>
    %360 = arith.addf %350, %359 : vector<16x128xf32>
    %c0_264 = arith.constant 0 : index
    %c0_265 = arith.constant 0 : index
    %361 = vector.load %arg30[%c0_264, %c0_265] : memref<16x1xf32, #tpu.memory_space<vmem>>, vector<16x1xf32>
    %362 = vector.broadcast %361 : vector<16x1xf32> to vector<16x128xf32>
    %363 = arith.addf %360, %362 : vector<16x128xf32>
    %cst_266 = arith.constant 0.000000e+00 : f32
    %364 = vector.broadcast %cst_266 : f32 to vector<16x128xf32>
    %365 = arith.maximumf %363, %364 : vector<16x128xf32>
    %c127_i32_267 = arith.constant 127 : i32
    %366 = tpu.dynamic_rotate %365 by %c127_i32_267 dim 1 : vector<16x128xf32>, i32 -> vector<16x128xf32>
    %367 = arith.maximumf %365, %366 : vector<16x128xf32>
    %c120_i32_268 = arith.constant 120 : i32
    %368 = tpu.dynamic_rotate %365 by %c120_i32_268 dim 1 : vector<16x128xf32>, i32 -> vector<16x128xf32>
    %369 = arith.maximumf %367, %368 : vector<16x128xf32>
    %c119_i32_269 = arith.constant 119 : i32
    %370 = tpu.dynamic_rotate %365 by %c119_i32_269 dim 1 : vector<16x128xf32>, i32 -> vector<16x128xf32>
    %371 = arith.maximumf %369, %370 : vector<16x128xf32>
    %c0_270 = arith.constant 0 : index
    %c0_271 = arith.constant 0 : index
    %372 = vector.load %arg6[%c0_270, %c0_271] : memref<128x128xbf16, #tpu.memory_space<vmem>>, vector<128x128xbf16>
    %373 = arith.truncf %371 : vector<16x128xf32> to vector<16x128xbf16>
    %cst_272 = arith.constant dense<0.000000e+00> : vector<16x128xf32>
    %374 = tpu.matmul %373, %372, %cst_272 {dimension_numbers = #tpu.dot_dimension_numbers<[1], [0], [0], [1], [0, 0, 1, 1], [], []>} : vector<16x128xbf16>, vector<128x128xbf16>, vector<16x128xf32> -> vector<16x128xf32>
    %c5_i32 = arith.constant 5 : i32
    %375 = tpu.dynamic_rotate %374 by %c5_i32 dim 1 : vector<16x128xf32>, i32 -> vector<16x128xf32>
    %c0_273 = arith.constant 0 : index
    %c0_274 = arith.constant 0 : index
    %c0_275 = arith.constant 0 : index
    %376 = vector.load %arg4[%c0_273, %c0_274, %c0_275] : memref<8x1x128xf32, #tpu.memory_space<vmem>>, vector<1x1x128xf32>
    %377 = vector.shape_cast %376 : vector<1x1x128xf32> to vector<1x128xf32>
    %378 = vector.broadcast %377 : vector<1x128xf32> to vector<16x128xf32>
    %379 = arith.mulf %375, %378 : vector<16x128xf32>
    %c0_276 = arith.constant 0 : index
    %c0_277 = arith.constant 0 : index
    %c0_278 = arith.constant 0 : index
    %380 = vector.load %arg11[%c0_276, %c0_277, %c0_278] : memref<9x32x16xbf16, #tpu.memory_space<vmem>>, vector<1x32x16xbf16>
    %381 = vector.shape_cast %380 : vector<1x32x16xbf16> to vector<32x16xbf16>
    %382 = arith.truncf %379 : vector<16x128xf32> to vector<16x128xbf16>
    %cst_279 = arith.constant dense<0.000000e+00> : vector<32x128xf32>
    %383 = tpu.matmul %381, %382, %cst_279 {dimension_numbers = #tpu.dot_dimension_numbers<[1], [0], [0], [1], [0, 0, 1, 1], [], []>} : vector<32x16xbf16>, vector<16x128xbf16>, vector<32x128xf32> -> vector<32x128xf32>
    %c4_i32 = arith.constant 4 : i32
    %384 = tpu.dynamic_rotate %374 by %c4_i32 dim 1 : vector<16x128xf32>, i32 -> vector<16x128xf32>
    %c1_280 = arith.constant 1 : index
    %c0_281 = arith.constant 0 : index
    %c0_282 = arith.constant 0 : index
    %385 = vector.load %arg4[%c1_280, %c0_281, %c0_282] : memref<8x1x128xf32, #tpu.memory_space<vmem>>, vector<1x1x128xf32>
    %386 = vector.shape_cast %385 : vector<1x1x128xf32> to vector<1x128xf32>
    %387 = vector.broadcast %386 : vector<1x128xf32> to vector<16x128xf32>
    %388 = arith.mulf %384, %387 : vector<16x128xf32>
    %c1_283 = arith.constant 1 : index
    %c0_284 = arith.constant 0 : index
    %c0_285 = arith.constant 0 : index
    %389 = vector.load %arg11[%c1_283, %c0_284, %c0_285] : memref<9x32x16xbf16, #tpu.memory_space<vmem>>, vector<1x32x16xbf16>
    %390 = vector.shape_cast %389 : vector<1x32x16xbf16> to vector<32x16xbf16>
    %391 = arith.truncf %388 : vector<16x128xf32> to vector<16x128xbf16>
    %cst_286 = arith.constant dense<0.000000e+00> : vector<32x128xf32>
    %392 = tpu.matmul %390, %391, %cst_286 {dimension_numbers = #tpu.dot_dimension_numbers<[1], [0], [0], [1], [0, 0, 1, 1], [], []>} : vector<32x16xbf16>, vector<16x128xbf16>, vector<32x128xf32> -> vector<32x128xf32>
    %393 = arith.addf %383, %392 : vector<32x128xf32>
    %c3_i32 = arith.constant 3 : i32
    %394 = tpu.dynamic_rotate %374 by %c3_i32 dim 1 : vector<16x128xf32>, i32 -> vector<16x128xf32>
    %c2_287 = arith.constant 2 : index
    %c0_288 = arith.constant 0 : index
    %c0_289 = arith.constant 0 : index
    %395 = vector.load %arg4[%c2_287, %c0_288, %c0_289] : memref<8x1x128xf32, #tpu.memory_space<vmem>>, vector<1x1x128xf32>
    %396 = vector.shape_cast %395 : vector<1x1x128xf32> to vector<1x128xf32>
    %397 = vector.broadcast %396 : vector<1x128xf32> to vector<16x128xf32>
    %398 = arith.mulf %394, %397 : vector<16x128xf32>
    %c2_290 = arith.constant 2 : index
    %c0_291 = arith.constant 0 : index
    %c0_292 = arith.constant 0 : index
    %399 = vector.load %arg11[%c2_290, %c0_291, %c0_292] : memref<9x32x16xbf16, #tpu.memory_space<vmem>>, vector<1x32x16xbf16>
    %400 = vector.shape_cast %399 : vector<1x32x16xbf16> to vector<32x16xbf16>
    %401 = arith.truncf %398 : vector<16x128xf32> to vector<16x128xbf16>
    %cst_293 = arith.constant dense<0.000000e+00> : vector<32x128xf32>
    %402 = tpu.matmul %400, %401, %cst_293 {dimension_numbers = #tpu.dot_dimension_numbers<[1], [0], [0], [1], [0, 0, 1, 1], [], []>} : vector<32x16xbf16>, vector<16x128xbf16>, vector<32x128xf32> -> vector<32x128xf32>
    %403 = arith.addf %393, %402 : vector<32x128xf32>
    %c1_i32_294 = arith.constant 1 : i32
    %404 = tpu.dynamic_rotate %374 by %c1_i32_294 dim 1 : vector<16x128xf32>, i32 -> vector<16x128xf32>
    %c3_295 = arith.constant 3 : index
    %c0_296 = arith.constant 0 : index
    %c0_297 = arith.constant 0 : index
    %405 = vector.load %arg4[%c3_295, %c0_296, %c0_297] : memref<8x1x128xf32, #tpu.memory_space<vmem>>, vector<1x1x128xf32>
    %406 = vector.shape_cast %405 : vector<1x1x128xf32> to vector<1x128xf32>
    %407 = vector.broadcast %406 : vector<1x128xf32> to vector<16x128xf32>
    %408 = arith.mulf %404, %407 : vector<16x128xf32>
    %c3_298 = arith.constant 3 : index
    %c0_299 = arith.constant 0 : index
    %c0_300 = arith.constant 0 : index
    %409 = vector.load %arg11[%c3_298, %c0_299, %c0_300] : memref<9x32x16xbf16, #tpu.memory_space<vmem>>, vector<1x32x16xbf16>
    %410 = vector.shape_cast %409 : vector<1x32x16xbf16> to vector<32x16xbf16>
    %411 = arith.truncf %408 : vector<16x128xf32> to vector<16x128xbf16>
    %cst_301 = arith.constant dense<0.000000e+00> : vector<32x128xf32>
    %412 = tpu.matmul %410, %411, %cst_301 {dimension_numbers = #tpu.dot_dimension_numbers<[1], [0], [0], [1], [0, 0, 1, 1], [], []>} : vector<32x16xbf16>, vector<16x128xbf16>, vector<32x128xf32> -> vector<32x128xf32>
    %413 = arith.addf %403, %412 : vector<32x128xf32>
    %c4_302 = arith.constant 4 : index
    %c0_303 = arith.constant 0 : index
    %c0_304 = arith.constant 0 : index
    %414 = vector.load %arg11[%c4_302, %c0_303, %c0_304] : memref<9x32x16xbf16, #tpu.memory_space<vmem>>, vector<1x32x16xbf16>
    %415 = vector.shape_cast %414 : vector<1x32x16xbf16> to vector<32x16xbf16>
    %416 = arith.truncf %374 : vector<16x128xf32> to vector<16x128xbf16>
    %cst_305 = arith.constant dense<0.000000e+00> : vector<32x128xf32>
    %417 = tpu.matmul %415, %416, %cst_305 {dimension_numbers = #tpu.dot_dimension_numbers<[1], [0], [0], [1], [0, 0, 1, 1], [], []>} : vector<32x16xbf16>, vector<16x128xbf16>, vector<32x128xf32> -> vector<32x128xf32>
    %418 = arith.addf %413, %417 : vector<32x128xf32>
    %c127_i32_306 = arith.constant 127 : i32
    %419 = tpu.dynamic_rotate %374 by %c127_i32_306 dim 1 : vector<16x128xf32>, i32 -> vector<16x128xf32>
    %c4_307 = arith.constant 4 : index
    %c0_308 = arith.constant 0 : index
    %c0_309 = arith.constant 0 : index
    %420 = vector.load %arg4[%c4_307, %c0_308, %c0_309] : memref<8x1x128xf32, #tpu.memory_space<vmem>>, vector<1x1x128xf32>
    %421 = vector.shape_cast %420 : vector<1x1x128xf32> to vector<1x128xf32>
    %422 = vector.broadcast %421 : vector<1x128xf32> to vector<16x128xf32>
    %423 = arith.mulf %419, %422 : vector<16x128xf32>
    %c5_310 = arith.constant 5 : index
    %c0_311 = arith.constant 0 : index
    %c0_312 = arith.constant 0 : index
    %424 = vector.load %arg11[%c5_310, %c0_311, %c0_312] : memref<9x32x16xbf16, #tpu.memory_space<vmem>>, vector<1x32x16xbf16>
    %425 = vector.shape_cast %424 : vector<1x32x16xbf16> to vector<32x16xbf16>
    %426 = arith.truncf %423 : vector<16x128xf32> to vector<16x128xbf16>
    %cst_313 = arith.constant dense<0.000000e+00> : vector<32x128xf32>
    %427 = tpu.matmul %425, %426, %cst_313 {dimension_numbers = #tpu.dot_dimension_numbers<[1], [0], [0], [1], [0, 0, 1, 1], [], []>} : vector<32x16xbf16>, vector<16x128xbf16>, vector<32x128xf32> -> vector<32x128xf32>
    %428 = arith.addf %418, %427 : vector<32x128xf32>
    %c125_i32 = arith.constant 125 : i32
    %429 = tpu.dynamic_rotate %374 by %c125_i32 dim 1 : vector<16x128xf32>, i32 -> vector<16x128xf32>
    %c5_314 = arith.constant 5 : index
    %c0_315 = arith.constant 0 : index
    %c0_316 = arith.constant 0 : index
    %430 = vector.load %arg4[%c5_314, %c0_315, %c0_316] : memref<8x1x128xf32, #tpu.memory_space<vmem>>, vector<1x1x128xf32>
    %431 = vector.shape_cast %430 : vector<1x1x128xf32> to vector<1x128xf32>
    %432 = vector.broadcast %431 : vector<1x128xf32> to vector<16x128xf32>
    %433 = arith.mulf %429, %432 : vector<16x128xf32>
    %c6_317 = arith.constant 6 : index
    %c0_318 = arith.constant 0 : index
    %c0_319 = arith.constant 0 : index
    %434 = vector.load %arg11[%c6_317, %c0_318, %c0_319] : memref<9x32x16xbf16, #tpu.memory_space<vmem>>, vector<1x32x16xbf16>
    %435 = vector.shape_cast %434 : vector<1x32x16xbf16> to vector<32x16xbf16>
    %436 = arith.truncf %433 : vector<16x128xf32> to vector<16x128xbf16>
    %cst_320 = arith.constant dense<0.000000e+00> : vector<32x128xf32>
    %437 = tpu.matmul %435, %436, %cst_320 {dimension_numbers = #tpu.dot_dimension_numbers<[1], [0], [0], [1], [0, 0, 1, 1], [], []>} : vector<32x16xbf16>, vector<16x128xbf16>, vector<32x128xf32> -> vector<32x128xf32>
    %438 = arith.addf %428, %437 : vector<32x128xf32>
    %c124_i32 = arith.constant 124 : i32
    %439 = tpu.dynamic_rotate %374 by %c124_i32 dim 1 : vector<16x128xf32>, i32 -> vector<16x128xf32>
    %c6_321 = arith.constant 6 : index
    %c0_322 = arith.constant 0 : index
    %c0_323 = arith.constant 0 : index
    %440 = vector.load %arg4[%c6_321, %c0_322, %c0_323] : memref<8x1x128xf32, #tpu.memory_space<vmem>>, vector<1x1x128xf32>
    %441 = vector.shape_cast %440 : vector<1x1x128xf32> to vector<1x128xf32>
    %442 = vector.broadcast %441 : vector<1x128xf32> to vector<16x128xf32>
    %443 = arith.mulf %439, %442 : vector<16x128xf32>
    %c7_324 = arith.constant 7 : index
    %c0_325 = arith.constant 0 : index
    %c0_326 = arith.constant 0 : index
    %444 = vector.load %arg11[%c7_324, %c0_325, %c0_326] : memref<9x32x16xbf16, #tpu.memory_space<vmem>>, vector<1x32x16xbf16>
    %445 = vector.shape_cast %444 : vector<1x32x16xbf16> to vector<32x16xbf16>
    %446 = arith.truncf %443 : vector<16x128xf32> to vector<16x128xbf16>
    %cst_327 = arith.constant dense<0.000000e+00> : vector<32x128xf32>
    %447 = tpu.matmul %445, %446, %cst_327 {dimension_numbers = #tpu.dot_dimension_numbers<[1], [0], [0], [1], [0, 0, 1, 1], [], []>} : vector<32x16xbf16>, vector<16x128xbf16>, vector<32x128xf32> -> vector<32x128xf32>
    %448 = arith.addf %438, %447 : vector<32x128xf32>
    %c123_i32 = arith.constant 123 : i32
    %449 = tpu.dynamic_rotate %374 by %c123_i32 dim 1 : vector<16x128xf32>, i32 -> vector<16x128xf32>
    %c7_328 = arith.constant 7 : index
    %c0_329 = arith.constant 0 : index
    %c0_330 = arith.constant 0 : index
    %450 = vector.load %arg4[%c7_328, %c0_329, %c0_330] : memref<8x1x128xf32, #tpu.memory_space<vmem>>, vector<1x1x128xf32>
    %451 = vector.shape_cast %450 : vector<1x1x128xf32> to vector<1x128xf32>
    %452 = vector.broadcast %451 : vector<1x128xf32> to vector<16x128xf32>
    %453 = arith.mulf %449, %452 : vector<16x128xf32>
    %c8_331 = arith.constant 8 : index
    %c0_332 = arith.constant 0 : index
    %c0_333 = arith.constant 0 : index
    %454 = vector.load %arg11[%c8_331, %c0_332, %c0_333] : memref<9x32x16xbf16, #tpu.memory_space<vmem>>, vector<1x32x16xbf16>
    %455 = vector.shape_cast %454 : vector<1x32x16xbf16> to vector<32x16xbf16>
    %456 = arith.truncf %453 : vector<16x128xf32> to vector<16x128xbf16>
    %cst_334 = arith.constant dense<0.000000e+00> : vector<32x128xf32>
    %457 = tpu.matmul %455, %456, %cst_334 {dimension_numbers = #tpu.dot_dimension_numbers<[1], [0], [0], [1], [0, 0, 1, 1], [], []>} : vector<32x16xbf16>, vector<16x128xbf16>, vector<32x128xf32> -> vector<32x128xf32>
    %458 = arith.addf %448, %457 : vector<32x128xf32>
    %c0_335 = arith.constant 0 : index
    %c0_336 = arith.constant 0 : index
    %459 = vector.load %arg9[%c0_335, %c0_336] : memref<32x1xf32, #tpu.memory_space<vmem>>, vector<32x1xf32>
    %460 = vector.broadcast %459 : vector<32x1xf32> to vector<32x128xf32>
    %461 = arith.addf %458, %460 : vector<32x128xf32>
    %cst_337 = arith.constant 0.000000e+00 : f32
    %462 = vector.broadcast %cst_337 : f32 to vector<32x128xf32>
    %463 = arith.maximumf %461, %462 : vector<32x128xf32>
    %c5_i32_338 = arith.constant 5 : i32
    %464 = tpu.dynamic_rotate %463 by %c5_i32_338 dim 1 : vector<32x128xf32>, i32 -> vector<32x128xf32>
    %c0_339 = arith.constant 0 : index
    %c0_340 = arith.constant 0 : index
    %c0_341 = arith.constant 0 : index
    %465 = vector.load %arg4[%c0_339, %c0_340, %c0_341] : memref<8x1x128xf32, #tpu.memory_space<vmem>>, vector<1x1x128xf32>
    %466 = vector.shape_cast %465 : vector<1x1x128xf32> to vector<1x128xf32>
    %467 = vector.broadcast %466 : vector<1x128xf32> to vector<32x128xf32>
    %468 = arith.mulf %464, %467 : vector<32x128xf32>
    %c0_342 = arith.constant 0 : index
    %c0_343 = arith.constant 0 : index
    %c0_344 = arith.constant 0 : index
    %469 = vector.load %arg12[%c0_342, %c0_343, %c0_344] : memref<9x32x32xbf16, #tpu.memory_space<vmem>>, vector<1x32x32xbf16>
    %470 = vector.shape_cast %469 : vector<1x32x32xbf16> to vector<32x32xbf16>
    %471 = arith.truncf %468 : vector<32x128xf32> to vector<32x128xbf16>
    %cst_345 = arith.constant dense<0.000000e+00> : vector<32x128xf32>
    %472 = tpu.matmul %470, %471, %cst_345 {dimension_numbers = #tpu.dot_dimension_numbers<[1], [0], [0], [1], [0, 0, 1, 1], [], []>} : vector<32x32xbf16>, vector<32x128xbf16>, vector<32x128xf32> -> vector<32x128xf32>
    %c4_i32_346 = arith.constant 4 : i32
    %473 = tpu.dynamic_rotate %463 by %c4_i32_346 dim 1 : vector<32x128xf32>, i32 -> vector<32x128xf32>
    %c1_347 = arith.constant 1 : index
    %c0_348 = arith.constant 0 : index
    %c0_349 = arith.constant 0 : index
    %474 = vector.load %arg4[%c1_347, %c0_348, %c0_349] : memref<8x1x128xf32, #tpu.memory_space<vmem>>, vector<1x1x128xf32>
    %475 = vector.shape_cast %474 : vector<1x1x128xf32> to vector<1x128xf32>
    %476 = vector.broadcast %475 : vector<1x128xf32> to vector<32x128xf32>
    %477 = arith.mulf %473, %476 : vector<32x128xf32>
    %c1_350 = arith.constant 1 : index
    %c0_351 = arith.constant 0 : index
    %c0_352 = arith.constant 0 : index
    %478 = vector.load %arg12[%c1_350, %c0_351, %c0_352] : memref<9x32x32xbf16, #tpu.memory_space<vmem>>, vector<1x32x32xbf16>
    %479 = vector.shape_cast %478 : vector<1x32x32xbf16> to vector<32x32xbf16>
    %480 = arith.truncf %477 : vector<32x128xf32> to vector<32x128xbf16>
    %cst_353 = arith.constant dense<0.000000e+00> : vector<32x128xf32>
    %481 = tpu.matmul %479, %480, %cst_353 {dimension_numbers = #tpu.dot_dimension_numbers<[1], [0], [0], [1], [0, 0, 1, 1], [], []>} : vector<32x32xbf16>, vector<32x128xbf16>, vector<32x128xf32> -> vector<32x128xf32>
    %482 = arith.addf %472, %481 : vector<32x128xf32>
    %c3_i32_354 = arith.constant 3 : i32
    %483 = tpu.dynamic_rotate %463 by %c3_i32_354 dim 1 : vector<32x128xf32>, i32 -> vector<32x128xf32>
    %c2_355 = arith.constant 2 : index
    %c0_356 = arith.constant 0 : index
    %c0_357 = arith.constant 0 : index
    %484 = vector.load %arg4[%c2_355, %c0_356, %c0_357] : memref<8x1x128xf32, #tpu.memory_space<vmem>>, vector<1x1x128xf32>
    %485 = vector.shape_cast %484 : vector<1x1x128xf32> to vector<1x128xf32>
    %486 = vector.broadcast %485 : vector<1x128xf32> to vector<32x128xf32>
    %487 = arith.mulf %483, %486 : vector<32x128xf32>
    %c2_358 = arith.constant 2 : index
    %c0_359 = arith.constant 0 : index
    %c0_360 = arith.constant 0 : index
    %488 = vector.load %arg12[%c2_358, %c0_359, %c0_360] : memref<9x32x32xbf16, #tpu.memory_space<vmem>>, vector<1x32x32xbf16>
    %489 = vector.shape_cast %488 : vector<1x32x32xbf16> to vector<32x32xbf16>
    %490 = arith.truncf %487 : vector<32x128xf32> to vector<32x128xbf16>
    %cst_361 = arith.constant dense<0.000000e+00> : vector<32x128xf32>
    %491 = tpu.matmul %489, %490, %cst_361 {dimension_numbers = #tpu.dot_dimension_numbers<[1], [0], [0], [1], [0, 0, 1, 1], [], []>} : vector<32x32xbf16>, vector<32x128xbf16>, vector<32x128xf32> -> vector<32x128xf32>
    %492 = arith.addf %482, %491 : vector<32x128xf32>
    %c1_i32_362 = arith.constant 1 : i32
    %493 = tpu.dynamic_rotate %463 by %c1_i32_362 dim 1 : vector<32x128xf32>, i32 -> vector<32x128xf32>
    %c3_363 = arith.constant 3 : index
    %c0_364 = arith.constant 0 : index
    %c0_365 = arith.constant 0 : index
    %494 = vector.load %arg4[%c3_363, %c0_364, %c0_365] : memref<8x1x128xf32, #tpu.memory_space<vmem>>, vector<1x1x128xf32>
    %495 = vector.shape_cast %494 : vector<1x1x128xf32> to vector<1x128xf32>
    %496 = vector.broadcast %495 : vector<1x128xf32> to vector<32x128xf32>
    %497 = arith.mulf %493, %496 : vector<32x128xf32>
    %c3_366 = arith.constant 3 : index
    %c0_367 = arith.constant 0 : index
    %c0_368 = arith.constant 0 : index
    %498 = vector.load %arg12[%c3_366, %c0_367, %c0_368] : memref<9x32x32xbf16, #tpu.memory_space<vmem>>, vector<1x32x32xbf16>
    %499 = vector.shape_cast %498 : vector<1x32x32xbf16> to vector<32x32xbf16>
    %500 = arith.truncf %497 : vector<32x128xf32> to vector<32x128xbf16>
    %cst_369 = arith.constant dense<0.000000e+00> : vector<32x128xf32>
    %501 = tpu.matmul %499, %500, %cst_369 {dimension_numbers = #tpu.dot_dimension_numbers<[1], [0], [0], [1], [0, 0, 1, 1], [], []>} : vector<32x32xbf16>, vector<32x128xbf16>, vector<32x128xf32> -> vector<32x128xf32>
    %502 = arith.addf %492, %501 : vector<32x128xf32>
    %c4_370 = arith.constant 4 : index
    %c0_371 = arith.constant 0 : index
    %c0_372 = arith.constant 0 : index
    %503 = vector.load %arg12[%c4_370, %c0_371, %c0_372] : memref<9x32x32xbf16, #tpu.memory_space<vmem>>, vector<1x32x32xbf16>
    %504 = vector.shape_cast %503 : vector<1x32x32xbf16> to vector<32x32xbf16>
    %505 = arith.truncf %463 : vector<32x128xf32> to vector<32x128xbf16>
    %cst_373 = arith.constant dense<0.000000e+00> : vector<32x128xf32>
    %506 = tpu.matmul %504, %505, %cst_373 {dimension_numbers = #tpu.dot_dimension_numbers<[1], [0], [0], [1], [0, 0, 1, 1], [], []>} : vector<32x32xbf16>, vector<32x128xbf16>, vector<32x128xf32> -> vector<32x128xf32>
    %507 = arith.addf %502, %506 : vector<32x128xf32>
    %c127_i32_374 = arith.constant 127 : i32
    %508 = tpu.dynamic_rotate %463 by %c127_i32_374 dim 1 : vector<32x128xf32>, i32 -> vector<32x128xf32>
    %c4_375 = arith.constant 4 : index
    %c0_376 = arith.constant 0 : index
    %c0_377 = arith.constant 0 : index
    %509 = vector.load %arg4[%c4_375, %c0_376, %c0_377] : memref<8x1x128xf32, #tpu.memory_space<vmem>>, vector<1x1x128xf32>
    %510 = vector.shape_cast %509 : vector<1x1x128xf32> to vector<1x128xf32>
    %511 = vector.broadcast %510 : vector<1x128xf32> to vector<32x128xf32>
    %512 = arith.mulf %508, %511 : vector<32x128xf32>
    %c5_378 = arith.constant 5 : index
    %c0_379 = arith.constant 0 : index
    %c0_380 = arith.constant 0 : index
    %513 = vector.load %arg12[%c5_378, %c0_379, %c0_380] : memref<9x32x32xbf16, #tpu.memory_space<vmem>>, vector<1x32x32xbf16>
    %514 = vector.shape_cast %513 : vector<1x32x32xbf16> to vector<32x32xbf16>
    %515 = arith.truncf %512 : vector<32x128xf32> to vector<32x128xbf16>
    %cst_381 = arith.constant dense<0.000000e+00> : vector<32x128xf32>
    %516 = tpu.matmul %514, %515, %cst_381 {dimension_numbers = #tpu.dot_dimension_numbers<[1], [0], [0], [1], [0, 0, 1, 1], [], []>} : vector<32x32xbf16>, vector<32x128xbf16>, vector<32x128xf32> -> vector<32x128xf32>
    %517 = arith.addf %507, %516 : vector<32x128xf32>
    %c125_i32_382 = arith.constant 125 : i32
    %518 = tpu.dynamic_rotate %463 by %c125_i32_382 dim 1 : vector<32x128xf32>, i32 -> vector<32x128xf32>
    %c5_383 = arith.constant 5 : index
    %c0_384 = arith.constant 0 : index
    %c0_385 = arith.constant 0 : index
    %519 = vector.load %arg4[%c5_383, %c0_384, %c0_385] : memref<8x1x128xf32, #tpu.memory_space<vmem>>, vector<1x1x128xf32>
    %520 = vector.shape_cast %519 : vector<1x1x128xf32> to vector<1x128xf32>
    %521 = vector.broadcast %520 : vector<1x128xf32> to vector<32x128xf32>
    %522 = arith.mulf %518, %521 : vector<32x128xf32>
    %c6_386 = arith.constant 6 : index
    %c0_387 = arith.constant 0 : index
    %c0_388 = arith.constant 0 : index
    %523 = vector.load %arg12[%c6_386, %c0_387, %c0_388] : memref<9x32x32xbf16, #tpu.memory_space<vmem>>, vector<1x32x32xbf16>
    %524 = vector.shape_cast %523 : vector<1x32x32xbf16> to vector<32x32xbf16>
    %525 = arith.truncf %522 : vector<32x128xf32> to vector<32x128xbf16>
    %cst_389 = arith.constant dense<0.000000e+00> : vector<32x128xf32>
    %526 = tpu.matmul %524, %525, %cst_389 {dimension_numbers = #tpu.dot_dimension_numbers<[1], [0], [0], [1], [0, 0, 1, 1], [], []>} : vector<32x32xbf16>, vector<32x128xbf16>, vector<32x128xf32> -> vector<32x128xf32>
    %527 = arith.addf %517, %526 : vector<32x128xf32>
    %c124_i32_390 = arith.constant 124 : i32
    %528 = tpu.dynamic_rotate %463 by %c124_i32_390 dim 1 : vector<32x128xf32>, i32 -> vector<32x128xf32>
    %c6_391 = arith.constant 6 : index
    %c0_392 = arith.constant 0 : index
    %c0_393 = arith.constant 0 : index
    %529 = vector.load %arg4[%c6_391, %c0_392, %c0_393] : memref<8x1x128xf32, #tpu.memory_space<vmem>>, vector<1x1x128xf32>
    %530 = vector.shape_cast %529 : vector<1x1x128xf32> to vector<1x128xf32>
    %531 = vector.broadcast %530 : vector<1x128xf32> to vector<32x128xf32>
    %532 = arith.mulf %528, %531 : vector<32x128xf32>
    %c7_394 = arith.constant 7 : index
    %c0_395 = arith.constant 0 : index
    %c0_396 = arith.constant 0 : index
    %533 = vector.load %arg12[%c7_394, %c0_395, %c0_396] : memref<9x32x32xbf16, #tpu.memory_space<vmem>>, vector<1x32x32xbf16>
    %534 = vector.shape_cast %533 : vector<1x32x32xbf16> to vector<32x32xbf16>
    %535 = arith.truncf %532 : vector<32x128xf32> to vector<32x128xbf16>
    %cst_397 = arith.constant dense<0.000000e+00> : vector<32x128xf32>
    %536 = tpu.matmul %534, %535, %cst_397 {dimension_numbers = #tpu.dot_dimension_numbers<[1], [0], [0], [1], [0, 0, 1, 1], [], []>} : vector<32x32xbf16>, vector<32x128xbf16>, vector<32x128xf32> -> vector<32x128xf32>
    %537 = arith.addf %527, %536 : vector<32x128xf32>
    %c123_i32_398 = arith.constant 123 : i32
    %538 = tpu.dynamic_rotate %463 by %c123_i32_398 dim 1 : vector<32x128xf32>, i32 -> vector<32x128xf32>
    %c7_399 = arith.constant 7 : index
    %c0_400 = arith.constant 0 : index
    %c0_401 = arith.constant 0 : index
    %539 = vector.load %arg4[%c7_399, %c0_400, %c0_401] : memref<8x1x128xf32, #tpu.memory_space<vmem>>, vector<1x1x128xf32>
    %540 = vector.shape_cast %539 : vector<1x1x128xf32> to vector<1x128xf32>
    %541 = vector.broadcast %540 : vector<1x128xf32> to vector<32x128xf32>
    %542 = arith.mulf %538, %541 : vector<32x128xf32>
    %c8_402 = arith.constant 8 : index
    %c0_403 = arith.constant 0 : index
    %c0_404 = arith.constant 0 : index
    %543 = vector.load %arg12[%c8_402, %c0_403, %c0_404] : memref<9x32x32xbf16, #tpu.memory_space<vmem>>, vector<1x32x32xbf16>
    %544 = vector.shape_cast %543 : vector<1x32x32xbf16> to vector<32x32xbf16>
    %545 = arith.truncf %542 : vector<32x128xf32> to vector<32x128xbf16>
    %cst_405 = arith.constant dense<0.000000e+00> : vector<32x128xf32>
    %546 = tpu.matmul %544, %545, %cst_405 {dimension_numbers = #tpu.dot_dimension_numbers<[1], [0], [0], [1], [0, 0, 1, 1], [], []>} : vector<32x32xbf16>, vector<32x128xbf16>, vector<32x128xf32> -> vector<32x128xf32>
    %547 = arith.addf %537, %546 : vector<32x128xf32>
    %c0_406 = arith.constant 0 : index
    %c0_407 = arith.constant 0 : index
    %548 = vector.load %arg10[%c0_406, %c0_407] : memref<32x1xf32, #tpu.memory_space<vmem>>, vector<32x1xf32>
    %549 = vector.broadcast %548 : vector<32x1xf32> to vector<32x128xf32>
    %550 = arith.addf %547, %549 : vector<32x128xf32>
    %cst_408 = arith.constant 0.000000e+00 : f32
    %551 = vector.broadcast %cst_408 : f32 to vector<32x128xf32>
    %552 = arith.maximumf %550, %551 : vector<32x128xf32>
    %553 = arith.truncf %552 : vector<32x128xf32> to vector<32x128xbf16>
    %c0_409 = arith.constant 0 : index
    %c0_410 = arith.constant 0 : index
    %c0_411 = arith.constant 0 : index
    %554 = vector.load %arg16[%c0_409, %c0_410, %c0_411] : memref<4x16x32xbf16, #tpu.memory_space<vmem>>, vector<1x16x32xbf16>
    %555 = vector.shape_cast %554 : vector<1x16x32xbf16> to vector<16x32xbf16>
    %cst_412 = arith.constant dense<0.000000e+00> : vector<16x128xf32>
    %556 = tpu.matmul %555, %553, %cst_412 {dimension_numbers = #tpu.dot_dimension_numbers<[1], [0], [0], [1], [0, 0, 1, 1], [], []>} : vector<16x32xbf16>, vector<32x128xbf16>, vector<16x128xf32> -> vector<16x128xf32>
    %557 = arith.truncf %556 : vector<16x128xf32> to vector<16x128xbf16>
    %c0_413 = arith.constant 0 : index
    %c0_414 = arith.constant 0 : index
    %c0_415 = arith.constant 0 : index
    %558 = vector.load %arg7[%c0_413, %c0_414, %c0_415] : memref<4x128x128xbf16, #tpu.memory_space<vmem>>, vector<1x128x128xbf16>
    %559 = vector.shape_cast %558 : vector<1x128x128xbf16> to vector<128x128xbf16>
    %cst_416 = arith.constant dense<0.000000e+00> : vector<16x128xf32>
    %560 = tpu.matmul %557, %559, %cst_416 {dimension_numbers = #tpu.dot_dimension_numbers<[1], [0], [0], [1], [0, 0, 1, 1], [], []>} : vector<16x128xbf16>, vector<128x128xbf16>, vector<16x128xf32> -> vector<16x128xf32>
    %c1_417 = arith.constant 1 : index
    %c0_418 = arith.constant 0 : index
    %c0_419 = arith.constant 0 : index
    %561 = vector.load %arg16[%c1_417, %c0_418, %c0_419] : memref<4x16x32xbf16, #tpu.memory_space<vmem>>, vector<1x16x32xbf16>
    %562 = vector.shape_cast %561 : vector<1x16x32xbf16> to vector<16x32xbf16>
    %cst_420 = arith.constant dense<0.000000e+00> : vector<16x128xf32>
    %563 = tpu.matmul %562, %553, %cst_420 {dimension_numbers = #tpu.dot_dimension_numbers<[1], [0], [0], [1], [0, 0, 1, 1], [], []>} : vector<16x32xbf16>, vector<32x128xbf16>, vector<16x128xf32> -> vector<16x128xf32>
    %564 = arith.truncf %563 : vector<16x128xf32> to vector<16x128xbf16>
    %c1_421 = arith.constant 1 : index
    %c0_422 = arith.constant 0 : index
    %c0_423 = arith.constant 0 : index
    %565 = vector.load %arg7[%c1_421, %c0_422, %c0_423] : memref<4x128x128xbf16, #tpu.memory_space<vmem>>, vector<1x128x128xbf16>
    %566 = vector.shape_cast %565 : vector<1x128x128xbf16> to vector<128x128xbf16>
    %cst_424 = arith.constant dense<0.000000e+00> : vector<16x128xf32>
    %567 = tpu.matmul %564, %566, %cst_424 {dimension_numbers = #tpu.dot_dimension_numbers<[1], [0], [0], [1], [0, 0, 1, 1], [], []>} : vector<16x128xbf16>, vector<128x128xbf16>, vector<16x128xf32> -> vector<16x128xf32>
    %568 = arith.addf %560, %567 : vector<16x128xf32>
    %c2_425 = arith.constant 2 : index
    %c0_426 = arith.constant 0 : index
    %c0_427 = arith.constant 0 : index
    %569 = vector.load %arg16[%c2_425, %c0_426, %c0_427] : memref<4x16x32xbf16, #tpu.memory_space<vmem>>, vector<1x16x32xbf16>
    %570 = vector.shape_cast %569 : vector<1x16x32xbf16> to vector<16x32xbf16>
    %cst_428 = arith.constant dense<0.000000e+00> : vector<16x128xf32>
    %571 = tpu.matmul %570, %553, %cst_428 {dimension_numbers = #tpu.dot_dimension_numbers<[1], [0], [0], [1], [0, 0, 1, 1], [], []>} : vector<16x32xbf16>, vector<32x128xbf16>, vector<16x128xf32> -> vector<16x128xf32>
    %572 = arith.truncf %571 : vector<16x128xf32> to vector<16x128xbf16>
    %c2_429 = arith.constant 2 : index
    %c0_430 = arith.constant 0 : index
    %c0_431 = arith.constant 0 : index
    %573 = vector.load %arg7[%c2_429, %c0_430, %c0_431] : memref<4x128x128xbf16, #tpu.memory_space<vmem>>, vector<1x128x128xbf16>
    %574 = vector.shape_cast %573 : vector<1x128x128xbf16> to vector<128x128xbf16>
    %cst_432 = arith.constant dense<0.000000e+00> : vector<16x128xf32>
    %575 = tpu.matmul %572, %574, %cst_432 {dimension_numbers = #tpu.dot_dimension_numbers<[1], [0], [0], [1], [0, 0, 1, 1], [], []>} : vector<16x128xbf16>, vector<128x128xbf16>, vector<16x128xf32> -> vector<16x128xf32>
    %576 = arith.addf %568, %575 : vector<16x128xf32>
    %c3_433 = arith.constant 3 : index
    %c0_434 = arith.constant 0 : index
    %c0_435 = arith.constant 0 : index
    %577 = vector.load %arg16[%c3_433, %c0_434, %c0_435] : memref<4x16x32xbf16, #tpu.memory_space<vmem>>, vector<1x16x32xbf16>
    %578 = vector.shape_cast %577 : vector<1x16x32xbf16> to vector<16x32xbf16>
    %cst_436 = arith.constant dense<0.000000e+00> : vector<16x128xf32>
    %579 = tpu.matmul %578, %553, %cst_436 {dimension_numbers = #tpu.dot_dimension_numbers<[1], [0], [0], [1], [0, 0, 1, 1], [], []>} : vector<16x32xbf16>, vector<32x128xbf16>, vector<16x128xf32> -> vector<16x128xf32>
    %580 = arith.truncf %579 : vector<16x128xf32> to vector<16x128xbf16>
    %c3_437 = arith.constant 3 : index
    %c0_438 = arith.constant 0 : index
    %c0_439 = arith.constant 0 : index
    %581 = vector.load %arg7[%c3_437, %c0_438, %c0_439] : memref<4x128x128xbf16, #tpu.memory_space<vmem>>, vector<1x128x128xbf16>
    %582 = vector.shape_cast %581 : vector<1x128x128xbf16> to vector<128x128xbf16>
    %cst_440 = arith.constant dense<0.000000e+00> : vector<16x128xf32>
    %583 = tpu.matmul %580, %582, %cst_440 {dimension_numbers = #tpu.dot_dimension_numbers<[1], [0], [0], [1], [0, 0, 1, 1], [], []>} : vector<16x128xbf16>, vector<128x128xbf16>, vector<16x128xf32> -> vector<16x128xf32>
    %584 = arith.addf %576, %583 : vector<16x128xf32>
    %c0_441 = arith.constant 0 : index
    %c0_442 = arith.constant 0 : index
    %585 = vector.load %arg15[%c0_441, %c0_442] : memref<16x1xf32, #tpu.memory_space<vmem>>, vector<16x1xf32>
    %586 = vector.broadcast %585 : vector<16x1xf32> to vector<16x128xf32>
    %587 = arith.addf %584, %586 : vector<16x128xf32>
    %588 = tpu.concatenate %365, %587 in 0 : vector<16x128xf32>, vector<16x128xf32> -> vector<32x128xf32>
    %c9_i32_443 = arith.constant 9 : i32
    %589 = tpu.dynamic_rotate %588 by %c9_i32_443 dim 1 : vector<32x128xf32>, i32 -> vector<32x128xf32>
    %c0_444 = arith.constant 0 : index
    %c0_445 = arith.constant 0 : index
    %c0_446 = arith.constant 0 : index
    %590 = vector.load %arg3[%c0_444, %c0_445, %c0_446] : memref<8x1x128xf32, #tpu.memory_space<vmem>>, vector<1x1x128xf32>
    %591 = vector.shape_cast %590 : vector<1x1x128xf32> to vector<1x128xf32>
    %592 = vector.broadcast %591 : vector<1x128xf32> to vector<32x128xf32>
    %593 = arith.mulf %589, %592 : vector<32x128xf32>
    %c0_447 = arith.constant 0 : index
    %c0_448 = arith.constant 0 : index
    %c0_449 = arith.constant 0 : index
    %594 = vector.load %arg17[%c0_447, %c0_448, %c0_449] : memref<9x16x32xbf16, #tpu.memory_space<vmem>>, vector<1x16x32xbf16>
    %595 = vector.shape_cast %594 : vector<1x16x32xbf16> to vector<16x32xbf16>
    %596 = arith.truncf %593 : vector<32x128xf32> to vector<32x128xbf16>
    %cst_450 = arith.constant dense<0.000000e+00> : vector<16x128xf32>
    %597 = tpu.matmul %595, %596, %cst_450 {dimension_numbers = #tpu.dot_dimension_numbers<[1], [0], [0], [1], [0, 0, 1, 1], [], []>} : vector<16x32xbf16>, vector<32x128xbf16>, vector<16x128xf32> -> vector<16x128xf32>
    %c8_i32_451 = arith.constant 8 : i32
    %598 = tpu.dynamic_rotate %588 by %c8_i32_451 dim 1 : vector<32x128xf32>, i32 -> vector<32x128xf32>
    %c1_452 = arith.constant 1 : index
    %c0_453 = arith.constant 0 : index
    %c0_454 = arith.constant 0 : index
    %599 = vector.load %arg3[%c1_452, %c0_453, %c0_454] : memref<8x1x128xf32, #tpu.memory_space<vmem>>, vector<1x1x128xf32>
    %600 = vector.shape_cast %599 : vector<1x1x128xf32> to vector<1x128xf32>
    %601 = vector.broadcast %600 : vector<1x128xf32> to vector<32x128xf32>
    %602 = arith.mulf %598, %601 : vector<32x128xf32>
    %c1_455 = arith.constant 1 : index
    %c0_456 = arith.constant 0 : index
    %c0_457 = arith.constant 0 : index
    %603 = vector.load %arg17[%c1_455, %c0_456, %c0_457] : memref<9x16x32xbf16, #tpu.memory_space<vmem>>, vector<1x16x32xbf16>
    %604 = vector.shape_cast %603 : vector<1x16x32xbf16> to vector<16x32xbf16>
    %605 = arith.truncf %602 : vector<32x128xf32> to vector<32x128xbf16>
    %cst_458 = arith.constant dense<0.000000e+00> : vector<16x128xf32>
    %606 = tpu.matmul %604, %605, %cst_458 {dimension_numbers = #tpu.dot_dimension_numbers<[1], [0], [0], [1], [0, 0, 1, 1], [], []>} : vector<16x32xbf16>, vector<32x128xbf16>, vector<16x128xf32> -> vector<16x128xf32>
    %607 = arith.addf %597, %606 : vector<16x128xf32>
    %c7_i32_459 = arith.constant 7 : i32
    %608 = tpu.dynamic_rotate %588 by %c7_i32_459 dim 1 : vector<32x128xf32>, i32 -> vector<32x128xf32>
    %c2_460 = arith.constant 2 : index
    %c0_461 = arith.constant 0 : index
    %c0_462 = arith.constant 0 : index
    %609 = vector.load %arg3[%c2_460, %c0_461, %c0_462] : memref<8x1x128xf32, #tpu.memory_space<vmem>>, vector<1x1x128xf32>
    %610 = vector.shape_cast %609 : vector<1x1x128xf32> to vector<1x128xf32>
    %611 = vector.broadcast %610 : vector<1x128xf32> to vector<32x128xf32>
    %612 = arith.mulf %608, %611 : vector<32x128xf32>
    %c2_463 = arith.constant 2 : index
    %c0_464 = arith.constant 0 : index
    %c0_465 = arith.constant 0 : index
    %613 = vector.load %arg17[%c2_463, %c0_464, %c0_465] : memref<9x16x32xbf16, #tpu.memory_space<vmem>>, vector<1x16x32xbf16>
    %614 = vector.shape_cast %613 : vector<1x16x32xbf16> to vector<16x32xbf16>
    %615 = arith.truncf %612 : vector<32x128xf32> to vector<32x128xbf16>
    %cst_466 = arith.constant dense<0.000000e+00> : vector<16x128xf32>
    %616 = tpu.matmul %614, %615, %cst_466 {dimension_numbers = #tpu.dot_dimension_numbers<[1], [0], [0], [1], [0, 0, 1, 1], [], []>} : vector<16x32xbf16>, vector<32x128xbf16>, vector<16x128xf32> -> vector<16x128xf32>
    %617 = arith.addf %607, %616 : vector<16x128xf32>
    %c1_i32_467 = arith.constant 1 : i32
    %618 = tpu.dynamic_rotate %588 by %c1_i32_467 dim 1 : vector<32x128xf32>, i32 -> vector<32x128xf32>
    %c3_468 = arith.constant 3 : index
    %c0_469 = arith.constant 0 : index
    %c0_470 = arith.constant 0 : index
    %619 = vector.load %arg3[%c3_468, %c0_469, %c0_470] : memref<8x1x128xf32, #tpu.memory_space<vmem>>, vector<1x1x128xf32>
    %620 = vector.shape_cast %619 : vector<1x1x128xf32> to vector<1x128xf32>
    %621 = vector.broadcast %620 : vector<1x128xf32> to vector<32x128xf32>
    %622 = arith.mulf %618, %621 : vector<32x128xf32>
    %c3_471 = arith.constant 3 : index
    %c0_472 = arith.constant 0 : index
    %c0_473 = arith.constant 0 : index
    %623 = vector.load %arg17[%c3_471, %c0_472, %c0_473] : memref<9x16x32xbf16, #tpu.memory_space<vmem>>, vector<1x16x32xbf16>
    %624 = vector.shape_cast %623 : vector<1x16x32xbf16> to vector<16x32xbf16>
    %625 = arith.truncf %622 : vector<32x128xf32> to vector<32x128xbf16>
    %cst_474 = arith.constant dense<0.000000e+00> : vector<16x128xf32>
    %626 = tpu.matmul %624, %625, %cst_474 {dimension_numbers = #tpu.dot_dimension_numbers<[1], [0], [0], [1], [0, 0, 1, 1], [], []>} : vector<16x32xbf16>, vector<32x128xbf16>, vector<16x128xf32> -> vector<16x128xf32>
    %627 = arith.addf %617, %626 : vector<16x128xf32>
    %c4_475 = arith.constant 4 : index
    %c0_476 = arith.constant 0 : index
    %c0_477 = arith.constant 0 : index
    %628 = vector.load %arg17[%c4_475, %c0_476, %c0_477] : memref<9x16x32xbf16, #tpu.memory_space<vmem>>, vector<1x16x32xbf16>
    %629 = vector.shape_cast %628 : vector<1x16x32xbf16> to vector<16x32xbf16>
    %630 = arith.truncf %588 : vector<32x128xf32> to vector<32x128xbf16>
    %cst_478 = arith.constant dense<0.000000e+00> : vector<16x128xf32>
    %631 = tpu.matmul %629, %630, %cst_478 {dimension_numbers = #tpu.dot_dimension_numbers<[1], [0], [0], [1], [0, 0, 1, 1], [], []>} : vector<16x32xbf16>, vector<32x128xbf16>, vector<16x128xf32> -> vector<16x128xf32>
    %632 = arith.addf %627, %631 : vector<16x128xf32>
    %c127_i32_479 = arith.constant 127 : i32
    %633 = tpu.dynamic_rotate %588 by %c127_i32_479 dim 1 : vector<32x128xf32>, i32 -> vector<32x128xf32>
    %c4_480 = arith.constant 4 : index
    %c0_481 = arith.constant 0 : index
    %c0_482 = arith.constant 0 : index
    %634 = vector.load %arg3[%c4_480, %c0_481, %c0_482] : memref<8x1x128xf32, #tpu.memory_space<vmem>>, vector<1x1x128xf32>
    %635 = vector.shape_cast %634 : vector<1x1x128xf32> to vector<1x128xf32>
    %636 = vector.broadcast %635 : vector<1x128xf32> to vector<32x128xf32>
    %637 = arith.mulf %633, %636 : vector<32x128xf32>
    %c5_483 = arith.constant 5 : index
    %c0_484 = arith.constant 0 : index
    %c0_485 = arith.constant 0 : index
    %638 = vector.load %arg17[%c5_483, %c0_484, %c0_485] : memref<9x16x32xbf16, #tpu.memory_space<vmem>>, vector<1x16x32xbf16>
    %639 = vector.shape_cast %638 : vector<1x16x32xbf16> to vector<16x32xbf16>
    %640 = arith.truncf %637 : vector<32x128xf32> to vector<32x128xbf16>
    %cst_486 = arith.constant dense<0.000000e+00> : vector<16x128xf32>
    %641 = tpu.matmul %639, %640, %cst_486 {dimension_numbers = #tpu.dot_dimension_numbers<[1], [0], [0], [1], [0, 0, 1, 1], [], []>} : vector<16x32xbf16>, vector<32x128xbf16>, vector<16x128xf32> -> vector<16x128xf32>
    %642 = arith.addf %632, %641 : vector<16x128xf32>
    %c121_i32_487 = arith.constant 121 : i32
    %643 = tpu.dynamic_rotate %588 by %c121_i32_487 dim 1 : vector<32x128xf32>, i32 -> vector<32x128xf32>
    %c5_488 = arith.constant 5 : index
    %c0_489 = arith.constant 0 : index
    %c0_490 = arith.constant 0 : index
    %644 = vector.load %arg3[%c5_488, %c0_489, %c0_490] : memref<8x1x128xf32, #tpu.memory_space<vmem>>, vector<1x1x128xf32>
    %645 = vector.shape_cast %644 : vector<1x1x128xf32> to vector<1x128xf32>
    %646 = vector.broadcast %645 : vector<1x128xf32> to vector<32x128xf32>
    %647 = arith.mulf %643, %646 : vector<32x128xf32>
    %c6_491 = arith.constant 6 : index
    %c0_492 = arith.constant 0 : index
    %c0_493 = arith.constant 0 : index
    %648 = vector.load %arg17[%c6_491, %c0_492, %c0_493] : memref<9x16x32xbf16, #tpu.memory_space<vmem>>, vector<1x16x32xbf16>
    %649 = vector.shape_cast %648 : vector<1x16x32xbf16> to vector<16x32xbf16>
    %650 = arith.truncf %647 : vector<32x128xf32> to vector<32x128xbf16>
    %cst_494 = arith.constant dense<0.000000e+00> : vector<16x128xf32>
    %651 = tpu.matmul %649, %650, %cst_494 {dimension_numbers = #tpu.dot_dimension_numbers<[1], [0], [0], [1], [0, 0, 1, 1], [], []>} : vector<16x32xbf16>, vector<32x128xbf16>, vector<16x128xf32> -> vector<16x128xf32>
    %652 = arith.addf %642, %651 : vector<16x128xf32>
    %c120_i32_495 = arith.constant 120 : i32
    %653 = tpu.dynamic_rotate %588 by %c120_i32_495 dim 1 : vector<32x128xf32>, i32 -> vector<32x128xf32>
    %c6_496 = arith.constant 6 : index
    %c0_497 = arith.constant 0 : index
    %c0_498 = arith.constant 0 : index
    %654 = vector.load %arg3[%c6_496, %c0_497, %c0_498] : memref<8x1x128xf32, #tpu.memory_space<vmem>>, vector<1x1x128xf32>
    %655 = vector.shape_cast %654 : vector<1x1x128xf32> to vector<1x128xf32>
    %656 = vector.broadcast %655 : vector<1x128xf32> to vector<32x128xf32>
    %657 = arith.mulf %653, %656 : vector<32x128xf32>
    %c7_499 = arith.constant 7 : index
    %c0_500 = arith.constant 0 : index
    %c0_501 = arith.constant 0 : index
    %658 = vector.load %arg17[%c7_499, %c0_500, %c0_501] : memref<9x16x32xbf16, #tpu.memory_space<vmem>>, vector<1x16x32xbf16>
    %659 = vector.shape_cast %658 : vector<1x16x32xbf16> to vector<16x32xbf16>
    %660 = arith.truncf %657 : vector<32x128xf32> to vector<32x128xbf16>
    %cst_502 = arith.constant dense<0.000000e+00> : vector<16x128xf32>
    %661 = tpu.matmul %659, %660, %cst_502 {dimension_numbers = #tpu.dot_dimension_numbers<[1], [0], [0], [1], [0, 0, 1, 1], [], []>} : vector<16x32xbf16>, vector<32x128xbf16>, vector<16x128xf32> -> vector<16x128xf32>
    %662 = arith.addf %652, %661 : vector<16x128xf32>
    %c119_i32_503 = arith.constant 119 : i32
    %663 = tpu.dynamic_rotate %588 by %c119_i32_503 dim 1 : vector<32x128xf32>, i32 -> vector<32x128xf32>
    %c7_504 = arith.constant 7 : index
    %c0_505 = arith.constant 0 : index
    %c0_506 = arith.constant 0 : index
    %664 = vector.load %arg3[%c7_504, %c0_505, %c0_506] : memref<8x1x128xf32, #tpu.memory_space<vmem>>, vector<1x1x128xf32>
    %665 = vector.shape_cast %664 : vector<1x1x128xf32> to vector<1x128xf32>
    %666 = vector.broadcast %665 : vector<1x128xf32> to vector<32x128xf32>
    %667 = arith.mulf %663, %666 : vector<32x128xf32>
    %c8_507 = arith.constant 8 : index
    %c0_508 = arith.constant 0 : index
    %c0_509 = arith.constant 0 : index
    %668 = vector.load %arg17[%c8_507, %c0_508, %c0_509] : memref<9x16x32xbf16, #tpu.memory_space<vmem>>, vector<1x16x32xbf16>
    %669 = vector.shape_cast %668 : vector<1x16x32xbf16> to vector<16x32xbf16>
    %670 = arith.truncf %667 : vector<32x128xf32> to vector<32x128xbf16>
    %cst_510 = arith.constant dense<0.000000e+00> : vector<16x128xf32>
    %671 = tpu.matmul %669, %670, %cst_510 {dimension_numbers = #tpu.dot_dimension_numbers<[1], [0], [0], [1], [0, 0, 1, 1], [], []>} : vector<16x32xbf16>, vector<32x128xbf16>, vector<16x128xf32> -> vector<16x128xf32>
    %672 = arith.addf %662, %671 : vector<16x128xf32>
    %c0_511 = arith.constant 0 : index
    %c0_512 = arith.constant 0 : index
    %673 = vector.load %arg13[%c0_511, %c0_512] : memref<16x1xf32, #tpu.memory_space<vmem>>, vector<16x1xf32>
    %674 = vector.broadcast %673 : vector<16x1xf32> to vector<16x128xf32>
    %675 = arith.addf %672, %674 : vector<16x128xf32>
    %cst_513 = arith.constant 0.000000e+00 : f32
    %676 = vector.broadcast %cst_513 : f32 to vector<16x128xf32>
    %677 = arith.maximumf %675, %676 : vector<16x128xf32>
    %c9_i32_514 = arith.constant 9 : i32
    %678 = tpu.dynamic_rotate %677 by %c9_i32_514 dim 1 : vector<16x128xf32>, i32 -> vector<16x128xf32>
    %c0_515 = arith.constant 0 : index
    %c0_516 = arith.constant 0 : index
    %c0_517 = arith.constant 0 : index
    %679 = vector.load %arg3[%c0_515, %c0_516, %c0_517] : memref<8x1x128xf32, #tpu.memory_space<vmem>>, vector<1x1x128xf32>
    %680 = vector.shape_cast %679 : vector<1x1x128xf32> to vector<1x128xf32>
    %681 = vector.broadcast %680 : vector<1x128xf32> to vector<16x128xf32>
    %682 = arith.mulf %678, %681 : vector<16x128xf32>
    %c0_518 = arith.constant 0 : index
    %c0_519 = arith.constant 0 : index
    %c0_520 = arith.constant 0 : index
    %683 = vector.load %arg18[%c0_518, %c0_519, %c0_520] : memref<9x16x16xbf16, #tpu.memory_space<vmem>>, vector<1x16x16xbf16>
    %684 = vector.shape_cast %683 : vector<1x16x16xbf16> to vector<16x16xbf16>
    %685 = arith.truncf %682 : vector<16x128xf32> to vector<16x128xbf16>
    %cst_521 = arith.constant dense<0.000000e+00> : vector<16x128xf32>
    %686 = tpu.matmul %684, %685, %cst_521 {dimension_numbers = #tpu.dot_dimension_numbers<[1], [0], [0], [1], [0, 0, 1, 1], [], []>} : vector<16x16xbf16>, vector<16x128xbf16>, vector<16x128xf32> -> vector<16x128xf32>
    %c8_i32_522 = arith.constant 8 : i32
    %687 = tpu.dynamic_rotate %677 by %c8_i32_522 dim 1 : vector<16x128xf32>, i32 -> vector<16x128xf32>
    %c1_523 = arith.constant 1 : index
    %c0_524 = arith.constant 0 : index
    %c0_525 = arith.constant 0 : index
    %688 = vector.load %arg3[%c1_523, %c0_524, %c0_525] : memref<8x1x128xf32, #tpu.memory_space<vmem>>, vector<1x1x128xf32>
    %689 = vector.shape_cast %688 : vector<1x1x128xf32> to vector<1x128xf32>
    %690 = vector.broadcast %689 : vector<1x128xf32> to vector<16x128xf32>
    %691 = arith.mulf %687, %690 : vector<16x128xf32>
    %c1_526 = arith.constant 1 : index
    %c0_527 = arith.constant 0 : index
    %c0_528 = arith.constant 0 : index
    %692 = vector.load %arg18[%c1_526, %c0_527, %c0_528] : memref<9x16x16xbf16, #tpu.memory_space<vmem>>, vector<1x16x16xbf16>
    %693 = vector.shape_cast %692 : vector<1x16x16xbf16> to vector<16x16xbf16>
    %694 = arith.truncf %691 : vector<16x128xf32> to vector<16x128xbf16>
    %cst_529 = arith.constant dense<0.000000e+00> : vector<16x128xf32>
    %695 = tpu.matmul %693, %694, %cst_529 {dimension_numbers = #tpu.dot_dimension_numbers<[1], [0], [0], [1], [0, 0, 1, 1], [], []>} : vector<16x16xbf16>, vector<16x128xbf16>, vector<16x128xf32> -> vector<16x128xf32>
    %696 = arith.addf %686, %695 : vector<16x128xf32>
    %c7_i32_530 = arith.constant 7 : i32
    %697 = tpu.dynamic_rotate %677 by %c7_i32_530 dim 1 : vector<16x128xf32>, i32 -> vector<16x128xf32>
    %c2_531 = arith.constant 2 : index
    %c0_532 = arith.constant 0 : index
    %c0_533 = arith.constant 0 : index
    %698 = vector.load %arg3[%c2_531, %c0_532, %c0_533] : memref<8x1x128xf32, #tpu.memory_space<vmem>>, vector<1x1x128xf32>
    %699 = vector.shape_cast %698 : vector<1x1x128xf32> to vector<1x128xf32>
    %700 = vector.broadcast %699 : vector<1x128xf32> to vector<16x128xf32>
    %701 = arith.mulf %697, %700 : vector<16x128xf32>
    %c2_534 = arith.constant 2 : index
    %c0_535 = arith.constant 0 : index
    %c0_536 = arith.constant 0 : index
    %702 = vector.load %arg18[%c2_534, %c0_535, %c0_536] : memref<9x16x16xbf16, #tpu.memory_space<vmem>>, vector<1x16x16xbf16>
    %703 = vector.shape_cast %702 : vector<1x16x16xbf16> to vector<16x16xbf16>
    %704 = arith.truncf %701 : vector<16x128xf32> to vector<16x128xbf16>
    %cst_537 = arith.constant dense<0.000000e+00> : vector<16x128xf32>
    %705 = tpu.matmul %703, %704, %cst_537 {dimension_numbers = #tpu.dot_dimension_numbers<[1], [0], [0], [1], [0, 0, 1, 1], [], []>} : vector<16x16xbf16>, vector<16x128xbf16>, vector<16x128xf32> -> vector<16x128xf32>
    %706 = arith.addf %696, %705 : vector<16x128xf32>
    %c1_i32_538 = arith.constant 1 : i32
    %707 = tpu.dynamic_rotate %677 by %c1_i32_538 dim 1 : vector<16x128xf32>, i32 -> vector<16x128xf32>
    %c3_539 = arith.constant 3 : index
    %c0_540 = arith.constant 0 : index
    %c0_541 = arith.constant 0 : index
    %708 = vector.load %arg3[%c3_539, %c0_540, %c0_541] : memref<8x1x128xf32, #tpu.memory_space<vmem>>, vector<1x1x128xf32>
    %709 = vector.shape_cast %708 : vector<1x1x128xf32> to vector<1x128xf32>
    %710 = vector.broadcast %709 : vector<1x128xf32> to vector<16x128xf32>
    %711 = arith.mulf %707, %710 : vector<16x128xf32>
    %c3_542 = arith.constant 3 : index
    %c0_543 = arith.constant 0 : index
    %c0_544 = arith.constant 0 : index
    %712 = vector.load %arg18[%c3_542, %c0_543, %c0_544] : memref<9x16x16xbf16, #tpu.memory_space<vmem>>, vector<1x16x16xbf16>
    %713 = vector.shape_cast %712 : vector<1x16x16xbf16> to vector<16x16xbf16>
    %714 = arith.truncf %711 : vector<16x128xf32> to vector<16x128xbf16>
    %cst_545 = arith.constant dense<0.000000e+00> : vector<16x128xf32>
    %715 = tpu.matmul %713, %714, %cst_545 {dimension_numbers = #tpu.dot_dimension_numbers<[1], [0], [0], [1], [0, 0, 1, 1], [], []>} : vector<16x16xbf16>, vector<16x128xbf16>, vector<16x128xf32> -> vector<16x128xf32>
    %716 = arith.addf %706, %715 : vector<16x128xf32>
    %c4_546 = arith.constant 4 : index
    %c0_547 = arith.constant 0 : index
    %c0_548 = arith.constant 0 : index
    %717 = vector.load %arg18[%c4_546, %c0_547, %c0_548] : memref<9x16x16xbf16, #tpu.memory_space<vmem>>, vector<1x16x16xbf16>
    %718 = vector.shape_cast %717 : vector<1x16x16xbf16> to vector<16x16xbf16>
    %719 = arith.truncf %677 : vector<16x128xf32> to vector<16x128xbf16>
    %cst_549 = arith.constant dense<0.000000e+00> : vector<16x128xf32>
    %720 = tpu.matmul %718, %719, %cst_549 {dimension_numbers = #tpu.dot_dimension_numbers<[1], [0], [0], [1], [0, 0, 1, 1], [], []>} : vector<16x16xbf16>, vector<16x128xbf16>, vector<16x128xf32> -> vector<16x128xf32>
    %721 = arith.addf %716, %720 : vector<16x128xf32>
    %c127_i32_550 = arith.constant 127 : i32
    %722 = tpu.dynamic_rotate %677 by %c127_i32_550 dim 1 : vector<16x128xf32>, i32 -> vector<16x128xf32>
    %c4_551 = arith.constant 4 : index
    %c0_552 = arith.constant 0 : index
    %c0_553 = arith.constant 0 : index
    %723 = vector.load %arg3[%c4_551, %c0_552, %c0_553] : memref<8x1x128xf32, #tpu.memory_space<vmem>>, vector<1x1x128xf32>
    %724 = vector.shape_cast %723 : vector<1x1x128xf32> to vector<1x128xf32>
    %725 = vector.broadcast %724 : vector<1x128xf32> to vector<16x128xf32>
    %726 = arith.mulf %722, %725 : vector<16x128xf32>
    %c5_554 = arith.constant 5 : index
    %c0_555 = arith.constant 0 : index
    %c0_556 = arith.constant 0 : index
    %727 = vector.load %arg18[%c5_554, %c0_555, %c0_556] : memref<9x16x16xbf16, #tpu.memory_space<vmem>>, vector<1x16x16xbf16>
    %728 = vector.shape_cast %727 : vector<1x16x16xbf16> to vector<16x16xbf16>
    %729 = arith.truncf %726 : vector<16x128xf32> to vector<16x128xbf16>
    %cst_557 = arith.constant dense<0.000000e+00> : vector<16x128xf32>
    %730 = tpu.matmul %728, %729, %cst_557 {dimension_numbers = #tpu.dot_dimension_numbers<[1], [0], [0], [1], [0, 0, 1, 1], [], []>} : vector<16x16xbf16>, vector<16x128xbf16>, vector<16x128xf32> -> vector<16x128xf32>
    %731 = arith.addf %721, %730 : vector<16x128xf32>
    %c121_i32_558 = arith.constant 121 : i32
    %732 = tpu.dynamic_rotate %677 by %c121_i32_558 dim 1 : vector<16x128xf32>, i32 -> vector<16x128xf32>
    %c5_559 = arith.constant 5 : index
    %c0_560 = arith.constant 0 : index
    %c0_561 = arith.constant 0 : index
    %733 = vector.load %arg3[%c5_559, %c0_560, %c0_561] : memref<8x1x128xf32, #tpu.memory_space<vmem>>, vector<1x1x128xf32>
    %734 = vector.shape_cast %733 : vector<1x1x128xf32> to vector<1x128xf32>
    %735 = vector.broadcast %734 : vector<1x128xf32> to vector<16x128xf32>
    %736 = arith.mulf %732, %735 : vector<16x128xf32>
    %c6_562 = arith.constant 6 : index
    %c0_563 = arith.constant 0 : index
    %c0_564 = arith.constant 0 : index
    %737 = vector.load %arg18[%c6_562, %c0_563, %c0_564] : memref<9x16x16xbf16, #tpu.memory_space<vmem>>, vector<1x16x16xbf16>
    %738 = vector.shape_cast %737 : vector<1x16x16xbf16> to vector<16x16xbf16>
    %739 = arith.truncf %736 : vector<16x128xf32> to vector<16x128xbf16>
    %cst_565 = arith.constant dense<0.000000e+00> : vector<16x128xf32>
    %740 = tpu.matmul %738, %739, %cst_565 {dimension_numbers = #tpu.dot_dimension_numbers<[1], [0], [0], [1], [0, 0, 1, 1], [], []>} : vector<16x16xbf16>, vector<16x128xbf16>, vector<16x128xf32> -> vector<16x128xf32>
    %741 = arith.addf %731, %740 : vector<16x128xf32>
    %c120_i32_566 = arith.constant 120 : i32
    %742 = tpu.dynamic_rotate %677 by %c120_i32_566 dim 1 : vector<16x128xf32>, i32 -> vector<16x128xf32>
    %c6_567 = arith.constant 6 : index
    %c0_568 = arith.constant 0 : index
    %c0_569 = arith.constant 0 : index
    %743 = vector.load %arg3[%c6_567, %c0_568, %c0_569] : memref<8x1x128xf32, #tpu.memory_space<vmem>>, vector<1x1x128xf32>
    %744 = vector.shape_cast %743 : vector<1x1x128xf32> to vector<1x128xf32>
    %745 = vector.broadcast %744 : vector<1x128xf32> to vector<16x128xf32>
    %746 = arith.mulf %742, %745 : vector<16x128xf32>
    %c7_570 = arith.constant 7 : index
    %c0_571 = arith.constant 0 : index
    %c0_572 = arith.constant 0 : index
    %747 = vector.load %arg18[%c7_570, %c0_571, %c0_572] : memref<9x16x16xbf16, #tpu.memory_space<vmem>>, vector<1x16x16xbf16>
    %748 = vector.shape_cast %747 : vector<1x16x16xbf16> to vector<16x16xbf16>
    %749 = arith.truncf %746 : vector<16x128xf32> to vector<16x128xbf16>
    %cst_573 = arith.constant dense<0.000000e+00> : vector<16x128xf32>
    %750 = tpu.matmul %748, %749, %cst_573 {dimension_numbers = #tpu.dot_dimension_numbers<[1], [0], [0], [1], [0, 0, 1, 1], [], []>} : vector<16x16xbf16>, vector<16x128xbf16>, vector<16x128xf32> -> vector<16x128xf32>
    %751 = arith.addf %741, %750 : vector<16x128xf32>
    %c119_i32_574 = arith.constant 119 : i32
    %752 = tpu.dynamic_rotate %677 by %c119_i32_574 dim 1 : vector<16x128xf32>, i32 -> vector<16x128xf32>
    %c7_575 = arith.constant 7 : index
    %c0_576 = arith.constant 0 : index
    %c0_577 = arith.constant 0 : index
    %753 = vector.load %arg3[%c7_575, %c0_576, %c0_577] : memref<8x1x128xf32, #tpu.memory_space<vmem>>, vector<1x1x128xf32>
    %754 = vector.shape_cast %753 : vector<1x1x128xf32> to vector<1x128xf32>
    %755 = vector.broadcast %754 : vector<1x128xf32> to vector<16x128xf32>
    %756 = arith.mulf %752, %755 : vector<16x128xf32>
    %c8_578 = arith.constant 8 : index
    %c0_579 = arith.constant 0 : index
    %c0_580 = arith.constant 0 : index
    %757 = vector.load %arg18[%c8_578, %c0_579, %c0_580] : memref<9x16x16xbf16, #tpu.memory_space<vmem>>, vector<1x16x16xbf16>
    %758 = vector.shape_cast %757 : vector<1x16x16xbf16> to vector<16x16xbf16>
    %759 = arith.truncf %756 : vector<16x128xf32> to vector<16x128xbf16>
    %cst_581 = arith.constant dense<0.000000e+00> : vector<16x128xf32>
    %760 = tpu.matmul %758, %759, %cst_581 {dimension_numbers = #tpu.dot_dimension_numbers<[1], [0], [0], [1], [0, 0, 1, 1], [], []>} : vector<16x16xbf16>, vector<16x128xbf16>, vector<16x128xf32> -> vector<16x128xf32>
    %761 = arith.addf %751, %760 : vector<16x128xf32>
    %c0_582 = arith.constant 0 : index
    %c0_583 = arith.constant 0 : index
    %762 = vector.load %arg14[%c0_582, %c0_583] : memref<16x1xf32, #tpu.memory_space<vmem>>, vector<16x1xf32>
    %763 = vector.broadcast %762 : vector<16x1xf32> to vector<16x128xf32>
    %764 = arith.addf %761, %763 : vector<16x128xf32>
    %cst_584 = arith.constant 0.000000e+00 : f32
    %765 = vector.broadcast %cst_584 : f32 to vector<16x128xf32>
    %766 = arith.maximumf %764, %765 : vector<16x128xf32>
    %767 = arith.truncf %766 : vector<16x128xf32> to vector<16x128xbf16>
    %c0_585 = arith.constant 0 : index
    %c0_586 = arith.constant 0 : index
    %c0_587 = arith.constant 0 : index
    %768 = vector.load %arg22[%c0_585, %c0_586, %c0_587] : memref<4x8x16xbf16, #tpu.memory_space<vmem>>, vector<1x8x16xbf16>
    %769 = vector.shape_cast %768 : vector<1x8x16xbf16> to vector<8x16xbf16>
    %cst_588 = arith.constant dense<0.000000e+00> : vector<8x128xf32>
    %770 = tpu.matmul %769, %767, %cst_588 {dimension_numbers = #tpu.dot_dimension_numbers<[1], [0], [0], [1], [0, 0, 1, 1], [], []>} : vector<8x16xbf16>, vector<16x128xbf16>, vector<8x128xf32> -> vector<8x128xf32>
    %771 = arith.truncf %770 : vector<8x128xf32> to vector<8x128xbf16>
    %c0_589 = arith.constant 0 : index
    %c0_590 = arith.constant 0 : index
    %c0_591 = arith.constant 0 : index
    %772 = vector.load %arg8[%c0_589, %c0_590, %c0_591] : memref<4x128x256xbf16, #tpu.memory_space<vmem>>, vector<1x128x256xbf16>
    %773 = vector.shape_cast %772 : vector<1x128x256xbf16> to vector<128x256xbf16>
    %cst_592 = arith.constant dense<0.000000e+00> : vector<8x256xf32>
    %774 = tpu.matmul %771, %773, %cst_592 {dimension_numbers = #tpu.dot_dimension_numbers<[1], [0], [0], [1], [0, 0, 1, 1], [], []>} : vector<8x128xbf16>, vector<128x256xbf16>, vector<8x256xf32> -> vector<8x256xf32>
    %c1_593 = arith.constant 1 : index
    %c0_594 = arith.constant 0 : index
    %c0_595 = arith.constant 0 : index
    %775 = vector.load %arg22[%c1_593, %c0_594, %c0_595] : memref<4x8x16xbf16, #tpu.memory_space<vmem>>, vector<1x8x16xbf16>
    %776 = vector.shape_cast %775 : vector<1x8x16xbf16> to vector<8x16xbf16>
    %cst_596 = arith.constant dense<0.000000e+00> : vector<8x128xf32>
    %777 = tpu.matmul %776, %767, %cst_596 {dimension_numbers = #tpu.dot_dimension_numbers<[1], [0], [0], [1], [0, 0, 1, 1], [], []>} : vector<8x16xbf16>, vector<16x128xbf16>, vector<8x128xf32> -> vector<8x128xf32>
    %778 = arith.truncf %777 : vector<8x128xf32> to vector<8x128xbf16>
    %c1_597 = arith.constant 1 : index
    %c0_598 = arith.constant 0 : index
    %c0_599 = arith.constant 0 : index
    %779 = vector.load %arg8[%c1_597, %c0_598, %c0_599] : memref<4x128x256xbf16, #tpu.memory_space<vmem>>, vector<1x128x256xbf16>
    %780 = vector.shape_cast %779 : vector<1x128x256xbf16> to vector<128x256xbf16>
    %cst_600 = arith.constant dense<0.000000e+00> : vector<8x256xf32>
    %781 = tpu.matmul %778, %780, %cst_600 {dimension_numbers = #tpu.dot_dimension_numbers<[1], [0], [0], [1], [0, 0, 1, 1], [], []>} : vector<8x128xbf16>, vector<128x256xbf16>, vector<8x256xf32> -> vector<8x256xf32>
    %782 = arith.addf %774, %781 : vector<8x256xf32>
    %c2_601 = arith.constant 2 : index
    %c0_602 = arith.constant 0 : index
    %c0_603 = arith.constant 0 : index
    %783 = vector.load %arg22[%c2_601, %c0_602, %c0_603] : memref<4x8x16xbf16, #tpu.memory_space<vmem>>, vector<1x8x16xbf16>
    %784 = vector.shape_cast %783 : vector<1x8x16xbf16> to vector<8x16xbf16>
    %cst_604 = arith.constant dense<0.000000e+00> : vector<8x128xf32>
    %785 = tpu.matmul %784, %767, %cst_604 {dimension_numbers = #tpu.dot_dimension_numbers<[1], [0], [0], [1], [0, 0, 1, 1], [], []>} : vector<8x16xbf16>, vector<16x128xbf16>, vector<8x128xf32> -> vector<8x128xf32>
    %786 = arith.truncf %785 : vector<8x128xf32> to vector<8x128xbf16>
    %c2_605 = arith.constant 2 : index
    %c0_606 = arith.constant 0 : index
    %c0_607 = arith.constant 0 : index
    %787 = vector.load %arg8[%c2_605, %c0_606, %c0_607] : memref<4x128x256xbf16, #tpu.memory_space<vmem>>, vector<1x128x256xbf16>
    %788 = vector.shape_cast %787 : vector<1x128x256xbf16> to vector<128x256xbf16>
    %cst_608 = arith.constant dense<0.000000e+00> : vector<8x256xf32>
    %789 = tpu.matmul %786, %788, %cst_608 {dimension_numbers = #tpu.dot_dimension_numbers<[1], [0], [0], [1], [0, 0, 1, 1], [], []>} : vector<8x128xbf16>, vector<128x256xbf16>, vector<8x256xf32> -> vector<8x256xf32>
    %790 = arith.addf %782, %789 : vector<8x256xf32>
    %c3_609 = arith.constant 3 : index
    %c0_610 = arith.constant 0 : index
    %c0_611 = arith.constant 0 : index
    %791 = vector.load %arg22[%c3_609, %c0_610, %c0_611] : memref<4x8x16xbf16, #tpu.memory_space<vmem>>, vector<1x8x16xbf16>
    %792 = vector.shape_cast %791 : vector<1x8x16xbf16> to vector<8x16xbf16>
    %cst_612 = arith.constant dense<0.000000e+00> : vector<8x128xf32>
    %793 = tpu.matmul %792, %767, %cst_612 {dimension_numbers = #tpu.dot_dimension_numbers<[1], [0], [0], [1], [0, 0, 1, 1], [], []>} : vector<8x16xbf16>, vector<16x128xbf16>, vector<8x128xf32> -> vector<8x128xf32>
    %794 = arith.truncf %793 : vector<8x128xf32> to vector<8x128xbf16>
    %c3_613 = arith.constant 3 : index
    %c0_614 = arith.constant 0 : index
    %c0_615 = arith.constant 0 : index
    %795 = vector.load %arg8[%c3_613, %c0_614, %c0_615] : memref<4x128x256xbf16, #tpu.memory_space<vmem>>, vector<1x128x256xbf16>
    %796 = vector.shape_cast %795 : vector<1x128x256xbf16> to vector<128x256xbf16>
    %cst_616 = arith.constant dense<0.000000e+00> : vector<8x256xf32>
    %797 = tpu.matmul %794, %796, %cst_616 {dimension_numbers = #tpu.dot_dimension_numbers<[1], [0], [0], [1], [0, 0, 1, 1], [], []>} : vector<8x128xbf16>, vector<128x256xbf16>, vector<8x256xf32> -> vector<8x256xf32>
    %798 = arith.addf %790, %797 : vector<8x256xf32>
    %c0_617 = arith.constant 0 : index
    %c0_618 = arith.constant 0 : index
    %799 = vector.load %arg21[%c0_617, %c0_618] : memref<8x1xf32, #tpu.memory_space<vmem>>, vector<8x1xf32>
    %800 = vector.broadcast %799 : vector<8x1xf32> to vector<8x256xf32>
    %801 = arith.addf %798, %800 : vector<8x256xf32>
    %802 = tpu.concatenate %178, %801 in 0 : vector<8x256xf32>, vector<8x256xf32> -> vector<16x256xf32>
    %c17_i32_619 = arith.constant 17 : i32
    %803 = tpu.dynamic_rotate %802 by %c17_i32_619 dim 1 : vector<16x256xf32>, i32 -> vector<16x256xf32>
    %c0_620 = arith.constant 0 : index
    %c0_621 = arith.constant 0 : index
    %c0_622 = arith.constant 0 : index
    %804 = vector.load %arg2[%c0_620, %c0_621, %c0_622] : memref<8x1x256xf32, #tpu.memory_space<vmem>>, vector<1x1x256xf32>
    %805 = vector.shape_cast %804 : vector<1x1x256xf32> to vector<1x256xf32>
    %806 = vector.broadcast %805 : vector<1x256xf32> to vector<16x256xf32>
    %807 = arith.mulf %803, %806 : vector<16x256xf32>
    %c0_623 = arith.constant 0 : index
    %c0_624 = arith.constant 0 : index
    %c0_625 = arith.constant 0 : index
    %808 = vector.load %arg23[%c0_623, %c0_624, %c0_625] : memref<9x8x16xbf16, #tpu.memory_space<vmem>>, vector<1x8x16xbf16>
    %809 = vector.shape_cast %808 : vector<1x8x16xbf16> to vector<8x16xbf16>
    %810 = arith.truncf %807 : vector<16x256xf32> to vector<16x256xbf16>
    %cst_626 = arith.constant dense<0.000000e+00> : vector<8x256xf32>
    %811 = tpu.matmul %809, %810, %cst_626 {dimension_numbers = #tpu.dot_dimension_numbers<[1], [0], [0], [1], [0, 0, 1, 1], [], []>} : vector<8x16xbf16>, vector<16x256xbf16>, vector<8x256xf32> -> vector<8x256xf32>
    %c16_i32_627 = arith.constant 16 : i32
    %812 = tpu.dynamic_rotate %802 by %c16_i32_627 dim 1 : vector<16x256xf32>, i32 -> vector<16x256xf32>
    %c1_628 = arith.constant 1 : index
    %c0_629 = arith.constant 0 : index
    %c0_630 = arith.constant 0 : index
    %813 = vector.load %arg2[%c1_628, %c0_629, %c0_630] : memref<8x1x256xf32, #tpu.memory_space<vmem>>, vector<1x1x256xf32>
    %814 = vector.shape_cast %813 : vector<1x1x256xf32> to vector<1x256xf32>
    %815 = vector.broadcast %814 : vector<1x256xf32> to vector<16x256xf32>
    %816 = arith.mulf %812, %815 : vector<16x256xf32>
    %c1_631 = arith.constant 1 : index
    %c0_632 = arith.constant 0 : index
    %c0_633 = arith.constant 0 : index
    %817 = vector.load %arg23[%c1_631, %c0_632, %c0_633] : memref<9x8x16xbf16, #tpu.memory_space<vmem>>, vector<1x8x16xbf16>
    %818 = vector.shape_cast %817 : vector<1x8x16xbf16> to vector<8x16xbf16>
    %819 = arith.truncf %816 : vector<16x256xf32> to vector<16x256xbf16>
    %cst_634 = arith.constant dense<0.000000e+00> : vector<8x256xf32>
    %820 = tpu.matmul %818, %819, %cst_634 {dimension_numbers = #tpu.dot_dimension_numbers<[1], [0], [0], [1], [0, 0, 1, 1], [], []>} : vector<8x16xbf16>, vector<16x256xbf16>, vector<8x256xf32> -> vector<8x256xf32>
    %821 = arith.addf %811, %820 : vector<8x256xf32>
    %c15_i32_635 = arith.constant 15 : i32
    %822 = tpu.dynamic_rotate %802 by %c15_i32_635 dim 1 : vector<16x256xf32>, i32 -> vector<16x256xf32>
    %c2_636 = arith.constant 2 : index
    %c0_637 = arith.constant 0 : index
    %c0_638 = arith.constant 0 : index
    %823 = vector.load %arg2[%c2_636, %c0_637, %c0_638] : memref<8x1x256xf32, #tpu.memory_space<vmem>>, vector<1x1x256xf32>
    %824 = vector.shape_cast %823 : vector<1x1x256xf32> to vector<1x256xf32>
    %825 = vector.broadcast %824 : vector<1x256xf32> to vector<16x256xf32>
    %826 = arith.mulf %822, %825 : vector<16x256xf32>
    %c2_639 = arith.constant 2 : index
    %c0_640 = arith.constant 0 : index
    %c0_641 = arith.constant 0 : index
    %827 = vector.load %arg23[%c2_639, %c0_640, %c0_641] : memref<9x8x16xbf16, #tpu.memory_space<vmem>>, vector<1x8x16xbf16>
    %828 = vector.shape_cast %827 : vector<1x8x16xbf16> to vector<8x16xbf16>
    %829 = arith.truncf %826 : vector<16x256xf32> to vector<16x256xbf16>
    %cst_642 = arith.constant dense<0.000000e+00> : vector<8x256xf32>
    %830 = tpu.matmul %828, %829, %cst_642 {dimension_numbers = #tpu.dot_dimension_numbers<[1], [0], [0], [1], [0, 0, 1, 1], [], []>} : vector<8x16xbf16>, vector<16x256xbf16>, vector<8x256xf32> -> vector<8x256xf32>
    %831 = arith.addf %821, %830 : vector<8x256xf32>
    %c1_i32_643 = arith.constant 1 : i32
    %832 = tpu.dynamic_rotate %802 by %c1_i32_643 dim 1 : vector<16x256xf32>, i32 -> vector<16x256xf32>
    %c3_644 = arith.constant 3 : index
    %c0_645 = arith.constant 0 : index
    %c0_646 = arith.constant 0 : index
    %833 = vector.load %arg2[%c3_644, %c0_645, %c0_646] : memref<8x1x256xf32, #tpu.memory_space<vmem>>, vector<1x1x256xf32>
    %834 = vector.shape_cast %833 : vector<1x1x256xf32> to vector<1x256xf32>
    %835 = vector.broadcast %834 : vector<1x256xf32> to vector<16x256xf32>
    %836 = arith.mulf %832, %835 : vector<16x256xf32>
    %c3_647 = arith.constant 3 : index
    %c0_648 = arith.constant 0 : index
    %c0_649 = arith.constant 0 : index
    %837 = vector.load %arg23[%c3_647, %c0_648, %c0_649] : memref<9x8x16xbf16, #tpu.memory_space<vmem>>, vector<1x8x16xbf16>
    %838 = vector.shape_cast %837 : vector<1x8x16xbf16> to vector<8x16xbf16>
    %839 = arith.truncf %836 : vector<16x256xf32> to vector<16x256xbf16>
    %cst_650 = arith.constant dense<0.000000e+00> : vector<8x256xf32>
    %840 = tpu.matmul %838, %839, %cst_650 {dimension_numbers = #tpu.dot_dimension_numbers<[1], [0], [0], [1], [0, 0, 1, 1], [], []>} : vector<8x16xbf16>, vector<16x256xbf16>, vector<8x256xf32> -> vector<8x256xf32>
    %841 = arith.addf %831, %840 : vector<8x256xf32>
    %c4_651 = arith.constant 4 : index
    %c0_652 = arith.constant 0 : index
    %c0_653 = arith.constant 0 : index
    %842 = vector.load %arg23[%c4_651, %c0_652, %c0_653] : memref<9x8x16xbf16, #tpu.memory_space<vmem>>, vector<1x8x16xbf16>
    %843 = vector.shape_cast %842 : vector<1x8x16xbf16> to vector<8x16xbf16>
    %844 = arith.truncf %802 : vector<16x256xf32> to vector<16x256xbf16>
    %cst_654 = arith.constant dense<0.000000e+00> : vector<8x256xf32>
    %845 = tpu.matmul %843, %844, %cst_654 {dimension_numbers = #tpu.dot_dimension_numbers<[1], [0], [0], [1], [0, 0, 1, 1], [], []>} : vector<8x16xbf16>, vector<16x256xbf16>, vector<8x256xf32> -> vector<8x256xf32>
    %846 = arith.addf %841, %845 : vector<8x256xf32>
    %c255_i32_655 = arith.constant 255 : i32
    %847 = tpu.dynamic_rotate %802 by %c255_i32_655 dim 1 : vector<16x256xf32>, i32 -> vector<16x256xf32>
    %c4_656 = arith.constant 4 : index
    %c0_657 = arith.constant 0 : index
    %c0_658 = arith.constant 0 : index
    %848 = vector.load %arg2[%c4_656, %c0_657, %c0_658] : memref<8x1x256xf32, #tpu.memory_space<vmem>>, vector<1x1x256xf32>
    %849 = vector.shape_cast %848 : vector<1x1x256xf32> to vector<1x256xf32>
    %850 = vector.broadcast %849 : vector<1x256xf32> to vector<16x256xf32>
    %851 = arith.mulf %847, %850 : vector<16x256xf32>
    %c5_659 = arith.constant 5 : index
    %c0_660 = arith.constant 0 : index
    %c0_661 = arith.constant 0 : index
    %852 = vector.load %arg23[%c5_659, %c0_660, %c0_661] : memref<9x8x16xbf16, #tpu.memory_space<vmem>>, vector<1x8x16xbf16>
    %853 = vector.shape_cast %852 : vector<1x8x16xbf16> to vector<8x16xbf16>
    %854 = arith.truncf %851 : vector<16x256xf32> to vector<16x256xbf16>
    %cst_662 = arith.constant dense<0.000000e+00> : vector<8x256xf32>
    %855 = tpu.matmul %853, %854, %cst_662 {dimension_numbers = #tpu.dot_dimension_numbers<[1], [0], [0], [1], [0, 0, 1, 1], [], []>} : vector<8x16xbf16>, vector<16x256xbf16>, vector<8x256xf32> -> vector<8x256xf32>
    %856 = arith.addf %846, %855 : vector<8x256xf32>
    %c241_i32_663 = arith.constant 241 : i32
    %857 = tpu.dynamic_rotate %802 by %c241_i32_663 dim 1 : vector<16x256xf32>, i32 -> vector<16x256xf32>
    %c5_664 = arith.constant 5 : index
    %c0_665 = arith.constant 0 : index
    %c0_666 = arith.constant 0 : index
    %858 = vector.load %arg2[%c5_664, %c0_665, %c0_666] : memref<8x1x256xf32, #tpu.memory_space<vmem>>, vector<1x1x256xf32>
    %859 = vector.shape_cast %858 : vector<1x1x256xf32> to vector<1x256xf32>
    %860 = vector.broadcast %859 : vector<1x256xf32> to vector<16x256xf32>
    %861 = arith.mulf %857, %860 : vector<16x256xf32>
    %c6_667 = arith.constant 6 : index
    %c0_668 = arith.constant 0 : index
    %c0_669 = arith.constant 0 : index
    %862 = vector.load %arg23[%c6_667, %c0_668, %c0_669] : memref<9x8x16xbf16, #tpu.memory_space<vmem>>, vector<1x8x16xbf16>
    %863 = vector.shape_cast %862 : vector<1x8x16xbf16> to vector<8x16xbf16>
    %864 = arith.truncf %861 : vector<16x256xf32> to vector<16x256xbf16>
    %cst_670 = arith.constant dense<0.000000e+00> : vector<8x256xf32>
    %865 = tpu.matmul %863, %864, %cst_670 {dimension_numbers = #tpu.dot_dimension_numbers<[1], [0], [0], [1], [0, 0, 1, 1], [], []>} : vector<8x16xbf16>, vector<16x256xbf16>, vector<8x256xf32> -> vector<8x256xf32>
    %866 = arith.addf %856, %865 : vector<8x256xf32>
    %c240_i32_671 = arith.constant 240 : i32
    %867 = tpu.dynamic_rotate %802 by %c240_i32_671 dim 1 : vector<16x256xf32>, i32 -> vector<16x256xf32>
    %c6_672 = arith.constant 6 : index
    %c0_673 = arith.constant 0 : index
    %c0_674 = arith.constant 0 : index
    %868 = vector.load %arg2[%c6_672, %c0_673, %c0_674] : memref<8x1x256xf32, #tpu.memory_space<vmem>>, vector<1x1x256xf32>
    %869 = vector.shape_cast %868 : vector<1x1x256xf32> to vector<1x256xf32>
    %870 = vector.broadcast %869 : vector<1x256xf32> to vector<16x256xf32>
    %871 = arith.mulf %867, %870 : vector<16x256xf32>
    %c7_675 = arith.constant 7 : index
    %c0_676 = arith.constant 0 : index
    %c0_677 = arith.constant 0 : index
    %872 = vector.load %arg23[%c7_675, %c0_676, %c0_677] : memref<9x8x16xbf16, #tpu.memory_space<vmem>>, vector<1x8x16xbf16>
    %873 = vector.shape_cast %872 : vector<1x8x16xbf16> to vector<8x16xbf16>
    %874 = arith.truncf %871 : vector<16x256xf32> to vector<16x256xbf16>
    %cst_678 = arith.constant dense<0.000000e+00> : vector<8x256xf32>
    %875 = tpu.matmul %873, %874, %cst_678 {dimension_numbers = #tpu.dot_dimension_numbers<[1], [0], [0], [1], [0, 0, 1, 1], [], []>} : vector<8x16xbf16>, vector<16x256xbf16>, vector<8x256xf32> -> vector<8x256xf32>
    %876 = arith.addf %866, %875 : vector<8x256xf32>
    %c239_i32_679 = arith.constant 239 : i32
    %877 = tpu.dynamic_rotate %802 by %c239_i32_679 dim 1 : vector<16x256xf32>, i32 -> vector<16x256xf32>
    %c7_680 = arith.constant 7 : index
    %c0_681 = arith.constant 0 : index
    %c0_682 = arith.constant 0 : index
    %878 = vector.load %arg2[%c7_680, %c0_681, %c0_682] : memref<8x1x256xf32, #tpu.memory_space<vmem>>, vector<1x1x256xf32>
    %879 = vector.shape_cast %878 : vector<1x1x256xf32> to vector<1x256xf32>
    %880 = vector.broadcast %879 : vector<1x256xf32> to vector<16x256xf32>
    %881 = arith.mulf %877, %880 : vector<16x256xf32>
    %c8_683 = arith.constant 8 : index
    %c0_684 = arith.constant 0 : index
    %c0_685 = arith.constant 0 : index
    %882 = vector.load %arg23[%c8_683, %c0_684, %c0_685] : memref<9x8x16xbf16, #tpu.memory_space<vmem>>, vector<1x8x16xbf16>
    %883 = vector.shape_cast %882 : vector<1x8x16xbf16> to vector<8x16xbf16>
    %884 = arith.truncf %881 : vector<16x256xf32> to vector<16x256xbf16>
    %cst_686 = arith.constant dense<0.000000e+00> : vector<8x256xf32>
    %885 = tpu.matmul %883, %884, %cst_686 {dimension_numbers = #tpu.dot_dimension_numbers<[1], [0], [0], [1], [0, 0, 1, 1], [], []>} : vector<8x16xbf16>, vector<16x256xbf16>, vector<8x256xf32> -> vector<8x256xf32>
    %886 = arith.addf %876, %885 : vector<8x256xf32>
    %c0_687 = arith.constant 0 : index
    %c0_688 = arith.constant 0 : index
    %887 = vector.load %arg19[%c0_687, %c0_688] : memref<8x1xf32, #tpu.memory_space<vmem>>, vector<8x1xf32>
    %888 = vector.broadcast %887 : vector<8x1xf32> to vector<8x256xf32>
    %889 = arith.addf %886, %888 : vector<8x256xf32>
    %cst_689 = arith.constant 0.000000e+00 : f32
    %890 = vector.broadcast %cst_689 : f32 to vector<8x256xf32>
    %891 = arith.maximumf %889, %890 : vector<8x256xf32>
    %c17_i32_690 = arith.constant 17 : i32
    %892 = tpu.dynamic_rotate %891 by %c17_i32_690 dim 1 : vector<8x256xf32>, i32 -> vector<8x256xf32>
    %c0_691 = arith.constant 0 : index
    %c0_692 = arith.constant 0 : index
    %c0_693 = arith.constant 0 : index
    %893 = vector.load %arg2[%c0_691, %c0_692, %c0_693] : memref<8x1x256xf32, #tpu.memory_space<vmem>>, vector<1x1x256xf32>
    %894 = vector.shape_cast %893 : vector<1x1x256xf32> to vector<1x256xf32>
    %895 = vector.broadcast %894 : vector<1x256xf32> to vector<8x256xf32>
    %896 = arith.mulf %892, %895 : vector<8x256xf32>
    %c0_694 = arith.constant 0 : index
    %c0_695 = arith.constant 0 : index
    %c0_696 = arith.constant 0 : index
    %897 = vector.load %arg24[%c0_694, %c0_695, %c0_696] : memref<9x8x8xbf16, #tpu.memory_space<vmem>>, vector<1x8x8xbf16>
    %898 = vector.shape_cast %897 : vector<1x8x8xbf16> to vector<8x8xbf16>
    %899 = arith.truncf %896 : vector<8x256xf32> to vector<8x256xbf16>
    %cst_697 = arith.constant dense<0.000000e+00> : vector<8x256xf32>
    %900 = tpu.matmul %898, %899, %cst_697 {dimension_numbers = #tpu.dot_dimension_numbers<[1], [0], [0], [1], [0, 0, 1, 1], [], []>} : vector<8x8xbf16>, vector<8x256xbf16>, vector<8x256xf32> -> vector<8x256xf32>
    %c16_i32_698 = arith.constant 16 : i32
    %901 = tpu.dynamic_rotate %891 by %c16_i32_698 dim 1 : vector<8x256xf32>, i32 -> vector<8x256xf32>
    %c1_699 = arith.constant 1 : index
    %c0_700 = arith.constant 0 : index
    %c0_701 = arith.constant 0 : index
    %902 = vector.load %arg2[%c1_699, %c0_700, %c0_701] : memref<8x1x256xf32, #tpu.memory_space<vmem>>, vector<1x1x256xf32>
    %903 = vector.shape_cast %902 : vector<1x1x256xf32> to vector<1x256xf32>
    %904 = vector.broadcast %903 : vector<1x256xf32> to vector<8x256xf32>
    %905 = arith.mulf %901, %904 : vector<8x256xf32>
    %c1_702 = arith.constant 1 : index
    %c0_703 = arith.constant 0 : index
    %c0_704 = arith.constant 0 : index
    %906 = vector.load %arg24[%c1_702, %c0_703, %c0_704] : memref<9x8x8xbf16, #tpu.memory_space<vmem>>, vector<1x8x8xbf16>
    %907 = vector.shape_cast %906 : vector<1x8x8xbf16> to vector<8x8xbf16>
    %908 = arith.truncf %905 : vector<8x256xf32> to vector<8x256xbf16>
    %cst_705 = arith.constant dense<0.000000e+00> : vector<8x256xf32>
    %909 = tpu.matmul %907, %908, %cst_705 {dimension_numbers = #tpu.dot_dimension_numbers<[1], [0], [0], [1], [0, 0, 1, 1], [], []>} : vector<8x8xbf16>, vector<8x256xbf16>, vector<8x256xf32> -> vector<8x256xf32>
    %910 = arith.addf %900, %909 : vector<8x256xf32>
    %c15_i32_706 = arith.constant 15 : i32
    %911 = tpu.dynamic_rotate %891 by %c15_i32_706 dim 1 : vector<8x256xf32>, i32 -> vector<8x256xf32>
    %c2_707 = arith.constant 2 : index
    %c0_708 = arith.constant 0 : index
    %c0_709 = arith.constant 0 : index
    %912 = vector.load %arg2[%c2_707, %c0_708, %c0_709] : memref<8x1x256xf32, #tpu.memory_space<vmem>>, vector<1x1x256xf32>
    %913 = vector.shape_cast %912 : vector<1x1x256xf32> to vector<1x256xf32>
    %914 = vector.broadcast %913 : vector<1x256xf32> to vector<8x256xf32>
    %915 = arith.mulf %911, %914 : vector<8x256xf32>
    %c2_710 = arith.constant 2 : index
    %c0_711 = arith.constant 0 : index
    %c0_712 = arith.constant 0 : index
    %916 = vector.load %arg24[%c2_710, %c0_711, %c0_712] : memref<9x8x8xbf16, #tpu.memory_space<vmem>>, vector<1x8x8xbf16>
    %917 = vector.shape_cast %916 : vector<1x8x8xbf16> to vector<8x8xbf16>
    %918 = arith.truncf %915 : vector<8x256xf32> to vector<8x256xbf16>
    %cst_713 = arith.constant dense<0.000000e+00> : vector<8x256xf32>
    %919 = tpu.matmul %917, %918, %cst_713 {dimension_numbers = #tpu.dot_dimension_numbers<[1], [0], [0], [1], [0, 0, 1, 1], [], []>} : vector<8x8xbf16>, vector<8x256xbf16>, vector<8x256xf32> -> vector<8x256xf32>
    %920 = arith.addf %910, %919 : vector<8x256xf32>
    %c1_i32_714 = arith.constant 1 : i32
    %921 = tpu.dynamic_rotate %891 by %c1_i32_714 dim 1 : vector<8x256xf32>, i32 -> vector<8x256xf32>
    %c3_715 = arith.constant 3 : index
    %c0_716 = arith.constant 0 : index
    %c0_717 = arith.constant 0 : index
    %922 = vector.load %arg2[%c3_715, %c0_716, %c0_717] : memref<8x1x256xf32, #tpu.memory_space<vmem>>, vector<1x1x256xf32>
    %923 = vector.shape_cast %922 : vector<1x1x256xf32> to vector<1x256xf32>
    %924 = vector.broadcast %923 : vector<1x256xf32> to vector<8x256xf32>
    %925 = arith.mulf %921, %924 : vector<8x256xf32>
    %c3_718 = arith.constant 3 : index
    %c0_719 = arith.constant 0 : index
    %c0_720 = arith.constant 0 : index
    %926 = vector.load %arg24[%c3_718, %c0_719, %c0_720] : memref<9x8x8xbf16, #tpu.memory_space<vmem>>, vector<1x8x8xbf16>
    %927 = vector.shape_cast %926 : vector<1x8x8xbf16> to vector<8x8xbf16>
    %928 = arith.truncf %925 : vector<8x256xf32> to vector<8x256xbf16>
    %cst_721 = arith.constant dense<0.000000e+00> : vector<8x256xf32>
    %929 = tpu.matmul %927, %928, %cst_721 {dimension_numbers = #tpu.dot_dimension_numbers<[1], [0], [0], [1], [0, 0, 1, 1], [], []>} : vector<8x8xbf16>, vector<8x256xbf16>, vector<8x256xf32> -> vector<8x256xf32>
    %930 = arith.addf %920, %929 : vector<8x256xf32>
    %c4_722 = arith.constant 4 : index
    %c0_723 = arith.constant 0 : index
    %c0_724 = arith.constant 0 : index
    %931 = vector.load %arg24[%c4_722, %c0_723, %c0_724] : memref<9x8x8xbf16, #tpu.memory_space<vmem>>, vector<1x8x8xbf16>
    %932 = vector.shape_cast %931 : vector<1x8x8xbf16> to vector<8x8xbf16>
    %933 = arith.truncf %891 : vector<8x256xf32> to vector<8x256xbf16>
    %cst_725 = arith.constant dense<0.000000e+00> : vector<8x256xf32>
    %934 = tpu.matmul %932, %933, %cst_725 {dimension_numbers = #tpu.dot_dimension_numbers<[1], [0], [0], [1], [0, 0, 1, 1], [], []>} : vector<8x8xbf16>, vector<8x256xbf16>, vector<8x256xf32> -> vector<8x256xf32>
    %935 = arith.addf %930, %934 : vector<8x256xf32>
    %c255_i32_726 = arith.constant 255 : i32
    %936 = tpu.dynamic_rotate %891 by %c255_i32_726 dim 1 : vector<8x256xf32>, i32 -> vector<8x256xf32>
    %c4_727 = arith.constant 4 : index
    %c0_728 = arith.constant 0 : index
    %c0_729 = arith.constant 0 : index
    %937 = vector.load %arg2[%c4_727, %c0_728, %c0_729] : memref<8x1x256xf32, #tpu.memory_space<vmem>>, vector<1x1x256xf32>
    %938 = vector.shape_cast %937 : vector<1x1x256xf32> to vector<1x256xf32>
    %939 = vector.broadcast %938 : vector<1x256xf32> to vector<8x256xf32>
    %940 = arith.mulf %936, %939 : vector<8x256xf32>
    %c5_730 = arith.constant 5 : index
    %c0_731 = arith.constant 0 : index
    %c0_732 = arith.constant 0 : index
    %941 = vector.load %arg24[%c5_730, %c0_731, %c0_732] : memref<9x8x8xbf16, #tpu.memory_space<vmem>>, vector<1x8x8xbf16>
    %942 = vector.shape_cast %941 : vector<1x8x8xbf16> to vector<8x8xbf16>
    %943 = arith.truncf %940 : vector<8x256xf32> to vector<8x256xbf16>
    %cst_733 = arith.constant dense<0.000000e+00> : vector<8x256xf32>
    %944 = tpu.matmul %942, %943, %cst_733 {dimension_numbers = #tpu.dot_dimension_numbers<[1], [0], [0], [1], [0, 0, 1, 1], [], []>} : vector<8x8xbf16>, vector<8x256xbf16>, vector<8x256xf32> -> vector<8x256xf32>
    %945 = arith.addf %935, %944 : vector<8x256xf32>
    %c241_i32_734 = arith.constant 241 : i32
    %946 = tpu.dynamic_rotate %891 by %c241_i32_734 dim 1 : vector<8x256xf32>, i32 -> vector<8x256xf32>
    %c5_735 = arith.constant 5 : index
    %c0_736 = arith.constant 0 : index
    %c0_737 = arith.constant 0 : index
    %947 = vector.load %arg2[%c5_735, %c0_736, %c0_737] : memref<8x1x256xf32, #tpu.memory_space<vmem>>, vector<1x1x256xf32>
    %948 = vector.shape_cast %947 : vector<1x1x256xf32> to vector<1x256xf32>
    %949 = vector.broadcast %948 : vector<1x256xf32> to vector<8x256xf32>
    %950 = arith.mulf %946, %949 : vector<8x256xf32>
    %c6_738 = arith.constant 6 : index
    %c0_739 = arith.constant 0 : index
    %c0_740 = arith.constant 0 : index
    %951 = vector.load %arg24[%c6_738, %c0_739, %c0_740] : memref<9x8x8xbf16, #tpu.memory_space<vmem>>, vector<1x8x8xbf16>
    %952 = vector.shape_cast %951 : vector<1x8x8xbf16> to vector<8x8xbf16>
    %953 = arith.truncf %950 : vector<8x256xf32> to vector<8x256xbf16>
    %cst_741 = arith.constant dense<0.000000e+00> : vector<8x256xf32>
    %954 = tpu.matmul %952, %953, %cst_741 {dimension_numbers = #tpu.dot_dimension_numbers<[1], [0], [0], [1], [0, 0, 1, 1], [], []>} : vector<8x8xbf16>, vector<8x256xbf16>, vector<8x256xf32> -> vector<8x256xf32>
    %955 = arith.addf %945, %954 : vector<8x256xf32>
    %c240_i32_742 = arith.constant 240 : i32
    %956 = tpu.dynamic_rotate %891 by %c240_i32_742 dim 1 : vector<8x256xf32>, i32 -> vector<8x256xf32>
    %c6_743 = arith.constant 6 : index
    %c0_744 = arith.constant 0 : index
    %c0_745 = arith.constant 0 : index
    %957 = vector.load %arg2[%c6_743, %c0_744, %c0_745] : memref<8x1x256xf32, #tpu.memory_space<vmem>>, vector<1x1x256xf32>
    %958 = vector.shape_cast %957 : vector<1x1x256xf32> to vector<1x256xf32>
    %959 = vector.broadcast %958 : vector<1x256xf32> to vector<8x256xf32>
    %960 = arith.mulf %956, %959 : vector<8x256xf32>
    %c7_746 = arith.constant 7 : index
    %c0_747 = arith.constant 0 : index
    %c0_748 = arith.constant 0 : index
    %961 = vector.load %arg24[%c7_746, %c0_747, %c0_748] : memref<9x8x8xbf16, #tpu.memory_space<vmem>>, vector<1x8x8xbf16>
    %962 = vector.shape_cast %961 : vector<1x8x8xbf16> to vector<8x8xbf16>
    %963 = arith.truncf %960 : vector<8x256xf32> to vector<8x256xbf16>
    %cst_749 = arith.constant dense<0.000000e+00> : vector<8x256xf32>
    %964 = tpu.matmul %962, %963, %cst_749 {dimension_numbers = #tpu.dot_dimension_numbers<[1], [0], [0], [1], [0, 0, 1, 1], [], []>} : vector<8x8xbf16>, vector<8x256xbf16>, vector<8x256xf32> -> vector<8x256xf32>
    %965 = arith.addf %955, %964 : vector<8x256xf32>
    %c239_i32_750 = arith.constant 239 : i32
    %966 = tpu.dynamic_rotate %891 by %c239_i32_750 dim 1 : vector<8x256xf32>, i32 -> vector<8x256xf32>
    %c7_751 = arith.constant 7 : index
    %c0_752 = arith.constant 0 : index
    %c0_753 = arith.constant 0 : index
    %967 = vector.load %arg2[%c7_751, %c0_752, %c0_753] : memref<8x1x256xf32, #tpu.memory_space<vmem>>, vector<1x1x256xf32>
    %968 = vector.shape_cast %967 : vector<1x1x256xf32> to vector<1x256xf32>
    %969 = vector.broadcast %968 : vector<1x256xf32> to vector<8x256xf32>
    %970 = arith.mulf %966, %969 : vector<8x256xf32>
    %c8_754 = arith.constant 8 : index
    %c0_755 = arith.constant 0 : index
    %c0_756 = arith.constant 0 : index
    %971 = vector.load %arg24[%c8_754, %c0_755, %c0_756] : memref<9x8x8xbf16, #tpu.memory_space<vmem>>, vector<1x8x8xbf16>
    %972 = vector.shape_cast %971 : vector<1x8x8xbf16> to vector<8x8xbf16>
    %973 = arith.truncf %970 : vector<8x256xf32> to vector<8x256xbf16>
    %cst_757 = arith.constant dense<0.000000e+00> : vector<8x256xf32>
    %974 = tpu.matmul %972, %973, %cst_757 {dimension_numbers = #tpu.dot_dimension_numbers<[1], [0], [0], [1], [0, 0, 1, 1], [], []>} : vector<8x8xbf16>, vector<8x256xbf16>, vector<8x256xf32> -> vector<8x256xf32>
    %975 = arith.addf %965, %974 : vector<8x256xf32>
    %c0_758 = arith.constant 0 : index
    %c0_759 = arith.constant 0 : index
    %976 = vector.load %arg20[%c0_758, %c0_759] : memref<8x1xf32, #tpu.memory_space<vmem>>, vector<8x1xf32>
    %977 = vector.broadcast %976 : vector<8x1xf32> to vector<8x256xf32>
    %978 = arith.addf %975, %977 : vector<8x256xf32>
    %cst_760 = arith.constant 0.000000e+00 : f32
    %979 = vector.broadcast %cst_760 : f32 to vector<8x256xf32>
    %980 = arith.maximumf %978, %979 : vector<8x256xf32>
    %c0_761 = arith.constant 0 : index
    %c0_762 = arith.constant 0 : index
    %981 = vector.load %arg34[%c0_761, %c0_762] : memref<8x8xbf16, #tpu.memory_space<vmem>>, vector<8x8xbf16>
    %982 = arith.truncf %980 : vector<8x256xf32> to vector<8x256xbf16>
    %cst_763 = arith.constant dense<0.000000e+00> : vector<8x256xf32>
    %983 = tpu.matmul %981, %982, %cst_763 {dimension_numbers = #tpu.dot_dimension_numbers<[1], [0], [0], [1], [0, 0, 1, 1], [], []>} : vector<8x8xbf16>, vector<8x256xbf16>, vector<8x256xf32> -> vector<8x256xf32>
    %c0_764 = arith.constant 0 : index
    %c0_765 = arith.constant 0 : index
    %984 = vector.load %arg33[%c0_764, %c0_765] : memref<8x1xf32, #tpu.memory_space<vmem>>, vector<8x1xf32>
    %985 = vector.broadcast %984 : vector<8x1xf32> to vector<8x256xf32>
    %986 = arith.addf %983, %985 : vector<8x256xf32>
    %c0_766 = arith.constant 0 : index
    %c0_767 = arith.constant 0 : index
    %987 = vector.load %arg35[%c0_766, %c0_767] : memref<8x256xf32, #tpu.memory_space<vmem>>, vector<8x256xf32>
    tpu.vector_store %arg35[%c0_766, %c0_767], %986 {strides = array<i32>} : memref<8x256xf32, #tpu.memory_space<vmem>>, vector<8x256xf32>,
    return
  }
  func.func @transform_0(%arg0: i32) -> (i32, i32) {
    %c0_i32 = arith.constant 0 : i32
    %c0_i32_0 = arith.constant 0 : i32
    return %c0_i32, %arg0 : i32, i32
  }
  func.func @transform_1(%arg0: i32) -> (i32, i32, i32) {
    %c0_i32 = arith.constant 0 : i32
    %c0_i32_0 = arith.constant 0 : i32
    %c0_i32_1 = arith.constant 0 : i32
    %c0_i32_2 = arith.constant 0 : i32
    return %c0_i32, %c0_i32_0, %c0_i32_1 : i32, i32, i32
  }
  func.func @transform_2(%arg0: i32) -> (i32, i32, i32) {
    %c0_i32 = arith.constant 0 : i32
    %c0_i32_0 = arith.constant 0 : i32
    %c0_i32_1 = arith.constant 0 : i32
    %c0_i32_2 = arith.constant 0 : i32
    return %c0_i32, %c0_i32_0, %c0_i32_1 : i32, i32, i32
  }
  func.func @transform_3(%arg0: i32) -> (i32, i32, i32) {
    %c0_i32 = arith.constant 0 : i32
    %c0_i32_0 = arith.constant 0 : i32
    %c0_i32_1 = arith.constant 0 : i32
    %c0_i32_2 = arith.constant 0 : i32
    return %c0_i32, %c0_i32_0, %c0_i32_1 : i32, i32, i32
  }
  func.func @transform_4(%arg0: i32) -> (i32, i32) {
    %c0_i32 = arith.constant 0 : i32
    %c0_i32_0 = arith.constant 0 : i32
    %c0_i32_1 = arith.constant 0 : i32
    return %c0_i32, %c0_i32_0 : i32, i32
  }
  func.func @transform_5(%arg0: i32) -> (i32, i32) {
    %c0_i32 = arith.constant 0 : i32
    %c0_i32_0 = arith.constant 0 : i32
    %c0_i32_1 = arith.constant 0 : i32
    return %c0_i32, %c0_i32_0 : i32, i32
  }
  func.func @transform_6(%arg0: i32) -> (i32, i32, i32) {
    %c0_i32 = arith.constant 0 : i32
    %c0_i32_0 = arith.constant 0 : i32
    %c0_i32_1 = arith.constant 0 : i32
    %c0_i32_2 = arith.constant 0 : i32
    return %c0_i32, %c0_i32_0, %c0_i32_1 : i32, i32, i32
  }
  func.func @transform_7(%arg0: i32) -> (i32, i32, i32) {
    %c0_i32 = arith.constant 0 : i32
    %c0_i32_0 = arith.constant 0 : i32
    %c0_i32_1 = arith.constant 0 : i32
    %c0_i32_2 = arith.constant 0 : i32
    return %c0_i32, %c0_i32_0, %c0_i32_1 : i32, i32, i32
  }
  func.func @transform_8(%arg0: i32) -> (i32, i32) {
    %c0_i32 = arith.constant 0 : i32
    %c0_i32_0 = arith.constant 0 : i32
    %c0_i32_1 = arith.constant 0 : i32
    return %c0_i32, %c0_i32_0 : i32, i32
  }
  func.func @transform_9(%arg0: i32) -> (i32, i32) {
    %c0_i32 = arith.constant 0 : i32
    %c0_i32_0 = arith.constant 0 : i32
    %c0_i32_1 = arith.constant 0 : i32
    return %c0_i32, %c0_i32_0 : i32, i32
  }
  func.func @transform_10(%arg0: i32) -> (i32, i32, i32) {
    %c0_i32 = arith.constant 0 : i32
    %c0_i32_0 = arith.constant 0 : i32
    %c0_i32_1 = arith.constant 0 : i32
    %c0_i32_2 = arith.constant 0 : i32
    return %c0_i32, %c0_i32_0, %c0_i32_1 : i32, i32, i32
  }
  func.func @transform_11(%arg0: i32) -> (i32, i32, i32) {
    %c0_i32 = arith.constant 0 : i32
    %c0_i32_0 = arith.constant 0 : i32
    %c0_i32_1 = arith.constant 0 : i32
    %c0_i32_2 = arith.constant 0 : i32
    return %c0_i32, %c0_i32_0, %c0_i32_1 : i32, i32, i32
  }
  func.func @transform_12(%arg0: i32) -> (i32, i32) {
    %c0_i32 = arith.constant 0 : i32
    %c0_i32_0 = arith.constant 0 : i32
    %c0_i32_1 = arith.constant 0 : i32
    return %c0_i32, %c0_i32_0 : i32, i32
  }
  func.func @transform_13(%arg0: i32) -> (i32, i32) {
    %c0_i32 = arith.constant 0 : i32
    %c0_i32_0 = arith.constant 0 : i32
    %c0_i32_1 = arith.constant 0 : i32
    return %c0_i32, %c0_i32_0 : i32, i32
  }
  func.func @transform_14(%arg0: i32) -> (i32, i32) {
    %c0_i32 = arith.constant 0 : i32
    %c0_i32_0 = arith.constant 0 : i32
    %c0_i32_1 = arith.constant 0 : i32
    return %c0_i32, %c0_i32_0 : i32, i32
  }
  func.func @transform_15(%arg0: i32) -> (i32, i32, i32) {
    %c0_i32 = arith.constant 0 : i32
    %c0_i32_0 = arith.constant 0 : i32
    %c0_i32_1 = arith.constant 0 : i32
    %c0_i32_2 = arith.constant 0 : i32
    return %c0_i32, %c0_i32_0, %c0_i32_1 : i32, i32, i32
  }
  func.func @transform_16(%arg0: i32) -> (i32, i32, i32) {
    %c0_i32 = arith.constant 0 : i32
    %c0_i32_0 = arith.constant 0 : i32
    %c0_i32_1 = arith.constant 0 : i32
    %c0_i32_2 = arith.constant 0 : i32
    return %c0_i32, %c0_i32_0, %c0_i32_1 : i32, i32, i32
  }
  func.func @transform_17(%arg0: i32) -> (i32, i32, i32) {
    %c0_i32 = arith.constant 0 : i32
    %c0_i32_0 = arith.constant 0 : i32
    %c0_i32_1 = arith.constant 0 : i32
    %c0_i32_2 = arith.constant 0 : i32
    return %c0_i32, %c0_i32_0, %c0_i32_1 : i32, i32, i32
  }
  func.func @transform_18(%arg0: i32) -> (i32, i32) {
    %c0_i32 = arith.constant 0 : i32
    %c0_i32_0 = arith.constant 0 : i32
    %c0_i32_1 = arith.constant 0 : i32
    return %c0_i32, %c0_i32_0 : i32, i32
  }
  func.func @transform_19(%arg0: i32) -> (i32, i32) {
    %c0_i32 = arith.constant 0 : i32
    %c0_i32_0 = arith.constant 0 : i32
    %c0_i32_1 = arith.constant 0 : i32
    return %c0_i32, %c0_i32_0 : i32, i32
  }
  func.func @transform_20(%arg0: i32) -> (i32, i32) {
    %c0_i32 = arith.constant 0 : i32
    %c0_i32_0 = arith.constant 0 : i32
    %c0_i32_1 = arith.constant 0 : i32
    return %c0_i32, %c0_i32_0 : i32, i32
  }
  func.func @transform_21(%arg0: i32) -> (i32, i32, i32) {
    %c0_i32 = arith.constant 0 : i32
    %c0_i32_0 = arith.constant 0 : i32
    %c0_i32_1 = arith.constant 0 : i32
    %c0_i32_2 = arith.constant 0 : i32
    return %c0_i32, %c0_i32_0, %c0_i32_1 : i32, i32, i32
  }
  func.func @transform_22(%arg0: i32) -> (i32, i32, i32) {
    %c0_i32 = arith.constant 0 : i32
    %c0_i32_0 = arith.constant 0 : i32
    %c0_i32_1 = arith.constant 0 : i32
    %c0_i32_2 = arith.constant 0 : i32
    return %c0_i32, %c0_i32_0, %c0_i32_1 : i32, i32, i32
  }
  func.func @transform_23(%arg0: i32) -> (i32, i32, i32) {
    %c0_i32 = arith.constant 0 : i32
    %c0_i32_0 = arith.constant 0 : i32
    %c0_i32_1 = arith.constant 0 : i32
    %c0_i32_2 = arith.constant 0 : i32
    return %c0_i32, %c0_i32_0, %c0_i32_1 : i32, i32, i32
  }
  func.func @transform_24(%arg0: i32) -> (i32, i32) {
    %c0_i32 = arith.constant 0 : i32
    %c0_i32_0 = arith.constant 0 : i32
    %c0_i32_1 = arith.constant 0 : i32
    return %c0_i32, %c0_i32_0 : i32, i32
  }
  func.func @transform_25(%arg0: i32) -> (i32, i32) {
    %c0_i32 = arith.constant 0 : i32
    %c0_i32_0 = arith.constant 0 : i32
    %c0_i32_1 = arith.constant 0 : i32
    return %c0_i32, %c0_i32_0 : i32, i32
  }
  func.func @transform_26(%arg0: i32) -> (i32, i32, i32) {
    %c0_i32 = arith.constant 0 : i32
    %c0_i32_0 = arith.constant 0 : i32
    %c0_i32_1 = arith.constant 0 : i32
    %c0_i32_2 = arith.constant 0 : i32
    return %c0_i32, %c0_i32_0, %c0_i32_1 : i32, i32, i32
  }
  func.func @transform_27(%arg0: i32) -> (i32, i32, i32) {
    %c0_i32 = arith.constant 0 : i32
    %c0_i32_0 = arith.constant 0 : i32
    %c0_i32_1 = arith.constant 0 : i32
    %c0_i32_2 = arith.constant 0 : i32
    return %c0_i32, %c0_i32_0, %c0_i32_1 : i32, i32, i32
  }
  func.func @transform_28(%arg0: i32) -> (i32, i32) {
    %c0_i32 = arith.constant 0 : i32
    %c0_i32_0 = arith.constant 0 : i32
    %c0_i32_1 = arith.constant 0 : i32
    return %c0_i32, %c0_i32_0 : i32, i32
  }
  func.func @transform_29(%arg0: i32) -> (i32, i32) {
    %c0_i32 = arith.constant 0 : i32
    %c0_i32_0 = arith.constant 0 : i32
    %c0_i32_1 = arith.constant 0 : i32
    return %c0_i32, %c0_i32_0 : i32, i32
  }
  func.func @transform_30(%arg0: i32) -> (i32, i32, i32) {
    %c0_i32 = arith.constant 0 : i32
    %c0_i32_0 = arith.constant 0 : i32
    %c0_i32_1 = arith.constant 0 : i32
    %c0_i32_2 = arith.constant 0 : i32
    return %c0_i32, %c0_i32_0, %c0_i32_1 : i32, i32, i32
  }
  func.func @transform_31(%arg0: i32) -> (i32, i32, i32) {
    %c0_i32 = arith.constant 0 : i32
    %c0_i32_0 = arith.constant 0 : i32
    %c0_i32_1 = arith.constant 0 : i32
    %c0_i32_2 = arith.constant 0 : i32
    return %c0_i32, %c0_i32_0, %c0_i32_1 : i32, i32, i32
  }
  func.func @transform_32(%arg0: i32) -> (i32, i32) {
    %c0_i32 = arith.constant 0 : i32
    %c0_i32_0 = arith.constant 0 : i32
    %c0_i32_1 = arith.constant 0 : i32
    return %c0_i32, %c0_i32_0 : i32, i32
  }
  func.func @transform_33(%arg0: i32) -> (i32, i32) {
    %c0_i32 = arith.constant 0 : i32
    %c0_i32_0 = arith.constant 0 : i32
    %c0_i32_1 = arith.constant 0 : i32
    return %c0_i32, %c0_i32_0 : i32, i32
  }
  func.func @transform_34(%arg0: i32) -> (i32, i32) {
    %c0_i32 = arith.constant 0 : i32
    %c0_i32_0 = arith.constant 0 : i32
    return %c0_i32, %arg0 : i32, i32
  }
}

</mosaic_0001>

<llo_original>
// kernel: unet_cae_forward.1
$region0: #{unet_cae_forward.1}
  #allocation0 [shape = 'u32[]', space=smem, size = 0x4, offset = 0x4, fixed_abs, tag = 'smem constant byte address 0x4 - core index']
  #allocation1 [shape = 'u32[72,128]{1,0:T(1,128)}', space=vmem, size = 0x9000, scoped, tag = 'internal scratch']
  %s0 = inlined_call_operand.smem [shape: u32[35], index: -1, kind: input, shape index: {}]
  %s1 = sld [smem:[%s0]]
  %s2 = scalar_lea.smem %s0, 1
  %s3 = sld [smem:[%s2]]
  %s4 = scalar_lea.smem %s0, 2
  %s5 = sld [smem:[%s4]]
  %s6 = scalar_lea.smem %s0, 3
  %s7 = sld [smem:[%s6]]
  %s8 = scalar_lea.smem %s0, 4
  %s9 = sld [smem:[%s8]]
  %s10 = scalar_lea.smem %s0, 5
  %s11 = sld [smem:[%s10]]
  %s12 = scalar_lea.smem %s0, 6
  %s13 = sld [smem:[%s12]]
  %s14 = scalar_lea.smem %s0, 7
  %s15 = sld [smem:[%s14]]
  %s16 = scalar_lea.smem %s0, 8
  %s17 = sld [smem:[%s16]]
  %s18 = scalar_lea.smem %s0, 9
  %s19 = sld [smem:[%s18]]
  %s20 = scalar_lea.smem %s0, 10
  %s21 = sld [smem:[%s20]]
  %s22 = scalar_lea.smem %s0, 11
  %s23 = sld [smem:[%s22]]
  %s24 = scalar_lea.smem %s0, 12
  %s25 = sld [smem:[%s24]]
  %s26 = scalar_lea.smem %s0, 13
  %s27 = sld [smem:[%s26]]
  %s28 = scalar_lea.smem %s0, 14
  %s29 = sld [smem:[%s28]]
  %s30 = scalar_lea.smem %s0, 15
  %s31 = sld [smem:[%s30]]
  %s32 = scalar_lea.smem %s0, 16
  %s33 = sld [smem:[%s32]]
  %s34 = scalar_lea.smem %s0, 17
  %s35 = sld [smem:[%s34]]
  %s36 = scalar_lea.smem %s0, 18
  %s37 = sld [smem:[%s36]]
  %s38 = scalar_lea.smem %s0, 19
  %s39 = sld [smem:[%s38]]
  %s40 = scalar_lea.smem %s0, 20
  %s41 = sld [smem:[%s40]]
  %s42 = scalar_lea.smem %s0, 21
  %s43 = sld [smem:[%s42]]
  %s44 = scalar_lea.smem %s0, 22
  %s45 = sld [smem:[%s44]]
  %s46 = scalar_lea.smem %s0, 23
  %s47 = sld [smem:[%s46]]
  %s48 = scalar_lea.smem %s0, 24
  %s49 = sld [smem:[%s48]]
  %s50 = scalar_lea.smem %s0, 25
  %s51 = sld [smem:[%s50]]
  %s52 = scalar_lea.smem %s0, 26
  %s53 = sld [smem:[%s52]]
  %s54 = scalar_lea.smem %s0, 27
  %s55 = sld [smem:[%s54]]
  %s56 = scalar_lea.smem %s0, 28
  %s57 = sld [smem:[%s56]]
  %s58 = scalar_lea.smem %s0, 29
  %s59 = sld [smem:[%s58]]
  %s60 = scalar_lea.smem %s0, 30
  %s61 = sld [smem:[%s60]]
  %s62 = scalar_lea.smem %s0, 31
  %s63 = sld [smem:[%s62]]
  %s64 = scalar_lea.smem %s0, 32
  %s65 = sld [smem:[%s64]]
  %s66 = scalar_lea.smem %s0, 33
  %s67 = sld [smem:[%s66]]
  %s68 = scalar_lea.smem %s0, 34
  %s69 = sld [smem:[%s68]]
  %s70 = sld [smem:[#allocation0]]
  $region205: #{unet_cae_forward.1} parent=0
    _
  %s72 = ssub.s32 1, %s70
  %s73 = scalar_select 0, %s72, %s70
  $region1: #{unet_cae_forward.1} parent=0
    #allocation2 [shape = 'u8[8192]{0}', space=vmem, size = 0x2000, scoped, tag = 'input window, operand 1, single buffered']
    #allocation3 [shape = 's32[2]{0}', space=sflag, size = 0x8, scoped, tag = 'scoped memory for unet_cae_forward.1']
    #allocation4 [shape = 'u8[4096]{0}', space=vmem, size = 0x1000, scoped, tag = 'input window, operand 2, single buffered']
    #allocation5 [shape = 's32[1]{0}', space=sflag, size = 0x4, scoped, tag = 'scoped memory for unet_cae_forward.1']
    #allocation6 [shape = 'u8[65536]{0}', space=vmem, size = 0x10000, scoped, tag = 'input window, operand 4, single buffered']
    #allocation7 [shape = 'u8[32768]{0}', space=vmem, size = 0x8000, scoped, tag = 'input window, operand 5, single buffered']
    #allocation8 [shape = 's32[1]{0}', space=sflag, size = 0x4, scoped, tag = 'scoped memory for unet_cae_forward.1']
    #allocation9 [shape = 'u8[16384]{0}', space=vmem, size = 0x4000, scoped, tag = 'input window, operand 15, single buffered']
    #allocation10 [shape = 'u8[36864]{0}', space=vmem, size = 0x9000, scoped, tag = 'input window, operand 16, single buffered']
    #allocation11 [shape = 's32[1]{0}', space=sflag, size = 0x4, scoped, tag = 'scoped memory for unet_cae_forward.1']
    #allocation12 [shape = 'u8[36864]{0}', space=vmem, size = 0x9000, scoped, tag = 'input window, operand 17, single buffered']
    #allocation13 [shape = 'u8[18432]{0}', space=vmem, size = 0x4800, scoped, tag = 'input window, operand 22, single buffered']
    #allocation14 [shape = 's32[1]{0}', space=sflag, size = 0x4, scoped, tag = 'scoped memory for unet_cae_forward.1']
    #allocation15 [shape = 'u8[36864]{0}', space=vmem, size = 0x9000, scoped, tag = 'input window, operand 31, single buffered']
    %74 = vsyncpa [#allocation3], 0
    %75 = vsyncpa [#allocation5], 0
    %76 = vsyncpa [#allocation8], 0
    %77 = vsyncpa [#allocation11], 0
    %78 = vsyncpa [#allocation14], 0
    loop: start=0, step=1, limit=4
    $region2: #{unet_cae_forward.1} parent=1 // loop_pre_header
      _
    $region3: #{unet_cae_forward.1} parent=1 // loop_header
      %s80 = sphi 0, %s84
      %p81 = scmp.ge.s32.totalorder %s80, 4
      %s90 = sphi 0, %s92
      %s93 = sphi 0, %s90
      %s94 = sphi 0, %s93
      %s110 = sphi 0, %s94
      %s114 = sphi 0, %s114
      %s116 = sphi 0, %s114
      %s117 = sphi 0, %s116
      %s131 = sphi 0, %s117
      %s135 = sphi 0, %s135
      %s137 = sphi 0, %s135
      %s138 = sphi 0, %s137
      %s152 = sphi 0, %s138
      %s156 = sphi 0, %s156
      %s158 = sphi 0, %s156
      %s159 = sphi 0, %s158
      %s173 = sphi 0, %s159
      %s177 = sphi 0, %s177
      %s179 = sphi 0, %s177
      %s180 = sphi 0, %s179
      %s194 = sphi 0, %s180
      %s198 = sphi 0, %s198
      %s200 = sphi 0, %s198
      %s201 = sphi 0, %s200
      %s215 = sphi 0, %s201
      %s219 = sphi 0, %s219
      %s221 = sphi 0, %s219
      %s222 = sphi 0, %s221
      %s236 = sphi 0, %s222
      %s240 = sphi 0, %s240
      %s242 = sphi 0, %s240
      %s243 = sphi 0, %s242
      %s257 = sphi 0, %s243
      %s261 = sphi 0, %s261
      %s263 = sphi 0, %s261
      %s264 = sphi 0, %s263
      %s278 = sphi 0, %s264
      %s282 = sphi 0, %s282
      %s284 = sphi 0, %s282
      %s285 = sphi 0, %s284
      %s299 = sphi 0, %s285
      %s303 = sphi 0, %s303
      %s305 = sphi 0, %s303
      %s306 = sphi 0, %s305
      %s320 = sphi 0, %s306
      %s324 = sphi 0, %s324
      %s326 = sphi 0, %s324
      %s327 = sphi 0, %s326
      %s341 = sphi 0, %s327
      %s345 = sphi 0, %s345
      %s347 = sphi 0, %s345
      %s348 = sphi 0, %s347
      %s362 = sphi 0, %s348
      %s366 = sphi 0, %s366
      %s368 = sphi 0, %s366
      %s369 = sphi 0, %s368
      %s383 = sphi 0, %s369
      %s387 = sphi 0, %s387
      %s389 = sphi 0, %s387
      %s390 = sphi 0, %s389
      %s404 = sphi 0, %s390
      %s408 = sphi 0, %s408
      %s410 = sphi 0, %s408
      %s411 = sphi 0, %s410
      %s425 = sphi 0, %s411
      %s429 = sphi 0, %s429
      %s431 = sphi 0, %s429
      %s432 = sphi 0, %s431
      %s446 = sphi 0, %s432
      %s450 = sphi 0, %s450
      %s452 = sphi 0, %s450
      %s453 = sphi 0, %s452
      %s467 = sphi 0, %s453
      %s471 = sphi 0, %s471
      %s473 = sphi 0, %s471
      %s474 = sphi 0, %s473
      %s488 = sphi 0, %s474
      %s492 = sphi 0, %s492
      %s494 = sphi 0, %s492
      %s495 = sphi 0, %s494
      %s509 = sphi 0, %s495
      %s513 = sphi 0, %s513
      %s515 = sphi 0, %s513
      %s516 = sphi 0, %s515
      %s530 = sphi 0, %s516
      %s534 = sphi 0, %s534
      %s536 = sphi 0, %s534
      %s537 = sphi 0, %s536
      %s551 = sphi 0, %s537
      %s555 = sphi 0, %s555
      %s557 = sphi 0, %s555
      %s558 = sphi 0, %s557
      %s572 = sphi 0, %s558
      %s576 = sphi 0, %s576
      %s578 = sphi 0, %s576
      %s579 = sphi 0, %s578
      %s593 = sphi 0, %s579
      %s597 = sphi 0, %s597
      %s599 = sphi 0, %s597
      %s600 = sphi 0, %s599
      %s614 = sphi 0, %s600
      %s618 = sphi 0, %s618
      %s620 = sphi 0, %s618
      %s621 = sphi 0, %s620
      %s635 = sphi 0, %s621
      %s639 = sphi 0, %s639
      %s641 = sphi 0, %s639
      %s642 = sphi 0, %s641
      %s656 = sphi 0, %s642
      %s660 = sphi 0, %s660
      %s662 = sphi 0, %s660
      %s663 = sphi 0, %s662
      %s677 = sphi 0, %s663
      %s681 = sphi 0, %s681
      %s683 = sphi 0, %s681
      %s684 = sphi 0, %s683
      %s698 = sphi 0, %s684
      %s702 = sphi 0, %s702
      %s704 = sphi 0, %s702
      %s705 = sphi 0, %s704
      %s719 = sphi 0, %s705
      %s723 = sphi 0, %s723
      %s725 = sphi 0, %s723
      %s726 = sphi 0, %s725
      %s740 = sphi 0, %s726
      %s744 = sphi 0, %s744
      %s746 = sphi 0, %s744
      %s747 = sphi 0, %s746
      %s761 = sphi 0, %s747
      %s765 = sphi 0, %s765
      %s767 = sphi 0, %s765
      %s768 = sphi 0, %s767
      %s782 = sphi 0, %s768
      %s786 = sphi 0, %s786
      %s788 = sphi 0, %s786
      %s789 = sphi 0, %s788
      %s803 = sphi 0, %s789
      %s809 = sphi 0, %s811
      %s812 = sphi 0, %s809
      %s813 = sphi 0, %s812
      %s829 = sphi 0, %s813
    $region4: #{unet_cae_forward.1} parent=1 // loop_header_branch
      %83 = sbr.rel (%p81) target = $region8
    $region5: #{unet_cae_forward.1} parent=1 // loop_body
      %s85 = ssub.s32 %s80, 1
      %s86 = ssub.s32 %s80, 2
      %s87 = sadd.s32 %s80, 1
      %s88 = ssub.s32 %s80, %s87
      %p89 = scmp.eq.s32.totalorder %s88, 0
      %s91 = sadd.s32 %s90, 1
      %s92 = scalar_select %p89, %s90, %s91
      %p95 = pneg %p89
      %p96 = scmp.eq.s32.totalorder %s80, 1
      %p97 = por %p95, %p96
      %p98 = scmp.ne.s32.totalorder %s90, %s93
      %p99 = scmp.eq.s32.totalorder %s80, 0
      %p100 = por %p98, %p99
      %p101 = scmp.ne.s32.totalorder %s90, %s93
      %p102 = scmp.eq.s32.totalorder %s85, 1
      %p103 = por %p101, %p102
      %p104 = scmp.ne.s32.totalorder %s93, %s94
      %p105 = scmp.eq.s32.totalorder %s85, 0
      %p106 = por %p104, %p105
      %p107 = scmp.ne.s32.totalorder %s93, %s94
      %p108 = scmp.eq.s32.totalorder %s86, 1
      %p109 = por %p107, %p108
      %p111 = scmp.ne.s32.totalorder %s94, %s110
      %p112 = scmp.eq.s32.totalorder %s86, 0
      %p113 = por %p111, %p112
      %s115 = sadd.s32 %s114, 1
      %p118 = scmp.eq.s32.totalorder %s80, 1
      %p119 = scmp.ne.s32.totalorder %s114, %s116
      %p120 = scmp.eq.s32.totalorder %s80, 0
      %p121 = por %p119, %p120
      %p122 = scmp.ne.s32.totalorder %s114, %s116
      %p123 = scmp.eq.s32.totalorder %s85, 1
      %p124 = por %p122, %p123
      %p125 = scmp.ne.s32.totalorder %s116, %s117
      %p126 = scmp.eq.s32.totalorder %s85, 0
      %p127 = por %p125, %p126
      %p128 = scmp.ne.s32.totalorder %s116, %s117
      %p129 = scmp.eq.s32.totalorder %s86, 1
      %p130 = por %p128, %p129
      %p132 = scmp.ne.s32.totalorder %s117, %s131
      %p133 = scmp.eq.s32.totalorder %s86, 0
      %p134 = por %p132, %p133
      %s136 = sadd.s32 %s135, 1
      %p139 = scmp.eq.s32.totalorder %s80, 1
      %p140 = scmp.ne.s32.totalorder %s135, %s137
      %p141 = scmp.eq.s32.totalorder %s80, 0
      %p142 = por %p140, %p141
      %p143 = scmp.ne.s32.totalorder %s135, %s137
      %p144 = scmp.eq.s32.totalorder %s85, 1
      %p145 = por %p143, %p144
      %p146 = scmp.ne.s32.totalorder %s137, %s138
      %p147 = scmp.eq.s32.totalorder %s85, 0
      %p148 = por %p146, %p147
      %p149 = scmp.ne.s32.totalorder %s137, %s138
      %p150 = scmp.eq.s32.totalorder %s86, 1
      %p151 = por %p149, %p150
      %p153 = scmp.ne.s32.totalorder %s138, %s152
      %p154 = scmp.eq.s32.totalorder %s86, 0
      %p155 = por %p153, %p154
      %s157 = sadd.s32 %s156, 1
      %p160 = scmp.eq.s32.totalorder %s80, 1
      %p161 = scmp.ne.s32.totalorder %s156, %s158
      %p162 = scmp.eq.s32.totalorder %s80, 0
      %p163 = por %p161, %p162
      %p164 = scmp.ne.s32.totalorder %s156, %s158
      %p165 = scmp.eq.s32.totalorder %s85, 1
      %p166 = por %p164, %p165
      %p167 = scmp.ne.s32.totalorder %s158, %s159
      %p168 = scmp.eq.s32.totalorder %s85, 0
      %p169 = por %p167, %p168
      %p170 = scmp.ne.s32.totalorder %s158, %s159
      %p171 = scmp.eq.s32.totalorder %s86, 1
      %p172 = por %p170, %p171
      %p174 = scmp.ne.s32.totalorder %s159, %s173
      %p175 = scmp.eq.s32.totalorder %s86, 0
      %p176 = por %p174, %p175
      %s178 = sadd.s32 %s177, 1
      %p181 = scmp.eq.s32.totalorder %s80, 1
      %p182 = scmp.ne.s32.totalorder %s177, %s179
      %p183 = scmp.eq.s32.totalorder %s80, 0
      %p184 = por %p182, %p183
      %p185 = scmp.ne.s32.totalorder %s177, %s179
      %p186 = scmp.eq.s32.totalorder %s85, 1
      %p187 = por %p185, %p186
      %p188 = scmp.ne.s32.totalorder %s179, %s180
      %p189 = scmp.eq.s32.totalorder %s85, 0
      %p190 = por %p188, %p189
      %p191 = scmp.ne.s32.totalorder %s179, %s180
      %p192 = scmp.eq.s32.totalorder %s86, 1
      %p193 = por %p191, %p192
      %p195 = scmp.ne.s32.totalorder %s180, %s194
      %p196 = scmp.eq.s32.totalorder %s86, 0
      %p197 = por %p195, %p196
      %s199 = sadd.s32 %s198, 1
      %p202 = scmp.eq.s32.totalorder %s80, 1
      %p203 = scmp.ne.s32.totalorder %s198, %s200
      %p204 = scmp.eq.s32.totalorder %s80, 0
      %p205 = por %p203, %p204
      %p206 = scmp.ne.s32.totalorder %s198, %s200
      %p207 = scmp.eq.s32.totalorder %s85, 1
      %p208 = por %p206, %p207
      %p209 = scmp.ne.s32.totalorder %s200, %s201
      %p210 = scmp.eq.s32.totalorder %s85, 0
      %p211 = por %p209, %p210
      %p212 = scmp.ne.s32.totalorder %s200, %s201
      %p213 = scmp.eq.s32.totalorder %s86, 1
      %p214 = por %p212, %p213
      %p216 = scmp.ne.s32.totalorder %s201, %s215
      %p217 = scmp.eq.s32.totalorder %s86, 0
      %p218 = por %p216, %p217
      %s220 = sadd.s32 %s219, 1
      %p223 = scmp.eq.s32.totalorder %s80, 1
      %p224 = scmp.ne.s32.totalorder %s219, %s221
      %p225 = scmp.eq.s32.totalorder %s80, 0
      %p226 = por %p224, %p225
      %p227 = scmp.ne.s32.totalorder %s219, %s221
      %p228 = scmp.eq.s32.totalorder %s85, 1
      %p229 = por %p227, %p228
      %p230 = scmp.ne.s32.totalorder %s221, %s222
      %p231 = scmp.eq.s32.totalorder %s85, 0
      %p232 = por %p230, %p231
      %p233 = scmp.ne.s32.totalorder %s221, %s222
      %p234 = scmp.eq.s32.totalorder %s86, 1
      %p235 = por %p233, %p234
      %p237 = scmp.ne.s32.totalorder %s222, %s236
      %p238 = scmp.eq.s32.totalorder %s86, 0
      %p239 = por %p237, %p238
      %s241 = sadd.s32 %s240, 1
      %p244 = scmp.eq.s32.totalorder %s80, 1
      %p245 = scmp.ne.s32.totalorder %s240, %s242
      %p246 = scmp.eq.s32.totalorder %s80, 0
      %p247 = por %p245, %p246
      %p248 = scmp.ne.s32.totalorder %s240, %s242
      %p249 = scmp.eq.s32.totalorder %s85, 1
      %p250 = por %p248, %p249
      %p251 = scmp.ne.s32.totalorder %s242, %s243
      %p252 = scmp.eq.s32.totalorder %s85, 0
      %p253 = por %p251, %p252
      %p254 = scmp.ne.s32.totalorder %s242, %s243
      %p255 = scmp.eq.s32.totalorder %s86, 1
      %p256 = por %p254, %p255
      %p258 = scmp.ne.s32.totalorder %s243, %s257
      %p259 = scmp.eq.s32.totalorder %s86, 0
      %p260 = por %p258, %p259
      %s262 = sadd.s32 %s261, 1
      %p265 = scmp.eq.s32.totalorder %s80, 1
      %p266 = scmp.ne.s32.totalorder %s261, %s263
      %p267 = scmp.eq.s32.totalorder %s80, 0
      %p268 = por %p266, %p267
      %p269 = scmp.ne.s32.totalorder %s261, %s263
      %p270 = scmp.eq.s32.totalorder %s85, 1
      %p271 = por %p269, %p270
      %p272 = scmp.ne.s32.totalorder %s263, %s264
      %p273 = scmp.eq.s32.totalorder %s85, 0
      %p274 = por %p272, %p273
      %p275 = scmp.ne.s32.totalorder %s263, %s264
      %p276 = scmp.eq.s32.totalorder %s86, 1
      %p277 = por %p275, %p276
      %p279 = scmp.ne.s32.totalorder %s264, %s278
      %p280 = scmp.eq.s32.totalorder %s86, 0
      %p281 = por %p279, %p280
      %s283 = sadd.s32 %s282, 1
      %p286 = scmp.eq.s32.totalorder %s80, 1
      %p287 = scmp.ne.s32.totalorder %s282, %s284
      %p288 = scmp.eq.s32.totalorder %s80, 0
      %p289 = por %p287, %p288
      %p290 = scmp.ne.s32.totalorder %s282, %s284
      %p291 = scmp.eq.s32.totalorder %s85, 1
      %p292 = por %p290, %p291
      %p293 = scmp.ne.s32.totalorder %s284, %s285
      %p294 = scmp.eq.s32.totalorder %s85, 0
      %p295 = por %p293, %p294
      %p296 = scmp.ne.s32.totalorder %s284, %s285
      %p297 = scmp.eq.s32.totalorder %s86, 1
      %p298 = por %p296, %p297
      %p300 = scmp.ne.s32.totalorder %s285, %s299
      %p301 = scmp.eq.s32.totalorder %s86, 0
      %p302 = por %p300, %p301
      %s304 = sadd.s32 %s303, 1
      %p307 = scmp.eq.s32.totalorder %s80, 1
      %p308 = scmp.ne.s32.totalorder %s303, %s305
      %p309 = scmp.eq.s32.totalorder %s80, 0
      %p310 = por %p308, %p309
      %p311 = scmp.ne.s32.totalorder %s303, %s305
      %p312 = scmp.eq.s32.totalorder %s85, 1
      %p313 = por %p311, %p312
      %p314 = scmp.ne.s32.totalorder %s305, %s306
      %p315 = scmp.eq.s32.totalorder %s85, 0
      %p316 = por %p314, %p315
      %p317 = scmp.ne.s32.totalorder %s305, %s306
      %p318 = scmp.eq.s32.totalorder %s86, 1
      %p319 = por %p317, %p318
      %p321 = scmp.ne.s32.totalorder %s306, %s320
      %p322 = scmp.eq.s32.totalorder %s86, 0
      %p323 = por %p321, %p322
      %s325 = sadd.s32 %s324, 1
      %p328 = scmp.eq.s32.totalorder %s80, 1
      %p329 = scmp.ne.s32.totalorder %s324, %s326
      %p330 = scmp.eq.s32.totalorder %s80, 0
      %p331 = por %p329, %p330
      %p332 = scmp.ne.s32.totalorder %s324, %s326
      %p333 = scmp.eq.s32.totalorder %s85, 1
      %p334 = por %p332, %p333
      %p335 = scmp.ne.s32.totalorder %s326, %s327
      %p336 = scmp.eq.s32.totalorder %s85, 0
      %p337 = por %p335, %p336
      %p338 = scmp.ne.s32.totalorder %s326, %s327
      %p339 = scmp.eq.s32.totalorder %s86, 1
      %p340 = por %p338, %p339
      %p342 = scmp.ne.s32.totalorder %s327, %s341
      %p343 = scmp.eq.s32.totalorder %s86, 0
      %p344 = por %p342, %p343
      %s346 = sadd.s32 %s345, 1
      %p349 = scmp.eq.s32.totalorder %s80, 1
      %p350 = scmp.ne.s32.totalorder %s345, %s347
      %p351 = scmp.eq.s32.totalorder %s80, 0
      %p352 = por %p350, %p351
      %p353 = scmp.ne.s32.totalorder %s345, %s347
      %p354 = scmp.eq.s32.totalorder %s85, 1
      %p355 = por %p353, %p354
      %p356 = scmp.ne.s32.totalorder %s347, %s348
      %p357 = scmp.eq.s32.totalorder %s85, 0
      %p358 = por %p356, %p357
      %p359 = scmp.ne.s32.totalorder %s347, %s348
      %p360 = scmp.eq.s32.totalorder %s86, 1
      %p361 = por %p359, %p360
      %p363 = scmp.ne.s32.totalorder %s348, %s362
      %p364 = scmp.eq.s32.totalorder %s86, 0
      %p365 = por %p363, %p364
      %s367 = sadd.s32 %s366, 1
      %p370 = scmp.eq.s32.totalorder %s80, 1
      %p371 = scmp.ne.s32.totalorder %s366, %s368
      %p372 = scmp.eq.s32.totalorder %s80, 0
      %p373 = por %p371, %p372
      %p374 = scmp.ne.s32.totalorder %s366, %s368
      %p375 = scmp.eq.s32.totalorder %s85, 1
      %p376 = por %p374, %p375
      %p377 = scmp.ne.s32.totalorder %s368, %s369
      %p378 = scmp.eq.s32.totalorder %s85, 0
      %p379 = por %p377, %p378
      %p380 = scmp.ne.s32.totalorder %s368, %s369
      %p381 = scmp.eq.s32.totalorder %s86, 1
      %p382 = por %p380, %p381
      %p384 = scmp.ne.s32.totalorder %s369, %s383
      %p385 = scmp.eq.s32.totalorder %s86, 0
      %p386 = por %p384, %p385
      %s388 = sadd.s32 %s387, 1
      %p391 = scmp.eq.s32.totalorder %s80, 1
      %p392 = scmp.ne.s32.totalorder %s387, %s389
      %p393 = scmp.eq.s32.totalorder %s80, 0
      %p394 = por %p392, %p393
      %p395 = scmp.ne.s32.totalorder %s387, %s389
      %p396 = scmp.eq.s32.totalorder %s85, 1
      %p397 = por %p395, %p396
      %p398 = scmp.ne.s32.totalorder %s389, %s390
      %p399 = scmp.eq.s32.totalorder %s85, 0
      %p400 = por %p398, %p399
      %p401 = scmp.ne.s32.totalorder %s389, %s390
      %p402 = scmp.eq.s32.totalorder %s86, 1
      %p403 = por %p401, %p402
      %p405 = scmp.ne.s32.totalorder %s390, %s404
      %p406 = scmp.eq.s32.totalorder %s86, 0
      %p407 = por %p405, %p406
      %s409 = sadd.s32 %s408, 1
      %p412 = scmp.eq.s32.totalorder %s80, 1
      %p413 = scmp.ne.s32.totalorder %s408, %s410
      %p414 = scmp.eq.s32.totalorder %s80, 0
      %p415 = por %p413, %p414
      %p416 = scmp.ne.s32.totalorder %s408, %s410
      %p417 = scmp.eq.s32.totalorder %s85, 1
      %p418 = por %p416, %p417
      %p419 = scmp.ne.s32.totalorder %s410, %s411
      %p420 = scmp.eq.s32.totalorder %s85, 0
      %p421 = por %p419, %p420
      %p422 = scmp.ne.s32.totalorder %s410, %s411
      %p423 = scmp.eq.s32.totalorder %s86, 1
      %p424 = por %p422, %p423
      %p426 = scmp.ne.s32.totalorder %s411, %s425
      %p427 = scmp.eq.s32.totalorder %s86, 0
      %p428 = por %p426, %p427
      %s430 = sadd.s32 %s429, 1
      %p433 = scmp.eq.s32.totalorder %s80, 1
      %p434 = scmp.ne.s32.totalorder %s429, %s431
      %p435 = scmp.eq.s32.totalorder %s80, 0
      %p436 = por %p434, %p435
      %p437 = scmp.ne.s32.totalorder %s429, %s431
      %p438 = scmp.eq.s32.totalorder %s85, 1
      %p439 = por %p437, %p438
      %p440 = scmp.ne.s32.totalorder %s431, %s432
      %p441 = scmp.eq.s32.totalorder %s85, 0
      %p442 = por %p440, %p441
      %p443 = scmp.ne.s32.totalorder %s431, %s432
      %p444 = scmp.eq.s32.totalorder %s86, 1
      %p445 = por %p443, %p444
      %p447 = scmp.ne.s32.totalorder %s432, %s446
      %p448 = scmp.eq.s32.totalorder %s86, 0
      %p449 = por %p447, %p448
      %s451 = sadd.s32 %s450, 1
      %p454 = scmp.eq.s32.totalorder %s80, 1
      %p455 = scmp.ne.s32.totalorder %s450, %s452
      %p456 = scmp.eq.s32.totalorder %s80, 0
      %p457 = por %p455, %p456
      %p458 = scmp.ne.s32.totalorder %s450, %s452
      %p459 = scmp.eq.s32.totalorder %s85, 1
      %p460 = por %p458, %p459
      %p461 = scmp.ne.s32.totalorder %s452, %s453
      %p462 = scmp.eq.s32.totalorder %s85, 0
      %p463 = por %p461, %p462
      %p464 = scmp.ne.s32.totalorder %s452, %s453
      %p465 = scmp.eq.s32.totalorder %s86, 1
      %p466 = por %p464, %p465
      %p468 = scmp.ne.s32.totalorder %s453, %s467
      %p469 = scmp.eq.s32.totalorder %s86, 0
      %p470 = por %p468, %p469
      %s472 = sadd.s32 %s471, 1
      %p475 = scmp.eq.s32.totalorder %s80, 1
      %p476 = scmp.ne.s32.totalorder %s471, %s473
      %p477 = scmp.eq.s32.totalorder %s80, 0
      %p478 = por %p476, %p477
      %p479 = scmp.ne.s32.totalorder %s471, %s473
      %p480 = scmp.eq.s32.totalorder %s85, 1
      %p481 = por %p479, %p480
      %p482 = scmp.ne.s32.totalorder %s473, %s474
      %p483 = scmp.eq.s32.totalorder %s85, 0
      %p484 = por %p482, %p483
      %p485 = scmp.ne.s32.totalorder %s473, %s474
      %p486 = scmp.eq.s32.totalorder %s86, 1
      %p487 = por %p485, %p486
      %p489 = scmp.ne.s32.totalorder %s474, %s488
      %p490 = scmp.eq.s32.totalorder %s86, 0
      %p491 = por %p489, %p490
      %s493 = sadd.s32 %s492, 1
      %p496 = scmp.eq.s32.totalorder %s80, 1
      %p497 = scmp.ne.s32.totalorder %s492, %s494
      %p498 = scmp.eq.s32.totalorder %s80, 0
      %p499 = por %p497, %p498
      %p500 = scmp.ne.s32.totalorder %s492, %s494
      %p501 = scmp.eq.s32.totalorder %s85, 1
      %p502 = por %p500, %p501
      %p503 = scmp.ne.s32.totalorder %s494, %s495
      %p504 = scmp.eq.s32.totalorder %s85, 0
      %p505 = por %p503, %p504
      %p506 = scmp.ne.s32.totalorder %s494, %s495
      %p507 = scmp.eq.s32.totalorder %s86, 1
      %p508 = por %p506, %p507
      %p510 = scmp.ne.s32.totalorder %s495, %s509
      %p511 = scmp.eq.s32.totalorder %s86, 0
      %p512 = por %p510, %p511
      %s514 = sadd.s32 %s513, 1
      %p517 = scmp.eq.s32.totalorder %s80, 1
      %p518 = scmp.ne.s32.totalorder %s513, %s515
      %p519 = scmp.eq.s32.totalorder %s80, 0
      %p520 = por %p518, %p519
      %p521 = scmp.ne.s32.totalorder %s513, %s515
      %p522 = scmp.eq.s32.totalorder %s85, 1
      %p523 = por %p521, %p522
      %p524 = scmp.ne.s32.totalorder %s515, %s516
      %p525 = scmp.eq.s32.totalorder %s85, 0
      %p526 = por %p524, %p525
      %p527 = scmp.ne.s32.totalorder %s515, %s516
      %p528 = scmp.eq.s32.totalorder %s86, 1
      %p529 = por %p527, %p528
      %p531 = scmp.ne.s32.totalorder %s516, %s530
      %p532 = scmp.eq.s32.totalorder %s86, 0
      %p533 = por %p531, %p532
      %s535 = sadd.s32 %s534, 1
      %p538 = scmp.eq.s32.totalorder %s80, 1
      %p539 = scmp.ne.s32.totalorder %s534, %s536
      %p540 = scmp.eq.s32.totalorder %s80, 0
      %p541 = por %p539, %p540
      %p542 = scmp.ne.s32.totalorder %s534, %s536
      %p543 = scmp.eq.s32.totalorder %s85, 1
      %p544 = por %p542, %p543
      %p545 = scmp.ne.s32.totalorder %s536, %s537
      %p546 = scmp.eq.s32.totalorder %s85, 0
      %p547 = por %p545, %p546
      %p548 = scmp.ne.s32.totalorder %s536, %s537
      %p549 = scmp.eq.s32.totalorder %s86, 1
      %p550 = por %p548, %p549
      %p552 = scmp.ne.s32.totalorder %s537, %s551
      %p553 = scmp.eq.s32.totalorder %s86, 0
      %p554 = por %p552, %p553
      %s556 = sadd.s32 %s555, 1
      %p559 = scmp.eq.s32.totalorder %s80, 1
      %p560 = scmp.ne.s32.totalorder %s555, %s557
      %p561 = scmp.eq.s32.totalorder %s80, 0
      %p562 = por %p560, %p561
      %p563 = scmp.ne.s32.totalorder %s555, %s557
      %p564 = scmp.eq.s32.totalorder %s85, 1
      %p565 = por %p563, %p564
      %p566 = scmp.ne.s32.totalorder %s557, %s558
      %p567 = scmp.eq.s32.totalorder %s85, 0
      %p568 = por %p566, %p567
      %p569 = scmp.ne.s32.totalorder %s557, %s558
      %p570 = scmp.eq.s32.totalorder %s86, 1
      %p571 = por %p569, %p570
      %p573 = scmp.ne.s32.totalorder %s558, %s572
      %p574 = scmp.eq.s32.totalorder %s86, 0
      %p575 = por %p573, %p574
      %s577 = sadd.s32 %s576, 1
      %p580 = scmp.eq.s32.totalorder %s80, 1
      %p581 = scmp.ne.s32.totalorder %s576, %s578
      %p582 = scmp.eq.s32.totalorder %s80, 0
      %p583 = por %p581, %p582
      %p584 = scmp.ne.s32.totalorder %s576, %s578
      %p585 = scmp.eq.s32.totalorder %s85, 1
      %p586 = por %p584, %p585
      %p587 = scmp.ne.s32.totalorder %s578, %s579
      %p588 = scmp.eq.s32.totalorder %s85, 0
      %p589 = por %p587, %p588
      %p590 = scmp.ne.s32.totalorder %s578, %s579
      %p591 = scmp.eq.s32.totalorder %s86, 1
      %p592 = por %p590, %p591
      %p594 = scmp.ne.s32.totalorder %s579, %s593
      %p595 = scmp.eq.s32.totalorder %s86, 0
      %p596 = por %p594, %p595
      %s598 = sadd.s32 %s597, 1
      %p601 = scmp.eq.s32.totalorder %s80, 1
      %p602 = scmp.ne.s32.totalorder %s597, %s599
      %p603 = scmp.eq.s32.totalorder %s80, 0
      %p604 = por %p602, %p603
      %p605 = scmp.ne.s32.totalorder %s597, %s599
      %p606 = scmp.eq.s32.totalorder %s85, 1
      %p607 = por %p605, %p606
      %p608 = scmp.ne.s32.totalorder %s599, %s600
      %p609 = scmp.eq.s32.totalorder %s85, 0
      %p610 = por %p608, %p609
      %p611 = scmp.ne.s32.totalorder %s599, %s600
      %p612 = scmp.eq.s32.totalorder %s86, 1
      %p613 = por %p611, %p612
      %p615 = scmp.ne.s32.totalorder %s600, %s614
      %p616 = scmp.eq.s32.totalorder %s86, 0
      %p617 = por %p615, %p616
      %s619 = sadd.s32 %s618, 1
      %p622 = scmp.eq.s32.totalorder %s80, 1
      %p623 = scmp.ne.s32.totalorder %s618, %s620
      %p624 = scmp.eq.s32.totalorder %s80, 0
      %p625 = por %p623, %p624
      %p626 = scmp.ne.s32.totalorder %s618, %s620
      %p627 = scmp.eq.s32.totalorder %s85, 1
      %p628 = por %p626, %p627
      %p629 = scmp.ne.s32.totalorder %s620, %s621
      %p630 = scmp.eq.s32.totalorder %s85, 0
      %p631 = por %p629, %p630
      %p632 = scmp.ne.s32.totalorder %s620, %s621
      %p633 = scmp.eq.s32.totalorder %s86, 1
      %p634 = por %p632, %p633
      %p636 = scmp.ne.s32.totalorder %s621, %s635
      %p637 = scmp.eq.s32.totalorder %s86, 0
      %p638 = por %p636, %p637
      %s640 = sadd.s32 %s639, 1
      %p643 = scmp.eq.s32.totalorder %s80, 1
      %p644 = scmp.ne.s32.totalorder %s639, %s641
      %p645 = scmp.eq.s32.totalorder %s80, 0
      %p646 = por %p644, %p645
      %p647 = scmp.ne.s32.totalorder %s639, %s641
      %p648 = scmp.eq.s32.totalorder %s85, 1
      %p649 = por %p647, %p648
      %p650 = scmp.ne.s32.totalorder %s641, %s642
      %p651 = scmp.eq.s32.totalorder %s85, 0
      %p652 = por %p650, %p651
      %p653 = scmp.ne.s32.totalorder %s641, %s642
      %p654 = scmp.eq.s32.totalorder %s86, 1
      %p655 = por %p653, %p654
      %p657 = scmp.ne.s32.totalorder %s642, %s656
      %p658 = scmp.eq.s32.totalorder %s86, 0
      %p659 = por %p657, %p658
      %s661 = sadd.s32 %s660, 1
      %p664 = scmp.eq.s32.totalorder %s80, 1
      %p665 = scmp.ne.s32.totalorder %s660, %s662
      %p666 = scmp.eq.s32.totalorder %s80, 0
      %p667 = por %p665, %p666
      %p668 = scmp.ne.s32.totalorder %s660, %s662
      %p669 = scmp.eq.s32.totalorder %s85, 1
      %p670 = por %p668, %p669
      %p671 = scmp.ne.s32.totalorder %s662, %s663
      %p672 = scmp.eq.s32.totalorder %s85, 0
      %p673 = por %p671, %p672
      %p674 = scmp.ne.s32.totalorder %s662, %s663
      %p675 = scmp.eq.s32.totalorder %s86, 1
      %p676 = por %p674, %p675
      %p678 = scmp.ne.s32.totalorder %s663, %s677
      %p679 = scmp.eq.s32.totalorder %s86, 0
      %p680 = por %p678, %p679
      %s682 = sadd.s32 %s681, 1
      %p685 = scmp.eq.s32.totalorder %s80, 1
      %p686 = scmp.ne.s32.totalorder %s681, %s683
      %p687 = scmp.eq.s32.totalorder %s80, 0
      %p688 = por %p686, %p687
      %p689 = scmp.ne.s32.totalorder %s681, %s683
      %p690 = scmp.eq.s32.totalorder %s85, 1
      %p691 = por %p689, %p690
      %p692 = scmp.ne.s32.totalorder %s683, %s684
      %p693 = scmp.eq.s32.totalorder %s85, 0
      %p694 = por %p692, %p693
      %p695 = scmp.ne.s32.totalorder %s683, %s684
      %p696 = scmp.eq.s32.totalorder %s86, 1
      %p697 = por %p695, %p696
      %p699 = scmp.ne.s32.totalorder %s684, %s698
      %p700 = scmp.eq.s32.totalorder %s86, 0
      %p701 = por %p699, %p700
      %s703 = sadd.s32 %s702, 1
      %p706 = scmp.eq.s32.totalorder %s80, 1
      %p707 = scmp.ne.s32.totalorder %s702, %s704
      %p708 = scmp.eq.s32.totalorder %s80, 0
      %p709 = por %p707, %p708
      %p710 = scmp.ne.s32.totalorder %s702, %s704
      %p711 = scmp.eq.s32.totalorder %s85, 1
      %p712 = por %p710, %p711
      %p713 = scmp.ne.s32.totalorder %s704, %s705
      %p714 = scmp.eq.s32.totalorder %s85, 0
      %p715 = por %p713, %p714
      %p716 = scmp.ne.s32.totalorder %s704, %s705
      %p717 = scmp.eq.s32.totalorder %s86, 1
      %p718 = por %p716, %p717
      %p720 = scmp.ne.s32.totalorder %s705, %s719
      %p721 = scmp.eq.s32.totalorder %s86, 0
      %p722 = por %p720, %p721
      %s724 = sadd.s32 %s723, 1
      %p727 = scmp.eq.s32.totalorder %s80, 1
      %p728 = scmp.ne.s32.totalorder %s723, %s725
      %p729 = scmp.eq.s32.totalorder %s80, 0
      %p730 = por %p728, %p729
      %p731 = scmp.ne.s32.totalorder %s723, %s725
      %p732 = scmp.eq.s32.totalorder %s85, 1
      %p733 = por %p731, %p732
      %p734 = scmp.ne.s32.totalorder %s725, %s726
      %p735 = scmp.eq.s32.totalorder %s85, 0
      %p736 = por %p734, %p735
      %p737 = scmp.ne.s32.totalorder %s725, %s726
      %p738 = scmp.eq.s32.totalorder %s86, 1
      %p739 = por %p737, %p738
      %p741 = scmp.ne.s32.totalorder %s726, %s740
      %p742 = scmp.eq.s32.totalorder %s86, 0
      %p743 = por %p741, %p742
      %s745 = sadd.s32 %s744, 1
      %p748 = scmp.eq.s32.totalorder %s80, 1
      %p749 = scmp.ne.s32.totalorder %s744, %s746
      %p750 = scmp.eq.s32.totalorder %s80, 0
      %p751 = por %p749, %p750
      %p752 = scmp.ne.s32.totalorder %s744, %s746
      %p753 = scmp.eq.s32.totalorder %s85, 1
      %p754 = por %p752, %p753
      %p755 = scmp.ne.s32.totalorder %s746, %s747
      %p756 = scmp.eq.s32.totalorder %s85, 0
      %p757 = por %p755, %p756
      %p758 = scmp.ne.s32.totalorder %s746, %s747
      %p759 = scmp.eq.s32.totalorder %s86, 1
      %p760 = por %p758, %p759
      %p762 = scmp.ne.s32.totalorder %s747, %s761
      %p763 = scmp.eq.s32.totalorder %s86, 0
      %p764 = por %p762, %p763
      %s766 = sadd.s32 %s765, 1
      %p769 = scmp.eq.s32.totalorder %s80, 1
      %p770 = scmp.ne.s32.totalorder %s765, %s767
      %p771 = scmp.eq.s32.totalorder %s80, 0
      %p772 = por %p770, %p771
      %p773 = scmp.ne.s32.totalorder %s765, %s767
      %p774 = scmp.eq.s32.totalorder %s85, 1
      %p775 = por %p773, %p774
      %p776 = scmp.ne.s32.totalorder %s767, %s768
      %p777 = scmp.eq.s32.totalorder %s85, 0
      %p778 = por %p776, %p777
      %p779 = scmp.ne.s32.totalorder %s767, %s768
      %p780 = scmp.eq.s32.totalorder %s86, 1
      %p781 = por %p779, %p780
      %p783 = scmp.ne.s32.totalorder %s768, %s782
      %p784 = scmp.eq.s32.totalorder %s86, 0
      %p785 = por %p783, %p784
      %s787 = sadd.s32 %s786, 1
      %p790 = scmp.eq.s32.totalorder %s80, 1
      %p791 = scmp.ne.s32.totalorder %s786, %s788
      %p792 = scmp.eq.s32.totalorder %s80, 0
      %p793 = por %p791, %p792
      %p794 = scmp.ne.s32.totalorder %s786, %s788
      %p795 = scmp.eq.s32.totalorder %s85, 1
      %p796 = por %p794, %p795
      %p797 = scmp.ne.s32.totalorder %s788, %s789
      %p798 = scmp.eq.s32.totalorder %s85, 0
      %p799 = por %p797, %p798
      %p800 = scmp.ne.s32.totalorder %s788, %s789
      %p801 = scmp.eq.s32.totalorder %s86, 1
      %p802 = por %p800, %p801
      %p804 = scmp.ne.s32.totalorder %s789, %s803
      %p805 = scmp.eq.s32.totalorder %s86, 0
      %p806 = por %p804, %p805
      %s807 = ssub.s32 %s80, %s87
      %p808 = scmp.eq.s32.totalorder %s807, 0
      %s810 = sadd.s32 %s809, 1
      %s811 = scalar_select %p808, %s809, %s810
      %p814 = pneg %p808
      %p815 = scmp.eq.s32.totalorder %s80, 1
      %p816 = por %p814, %p815
      %p817 = scmp.ne.s32.totalorder %s809, %s812
      %p818 = scmp.eq.s32.totalorder %s80, 0
      %p819 = por %p817, %p818
      %p820 = scmp.ne.s32.totalorder %s809, %s812
      %p821 = scmp.eq.s32.totalorder %s85, 1
      %p822 = por %p820, %p821
      %p823 = scmp.ne.s32.totalorder %s812, %s813
      %p824 = scmp.eq.s32.totalorder %s85, 0
      %p825 = por %p823, %p824
      %p826 = scmp.ne.s32.totalorder %s812, %s813
      %p827 = scmp.eq.s32.totalorder %s86, 1
      %p828 = por %p826, %p827
      %p830 = scmp.ne.s32.totalorder %s813, %s829
      %p831 = scmp.eq.s32.totalorder %s86, 0
      %p832 = por %p830, %p831
      %p833 = scmp.le.s32.totalorder 1, %s80
      %p834 = scmp.lt.s32.totalorder %s80, 3
      %p835 = pnand %p833, %p834
      %p836 = pneg %p835
      // Predicated region
      $region9: #{unet_cae_forward.1} parent=5 // pred_check
        _
      $region10: #{unet_cae_forward.1} parent=5 // pred_check_branch
        %838 = sbr.rel (%p835) target = $region12
      $region11: #{unet_cae_forward.1} parent=5 // pred_region
        %s839 = ssub.s32 %s80, 1
        // Predicated region
        $region13: #{unet_cae_forward.1} parent=11 // pred_check
          %p840 = pneg %p127
        $region14: #{unet_cae_forward.1} parent=11 // pred_check_branch
          %842 = sbr.rel (%p840) target = $region16
        $region15: #{unet_cae_forward.1} parent=11 // pred_region
          %844 = vsyncadd [#allocation3], 0
          %s845 = sshll.u32 %s3, 4
          %s846 = int_to_ptr.hbm [resolvable:$true] %s845
          %s847 = sshll.u32 [#allocation2], 4
          %s848 = int_to_ptr.vmem [resolvable:$true] %s847
          %853 = dma.hbm_to_vmem [thread:$0]  %s846, 256, %s848, [#allocation3], 32, 32, 2
        $region16: #{unet_cae_forward.1} parent=11 // pred_fallthru
          _
        // Predicated region
        $region17: #{unet_cae_forward.1} parent=11 // pred_check
          %p854 = pneg %p148
        $region18: #{unet_cae_forward.1} parent=11 // pred_check_branch
          %856 = sbr.rel (%p854) target = $region20
        $region19: #{unet_cae_forward.1} parent=11 // pred_region
          %858 = vsyncadd [#allocation5], 0
          %s859 = sshll.u32 %s5, 4
          %s860 = int_to_ptr.hbm [resolvable:$true] %s859
          %s861 = sshll.u32 [#allocation4], 4
          %s862 = int_to_ptr.vmem [resolvable:$true] %s861
          %867 = dma.hbm_to_vmem [thread:$0]  %s860, 128, %s862, [#allocation5], 16, 16, 1
        $region20: #{unet_cae_forward.1} parent=11 // pred_fallthru
          _
        // Predicated region
        $region21: #{unet_cae_forward.1} parent=11 // pred_check
          %p868 = pneg %p169
        $region22: #{unet_cae_forward.1} parent=11 // pred_check_branch
          %870 = sbr.rel (%p868) target = $region24
        $region23: #{unet_cae_forward.1} parent=11 // pred_region
          _
        $region24: #{unet_cae_forward.1} parent=11 // pred_fallthru
          _
        // Predicated region
        $region25: #{unet_cae_forward.1} parent=11 // pred_check
          %p871 = pneg %p190
        $region26: #{unet_cae_forward.1} parent=11 // pred_check_branch
          %873 = sbr.rel (%p871) target = $region28
        $region27: #{unet_cae_forward.1} parent=11 // pred_region
          %875 = vsyncadd [#allocation5], 0
          %s876 = sshll.u32 %s9, 4
          %s877 = int_to_ptr.hbm [resolvable:$true] %s876
          %s878 = sshll.u32 [#allocation6], 4
          %s879 = int_to_ptr.vmem [resolvable:$true] %s878
          %884 = dma.hbm_to_vmem [thread:$0]  %s877, 2048, %s879, [#allocation5], 64, 64, 4
        $region28: #{unet_cae_forward.1} parent=11 // pred_fallthru
          _
        // Predicated region
        $region29: #{unet_cae_forward.1} parent=11 // pred_check
          %p885 = pneg %p211
        $region30: #{unet_cae_forward.1} parent=11 // pred_check_branch
          %887 = sbr.rel (%p885) target = $region32
        $region31: #{unet_cae_forward.1} parent=11 // pred_region
          %889 = vsyncadd [#allocation8], 0
          %s890 = sshll.u32 %s11, 4
          %s891 = int_to_ptr.hbm [resolvable:$true] %s890
          %s892 = sshll.u32 [#allocation7], 4
          %s893 = int_to_ptr.vmem [resolvable:$true] %s892
          %898 = dma.hbm_to_vmem [thread:$0]  %s891, 1024, %s893, [#allocation8], 64, 64, 4
        $region32: #{unet_cae_forward.1} parent=11 // pred_fallthru
          _
        // Predicated region
        $region33: #{unet_cae_forward.1} parent=11 // pred_check
          %p899 = pneg %p232
        $region34: #{unet_cae_forward.1} parent=11 // pred_check_branch
          %901 = sbr.rel (%p899) target = $region36
        $region35: #{unet_cae_forward.1} parent=11 // pred_region
          _
        $region36: #{unet_cae_forward.1} parent=11 // pred_fallthru
          _
        // Predicated region
        $region37: #{unet_cae_forward.1} parent=11 // pred_check
          %p902 = pneg %p253
        $region38: #{unet_cae_forward.1} parent=11 // pred_check_branch
          %904 = sbr.rel (%p902) target = $region40
        $region39: #{unet_cae_forward.1} parent=11 // pred_region
          _
        $region40: #{unet_cae_forward.1} parent=11 // pred_fallthru
          _
        // Predicated region
        $region41: #{unet_cae_forward.1} parent=11 // pred_check
          %p905 = pneg %p274
        $region42: #{unet_cae_forward.1} parent=11 // pred_check_branch
          %907 = sbr.rel (%p905) target = $region44
        $region43: #{unet_cae_forward.1} parent=11 // pred_region
          _
        $region44: #{unet_cae_forward.1} parent=11 // pred_fallthru
          _
        // Predicated region
        $region45: #{unet_cae_forward.1} parent=11 // pred_check
          %p908 = pneg %p295
        $region46: #{unet_cae_forward.1} parent=11 // pred_check_branch
          %910 = sbr.rel (%p908) target = $region48
        $region47: #{unet_cae_forward.1} parent=11 // pred_region
          _
        $region48: #{unet_cae_forward.1} parent=11 // pred_fallthru
          _
        // Predicated region
        $region49: #{unet_cae_forward.1} parent=11 // pred_check
          %p911 = pneg %p316
        $region50: #{unet_cae_forward.1} parent=11 // pred_check_branch
          %913 = sbr.rel (%p911) target = $region52
        $region51: #{unet_cae_forward.1} parent=11 // pred_region
          _
        $region52: #{unet_cae_forward.1} parent=11 // pred_fallthru
          _
        // Predicated region
        $region53: #{unet_cae_forward.1} parent=11 // pred_check
          %p914 = pneg %p337
        $region54: #{unet_cae_forward.1} parent=11 // pred_check_branch
          %916 = sbr.rel (%p914) target = $region56
        $region55: #{unet_cae_forward.1} parent=11 // pred_region
          _
        $region56: #{unet_cae_forward.1} parent=11 // pred_fallthru
          _
        // Predicated region
        $region57: #{unet_cae_forward.1} parent=11 // pred_check
          %p917 = pneg %p358
        $region58: #{unet_cae_forward.1} parent=11 // pred_check_branch
          %919 = sbr.rel (%p917) target = $region60
        $region59: #{unet_cae_forward.1} parent=11 // pred_region
          _
        $region60: #{unet_cae_forward.1} parent=11 // pred_fallthru
          _
        // Predicated region
        $region61: #{unet_cae_forward.1} parent=11 // pred_check
          %p920 = pneg %p379
        $region62: #{unet_cae_forward.1} parent=11 // pred_check_branch
          %922 = sbr.rel (%p920) target = $region64
        $region63: #{unet_cae_forward.1} parent=11 // pred_region
          _
        $region64: #{unet_cae_forward.1} parent=11 // pred_fallthru
          _
        // Predicated region
        $region65: #{unet_cae_forward.1} parent=11 // pred_check
          %p923 = pneg %p400
        $region66: #{unet_cae_forward.1} parent=11 // pred_check_branch
          %925 = sbr.rel (%p923) target = $region68
        $region67: #{unet_cae_forward.1} parent=11 // pred_region
          _
        $region68: #{unet_cae_forward.1} parent=11 // pred_fallthru
          _
        // Predicated region
        $region69: #{unet_cae_forward.1} parent=11 // pred_check
          %p926 = pneg %p421
        $region70: #{unet_cae_forward.1} parent=11 // pred_check_branch
          %928 = sbr.rel (%p926) target = $region72
        $region71: #{unet_cae_forward.1} parent=11 // pred_region
          %930 = vsyncadd [#allocation8], 0
          %s931 = sshll.u32 %s31, 4
          %s932 = int_to_ptr.hbm [resolvable:$true] %s931
          %s933 = sshll.u32 [#allocation9], 4
          %s934 = int_to_ptr.vmem [resolvable:$true] %s933
          %939 = dma.hbm_to_vmem [thread:$0]  %s932, 512, %s934, [#allocation8], 64, 64, 4
        $region72: #{unet_cae_forward.1} parent=11 // pred_fallthru
          _
        // Predicated region
        $region73: #{unet_cae_forward.1} parent=11 // pred_check
          %p940 = pneg %p442
        $region74: #{unet_cae_forward.1} parent=11 // pred_check_branch
          %942 = sbr.rel (%p940) target = $region76
        $region75: #{unet_cae_forward.1} parent=11 // pred_region
          %944 = vsyncadd [#allocation11], 0
          %s945 = sshll.u32 %s33, 4
          %s946 = int_to_ptr.hbm [resolvable:$true] %s945
          %s947 = sshll.u32 [#allocation10], 4
          %s948 = int_to_ptr.vmem [resolvable:$true] %s947
          %953 = dma.hbm_to_vmem [thread:$0]  %s946, 1152, %s948, [#allocation11], 64, 64, 4
        $region76: #{unet_cae_forward.1} parent=11 // pred_fallthru
          _
        // Predicated region
        $region77: #{unet_cae_forward.1} parent=11 // pred_check
          %p954 = pneg %p463
        $region78: #{unet_cae_forward.1} parent=11 // pred_check_branch
          %956 = sbr.rel (%p954) target = $region80
        $region79: #{unet_cae_forward.1} parent=11 // pred_region
          %958 = vsyncadd [#allocation11], 0
          %s959 = sshll.u32 %s35, 4
          %s960 = int_to_ptr.hbm [resolvable:$true] %s959
          %s961 = sshll.u32 [#allocation12], 4
          %s962 = int_to_ptr.vmem [resolvable:$true] %s961
          %967 = dma.hbm_to_vmem [thread:$0]  %s960, 1152, %s962, [#allocation11], 64, 64, 4
        $region80: #{unet_cae_forward.1} parent=11 // pred_fallthru
          _
        // Predicated region
        $region81: #{unet_cae_forward.1} parent=11 // pred_check
          %p968 = pneg %p484
        $region82: #{unet_cae_forward.1} parent=11 // pred_check_branch
          %970 = sbr.rel (%p968) target = $region84
        $region83: #{unet_cae_forward.1} parent=11 // pred_region
          _
        $region84: #{unet_cae_forward.1} parent=11 // pred_fallthru
          _
        // Predicated region
        $region85: #{unet_cae_forward.1} parent=11 // pred_check
          %p971 = pneg %p505
        $region86: #{unet_cae_forward.1} parent=11 // pred_check_branch
          %973 = sbr.rel (%p971) target = $region88
        $region87: #{unet_cae_forward.1} parent=11 // pred_region
          _
        $region88: #{unet_cae_forward.1} parent=11 // pred_fallthru
          _
        // Predicated region
        $region89: #{unet_cae_forward.1} parent=11 // pred_check
          %p974 = pneg %p526
        $region90: #{unet_cae_forward.1} parent=11 // pred_check_branch
          %976 = sbr.rel (%p974) target = $region92
        $region91: #{unet_cae_forward.1} parent=11 // pred_region
          _
        $region92: #{unet_cae_forward.1} parent=11 // pred_fallthru
          _
        // Predicated region
        $region93: #{unet_cae_forward.1} parent=11 // pred_check
          %p977 = pneg %p547
        $region94: #{unet_cae_forward.1} parent=11 // pred_check_branch
          %979 = sbr.rel (%p977) target = $region96
        $region95: #{unet_cae_forward.1} parent=11 // pred_region
          _
        $region96: #{unet_cae_forward.1} parent=11 // pred_fallthru
          _
        // Predicated region
        $region97: #{unet_cae_forward.1} parent=11 // pred_check
          %p980 = pneg %p568
        $region98: #{unet_cae_forward.1} parent=11 // pred_check_branch
          %982 = sbr.rel (%p980) target = $region100
        $region99: #{unet_cae_forward.1} parent=11 // pred_region
          %984 = vsyncadd [#allocation14], 0
          %s985 = sshll.u32 %s45, 4
          %s986 = int_to_ptr.hbm [resolvable:$true] %s985
          %s987 = sshll.u32 [#allocation13], 4
          %s988 = int_to_ptr.vmem [resolvable:$true] %s987
          %993 = dma.hbm_to_vmem [thread:$0]  %s986, 576, %s988, [#allocation14], 64, 64, 4
        $region100: #{unet_cae_forward.1} parent=11 // pred_fallthru
          _
        // Predicated region
        $region101: #{unet_cae_forward.1} parent=11 // pred_check
          %p994 = pneg %p589
        $region102: #{unet_cae_forward.1} parent=11 // pred_check_branch
          %996 = sbr.rel (%p994) target = $region104
        $region103: #{unet_cae_forward.1} parent=11 // pred_region
          _
        $region104: #{unet_cae_forward.1} parent=11 // pred_fallthru
          _
        // Predicated region
        $region105: #{unet_cae_forward.1} parent=11 // pred_check
          %p997 = pneg %p610
        $region106: #{unet_cae_forward.1} parent=11 // pred_check_branch
          %999 = sbr.rel (%p997) target = $region108
        $region107: #{unet_cae_forward.1} parent=11 // pred_region
          _
        $region108: #{unet_cae_forward.1} parent=11 // pred_fallthru
          _
        // Predicated region
        $region109: #{unet_cae_forward.1} parent=11 // pred_check
          %p1000 = pneg %p631
        $region110: #{unet_cae_forward.1} parent=11 // pred_check_branch
          %1002 = sbr.rel (%p1000) target = $region112
        $region111: #{unet_cae_forward.1} parent=11 // pred_region
          _
        $region112: #{unet_cae_forward.1} parent=11 // pred_fallthru
          _
        // Predicated region
        $region113: #{unet_cae_forward.1} parent=11 // pred_check
          %p1003 = pneg %p652
        $region114: #{unet_cae_forward.1} parent=11 // pred_check_branch
          %1005 = sbr.rel (%p1003) target = $region116
        $region115: #{unet_cae_forward.1} parent=11 // pred_region
          _
        $region116: #{unet_cae_forward.1} parent=11 // pred_fallthru
          _
        // Predicated region
        $region117: #{unet_cae_forward.1} parent=11 // pred_check
          %p1006 = pneg %p673
        $region118: #{unet_cae_forward.1} parent=11 // pred_check_branch
          %1008 = sbr.rel (%p1006) target = $region120
        $region119: #{unet_cae_forward.1} parent=11 // pred_region
          _
        $region120: #{unet_cae_forward.1} parent=11 // pred_fallthru
          _
        // Predicated region
        $region121: #{unet_cae_forward.1} parent=11 // pred_check
          %p1009 = pneg %p694
        $region122: #{unet_cae_forward.1} parent=11 // pred_check_branch
          %1011 = sbr.rel (%p1009) target = $region124
        $region123: #{unet_cae_forward.1} parent=11 // pred_region
          _
        $region124: #{unet_cae_forward.1} parent=11 // pred_fallthru
          _
        // Predicated region
        $region125: #{unet_cae_forward.1} parent=11 // pred_check
          %p1012 = pneg %p715
        $region126: #{unet_cae_forward.1} parent=11 // pred_check_branch
          %1014 = sbr.rel (%p1012) target = $region128
        $region127: #{unet_cae_forward.1} parent=11 // pred_region
          _
        $region128: #{unet_cae_forward.1} parent=11 // pred_fallthru
          _
        // Predicated region
        $region129: #{unet_cae_forward.1} parent=11 // pred_check
          %p1015 = pneg %p736
        $region130: #{unet_cae_forward.1} parent=11 // pred_check_branch
          %1017 = sbr.rel (%p1015) target = $region132
        $region131: #{unet_cae_forward.1} parent=11 // pred_region
          _
        $region132: #{unet_cae_forward.1} parent=11 // pred_fallthru
          _
        // Predicated region
        $region133: #{unet_cae_forward.1} parent=11 // pred_check
          %p1018 = pneg %p757
        $region134: #{unet_cae_forward.1} parent=11 // pred_check_branch
          %1020 = sbr.rel (%p1018) target = $region136
        $region135: #{unet_cae_forward.1} parent=11 // pred_region
          %1022 = vsyncadd [#allocation14], 0
          %s1023 = sshll.u32 %s63, 4
          %s1024 = int_to_ptr.hbm [resolvable:$true] %s1023
          %s1025 = sshll.u32 [#allocation15], 4
          %s1026 = int_to_ptr.vmem [resolvable:$true] %s1025
          %1031 = dma.hbm_to_vmem [thread:$0]  %s1024, 1152, %s1026, [#allocation14], 64, 64, 4
        $region136: #{unet_cae_forward.1} parent=11 // pred_fallthru
          _
        // Predicated region
        $region137: #{unet_cae_forward.1} parent=11 // pred_check
          %p1032 = pneg %p778
        $region138: #{unet_cae_forward.1} parent=11 // pred_check_branch
          %1034 = sbr.rel (%p1032) target = $region140
        $region139: #{unet_cae_forward.1} parent=11 // pred_region
          _
        $region140: #{unet_cae_forward.1} parent=11 // pred_fallthru
          _
        // Predicated region
        $region141: #{unet_cae_forward.1} parent=11 // pred_check
          %p1035 = pneg %p799
        $region142: #{unet_cae_forward.1} parent=11 // pred_check_branch
          %1037 = sbr.rel (%p1035) target = $region144
        $region143: #{unet_cae_forward.1} parent=11 // pred_region
          _
        $region144: #{unet_cae_forward.1} parent=11 // pred_fallthru
          _
      $region12: #{unet_cae_forward.1} parent=5 // pred_fallthru
        _
      %p1038 = scmp.lt.s32.totalorder %s80, 2
      // Predicated region
      $region145: #{unet_cae_forward.1} parent=5 // pred_check
        %p1039 = pneg %p1038
      $region146: #{unet_cae_forward.1} parent=5 // pred_check_branch
        %1041 = sbr.rel (%p1039) target = $region148
      $region147: #{unet_cae_forward.1} parent=5 // pred_region
        // Predicated region
        $region149: #{unet_cae_forward.1} parent=147 // pred_check
          %p1042 = pneg %p100
        $region150: #{unet_cae_forward.1} parent=147 // pred_check_branch
          %1044 = sbr.rel (%p1042) target = $region152
        $region151: #{unet_cae_forward.1} parent=147 // pred_region
          %s1045 = smul.u32 2, %s80
          %p1046 = scmp.lt.s32.totalorder %s1045, 3
          %s1047 = scalar_select %p1046, %s1045, 3
          %s1048 = smul.addr %s1047, 8
          %s1049 = scalar_lea.vmem %s1, %s1048
          %s1050 = smul.u32 2, %s80
        $region152: #{unet_cae_forward.1} parent=147 // pred_fallthru
          _
      $region148: #{unet_cae_forward.1} parent=5 // pred_fallthru
        _
      %p1051 = scmp.le.s32.totalorder 1, %s80
      %p1052 = scmp.lt.s32.totalorder %s80, 3
      %p1053 = pnand %p1051, %p1052
      %p1054 = pneg %p1053
      // Predicated region
      $region153: #{unet_cae_forward.1} parent=5 // pred_check
        _
      $region154: #{unet_cae_forward.1} parent=5 // pred_check_branch
        %1056 = sbr.rel (%p1053) target = $region156
      $region155: #{unet_cae_forward.1} parent=5 // pred_region
        %s1057 = ssub.s32 %s80, 1
        // Predicated region
        $region157: #{unet_cae_forward.1} parent=155 // pred_check
          %p1058 = pneg %p127
        $region158: #{unet_cae_forward.1} parent=155 // pred_check_branch
          %1060 = sbr.rel (%p1058) target = $region160
        $region159: #{unet_cae_forward.1} parent=155 // pred_region
          %1062 = dma.done [#allocation3], 256
        $region160: #{unet_cae_forward.1} parent=155 // pred_fallthru
          _
        // Predicated region
        $region161: #{unet_cae_forward.1} parent=155 // pred_check
          %p1063 = pneg %p148
        $region162: #{unet_cae_forward.1} parent=155 // pred_check_branch
          %1065 = sbr.rel (%p1063) target = $region164
        $region163: #{unet_cae_forward.1} parent=155 // pred_region
          %1067 = dma.done [#allocation5], 128
        $region164: #{unet_cae_forward.1} parent=155 // pred_fallthru
          _
        // Predicated region
        $region165: #{unet_cae_forward.1} parent=155 // pred_check
          %p1068 = pneg %p190
        $region166: #{unet_cae_forward.1} parent=155 // pred_check_branch
          %1070 = sbr.rel (%p1068) target = $region168
        $region167: #{unet_cae_forward.1} parent=155 // pred_region
          %1072 = dma.done [#allocation5], 2048
        $region168: #{unet_cae_forward.1} parent=155 // pred_fallthru
          _
        // Predicated region
        $region169: #{unet_cae_forward.1} parent=155 // pred_check
          %p1073 = pneg %p211
        $region170: #{unet_cae_forward.1} parent=155 // pred_check_branch
          %1075 = sbr.rel (%p1073) target = $region172
        $region171: #{unet_cae_forward.1} parent=155 // pred_region
          %1077 = dma.done [#allocation8], 1024
        $region172: #{unet_cae_forward.1} parent=155 // pred_fallthru
          _
        // Predicated region
        $region173: #{unet_cae_forward.1} parent=155 // pred_check
          %p1078 = pneg %p421
        $region174: #{unet_cae_forward.1} parent=155 // pred_check_branch
          %1080 = sbr.rel (%p1078) target = $region176
        $region175: #{unet_cae_forward.1} parent=155 // pred_region
          %1082 = dma.done [#allocation8], 512
        $region176: #{unet_cae_forward.1} parent=155 // pred_fallthru
          _
        // Predicated region
        $region177: #{unet_cae_forward.1} parent=155 // pred_check
          %p1083 = pneg %p442
        $region178: #{unet_cae_forward.1} parent=155 // pred_check_branch
          %1085 = sbr.rel (%p1083) target = $region180
        $region179: #{unet_cae_forward.1} parent=155 // pred_region
          %1087 = dma.done [#allocation11], 1152
        $region180: #{unet_cae_forward.1} parent=155 // pred_fallthru
          _
        // Predicated region
        $region181: #{unet_cae_forward.1} parent=155 // pred_check
          %p1088 = pneg %p463
        $region182: #{unet_cae_forward.1} parent=155 // pred_check_branch
          %1090 = sbr.rel (%p1088) target = $region184
        $region183: #{unet_cae_forward.1} parent=155 // pred_region
          %1092 = dma.done [#allocation11], 1152
        $region184: #{unet_cae_forward.1} parent=155 // pred_fallthru
          _
        // Predicated region
        $region185: #{unet_cae_forward.1} parent=155 // pred_check
          %p1093 = pneg %p568
        $region186: #{unet_cae_forward.1} parent=155 // pred_check_branch
          %1095 = sbr.rel (%p1093) target = $region188
        $region187: #{unet_cae_forward.1} parent=155 // pred_region
          %1097 = dma.done [#allocation14], 576
        $region188: #{unet_cae_forward.1} parent=155 // pred_fallthru
          _
        // Predicated region
        $region189: #{unet_cae_forward.1} parent=155 // pred_check
          %p1098 = pneg %p757
        $region190: #{unet_cae_forward.1} parent=155 // pred_check_branch
          %1100 = sbr.rel (%p1098) target = $region192
        $region191: #{unet_cae_forward.1} parent=155 // pred_region
          %1102 = dma.done [#allocation14], 1152
        $region192: #{unet_cae_forward.1} parent=155 // pred_fallthru
          _
        %s1103 = smul.u32 2, %s85
        %p1104 = scmp.lt.s32.totalorder %s1103, 3
        %s1105 = scalar_select %p1104, %s1103, 3
        %s1106 = smul.addr %s1105, 8
        %s1107 = scalar_lea.vmem %s1, %s1106
        %p1108 = pneg %p106
        %p1109 = pneg %p103
        %p1110 = pneg %p127
        %p1111 = pneg %p124
        %p1112 = pneg %p148
        %p1113 = pneg %p145
        %p1114 = pneg %p169
        %p1115 = pneg %p166
        %p1116 = pneg %p190
        %p1117 = pneg %p187
        %p1118 = pneg %p211
        %p1119 = pneg %p208
        %p1120 = pneg %p232
        %p1121 = pneg %p229
        %p1122 = pneg %p253
        %p1123 = pneg %p250
        %p1124 = pneg %p274
        %p1125 = pneg %p271
        %p1126 = pneg %p295
        %p1127 = pneg %p292
        %p1128 = pneg %p316
        %p1129 = pneg %p313
        %p1130 = pneg %p337
        %p1131 = pneg %p334
        %p1132 = pneg %p358
        %p1133 = pneg %p355
        %p1134 = pneg %p379
        %p1135 = pneg %p376
        %p1136 = pneg %p400
        %p1137 = pneg %p397
        %p1138 = pneg %p421
        %p1139 = pneg %p418
        %p1140 = pneg %p442
        %p1141 = pneg %p439
        %p1142 = pneg %p463
        %p1143 = pneg %p460
        %p1144 = pneg %p484
        %p1145 = pneg %p481
        %p1146 = pneg %p505
        %p1147 = pneg %p502
        %p1148 = pneg %p526
        %p1149 = pneg %p523
        %p1150 = pneg %p547
        %p1151 = pneg %p544
        %p1152 = pneg %p568
        %p1153 = pneg %p565
        %p1154 = pneg %p589
        %p1155 = pneg %p586
        %p1156 = pneg %p610
        %p1157 = pneg %p607
        %p1158 = pneg %p631
        %p1159 = pneg %p628
        %p1160 = pneg %p652
        %p1161 = pneg %p649
        %p1162 = pneg %p673
        %p1163 = pneg %p670
        %p1164 = pneg %p694
        %p1165 = pneg %p691
        %p1166 = pneg %p715
        %p1167 = pneg %p712
        %p1168 = pneg %p736
        %p1169 = pneg %p733
        %p1170 = pneg %p757
        %p1171 = pneg %p754
        %p1172 = pneg %p778
        %p1173 = pneg %p775
        %p1174 = pneg %p799
        %p1175 = pneg %p796
        %p1176 = pneg %p825
        %p1177 = pneg %p822
        %s1178 = smul.u32 2, %s85
        %p1179 = scmp.lt.s32.totalorder %s1178, 3
        %s1180 = scalar_select %p1179, %s1178, 3
        %s1181 = smul.addr %s1180, 8
        %s1182 = scalar_lea.vmem %s69, %s1181
        %s1183 = smul.u32 2, %s85
        %p1184 = scmp.lt.s32.totalorder %s1183, 3
        %s1185 = scalar_select %p1184, %s1183, 3
        %s1186 = smul.addr %s1185, 8
        %s1187 = scalar_lea.vmem %s1, %s1186
        %s1188 = smul.u32 2, %s85
        %s1189 = smul.u32 2, %s85
        %p1190 = scmp.lt.s32.totalorder %s1189, 3
        %s1191 = scalar_select %p1190, %s1189, 3
        %s1192 = smul.addr %s1191, 8
        %s1193 = scalar_lea.vmem %s69, %s1192
        %s1194 = smul.u32 2, %s85
        %v1196 = vld [vmem:[%s1187] sm:$0xff]
        %v1197 = vld [vmem:[%s1187 + $0x8] sm:$0xff]
        %1198 = vrot.lane.b32.xlu0 %v1196, 17
        %v1199 = vpop.permute.xlu0 %1198
        %1200 = vrot.lane.b32.xlu0 %v1197, 17
        %v1201 = vpop.permute.xlu0 %1200
        %v1202 = vlaneseq
        %v1203 = vand.u32 %v1202, 127
        %vm1204 = vcmp.lt.s32.totalorder %v1203, 17
        %v1205 = vsel %vm1204, %v1199, %v1201
        %v1206 = vsel %vm1204, %v1201, %v1199
        %v1207 = vld [vmem:[#allocation2] sm:$0x3]
        %v1209 = vperm.slane %v1207, 0
        %v1210 = vperm.slane %v1207, 1
        %v1213 = vmul.f32 %v1206, %v1209
        %v1214 = vmul.f32 %v1205, %v1210
        %v1215 = vld [vmem:[%s53] sm:$0xf]
        %v1216 = vpack.c.bf16 %v1213, %v1213
        %v1217 = vpack.c.bf16 %v1214, %v1214
        %1218 = vrot.lane.b32.xlu0 %v1196, 16
        %v1219 = vpop.permute.xlu0 %1218
        %1220 = vrot.lane.b32.xlu0 %v1197, 16
        %v1221 = vpop.permute.xlu0 %1220
        %vm1222 = vcmp.lt.s32.totalorder %v1203, 16
        %v1223 = vsel %vm1222, %v1219, %v1221
        %v1224 = vsel %vm1222, %v1221, %v1219
        %s1225 = scalar_lea.vmem [#allocation2], 2
        %v1226 = vld [vmem:[%s1225] sm:$0x3]
        %v1228 = vperm.slane %v1226, 0
        %v1229 = vperm.slane %v1226, 1
        %v1232 = vmul.f32 %v1224, %v1228
        %v1233 = vmul.f32 %v1223, %v1229
        %s1234 = scalar_lea.vmem %s53, 4
        %v1235 = vld [vmem:[%s1234] sm:$0xf]
        %v1236 = vpack.c.bf16 %v1232, %v1232
        %v1237 = vpack.c.bf16 %v1233, %v1233
        %vm1238 = vcmask 64512
        %v1240 = vsel %vm1238, %v1235, 0
        %vm1242 = vcmask 1043456
        %v1244 = vsel %vm1242, %v1236, 0
        %v1247 = vsel %vm1242, %v1237, 0
        %1249 = vmatpush.bf16.msra.mxu0 0
        %1250 = vmatpush.bf16.msra.mxu0 0
        %1251 = vmatpush.bf16.msra.mxu0 0
        %1252 = vmatpush.bf16.msra.mxu0 0
        %1253 = vmatpush.bf16.msra.mxu0 0
        %1254 = vmatpush.bf16.msra.mxu0 0
        %1255 = vmatpush.bf16.msra.mxu0 0
        %1256 = vmatpush.bf16.msra.mxu0 %v1244
        %1257 = vmatmul.bf16.gmra.mxu0 %v1240
        %v1258 = vpop.f32.mrf.mxu0
        %v1259 = vadd.f32 0.0, %v1258
        %v1260 = vpop.f32.mrf.mxu0
        %1261 = vdwg.mxu0
        %1262 = vmatpush.bf16.msra.mxu0 0
        %1263 = vmatpush.bf16.msra.mxu0 0
        %1264 = vmatpush.bf16.msra.mxu0 0
        %1265 = vmatpush.bf16.msra.mxu0 0
        %1266 = vmatpush.bf16.msra.mxu0 0
        %1267 = vmatpush.bf16.msra.mxu0 0
        %1268 = vmatpush.bf16.msra.mxu0 0
        %1269 = vmatpush.bf16.msra.mxu0 %v1247
        %1270 = vmatmul.bf16.gmra.mxu0 %v1240
        %v1271 = vpop.f32.mrf.mxu0
        %v1272 = vadd.f32 0.0, %v1271
        %v1273 = vpop.f32.mrf.mxu0
        %1274 = vdwg.mxu0
        %v1276 = vsel %vm1238, %v1215, 0
        %v1279 = vsel %vm1242, %v1216, 0
        %v1282 = vsel %vm1242, %v1217, 0
        %1284 = vmatpush.bf16.msra.mxu0 0
        %1285 = vmatpush.bf16.msra.mxu0 0
        %1286 = vmatpush.bf16.msra.mxu0 0
        %1287 = vmatpush.bf16.msra.mxu0 0
        %1288 = vmatpush.bf16.msra.mxu0 0
        %1289 = vmatpush.bf16.msra.mxu0 0
        %1290 = vmatpush.bf16.msra.mxu0 0
        %1291 = vmatpush.bf16.msra.mxu0 %v1279
        %1292 = vmatmul.bf16.gmra.mxu0 %v1276
        %v1293 = vpop.f32.mrf.mxu0
        %v1294 = vadd.f32 %v1259, %v1293
        %v1295 = vpop.f32.mrf.mxu0
        %1296 = vdwg.mxu0
        %1297 = vmatpush.bf16.msra.mxu0 0
        %1298 = vmatpush.bf16.msra.mxu0 0
        %1299 = vmatpush.bf16.msra.mxu0 0
        %1300 = vmatpush.bf16.msra.mxu0 0
        %1301 = vmatpush.bf16.msra.mxu0 0
        %1302 = vmatpush.bf16.msra.mxu0 0
        %1303 = vmatpush.bf16.msra.mxu0 0
        %1304 = vmatpush.bf16.msra.mxu0 %v1282
        %1305 = vmatmul.bf16.gmra.mxu0 %v1276
        %v1306 = vpop.f32.mrf.mxu0
        %v1307 = vadd.f32 %v1272, %v1306
        %v1308 = vpop.f32.mrf.mxu0
        %1309 = vdwg.mxu0
        %1310 = vrot.lane.b32.xlu0 %v1196, 15
        %v1311 = vpop.permute.xlu0 %1310
        %1312 = vrot.lane.b32.xlu0 %v1197, 15
        %v1313 = vpop.permute.xlu0 %1312
        %vm1314 = vcmp.lt.s32.totalorder %v1203, 15
        %v1315 = vsel %vm1314, %v1311, %v1313
        %v1316 = vsel %vm1314, %v1313, %v1311
        %s1317 = scalar_lea.vmem [#allocation2], 4
        %v1318 = vld [vmem:[%s1317] sm:$0x3]
        %v1320 = vperm.slane %v1318, 0
        %v1321 = vperm.slane %v1318, 1
        %v1324 = vmul.f32 %v1316, %v1320
        %v1325 = vmul.f32 %v1315, %v1321
        %s1326 = scalar_lea.vmem %s53, 8
        %v1327 = vld [vmem:[%s1326] sm:$0xf]
        %v1328 = vpack.c.bf16 %v1324, %v1324
        %v1329 = vpack.c.bf16 %v1325, %v1325
        %v1331 = vsel %vm1238, %v1327, 0
        %v1334 = vsel %vm1242, %v1328, 0
        %v1337 = vsel %vm1242, %v1329, 0
        %1339 = vmatpush.bf16.msra.mxu0 0
        %1340 = vmatpush.bf16.msra.mxu0 0
        %1341 = vmatpush.bf16.msra.mxu0 0
        %1342 = vmatpush.bf16.msra.mxu0 0
        %1343 = vmatpush.bf16.msra.mxu0 0
        %1344 = vmatpush.bf16.msra.mxu0 0
        %1345 = vmatpush.bf16.msra.mxu0 0
        %1346 = vmatpush.bf16.msra.mxu0 %v1334
        %1347 = vmatmul.bf16.gmra.mxu0 %v1331
        %v1348 = vpop.f32.mrf.mxu0
        %v1349 = vadd.f32 0.0, %v1348
        %v1350 = vpop.f32.mrf.mxu0
        %1351 = vdwg.mxu0
        %1352 = vmatpush.bf16.msra.mxu0 0
        %1353 = vmatpush.bf16.msra.mxu0 0
        %1354 = vmatpush.bf16.msra.mxu0 0
        %1355 = vmatpush.bf16.msra.mxu0 0
        %1356 = vmatpush.bf16.msra.mxu0 0
        %1357 = vmatpush.bf16.msra.mxu0 0
        %1358 = vmatpush.bf16.msra.mxu0 0
        %1359 = vmatpush.bf16.msra.mxu0 %v1337
        %1360 = vmatmul.bf16.gmra.mxu0 %v1331
        %v1361 = vpop.f32.mrf.mxu0
        %v1362 = vadd.f32 0.0, %v1361
        %v1363 = vpop.f32.mrf.mxu0
        %1364 = vdwg.mxu0
        %v1365 = vadd.f32 %v1294, %v1349
        %v1366 = vadd.f32 %v1307, %v1362
        %1367 = vrot.lane.b32.xlu0 %v1196, 1
        %v1368 = vpop.permute.xlu0 %1367
        %1369 = vrot.lane.b32.xlu0 %v1197, 1
        %v1370 = vpop.permute.xlu0 %1369
        %vm1371 = vcmp.lt.s32.totalorder %v1203, 1
        %v1372 = vsel %vm1371, %v1368, %v1370
        %v1373 = vsel %vm1371, %v1370, %v1368
        %s1374 = scalar_lea.vmem [#allocation2], 6
        %v1375 = vld [vmem:[%s1374] sm:$0x3]
        %v1377 = vperm.slane %v1375, 0
        %v1378 = vperm.slane %v1375, 1
        %v1381 = vmul.f32 %v1373, %v1377
        %v1382 = vmul.f32 %v1372, %v1378
        %s1383 = scalar_lea.vmem %s53, 12
        %v1384 = vld [vmem:[%s1383] sm:$0xf]
        %v1385 = vpack.c.bf16 %v1381, %v1381
        %v1386 = vpack.c.bf16 %v1382, %v1382
        %v1388 = vsel %vm1238, %v1384, 0
        %v1391 = vsel %vm1242, %v1385, 0
        %v1394 = vsel %vm1242, %v1386, 0
        %1396 = vmatpush.bf16.msra.mxu0 0
        %1397 = vmatpush.bf16.msra.mxu0 0
        %1398 = vmatpush.bf16.msra.mxu0 0
        %1399 = vmatpush.bf16.msra.mxu0 0
        %1400 = vmatpush.bf16.msra.mxu0 0
        %1401 = vmatpush.bf16.msra.mxu0 0
        %1402 = vmatpush.bf16.msra.mxu0 0
        %1403 = vmatpush.bf16.msra.mxu0 %v1391
        %1404 = vmatmul.bf16.gmra.mxu0 %v1388
        %v1405 = vpop.f32.mrf.mxu0
        %v1406 = vadd.f32 0.0, %v1405
        %v1407 = vpop.f32.mrf.mxu0
        %1408 = vdwg.mxu0
        %1409 = vmatpush.bf16.msra.mxu0 0
        %1410 = vmatpush.bf16.msra.mxu0 0
        %1411 = vmatpush.bf16.msra.mxu0 0
        %1412 = vmatpush.bf16.msra.mxu0 0
        %1413 = vmatpush.bf16.msra.mxu0 0
        %1414 = vmatpush.bf16.msra.mxu0 0
        %1415 = vmatpush.bf16.msra.mxu0 0
        %1416 = vmatpush.bf16.msra.mxu0 %v1394
        %1417 = vmatmul.bf16.gmra.mxu0 %v1388
        %v1418 = vpop.f32.mrf.mxu0
        %v1419 = vadd.f32 0.0, %v1418
        %v1420 = vpop.f32.mrf.mxu0
        %1421 = vdwg.mxu0
        %v1422 = vadd.f32 %v1365, %v1406
        %v1423 = vadd.f32 %v1366, %v1419
        %s1424 = scalar_lea.vmem %s53, 16
        %v1425 = vld [vmem:[%s1424] sm:$0xf]
        %v1426 = vpack.c.bf16 %v1196, %v1196
        %v1427 = vpack.c.bf16 %v1197, %v1197
        %v1429 = vsel %vm1238, %v1425, 0
        %v1432 = vsel %vm1242, %v1426, 0
        %v1435 = vsel %vm1242, %v1427, 0
        %1437 = vmatpush.bf16.msra.mxu0 0
        %1438 = vmatpush.bf16.msra.mxu0 0
        %1439 = vmatpush.bf16.msra.mxu0 0
        %1440 = vmatpush.bf16.msra.mxu0 0
        %1441 = vmatpush.bf16.msra.mxu0 0
        %1442 = vmatpush.bf16.msra.mxu0 0
        %1443 = vmatpush.bf16.msra.mxu0 0
        %1444 = vmatpush.bf16.msra.mxu0 %v1432
        %1445 = vmatmul.bf16.gmra.mxu0 %v1429
        %v1446 = vpop.f32.mrf.mxu0
        %v1447 = vadd.f32 0.0, %v1446
        %v1448 = vpop.f32.mrf.mxu0
        %1449 = vdwg.mxu0
        %1450 = vmatpush.bf16.msra.mxu0 0
        %1451 = vmatpush.bf16.msra.mxu0 0
        %1452 = vmatpush.bf16.msra.mxu0 0
        %1453 = vmatpush.bf16.msra.mxu0 0
        %1454 = vmatpush.bf16.msra.mxu0 0
        %1455 = vmatpush.bf16.msra.mxu0 0
        %1456 = vmatpush.bf16.msra.mxu0 0
        %1457 = vmatpush.bf16.msra.mxu0 %v1435
        %1458 = vmatmul.bf16.gmra.mxu0 %v1429
        %v1459 = vpop.f32.mrf.mxu0
        %v1460 = vadd.f32 0.0, %v1459
        %v1461 = vpop.f32.mrf.mxu0
        %1462 = vdwg.mxu0
        %v1463 = vadd.f32 %v1422, %v1447
        %v1464 = vadd.f32 %v1423, %v1460
        %1465 = vrot.lane.b32.xlu0 %v1196, 127
        %v1466 = vpop.permute.xlu0 %1465
        %1467 = vrot.lane.b32.xlu0 %v1197, 127
        %v1468 = vpop.permute.xlu0 %1467
        %vm1469 = vcmp.lt.s32.totalorder %v1203, 127
        %v1470 = vsel %vm1469, %v1466, %v1468
        %v1471 = vsel %vm1469, %v1468, %v1466
        %s1472 = scalar_lea.vmem [#allocation2], 8
        %v1473 = vld [vmem:[%s1472] sm:$0x3]
        %v1475 = vperm.slane %v1473, 0
        %v1476 = vperm.slane %v1473, 1
        %v1479 = vmul.f32 %v1470, %v1475
        %v1480 = vmul.f32 %v1471, %v1476
        %s1481 = scalar_lea.vmem %s53, 20
        %v1482 = vld [vmem:[%s1481] sm:$0xf]
        %v1483 = vpack.c.bf16 %v1479, %v1479
        %v1484 = vpack.c.bf16 %v1480, %v1480
        %v1486 = vsel %vm1238, %v1482, 0
        %v1489 = vsel %vm1242, %v1483, 0
        %v1492 = vsel %vm1242, %v1484, 0
        %1494 = vmatpush.bf16.msra.mxu0 0
        %1495 = vmatpush.bf16.msra.mxu0 0
        %1496 = vmatpush.bf16.msra.mxu0 0
        %1497 = vmatpush.bf16.msra.mxu0 0
        %1498 = vmatpush.bf16.msra.mxu0 0
        %1499 = vmatpush.bf16.msra.mxu0 0
        %1500 = vmatpush.bf16.msra.mxu0 0
        %1501 = vmatpush.bf16.msra.mxu0 %v1489
        %1502 = vmatmul.bf16.gmra.mxu0 %v1486
        %v1503 = vpop.f32.mrf.mxu0
        %v1504 = vadd.f32 0.0, %v1503
        %v1505 = vpop.f32.mrf.mxu0
        %1506 = vdwg.mxu0
        %1507 = vmatpush.bf16.msra.mxu0 0
        %1508 = vmatpush.bf16.msra.mxu0 0
        %1509 = vmatpush.bf16.msra.mxu0 0
        %1510 = vmatpush.bf16.msra.mxu0 0
        %1511 = vmatpush.bf16.msra.mxu0 0
        %1512 = vmatpush.bf16.msra.mxu0 0
        %1513 = vmatpush.bf16.msra.mxu0 0
        %1514 = vmatpush.bf16.msra.mxu0 %v1492
        %1515 = vmatmul.bf16.gmra.mxu0 %v1486
        %v1516 = vpop.f32.mrf.mxu0
        %v1517 = vadd.f32 0.0, %v1516
        %v1518 = vpop.f32.mrf.mxu0
        %1519 = vdwg.mxu0
        %v1520 = vadd.f32 %v1463, %v1504
        %v1521 = vadd.f32 %v1464, %v1517
        %1522 = vrot.lane.b32.xlu0 %v1196, 113
        %v1523 = vpop.permute.xlu0 %1522
        %1524 = vrot.lane.b32.xlu0 %v1197, 113
        %v1525 = vpop.permute.xlu0 %1524
        %vm1526 = vcmp.lt.s32.totalorder %v1203, 113
        %v1527 = vsel %vm1526, %v1523, %v1525
        %v1528 = vsel %vm1526, %v1525, %v1523
        %s1529 = scalar_lea.vmem [#allocation2], 10
        %v1530 = vld [vmem:[%s1529] sm:$0x3]
        %v1532 = vperm.slane %v1530, 0
        %v1533 = vperm.slane %v1530, 1
        %v1536 = vmul.f32 %v1527, %v1532
        %v1537 = vmul.f32 %v1528, %v1533
        %s1538 = scalar_lea.vmem %s53, 24
        %v1539 = vld [vmem:[%s1538] sm:$0xf]
        %v1540 = vpack.c.bf16 %v1536, %v1536
        %v1541 = vpack.c.bf16 %v1537, %v1537
        %v1543 = vsel %vm1238, %v1539, 0
        %v1546 = vsel %vm1242, %v1540, 0
        %v1549 = vsel %vm1242, %v1541, 0
        %1551 = vmatpush.bf16.msra.mxu0 0
        %1552 = vmatpush.bf16.msra.mxu0 0
        %1553 = vmatpush.bf16.msra.mxu0 0
        %1554 = vmatpush.bf16.msra.mxu0 0
        %1555 = vmatpush.bf16.msra.mxu0 0
        %1556 = vmatpush.bf16.msra.mxu0 0
        %1557 = vmatpush.bf16.msra.mxu0 0
        %1558 = vmatpush.bf16.msra.mxu0 %v1546
        %1559 = vmatmul.bf16.gmra.mxu0 %v1543
        %v1560 = vpop.f32.mrf.mxu0
        %v1561 = vadd.f32 0.0, %v1560
        %v1562 = vpop.f32.mrf.mxu0
        %1563 = vdwg.mxu0
        %1564 = vmatpush.bf16.msra.mxu0 0
        %1565 = vmatpush.bf16.msra.mxu0 0
        %1566 = vmatpush.bf16.msra.mxu0 0
        %1567 = vmatpush.bf16.msra.mxu0 0
        %1568 = vmatpush.bf16.msra.mxu0 0
        %1569 = vmatpush.bf16.msra.mxu0 0
        %1570 = vmatpush.bf16.msra.mxu0 0
        %1571 = vmatpush.bf16.msra.mxu0 %v1549
        %1572 = vmatmul.bf16.gmra.mxu0 %v1543
        %v1573 = vpop.f32.mrf.mxu0
        %v1574 = vadd.f32 0.0, %v1573
        %v1575 = vpop.f32.mrf.mxu0
        %1576 = vdwg.mxu0
        %v1577 = vadd.f32 %v1520, %v1561
        %v1578 = vadd.f32 %v1521, %v1574
        %1579 = vrot.lane.b32.xlu0 %v1196, 112
        %v1580 = vpop.permute.xlu0 %1579
        %1581 = vrot.lane.b32.xlu0 %v1197, 112
        %v1582 = vpop.permute.xlu0 %1581
        %vm1583 = vcmp.lt.s32.totalorder %v1203, 112
        %v1584 = vsel %vm1583, %v1580, %v1582
        %v1585 = vsel %vm1583, %v1582, %v1580
        %s1586 = scalar_lea.vmem [#allocation2], 12
        %v1587 = vld [vmem:[%s1586] sm:$0x3]
        %v1589 = vperm.slane %v1587, 0
        %v1590 = vperm.slane %v1587, 1
        %v1593 = vmul.f32 %v1584, %v1589
        %v1594 = vmul.f32 %v1585, %v1590
        %s1595 = scalar_lea.vmem %s53, 28
        %v1596 = vld [vmem:[%s1595] sm:$0xf]
        %v1597 = vpack.c.bf16 %v1593, %v1593
        %v1598 = vpack.c.bf16 %v1594, %v1594
        %v1600 = vsel %vm1238, %v1596, 0
        %v1603 = vsel %vm1242, %v1597, 0
        %v1606 = vsel %vm1242, %v1598, 0
        %1608 = vmatpush.bf16.msra.mxu0 0
        %1609 = vmatpush.bf16.msra.mxu0 0
        %1610 = vmatpush.bf16.msra.mxu0 0
        %1611 = vmatpush.bf16.msra.mxu0 0
        %1612 = vmatpush.bf16.msra.mxu0 0
        %1613 = vmatpush.bf16.msra.mxu0 0
        %1614 = vmatpush.bf16.msra.mxu0 0
        %1615 = vmatpush.bf16.msra.mxu0 %v1603
        %1616 = vmatmul.bf16.gmra.mxu0 %v1600
        %v1617 = vpop.f32.mrf.mxu0
        %v1618 = vadd.f32 0.0, %v1617
        %v1619 = vpop.f32.mrf.mxu0
        %1620 = vdwg.mxu0
        %1621 = vmatpush.bf16.msra.mxu0 0
        %1622 = vmatpush.bf16.msra.mxu0 0
        %1623 = vmatpush.bf16.msra.mxu0 0
        %1624 = vmatpush.bf16.msra.mxu0 0
        %1625 = vmatpush.bf16.msra.mxu0 0
        %1626 = vmatpush.bf16.msra.mxu0 0
        %1627 = vmatpush.bf16.msra.mxu0 0
        %1628 = vmatpush.bf16.msra.mxu0 %v1606
        %1629 = vmatmul.bf16.gmra.mxu0 %v1600
        %v1630 = vpop.f32.mrf.mxu0
        %v1631 = vadd.f32 0.0, %v1630
        %v1632 = vpop.f32.mrf.mxu0
        %1633 = vdwg.mxu0
        %v1634 = vadd.f32 %v1577, %v1618
        %v1635 = vadd.f32 %v1578, %v1631
        %1636 = vrot.lane.b32.xlu0 %v1196, 111
        %v1637 = vpop.permute.xlu0 %1636
        %1638 = vrot.lane.b32.xlu0 %v1197, 111
        %v1639 = vpop.permute.xlu0 %1638
        %vm1640 = vcmp.lt.s32.totalorder %v1203, 111
        %v1641 = vsel %vm1640, %v1637, %v1639
        %v1642 = vsel %vm1640, %v1639, %v1637
        %s1643 = scalar_lea.vmem [#allocation2], 14
        %v1644 = vld [vmem:[%s1643] sm:$0x3]
        %v1646 = vperm.slane %v1644, 0
        %v1647 = vperm.slane %v1644, 1
        %v1650 = vmul.f32 %v1641, %v1646
        %v1651 = vmul.f32 %v1642, %v1647
        %s1652 = scalar_lea.vmem %s53, 32
        %v1653 = vld [vmem:[%s1652] sm:$0xf]
        %v1654 = vpack.c.bf16 %v1650, %v1650
        %v1655 = vpack.c.bf16 %v1651, %v1651
        %v1657 = vsel %vm1238, %v1653, 0
        %v1660 = vsel %vm1242, %v1654, 0
        %v1663 = vsel %vm1242, %v1655, 0
        %1665 = vmatpush.bf16.msra.mxu0 0
        %1666 = vmatpush.bf16.msra.mxu0 0
        %1667 = vmatpush.bf16.msra.mxu0 0
        %1668 = vmatpush.bf16.msra.mxu0 0
        %1669 = vmatpush.bf16.msra.mxu0 0
        %1670 = vmatpush.bf16.msra.mxu0 0
        %1671 = vmatpush.bf16.msra.mxu0 0
        %1672 = vmatpush.bf16.msra.mxu0 %v1660
        %1673 = vmatmul.bf16.gmra.mxu0 %v1657
        %v1674 = vpop.f32.mrf.mxu0
        %v1675 = vadd.f32 0.0, %v1674
        %v1676 = vpop.f32.mrf.mxu0
        %1677 = vdwg.mxu0
        %1678 = vmatpush.bf16.msra.mxu0 0
        %1679 = vmatpush.bf16.msra.mxu0 0
        %1680 = vmatpush.bf16.msra.mxu0 0
        %1681 = vmatpush.bf16.msra.mxu0 0
        %1682 = vmatpush.bf16.msra.mxu0 0
        %1683 = vmatpush.bf16.msra.mxu0 0
        %1684 = vmatpush.bf16.msra.mxu0 0
        %1685 = vmatpush.bf16.msra.mxu0 %v1663
        %1686 = vmatmul.bf16.gmra.mxu0 %v1657
        %v1687 = vpop.f32.mrf.mxu0
        %v1688 = vadd.f32 0.0, %v1687
        %v1689 = vpop.f32.mrf.mxu0
        %1690 = vdwg.mxu0
        %v1691 = vadd.f32 %v1634, %v1675
        %v1692 = vadd.f32 %v1635, %v1688
        %v1693 = vld [vmem:[%s49] sm:$0xff]
        %1695 = vset.pattern.permute.xlu0 0
        %1696 = vperm.xlu0 %1695, %v1693
        %v1697 = vpop.permute.xlu0 %1696
        %v1699 = vadd.f32 %v1691, %v1697
        %v1700 = vadd.f32 %v1692, %v1697
        %v1701 = vmax.f32 %v1699, 0.0
        %v1702 = vmax.f32 %v1700, 0.0
        %1703 = vrot.lane.b32.xlu0 %v1701, 17
        %v1704 = vpop.permute.xlu0 %1703
        %1705 = vrot.lane.b32.xlu0 %v1702, 17
        %v1706 = vpop.permute.xlu0 %1705
        %v1707 = vsel %vm1204, %v1704, %v1706
        %v1708 = vsel %vm1204, %v1706, %v1704
        %v1709 = vmul.f32 %v1708, %v1209
        %v1710 = vmul.f32 %v1707, %v1210
        %v1711 = vld [vmem:[%s55] sm:$0xf]
        %v1712 = vpack.c.bf16 %v1709, %v1709
        %v1713 = vpack.c.bf16 %v1710, %v1710
        %1714 = vrot.lane.b32.xlu0 %v1701, 16
        %v1715 = vpop.permute.xlu0 %1714
        %1716 = vrot.lane.b32.xlu0 %v1702, 16
        %v1717 = vpop.permute.xlu0 %1716
        %v1718 = vsel %vm1222, %v1715, %v1717
        %v1719 = vsel %vm1222, %v1717, %v1715
        %v1720 = vmul.f32 %v1719, %v1228
        %v1721 = vmul.f32 %v1718, %v1229
        %s1722 = scalar_lea.vmem %s55, 4
        %v1723 = vld [vmem:[%s1722] sm:$0xf]
        %v1724 = vpack.c.bf16 %v1720, %v1720
        %v1725 = vpack.c.bf16 %v1721, %v1721
        %v1727 = vsel %vm1238, %v1723, 0
        %v1730 = vsel %vm1242, %v1724, 0
        %v1733 = vsel %vm1242, %v1725, 0
        %1735 = vmatpush.bf16.msra.mxu0 0
        %1736 = vmatpush.bf16.msra.mxu0 0
        %1737 = vmatpush.bf16.msra.mxu0 0
        %1738 = vmatpush.bf16.msra.mxu0 0
        %1739 = vmatpush.bf16.msra.mxu0 0
        %1740 = vmatpush.bf16.msra.mxu0 0
        %1741 = vmatpush.bf16.msra.mxu0 0
        %1742 = vmatpush.bf16.msra.mxu0 %v1730
        %1743 = vmatmul.bf16.gmra.mxu0 %v1727
        %v1744 = vpop.f32.mrf.mxu0
        %v1745 = vadd.f32 0.0, %v1744
        %v1746 = vpop.f32.mrf.mxu0
        %1747 = vdwg.mxu0
        %1748 = vmatpush.bf16.msra.mxu0 0
        %1749 = vmatpush.bf16.msra.mxu0 0
        %1750 = vmatpush.bf16.msra.mxu0 0
        %1751 = vmatpush.bf16.msra.mxu0 0
        %1752 = vmatpush.bf16.msra.mxu0 0
        %1753 = vmatpush.bf16.msra.mxu0 0
        %1754 = vmatpush.bf16.msra.mxu0 0
        %1755 = vmatpush.bf16.msra.mxu0 %v1733
        %1756 = vmatmul.bf16.gmra.mxu0 %v1727
        %v1757 = vpop.f32.mrf.mxu0
        %v1758 = vadd.f32 0.0, %v1757
        %v1759 = vpop.f32.mrf.mxu0
        %1760 = vdwg.mxu0
        %v1762 = vsel %vm1238, %v1711, 0
        %v1765 = vsel %vm1242, %v1712, 0
        %v1768 = vsel %vm1242, %v1713, 0
        %1770 = vmatpush.bf16.msra.mxu0 0
        %1771 = vmatpush.bf16.msra.mxu0 0
        %1772 = vmatpush.bf16.msra.mxu0 0
        %1773 = vmatpush.bf16.msra.mxu0 0
        %1774 = vmatpush.bf16.msra.mxu0 0
        %1775 = vmatpush.bf16.msra.mxu0 0
        %1776 = vmatpush.bf16.msra.mxu0 0
        %1777 = vmatpush.bf16.msra.mxu0 %v1765
        %1778 = vmatmul.bf16.gmra.mxu0 %v1762
        %v1779 = vpop.f32.mrf.mxu0
        %v1780 = vadd.f32 %v1745, %v1779
        %v1781 = vpop.f32.mrf.mxu0
        %1782 = vdwg.mxu0
        %1783 = vmatpush.bf16.msra.mxu0 0
        %1784 = vmatpush.bf16.msra.mxu0 0
        %1785 = vmatpush.bf16.msra.mxu0 0
        %1786 = vmatpush.bf16.msra.mxu0 0
        %1787 = vmatpush.bf16.msra.mxu0 0
        %1788 = vmatpush.bf16.msra.mxu0 0
        %1789 = vmatpush.bf16.msra.mxu0 0
        %1790 = vmatpush.bf16.msra.mxu0 %v1768
        %1791 = vmatmul.bf16.gmra.mxu0 %v1762
        %v1792 = vpop.f32.mrf.mxu0
        %v1793 = vadd.f32 %v1758, %v1792
        %v1794 = vpop.f32.mrf.mxu0
        %1795 = vdwg.mxu0
        %1796 = vrot.lane.b32.xlu0 %v1701, 15
        %v1797 = vpop.permute.xlu0 %1796
        %1798 = vrot.lane.b32.xlu0 %v1702, 15
        %v1799 = vpop.permute.xlu0 %1798
        %v1800 = vsel %vm1314, %v1797, %v1799
        %v1801 = vsel %vm1314, %v1799, %v1797
        %v1802 = vmul.f32 %v1801, %v1320
        %v1803 = vmul.f32 %v1800, %v1321
        %s1804 = scalar_lea.vmem %s55, 8
        %v1805 = vld [vmem:[%s1804] sm:$0xf]
        %v1806 = vpack.c.bf16 %v1802, %v1802
        %v1807 = vpack.c.bf16 %v1803, %v1803
        %v1809 = vsel %vm1238, %v1805, 0
        %v1812 = vsel %vm1242, %v1806, 0
        %v1815 = vsel %vm1242, %v1807, 0
        %1817 = vmatpush.bf16.msra.mxu0 0
        %1818 = vmatpush.bf16.msra.mxu0 0
        %1819 = vmatpush.bf16.msra.mxu0 0
        %1820 = vmatpush.bf16.msra.mxu0 0
        %1821 = vmatpush.bf16.msra.mxu0 0
        %1822 = vmatpush.bf16.msra.mxu0 0
        %1823 = vmatpush.bf16.msra.mxu0 0
        %1824 = vmatpush.bf16.msra.mxu0 %v1812
        %1825 = vmatmul.bf16.gmra.mxu0 %v1809
        %v1826 = vpop.f32.mrf.mxu0
        %v1827 = vadd.f32 0.0, %v1826
        %v1828 = vpop.f32.mrf.mxu0
        %1829 = vdwg.mxu0
        %1830 = vmatpush.bf16.msra.mxu0 0
        %1831 = vmatpush.bf16.msra.mxu0 0
        %1832 = vmatpush.bf16.msra.mxu0 0
        %1833 = vmatpush.bf16.msra.mxu0 0
        %1834 = vmatpush.bf16.msra.mxu0 0
        %1835 = vmatpush.bf16.msra.mxu0 0
        %1836 = vmatpush.bf16.msra.mxu0 0
        %1837 = vmatpush.bf16.msra.mxu0 %v1815
        %1838 = vmatmul.bf16.gmra.mxu0 %v1809
        %v1839 = vpop.f32.mrf.mxu0
        %v1840 = vadd.f32 0.0, %v1839
        %v1841 = vpop.f32.mrf.mxu0
        %1842 = vdwg.mxu0
        %v1843 = vadd.f32 %v1780, %v1827
        %v1844 = vadd.f32 %v1793, %v1840
        %1845 = vrot.lane.b32.xlu0 %v1701, 1
        %v1846 = vpop.permute.xlu0 %1845
        %1847 = vrot.lane.b32.xlu0 %v1702, 1
        %v1848 = vpop.permute.xlu0 %1847
        %v1849 = vsel %vm1371, %v1846, %v1848
        %v1850 = vsel %vm1371, %v1848, %v1846
        %v1851 = vmul.f32 %v1850, %v1377
        %v1852 = vmul.f32 %v1849, %v1378
        %s1853 = scalar_lea.vmem %s55, 12
        %v1854 = vld [vmem:[%s1853] sm:$0xf]
        %v1855 = vpack.c.bf16 %v1851, %v1851
        %v1856 = vpack.c.bf16 %v1852, %v1852
        %v1858 = vsel %vm1238, %v1854, 0
        %v1861 = vsel %vm1242, %v1855, 0
        %v1864 = vsel %vm1242, %v1856, 0
        %1866 = vmatpush.bf16.msra.mxu0 0
        %1867 = vmatpush.bf16.msra.mxu0 0
        %1868 = vmatpush.bf16.msra.mxu0 0
        %1869 = vmatpush.bf16.msra.mxu0 0
        %1870 = vmatpush.bf16.msra.mxu0 0
        %1871 = vmatpush.bf16.msra.mxu0 0
        %1872 = vmatpush.bf16.msra.mxu0 0
        %1873 = vmatpush.bf16.msra.mxu0 %v1861
        %1874 = vmatmul.bf16.gmra.mxu0 %v1858
        %v1875 = vpop.f32.mrf.mxu0
        %v1876 = vadd.f32 0.0, %v1875
        %v1877 = vpop.f32.mrf.mxu0
        %1878 = vdwg.mxu0
        %1879 = vmatpush.bf16.msra.mxu0 0
        %1880 = vmatpush.bf16.msra.mxu0 0
        %1881 = vmatpush.bf16.msra.mxu0 0
        %1882 = vmatpush.bf16.msra.mxu0 0
        %1883 = vmatpush.bf16.msra.mxu0 0
        %1884 = vmatpush.bf16.msra.mxu0 0
        %1885 = vmatpush.bf16.msra.mxu0 0
        %1886 = vmatpush.bf16.msra.mxu0 %v1864
        %1887 = vmatmul.bf16.gmra.mxu0 %v1858
        %v1888 = vpop.f32.mrf.mxu0
        %v1889 = vadd.f32 0.0, %v1888
        %v1890 = vpop.f32.mrf.mxu0
        %1891 = vdwg.mxu0
        %v1892 = vadd.f32 %v1843, %v1876
        %v1893 = vadd.f32 %v1844, %v1889
        %s1894 = scalar_lea.vmem %s55, 16
        %v1895 = vld [vmem:[%s1894] sm:$0xf]
        %v1896 = vpack.c.bf16 %v1701, %v1701
        %v1897 = vpack.c.bf16 %v1702, %v1702
        %v1899 = vsel %vm1238, %v1895, 0
        %v1902 = vsel %vm1242, %v1896, 0
        %v1905 = vsel %vm1242, %v1897, 0
        %1907 = vmatpush.bf16.msra.mxu0 0
        %1908 = vmatpush.bf16.msra.mxu0 0
        %1909 = vmatpush.bf16.msra.mxu0 0
        %1910 = vmatpush.bf16.msra.mxu0 0
        %1911 = vmatpush.bf16.msra.mxu0 0
        %1912 = vmatpush.bf16.msra.mxu0 0
        %1913 = vmatpush.bf16.msra.mxu0 0
        %1914 = vmatpush.bf16.msra.mxu0 %v1902
        %1915 = vmatmul.bf16.gmra.mxu0 %v1899
        %v1916 = vpop.f32.mrf.mxu0
        %v1917 = vadd.f32 0.0, %v1916
        %v1918 = vpop.f32.mrf.mxu0
        %1919 = vdwg.mxu0
        %1920 = vmatpush.bf16.msra.mxu0 0
        %1921 = vmatpush.bf16.msra.mxu0 0
        %1922 = vmatpush.bf16.msra.mxu0 0
        %1923 = vmatpush.bf16.msra.mxu0 0
        %1924 = vmatpush.bf16.msra.mxu0 0
        %1925 = vmatpush.bf16.msra.mxu0 0
        %1926 = vmatpush.bf16.msra.mxu0 0
        %1927 = vmatpush.bf16.msra.mxu0 %v1905
        %1928 = vmatmul.bf16.gmra.mxu0 %v1899
        %v1929 = vpop.f32.mrf.mxu0
        %v1930 = vadd.f32 0.0, %v1929
        %v1931 = vpop.f32.mrf.mxu0
        %1932 = vdwg.mxu0
        %v1933 = vadd.f32 %v1892, %v1917
        %v1934 = vadd.f32 %v1893, %v1930
        %1935 = vrot.lane.b32.xlu0 %v1701, 127
        %v1936 = vpop.permute.xlu0 %1935
        %1937 = vrot.lane.b32.xlu0 %v1702, 127
        %v1938 = vpop.permute.xlu0 %1937
        %v1939 = vsel %vm1469, %v1936, %v1938
        %v1940 = vsel %vm1469, %v1938, %v1936
        %v1941 = vmul.f32 %v1939, %v1475
        %v1942 = vmul.f32 %v1940, %v1476
        %s1943 = scalar_lea.vmem %s55, 20
        %v1944 = vld [vmem:[%s1943] sm:$0xf]
        %v1945 = vpack.c.bf16 %v1941, %v1941
        %v1946 = vpack.c.bf16 %v1942, %v1942
        %v1948 = vsel %vm1238, %v1944, 0
        %v1951 = vsel %vm1242, %v1945, 0
        %v1954 = vsel %vm1242, %v1946, 0
        %1956 = vmatpush.bf16.msra.mxu0 0
        %1957 = vmatpush.bf16.msra.mxu0 0
        %1958 = vmatpush.bf16.msra.mxu0 0
        %1959 = vmatpush.bf16.msra.mxu0 0
        %1960 = vmatpush.bf16.msra.mxu0 0
        %1961 = vmatpush.bf16.msra.mxu0 0
        %1962 = vmatpush.bf16.msra.mxu0 0
        %1963 = vmatpush.bf16.msra.mxu0 %v1951
        %1964 = vmatmul.bf16.gmra.mxu0 %v1948
        %v1965 = vpop.f32.mrf.mxu0
        %v1966 = vadd.f32 0.0, %v1965
        %v1967 = vpop.f32.mrf.mxu0
        %1968 = vdwg.mxu0
        %1969 = vmatpush.bf16.msra.mxu0 0
        %1970 = vmatpush.bf16.msra.mxu0 0
        %1971 = vmatpush.bf16.msra.mxu0 0
        %1972 = vmatpush.bf16.msra.mxu0 0
        %1973 = vmatpush.bf16.msra.mxu0 0
        %1974 = vmatpush.bf16.msra.mxu0 0
        %1975 = vmatpush.bf16.msra.mxu0 0
        %1976 = vmatpush.bf16.msra.mxu0 %v1954
        %1977 = vmatmul.bf16.gmra.mxu0 %v1948
        %v1978 = vpop.f32.mrf.mxu0
        %v1979 = vadd.f32 0.0, %v1978
        %v1980 = vpop.f32.mrf.mxu0
        %1981 = vdwg.mxu0
        %v1982 = vadd.f32 %v1933, %v1966
        %v1983 = vadd.f32 %v1934, %v1979
        %1984 = vrot.lane.b32.xlu0 %v1701, 113
        %v1985 = vpop.permute.xlu0 %1984
        %1986 = vrot.lane.b32.xlu0 %v1702, 113
        %v1987 = vpop.permute.xlu0 %1986
        %v1988 = vsel %vm1526, %v1985, %v1987
        %v1989 = vsel %vm1526, %v1987, %v1985
        %v1990 = vmul.f32 %v1988, %v1532
        %v1991 = vmul.f32 %v1989, %v1533
        %s1992 = scalar_lea.vmem %s55, 24
        %v1993 = vld [vmem:[%s1992] sm:$0xf]
        %v1994 = vpack.c.bf16 %v1990, %v1990
        %v1995 = vpack.c.bf16 %v1991, %v1991
        %v1997 = vsel %vm1238, %v1993, 0
        %v2000 = vsel %vm1242, %v1994, 0
        %v2003 = vsel %vm1242, %v1995, 0
        %2005 = vmatpush.bf16.msra.mxu0 0
        %2006 = vmatpush.bf16.msra.mxu0 0
        %2007 = vmatpush.bf16.msra.mxu0 0
        %2008 = vmatpush.bf16.msra.mxu0 0
        %2009 = vmatpush.bf16.msra.mxu0 0
        %2010 = vmatpush.bf16.msra.mxu0 0
        %2011 = vmatpush.bf16.msra.mxu0 0
        %2012 = vmatpush.bf16.msra.mxu0 %v2000
        %2013 = vmatmul.bf16.gmra.mxu0 %v1997
        %v2014 = vpop.f32.mrf.mxu0
        %v2015 = vadd.f32 0.0, %v2014
        %v2016 = vpop.f32.mrf.mxu0
        %2017 = vdwg.mxu0
        %2018 = vmatpush.bf16.msra.mxu0 0
        %2019 = vmatpush.bf16.msra.mxu0 0
        %2020 = vmatpush.bf16.msra.mxu0 0
        %2021 = vmatpush.bf16.msra.mxu0 0
        %2022 = vmatpush.bf16.msra.mxu0 0
        %2023 = vmatpush.bf16.msra.mxu0 0
        %2024 = vmatpush.bf16.msra.mxu0 0
        %2025 = vmatpush.bf16.msra.mxu0 %v2003
        %2026 = vmatmul.bf16.gmra.mxu0 %v1997
        %v2027 = vpop.f32.mrf.mxu0
        %v2028 = vadd.f32 0.0, %v2027
        %v2029 = vpop.f32.mrf.mxu0
        %2030 = vdwg.mxu0
        %v2031 = vadd.f32 %v1982, %v2015
        %v2032 = vadd.f32 %v1983, %v2028
        %2033 = vrot.lane.b32.xlu0 %v1701, 112
        %v2034 = vpop.permute.xlu0 %2033
        %2035 = vrot.lane.b32.xlu0 %v1702, 112
        %v2036 = vpop.permute.xlu0 %2035
        %v2037 = vsel %vm1583, %v2034, %v2036
        %v2038 = vsel %vm1583, %v2036, %v2034
        %v2039 = vmul.f32 %v2037, %v1589
        %v2040 = vmul.f32 %v2038, %v1590
        %s2041 = scalar_lea.vmem %s55, 28
        %v2042 = vld [vmem:[%s2041] sm:$0xf]
        %v2043 = vpack.c.bf16 %v2039, %v2039
        %v2044 = vpack.c.bf16 %v2040, %v2040
        %v2046 = vsel %vm1238, %v2042, 0
        %v2049 = vsel %vm1242, %v2043, 0
        %v2052 = vsel %vm1242, %v2044, 0
        %2054 = vmatpush.bf16.msra.mxu0 0
        %2055 = vmatpush.bf16.msra.mxu0 0
        %2056 = vmatpush.bf16.msra.mxu0 0
        %2057 = vmatpush.bf16.msra.mxu0 0
        %2058 = vmatpush.bf16.msra.mxu0 0
        %2059 = vmatpush.bf16.msra.mxu0 0
        %2060 = vmatpush.bf16.msra.mxu0 0
        %2061 = vmatpush.bf16.msra.mxu0 %v2049
        %2062 = vmatmul.bf16.gmra.mxu0 %v2046
        %v2063 = vpop.f32.mrf.mxu0
        %v2064 = vadd.f32 0.0, %v2063
        %v2065 = vpop.f32.mrf.mxu0
        %2066 = vdwg.mxu0
        %2067 = vmatpush.bf16.msra.mxu0 0
        %2068 = vmatpush.bf16.msra.mxu0 0
        %2069 = vmatpush.bf16.msra.mxu0 0
        %2070 = vmatpush.bf16.msra.mxu0 0
        %2071 = vmatpush.bf16.msra.mxu0 0
        %2072 = vmatpush.bf16.msra.mxu0 0
        %2073 = vmatpush.bf16.msra.mxu0 0
        %2074 = vmatpush.bf16.msra.mxu0 %v2052
        %2075 = vmatmul.bf16.gmra.mxu0 %v2046
        %v2076 = vpop.f32.mrf.mxu0
        %v2077 = vadd.f32 0.0, %v2076
        %v2078 = vpop.f32.mrf.mxu0
        %2079 = vdwg.mxu0
        %v2080 = vadd.f32 %v2031, %v2064
        %v2081 = vadd.f32 %v2032, %v2077
        %2082 = vrot.lane.b32.xlu0 %v1701, 111
        %v2083 = vpop.permute.xlu0 %2082
        %2084 = vrot.lane.b32.xlu0 %v1702, 111
        %v2085 = vpop.permute.xlu0 %2084
        %v2086 = vsel %vm1640, %v2083, %v2085
        %v2087 = vsel %vm1640, %v2085, %v2083
        %v2088 = vmul.f32 %v2086, %v1646
        %v2089 = vmul.f32 %v2087, %v1647
        %s2090 = scalar_lea.vmem %s55, 32
        %v2091 = vld [vmem:[%s2090] sm:$0xf]
        %v2092 = vpack.c.bf16 %v2088, %v2088
        %v2093 = vpack.c.bf16 %v2089, %v2089
        %v2095 = vsel %vm1238, %v2091, 0
        %v2098 = vsel %vm1242, %v2092, 0
        %v2101 = vsel %vm1242, %v2093, 0
        %2103 = vmatpush.bf16.msra.mxu0 0
        %2104 = vmatpush.bf16.msra.mxu0 0
        %2105 = vmatpush.bf16.msra.mxu0 0
        %2106 = vmatpush.bf16.msra.mxu0 0
        %2107 = vmatpush.bf16.msra.mxu0 0
        %2108 = vmatpush.bf16.msra.mxu0 0
        %2109 = vmatpush.bf16.msra.mxu0 0
        %2110 = vmatpush.bf16.msra.mxu0 %v2098
        %2111 = vmatmul.bf16.gmra.mxu0 %v2095
        %v2112 = vpop.f32.mrf.mxu0
        %v2113 = vadd.f32 0.0, %v2112
        %v2114 = vpop.f32.mrf.mxu0
        %2115 = vdwg.mxu0
        %2116 = vmatpush.bf16.msra.mxu0 0
        %2117 = vmatpush.bf16.msra.mxu0 0
        %2118 = vmatpush.bf16.msra.mxu0 0
        %2119 = vmatpush.bf16.msra.mxu0 0
        %2120 = vmatpush.bf16.msra.mxu0 0
        %2121 = vmatpush.bf16.msra.mxu0 0
        %2122 = vmatpush.bf16.msra.mxu0 0
        %2123 = vmatpush.bf16.msra.mxu0 %v2101
        %2124 = vmatmul.bf16.gmra.mxu0 %v2095
        %v2125 = vpop.f32.mrf.mxu0
        %v2126 = vadd.f32 0.0, %v2125
        %v2127 = vpop.f32.mrf.mxu0
        %2128 = vdwg.mxu0
        %v2129 = vadd.f32 %v2080, %v2113
        %v2130 = vadd.f32 %v2081, %v2126
        %v2131 = vld [vmem:[%s51] sm:$0xff]
        %2133 = vset.pattern.permute.xlu0 0
        %2134 = vperm.xlu0 %2133, %v2131
        %v2135 = vpop.permute.xlu0 %2134
        %v2137 = vadd.f32 %v2129, %v2135
        %v2138 = vadd.f32 %v2130, %v2135
        %v2139 = vmax.f32 %v2137, 0.0
        %v2140 = vmax.f32 %v2138, 0.0
        %2141 = vrot.lane.b32.xlu0 %v2139, 127
        %v2142 = vpop.permute.xlu0 %2141
        %2143 = vrot.lane.b32.xlu0 %v2140, 127
        %v2144 = vpop.permute.xlu0 %2143
        %v2145 = vsel %vm1469, %v2142, %v2144
        %v2146 = vsel %vm1469, %v2144, %v2142
        %v2147 = vmax.f32 %v2139, %v2145
        %v2148 = vmax.f32 %v2140, %v2146
        %2149 = vrot.lane.b32.xlu0 %v2139, 112
        %v2150 = vpop.permute.xlu0 %2149
        %2151 = vrot.lane.b32.xlu0 %v2140, 112
        %v2152 = vpop.permute.xlu0 %2151
        %v2153 = vsel %vm1583, %v2150, %v2152
        %v2154 = vsel %vm1583, %v2152, %v2150
        %v2155 = vmax.f32 %v2147, %v2153
        %v2156 = vmax.f32 %v2148, %v2154
        %2157 = vrot.lane.b32.xlu0 %v2139, 111
        %v2158 = vpop.permute.xlu0 %2157
        %2159 = vrot.lane.b32.xlu0 %v2140, 111
        %v2160 = vpop.permute.xlu0 %2159
        %v2161 = vsel %vm1640, %v2158, %v2160
        %v2162 = vsel %vm1640, %v2160, %v2158
        %v2163 = vmax.f32 %v2155, %v2161
        %v2164 = vmax.f32 %v2156, %v2162
        %v2165 = vld [vmem:[#allocation6] sm:$0xf]
        %v2166 = vld [vmem:[#allocation6 + $0x4] sm:$0xf]
        %v2167 = vld [vmem:[#allocation6 + $0x8] sm:$0xf]
        %v2168 = vld [vmem:[#allocation6 + $0xc] sm:$0xf]
        %v2169 = vld [vmem:[#allocation6 + $0x10] sm:$0xf]
        %v2170 = vld [vmem:[#allocation6 + $0x14] sm:$0xf]
        %v2171 = vld [vmem:[#allocation6 + $0x18] sm:$0xf]
        %v2172 = vld [vmem:[#allocation6 + $0x1c] sm:$0xf]
        %v2173 = vld [vmem:[#allocation6 + $0x20] sm:$0xf]
        %v2174 = vld [vmem:[#allocation6 + $0x24] sm:$0xf]
        %v2175 = vld [vmem:[#allocation6 + $0x28] sm:$0xf]
        %v2176 = vld [vmem:[#allocation6 + $0x2c] sm:$0xf]
        %v2177 = vld [vmem:[#allocation6 + $0x30] sm:$0xf]
        %v2178 = vld [vmem:[#allocation6 + $0x34] sm:$0xf]
        %v2179 = vld [vmem:[#allocation6 + $0x38] sm:$0xf]
        %v2180 = vld [vmem:[#allocation6 + $0x3c] sm:$0xf]
        %v2181 = vld [vmem:[#allocation6 + $0x40] sm:$0xf]
        %v2182 = vld [vmem:[#allocation6 + $0x44] sm:$0xf]
        %v2183 = vld [vmem:[#allocation6 + $0x48] sm:$0xf]
        %v2184 = vld [vmem:[#allocation6 + $0x4c] sm:$0xf]
        %v2185 = vld [vmem:[#allocation6 + $0x50] sm:$0xf]
        %v2186 = vld [vmem:[#allocation6 + $0x54] sm:$0xf]
        %v2187 = vld [vmem:[#allocation6 + $0x58] sm:$0xf]
        %v2188 = vld [vmem:[#allocation6 + $0x5c] sm:$0xf]
        %v2189 = vld [vmem:[#allocation6 + $0x60] sm:$0xf]
        %v2190 = vld [vmem:[#allocation6 + $0x64] sm:$0xf]
        %v2191 = vld [vmem:[#allocation6 + $0x68] sm:$0xf]
        %v2192 = vld [vmem:[#allocation6 + $0x6c] sm:$0xf]
        %v2193 = vld [vmem:[#allocation6 + $0x70] sm:$0xf]
        %v2194 = vld [vmem:[#allocation6 + $0x74] sm:$0xf]
        %v2195 = vld [vmem:[#allocation6 + $0x78] sm:$0xf]
        %v2196 = vld [vmem:[#allocation6 + $0x7c] sm:$0xf]
        %v2197 = vpack.c.bf16 %v2163, %v2163
        %v2198 = vpack.c.bf16 %v2164, %v2164
        %v2231 = vunpack.c.l.b16 %v2165
        %v2232 = vunpack.c.l.b16 %v2166
        %v2233 = vunpack.c.l.b16 %v2167
        %v2234 = vunpack.c.l.b16 %v2168
        %v2235 = vunpack.c.l.b16 %v2169
        %v2236 = vunpack.c.l.b16 %v2170
        %v2237 = vunpack.c.l.b16 %v2171
        %v2238 = vunpack.c.l.b16 %v2172
        %v2239 = vunpack.c.l.b16 %v2173
        %v2240 = vunpack.c.l.b16 %v2174
        %v2241 = vunpack.c.l.b16 %v2175
        %v2242 = vunpack.c.l.b16 %v2176
        %v2243 = vunpack.c.l.b16 %v2177
        %v2244 = vunpack.c.l.b16 %v2178
        %v2245 = vunpack.c.l.b16 %v2179
        %v2246 = vunpack.c.l.b16 %v2180
        %v2247 = vunpack.c.l.b16 %v2181
        %v2248 = vunpack.c.l.b16 %v2182
        %v2249 = vunpack.c.l.b16 %v2183
        %v2250 = vunpack.c.l.b16 %v2184
        %v2251 = vunpack.c.l.b16 %v2185
        %v2252 = vunpack.c.l.b16 %v2186
        %v2253 = vunpack.c.l.b16 %v2187
        %v2254 = vunpack.c.l.b16 %v2188
        %v2255 = vunpack.c.l.b16 %v2189
        %v2256 = vunpack.c.l.b16 %v2190
        %v2257 = vunpack.c.l.b16 %v2191
        %v2258 = vunpack.c.l.b16 %v2192
        %v2259 = vunpack.c.l.b16 %v2193
        %v2260 = vunpack.c.l.b16 %v2194
        %v2261 = vunpack.c.l.b16 %v2195
        %v2262 = vunpack.c.l.b16 %v2196
        %v2263 = vpack.c.b16 %v2232, %v2231
        %v2264 = vpack.c.b16 %v2234, %v2233
        %v2265 = vpack.c.b16 %v2236, %v2235
        %v2266 = vpack.c.b16 %v2238, %v2237
        %v2267 = vpack.c.b16 %v2240, %v2239
        %v2268 = vpack.c.b16 %v2242, %v2241
        %v2269 = vpack.c.b16 %v2244, %v2243
        %v2270 = vpack.c.b16 %v2246, %v2245
        %v2271 = vpack.c.b16 %v2248, %v2247
        %v2272 = vpack.c.b16 %v2250, %v2249
        %v2273 = vpack.c.b16 %v2252, %v2251
        %v2274 = vpack.c.b16 %v2254, %v2253
        %v2275 = vpack.c.b16 %v2256, %v2255
        %v2276 = vpack.c.b16 %v2258, %v2257
        %v2277 = vpack.c.b16 %v2260, %v2259
        %v2278 = vpack.c.b16 %v2262, %v2261
        %2295 = vmatpush.bf16.msra.mxu0 %v2270
        %2296 = vmatpush.bf16.msra.mxu0 %v2269
        %2297 = vmatpush.bf16.msra.mxu0 %v2268
        %2298 = vmatpush.bf16.msra.mxu0 %v2267
        %2299 = vmatpush.bf16.msra.mxu0 %v2266
        %2300 = vmatpush.bf16.msra.mxu0 %v2265
        %2301 = vmatpush.bf16.msra.mxu0 %v2264
        %2302 = vmatpush.bf16.msra.mxu0 %v2263
        %2303 = vmatmul.bf16.gmra.mxu0 %v2197
        %v2304 = vpop.f32.mrf.mxu0
        %v2305 = vadd.f32 0.0, %v2304
        %v2306 = vpop.f32.mrf.mxu0
        %2307 = vdwg.mxu0
        %2308 = vmatpush.bf16.msra.mxu0 %v2278
        %2309 = vmatpush.bf16.msra.mxu0 %v2277
        %2310 = vmatpush.bf16.msra.mxu0 %v2276
        %2311 = vmatpush.bf16.msra.mxu0 %v2275
        %2312 = vmatpush.bf16.msra.mxu0 %v2274
        %2313 = vmatpush.bf16.msra.mxu0 %v2273
        %2314 = vmatpush.bf16.msra.mxu0 %v2272
        %2315 = vmatpush.bf16.msra.mxu0 %v2271
        %2316 = vmatmul.bf16.gmra.mxu0 %v2198
        %v2317 = vpop.f32.mrf.mxu0
        %v2318 = vadd.f32 %v2305, %v2317
        %v2319 = vpop.f32.mrf.mxu0
        %2320 = vdwg.mxu0
        %2321 = vrot.lane.b32.xlu0 %v2318, 9
        %v2322 = vpop.permute.xlu0 %2321
        %v2323 = vld [vmem:[#allocation4] sm:$0x1]
        %v2325 = vperm.slane %v2323, 0
        %v2327 = vmul.f32 %v2322, %v2325
        %v2328 = vld [vmem:[%s61] sm:$0xf]
        %v2329 = vld [vmem:[%s61 + $0x4] sm:$0xf]
        %v2330 = vpack.c.bf16 %v2327, %v2327
        %2331 = vrot.lane.b32.xlu0 %v2318, 8
        %v2332 = vpop.permute.xlu0 %2331
        %s2333 = scalar_lea.vmem [#allocation4], 1
        %v2334 = vld [vmem:[%s2333] sm:$0x1]
        %v2336 = vperm.slane %v2334, 0
        %v2338 = vmul.f32 %v2332, %v2336
        %s2339 = scalar_lea.vmem %s61, 8
        %v2340 = vld [vmem:[%s2339] sm:$0xf]
        %v2341 = vld [vmem:[%s2339 + $0x4] sm:$0xf]
        %v2342 = vpack.c.bf16 %v2338, %v2338
        %v2345 = vunpack.c.l.b16 %v2340
        %v2346 = vunpack.c.l.b16 %v2341
        %v2347 = vpack.c.b16 %v2346, %v2345
        %v2349 = vsel %vm1238, %v2347, 0
        %v2352 = vsel %vm1242, %v2342, 0
        %2354 = vmatpush.bf16.msra.mxu0 0
        %2355 = vmatpush.bf16.msra.mxu0 0
        %2356 = vmatpush.bf16.msra.mxu0 0
        %2357 = vmatpush.bf16.msra.mxu0 0
        %2358 = vmatpush.bf16.msra.mxu0 0
        %2359 = vmatpush.bf16.msra.mxu0 0
        %2360 = vmatpush.bf16.msra.mxu0 0
        %2361 = vmatpush.bf16.msra.mxu0 %v2352
        %2362 = vmatmul.bf16.gmra.mxu0 %v2349
        %v2363 = vpop.f32.mrf.mxu0
        %v2364 = vadd.f32 0.0, %v2363
        %v2365 = vpop.f32.mrf.mxu0
        %v2366 = vadd.f32 0.0, %v2365
        %2367 = vdwg.mxu0
        %v2370 = vunpack.c.l.b16 %v2328
        %v2371 = vunpack.c.l.b16 %v2329
        %v2372 = vpack.c.b16 %v2371, %v2370
        %v2374 = vsel %vm1238, %v2372, 0
        %v2377 = vsel %vm1242, %v2330, 0
        %2379 = vmatpush.bf16.msra.mxu0 0
        %2380 = vmatpush.bf16.msra.mxu0 0
        %2381 = vmatpush.bf16.msra.mxu0 0
        %2382 = vmatpush.bf16.msra.mxu0 0
        %2383 = vmatpush.bf16.msra.mxu0 0
        %2384 = vmatpush.bf16.msra.mxu0 0
        %2385 = vmatpush.bf16.msra.mxu0 0
        %2386 = vmatpush.bf16.msra.mxu0 %v2377
        %2387 = vmatmul.bf16.gmra.mxu0 %v2374
        %v2388 = vpop.f32.mrf.mxu0
        %v2389 = vadd.f32 %v2364, %v2388
        %v2390 = vpop.f32.mrf.mxu0
        %v2391 = vadd.f32 %v2366, %v2390
        %2392 = vdwg.mxu0
        %2393 = vrot.lane.b32.xlu0 %v2318, 7
        %v2394 = vpop.permute.xlu0 %2393
        %s2395 = scalar_lea.vmem [#allocation4], 2
        %v2396 = vld [vmem:[%s2395] sm:$0x1]
        %v2398 = vperm.slane %v2396, 0
        %v2400 = vmul.f32 %v2394, %v2398
        %s2401 = scalar_lea.vmem %s61, 16
        %v2402 = vld [vmem:[%s2401] sm:$0xf]
        %v2403 = vld [vmem:[%s2401 + $0x4] sm:$0xf]
        %v2404 = vpack.c.bf16 %v2400, %v2400
        %v2407 = vunpack.c.l.b16 %v2402
        %v2408 = vunpack.c.l.b16 %v2403
        %v2409 = vpack.c.b16 %v2408, %v2407
        %v2411 = vsel %vm1238, %v2409, 0
        %v2414 = vsel %vm1242, %v2404, 0
        %2416 = vmatpush.bf16.msra.mxu0 0
        %2417 = vmatpush.bf16.msra.mxu0 0
        %2418 = vmatpush.bf16.msra.mxu0 0
        %2419 = vmatpush.bf16.msra.mxu0 0
        %2420 = vmatpush.bf16.msra.mxu0 0
        %2421 = vmatpush.bf16.msra.mxu0 0
        %2422 = vmatpush.bf16.msra.mxu0 0
        %2423 = vmatpush.bf16.msra.mxu0 %v2414
        %2424 = vmatmul.bf16.gmra.mxu0 %v2411
        %v2425 = vpop.f32.mrf.mxu0
        %v2426 = vadd.f32 0.0, %v2425
        %v2427 = vpop.f32.mrf.mxu0
        %v2428 = vadd.f32 0.0, %v2427
        %2429 = vdwg.mxu0
        %v2430 = vadd.f32 %v2389, %v2426
        %v2431 = vadd.f32 %v2391, %v2428
        %2432 = vrot.lane.b32.xlu0 %v2318, 1
        %v2433 = vpop.permute.xlu0 %2432
        %s2434 = scalar_lea.vmem [#allocation4], 3
        %v2435 = vld [vmem:[%s2434] sm:$0x1]
        %v2437 = vperm.slane %v2435, 0
        %v2439 = vmul.f32 %v2433, %v2437
        %s2440 = scalar_lea.vmem %s61, 24
        %v2441 = vld [vmem:[%s2440] sm:$0xf]
        %v2442 = vld [vmem:[%s2440 + $0x4] sm:$0xf]
        %v2443 = vpack.c.bf16 %v2439, %v2439
        %v2446 = vunpack.c.l.b16 %v2441
        %v2447 = vunpack.c.l.b16 %v2442
        %v2448 = vpack.c.b16 %v2447, %v2446
        %v2450 = vsel %vm1238, %v2448, 0
        %v2453 = vsel %vm1242, %v2443, 0
        %2455 = vmatpush.bf16.msra.mxu0 0
        %2456 = vmatpush.bf16.msra.mxu0 0
        %2457 = vmatpush.bf16.msra.mxu0 0
        %2458 = vmatpush.bf16.msra.mxu0 0
        %2459 = vmatpush.bf16.msra.mxu0 0
        %2460 = vmatpush.bf16.msra.mxu0 0
        %2461 = vmatpush.bf16.msra.mxu0 0
        %2462 = vmatpush.bf16.msra.mxu0 %v2453
        %2463 = vmatmul.bf16.gmra.mxu0 %v2450
        %v2464 = vpop.f32.mrf.mxu0
        %v2465 = vadd.f32 0.0, %v2464
        %v2466 = vpop.f32.mrf.mxu0
        %v2467 = vadd.f32 0.0, %v2466
        %2468 = vdwg.mxu0
        %v2469 = vadd.f32 %v2430, %v2465
        %v2470 = vadd.f32 %v2431, %v2467
        %s2471 = scalar_lea.vmem %s61, 32
        %v2472 = vld [vmem:[%s2471] sm:$0xf]
        %v2473 = vld [vmem:[%s2471 + $0x4] sm:$0xf]
        %v2474 = vpack.c.bf16 %v2318, %v2318
        %v2477 = vunpack.c.l.b16 %v2472
        %v2478 = vunpack.c.l.b16 %v2473
        %v2479 = vpack.c.b16 %v2478, %v2477
        %v2481 = vsel %vm1238, %v2479, 0
        %v2484 = vsel %vm1242, %v2474, 0
        %2486 = vmatpush.bf16.msra.mxu0 0
        %2487 = vmatpush.bf16.msra.mxu0 0
        %2488 = vmatpush.bf16.msra.mxu0 0
        %2489 = vmatpush.bf16.msra.mxu0 0
        %2490 = vmatpush.bf16.msra.mxu0 0
        %2491 = vmatpush.bf16.msra.mxu0 0
        %2492 = vmatpush.bf16.msra.mxu0 0
        %2493 = vmatpush.bf16.msra.mxu0 %v2484
        %2494 = vmatmul.bf16.gmra.mxu0 %v2481
        %v2495 = vpop.f32.mrf.mxu0
        %v2496 = vadd.f32 0.0, %v2495
        %v2497 = vpop.f32.mrf.mxu0
        %v2498 = vadd.f32 0.0, %v2497
        %2499 = vdwg.mxu0
        %v2500 = vadd.f32 %v2469, %v2496
        %v2501 = vadd.f32 %v2470, %v2498
        %2502 = vrot.lane.b32.xlu0 %v2318, 127
        %v2503 = vpop.permute.xlu0 %2502
        %s2504 = scalar_lea.vmem [#allocation4], 4
        %v2505 = vld [vmem:[%s2504] sm:$0x1]
        %v2507 = vperm.slane %v2505, 0
        %v2509 = vmul.f32 %v2503, %v2507
        %s2510 = scalar_lea.vmem %s61, 40
        %v2511 = vld [vmem:[%s2510] sm:$0xf]
        %v2512 = vld [vmem:[%s2510 + $0x4] sm:$0xf]
        %v2513 = vpack.c.bf16 %v2509, %v2509
        %v2516 = vunpack.c.l.b16 %v2511
        %v2517 = vunpack.c.l.b16 %v2512
        %v2518 = vpack.c.b16 %v2517, %v2516
        %v2520 = vsel %vm1238, %v2518, 0
        %v2523 = vsel %vm1242, %v2513, 0
        %2525 = vmatpush.bf16.msra.mxu0 0
        %2526 = vmatpush.bf16.msra.mxu0 0
        %2527 = vmatpush.bf16.msra.mxu0 0
        %2528 = vmatpush.bf16.msra.mxu0 0
        %2529 = vmatpush.bf16.msra.mxu0 0
        %2530 = vmatpush.bf16.msra.mxu0 0
        %2531 = vmatpush.bf16.msra.mxu0 0
        %2532 = vmatpush.bf16.msra.mxu0 %v2523
        %2533 = vmatmul.bf16.gmra.mxu0 %v2520
        %v2534 = vpop.f32.mrf.mxu0
        %v2535 = vadd.f32 0.0, %v2534
        %v2536 = vpop.f32.mrf.mxu0
        %v2537 = vadd.f32 0.0, %v2536
        %2538 = vdwg.mxu0
        %v2539 = vadd.f32 %v2500, %v2535
        %v2540 = vadd.f32 %v2501, %v2537
        %2541 = vrot.lane.b32.xlu0 %v2318, 121
        %v2542 = vpop.permute.xlu0 %2541
        %s2543 = scalar_lea.vmem [#allocation4], 5
        %v2544 = vld [vmem:[%s2543] sm:$0x1]
        %v2546 = vperm.slane %v2544, 0
        %v2548 = vmul.f32 %v2542, %v2546
        %s2549 = scalar_lea.vmem %s61, 48
        %v2550 = vld [vmem:[%s2549] sm:$0xf]
        %v2551 = vld [vmem:[%s2549 + $0x4] sm:$0xf]
        %v2552 = vpack.c.bf16 %v2548, %v2548
        %v2555 = vunpack.c.l.b16 %v2550
        %v2556 = vunpack.c.l.b16 %v2551
        %v2557 = vpack.c.b16 %v2556, %v2555
        %v2559 = vsel %vm1238, %v2557, 0
        %v2562 = vsel %vm1242, %v2552, 0
        %2564 = vmatpush.bf16.msra.mxu0 0
        %2565 = vmatpush.bf16.msra.mxu0 0
        %2566 = vmatpush.bf16.msra.mxu0 0
        %2567 = vmatpush.bf16.msra.mxu0 0
        %2568 = vmatpush.bf16.msra.mxu0 0
        %2569 = vmatpush.bf16.msra.mxu0 0
        %2570 = vmatpush.bf16.msra.mxu0 0
        %2571 = vmatpush.bf16.msra.mxu0 %v2562
        %2572 = vmatmul.bf16.gmra.mxu0 %v2559
        %v2573 = vpop.f32.mrf.mxu0
        %v2574 = vadd.f32 0.0, %v2573
        %v2575 = vpop.f32.mrf.mxu0
        %v2576 = vadd.f32 0.0, %v2575
        %2577 = vdwg.mxu0
        %v2578 = vadd.f32 %v2539, %v2574
        %v2579 = vadd.f32 %v2540, %v2576
        %2580 = vrot.lane.b32.xlu0 %v2318, 120
        %v2581 = vpop.permute.xlu0 %2580
        %s2582 = scalar_lea.vmem [#allocation4], 6
        %v2583 = vld [vmem:[%s2582] sm:$0x1]
        %v2585 = vperm.slane %v2583, 0
        %v2587 = vmul.f32 %v2581, %v2585
        %s2588 = scalar_lea.vmem %s61, 56
        %v2589 = vld [vmem:[%s2588] sm:$0xf]
        %v2590 = vld [vmem:[%s2588 + $0x4] sm:$0xf]
        %v2591 = vpack.c.bf16 %v2587, %v2587
        %v2594 = vunpack.c.l.b16 %v2589
        %v2595 = vunpack.c.l.b16 %v2590
        %v2596 = vpack.c.b16 %v2595, %v2594
        %v2598 = vsel %vm1238, %v2596, 0
        %v2601 = vsel %vm1242, %v2591, 0
        %2603 = vmatpush.bf16.msra.mxu0 0
        %2604 = vmatpush.bf16.msra.mxu0 0
        %2605 = vmatpush.bf16.msra.mxu0 0
        %2606 = vmatpush.bf16.msra.mxu0 0
        %2607 = vmatpush.bf16.msra.mxu0 0
        %2608 = vmatpush.bf16.msra.mxu0 0
        %2609 = vmatpush.bf16.msra.mxu0 0
        %2610 = vmatpush.bf16.msra.mxu0 %v2601
        %2611 = vmatmul.bf16.gmra.mxu0 %v2598
        %v2612 = vpop.f32.mrf.mxu0
        %v2613 = vadd.f32 0.0, %v2612
        %v2614 = vpop.f32.mrf.mxu0
        %v2615 = vadd.f32 0.0, %v2614
        %2616 = vdwg.mxu0
        %v2617 = vadd.f32 %v2578, %v2613
        %v2618 = vadd.f32 %v2579, %v2615
        %2619 = vrot.lane.b32.xlu0 %v2318, 119
        %v2620 = vpop.permute.xlu0 %2619
        %s2621 = scalar_lea.vmem [#allocation4], 7
        %v2622 = vld [vmem:[%s2621] sm:$0x1]
        %v2624 = vperm.slane %v2622, 0
        %v2626 = vmul.f32 %v2620, %v2624
        %s2627 = scalar_lea.vmem %s61, 64
        %v2628 = vld [vmem:[%s2627] sm:$0xf]
        %v2629 = vld [vmem:[%s2627 + $0x4] sm:$0xf]
        %v2630 = vpack.c.bf16 %v2626, %v2626
        %v2633 = vunpack.c.l.b16 %v2628
        %v2634 = vunpack.c.l.b16 %v2629
        %v2635 = vpack.c.b16 %v2634, %v2633
        %v2637 = vsel %vm1238, %v2635, 0
        %v2640 = vsel %vm1242, %v2630, 0
        %2642 = vmatpush.bf16.msra.mxu0 0
        %2643 = vmatpush.bf16.msra.mxu0 0
        %2644 = vmatpush.bf16.msra.mxu0 0
        %2645 = vmatpush.bf16.msra.mxu0 0
        %2646 = vmatpush.bf16.msra.mxu0 0
        %2647 = vmatpush.bf16.msra.mxu0 0
        %2648 = vmatpush.bf16.msra.mxu0 0
        %2649 = vmatpush.bf16.msra.mxu0 %v2640
        %2650 = vmatmul.bf16.gmra.mxu0 %v2637
        %v2651 = vpop.f32.mrf.mxu0
        %v2652 = vadd.f32 0.0, %v2651
        %v2653 = vpop.f32.mrf.mxu0
        %v2654 = vadd.f32 0.0, %v2653
        %2655 = vdwg.mxu0
        %v2656 = vadd.f32 %v2617, %v2652
        %v2657 = vadd.f32 %v2618, %v2654
        %v2658 = vld [vmem:[%s57] sm:$0xff]
        %v2659 = vld [vmem:[%s57 + $0x8] sm:$0xff]
        %2661 = vset.pattern.permute.xlu0 0
        %2662 = vperm.xlu0 %2661, %v2658
        %v2663 = vpop.permute.xlu0 %2662
        %2666 = vset.pattern.permute.xlu0 0
        %2667 = vperm.xlu0 %2666, %v2659
        %v2668 = vpop.permute.xlu0 %2667
        %v2670 = vadd.f32 %v2656, %v2663
        %v2671 = vadd.f32 %v2657, %v2668
        %v2672 = vmax.f32 %v2670, 0.0
        %v2673 = vmax.f32 %v2671, 0.0
        %2674 = vrot.lane.b32.xlu0 %v2672, 9
        %v2675 = vpop.permute.xlu0 %2674
        %2676 = vrot.lane.b32.xlu0 %v2673, 9
        %v2677 = vpop.permute.xlu0 %2676
        %v2678 = vmul.f32 %v2675, %v2325
        %v2679 = vmul.f32 %v2677, %v2325
        %v2680 = vld [vmem:[#allocation15] sm:$0xf]
        %v2681 = vld [vmem:[#allocation15 + $0x4] sm:$0xf]
        %v2682 = vpack.c.bf16 %v2679, %v2678
        %2683 = vrot.lane.b32.xlu0 %v2672, 8
        %v2684 = vpop.permute.xlu0 %2683
        %2685 = vrot.lane.b32.xlu0 %v2673, 8
        %v2686 = vpop.permute.xlu0 %2685
        %v2687 = vmul.f32 %v2684, %v2336
        %v2688 = vmul.f32 %v2686, %v2336
        %s2689 = scalar_lea.vmem [#allocation15], 8
        %v2690 = vld [vmem:[%s2689] sm:$0xf]
        %v2691 = vld [vmem:[%s2689 + $0x4] sm:$0xf]
        %v2692 = vpack.c.bf16 %v2688, %v2687
        %v2695 = vunpack.c.l.b16 %v2690
        %v2696 = vunpack.c.l.b16 %v2691
        %v2697 = vpack.c.b16 %v2696, %v2695
        %vm2698 = vcmask 130048
        %v2700 = vsel %vm2698, %v2697, 0
        %2702 = vmatpush.bf16.msra.mxu0 0
        %2703 = vmatpush.bf16.msra.mxu0 0
        %2704 = vmatpush.bf16.msra.mxu0 0
        %2705 = vmatpush.bf16.msra.mxu0 0
        %2706 = vmatpush.bf16.msra.mxu0 0
        %2707 = vmatpush.bf16.msra.mxu0 0
        %2708 = vmatpush.bf16.msra.mxu0 0
        %2709 = vmatpush.bf16.msra.mxu0 %v2692
        %2710 = vmatmul.bf16.gmra.mxu0 %v2700
        %v2711 = vpop.f32.mrf.mxu0
        %v2712 = vadd.f32 0.0, %v2711
        %v2713 = vpop.f32.mrf.mxu0
        %v2714 = vadd.f32 0.0, %v2713
        %2715 = vdwg.mxu0
        %v2718 = vunpack.c.l.b16 %v2680
        %v2719 = vunpack.c.l.b16 %v2681
        %v2720 = vpack.c.b16 %v2719, %v2718
        %v2722 = vsel %vm2698, %v2720, 0
        %2724 = vmatpush.bf16.msra.mxu0 0
        %2725 = vmatpush.bf16.msra.mxu0 0
        %2726 = vmatpush.bf16.msra.mxu0 0
        %2727 = vmatpush.bf16.msra.mxu0 0
        %2728 = vmatpush.bf16.msra.mxu0 0
        %2729 = vmatpush.bf16.msra.mxu0 0
        %2730 = vmatpush.bf16.msra.mxu0 0
        %2731 = vmatpush.bf16.msra.mxu0 %v2682
        %2732 = vmatmul.bf16.gmra.mxu0 %v2722
        %v2733 = vpop.f32.mrf.mxu0
        %v2734 = vadd.f32 %v2712, %v2733
        %v2735 = vpop.f32.mrf.mxu0
        %v2736 = vadd.f32 %v2714, %v2735
        %2737 = vdwg.mxu0
        %2738 = vrot.lane.b32.xlu0 %v2672, 7
        %v2739 = vpop.permute.xlu0 %2738
        %2740 = vrot.lane.b32.xlu0 %v2673, 7
        %v2741 = vpop.permute.xlu0 %2740
        %v2742 = vmul.f32 %v2739, %v2398
        %v2743 = vmul.f32 %v2741, %v2398
        %s2744 = scalar_lea.vmem [#allocation15], 16
        %v2745 = vld [vmem:[%s2744] sm:$0xf]
        %v2746 = vld [vmem:[%s2744 + $0x4] sm:$0xf]
        %v2747 = vpack.c.bf16 %v2743, %v2742
        %v2750 = vunpack.c.l.b16 %v2745
        %v2751 = vunpack.c.l.b16 %v2746
        %v2752 = vpack.c.b16 %v2751, %v2750
        %v2754 = vsel %vm2698, %v2752, 0
        %2756 = vmatpush.bf16.msra.mxu0 0
        %2757 = vmatpush.bf16.msra.mxu0 0
        %2758 = vmatpush.bf16.msra.mxu0 0
        %2759 = vmatpush.bf16.msra.mxu0 0
        %2760 = vmatpush.bf16.msra.mxu0 0
        %2761 = vmatpush.bf16.msra.mxu0 0
        %2762 = vmatpush.bf16.msra.mxu0 0
        %2763 = vmatpush.bf16.msra.mxu0 %v2747
        %2764 = vmatmul.bf16.gmra.mxu0 %v2754
        %v2765 = vpop.f32.mrf.mxu0
        %v2766 = vadd.f32 0.0, %v2765
        %v2767 = vpop.f32.mrf.mxu0
        %v2768 = vadd.f32 0.0, %v2767
        %2769 = vdwg.mxu0
        %v2770 = vadd.f32 %v2734, %v2766
        %v2771 = vadd.f32 %v2736, %v2768
        %2772 = vrot.lane.b32.xlu0 %v2672, 1
        %v2773 = vpop.permute.xlu0 %2772
        %2774 = vrot.lane.b32.xlu0 %v2673, 1
        %v2775 = vpop.permute.xlu0 %2774
        %v2776 = vmul.f32 %v2773, %v2437
        %v2777 = vmul.f32 %v2775, %v2437
        %s2778 = scalar_lea.vmem [#allocation15], 24
        %v2779 = vld [vmem:[%s2778] sm:$0xf]
        %v2780 = vld [vmem:[%s2778 + $0x4] sm:$0xf]
        %v2781 = vpack.c.bf16 %v2777, %v2776
        %v2784 = vunpack.c.l.b16 %v2779
        %v2785 = vunpack.c.l.b16 %v2780
        %v2786 = vpack.c.b16 %v2785, %v2784
        %v2788 = vsel %vm2698, %v2786, 0
        %2790 = vmatpush.bf16.msra.mxu0 0
        %2791 = vmatpush.bf16.msra.mxu0 0
        %2792 = vmatpush.bf16.msra.mxu0 0
        %2793 = vmatpush.bf16.msra.mxu0 0
        %2794 = vmatpush.bf16.msra.mxu0 0
        %2795 = vmatpush.bf16.msra.mxu0 0
        %2796 = vmatpush.bf16.msra.mxu0 0
        %2797 = vmatpush.bf16.msra.mxu0 %v2781
        %2798 = vmatmul.bf16.gmra.mxu0 %v2788
        %v2799 = vpop.f32.mrf.mxu0
        %v2800 = vadd.f32 0.0, %v2799
        %v2801 = vpop.f32.mrf.mxu0
        %v2802 = vadd.f32 0.0, %v2801
        %2803 = vdwg.mxu0
        %v2804 = vadd.f32 %v2770, %v2800
        %v2805 = vadd.f32 %v2771, %v2802
        %s2806 = scalar_lea.vmem [#allocation15], 32
        %v2807 = vld [vmem:[%s2806] sm:$0xf]
        %v2808 = vld [vmem:[%s2806 + $0x4] sm:$0xf]
        %v2809 = vpack.c.bf16 %v2673, %v2672
        %v2812 = vunpack.c.l.b16 %v2807
        %v2813 = vunpack.c.l.b16 %v2808
        %v2814 = vpack.c.b16 %v2813, %v2812
        %v2816 = vsel %vm2698, %v2814, 0
        %2818 = vmatpush.bf16.msra.mxu0 0
        %2819 = vmatpush.bf16.msra.mxu0 0
        %2820 = vmatpush.bf16.msra.mxu0 0
        %2821 = vmatpush.bf16.msra.mxu0 0
        %2822 = vmatpush.bf16.msra.mxu0 0
        %2823 = vmatpush.bf16.msra.mxu0 0
        %2824 = vmatpush.bf16.msra.mxu0 0
        %2825 = vmatpush.bf16.msra.mxu0 %v2809
        %2826 = vmatmul.bf16.gmra.mxu0 %v2816
        %v2827 = vpop.f32.mrf.mxu0
        %v2828 = vadd.f32 0.0, %v2827
        %v2829 = vpop.f32.mrf.mxu0
        %v2830 = vadd.f32 0.0, %v2829
        %2831 = vdwg.mxu0
        %v2832 = vadd.f32 %v2804, %v2828
        %v2833 = vadd.f32 %v2805, %v2830
        %2834 = vrot.lane.b32.xlu0 %v2672, 127
        %v2835 = vpop.permute.xlu0 %2834
        %2836 = vrot.lane.b32.xlu0 %v2673, 127
        %v2837 = vpop.permute.xlu0 %2836
        %v2838 = vmul.f32 %v2835, %v2507
        %v2839 = vmul.f32 %v2837, %v2507
        %s2840 = scalar_lea.vmem [#allocation15], 40
        %v2841 = vld [vmem:[%s2840] sm:$0xf]
        %v2842 = vld [vmem:[%s2840 + $0x4] sm:$0xf]
        %v2843 = vpack.c.bf16 %v2839, %v2838
        %v2846 = vunpack.c.l.b16 %v2841
        %v2847 = vunpack.c.l.b16 %v2842
        %v2848 = vpack.c.b16 %v2847, %v2846
        %v2850 = vsel %vm2698, %v2848, 0
        %2852 = vmatpush.bf16.msra.mxu0 0
        %2853 = vmatpush.bf16.msra.mxu0 0
        %2854 = vmatpush.bf16.msra.mxu0 0
        %2855 = vmatpush.bf16.msra.mxu0 0
        %2856 = vmatpush.bf16.msra.mxu0 0
        %2857 = vmatpush.bf16.msra.mxu0 0
        %2858 = vmatpush.bf16.msra.mxu0 0
        %2859 = vmatpush.bf16.msra.mxu0 %v2843
        %2860 = vmatmul.bf16.gmra.mxu0 %v2850
        %v2861 = vpop.f32.mrf.mxu0
        %v2862 = vadd.f32 0.0, %v2861
        %v2863 = vpop.f32.mrf.mxu0
        %v2864 = vadd.f32 0.0, %v2863
        %2865 = vdwg.mxu0
        %v2866 = vadd.f32 %v2832, %v2862
        %v2867 = vadd.f32 %v2833, %v2864
        %2868 = vrot.lane.b32.xlu0 %v2672, 121
        %v2869 = vpop.permute.xlu0 %2868
        %2870 = vrot.lane.b32.xlu0 %v2673, 121
        %v2871 = vpop.permute.xlu0 %2870
        %v2872 = vmul.f32 %v2869, %v2546
        %v2873 = vmul.f32 %v2871, %v2546
        %s2874 = scalar_lea.vmem [#allocation15], 48
        %v2875 = vld [vmem:[%s2874] sm:$0xf]
        %v2876 = vld [vmem:[%s2874 + $0x4] sm:$0xf]
        %v2877 = vpack.c.bf16 %v2873, %v2872
        %v2880 = vunpack.c.l.b16 %v2875
        %v2881 = vunpack.c.l.b16 %v2876
        %v2882 = vpack.c.b16 %v2881, %v2880
        %v2884 = vsel %vm2698, %v2882, 0
        %2886 = vmatpush.bf16.msra.mxu0 0
        %2887 = vmatpush.bf16.msra.mxu0 0
        %2888 = vmatpush.bf16.msra.mxu0 0
        %2889 = vmatpush.bf16.msra.mxu0 0
        %2890 = vmatpush.bf16.msra.mxu0 0
        %2891 = vmatpush.bf16.msra.mxu0 0
        %2892 = vmatpush.bf16.msra.mxu0 0
        %2893 = vmatpush.bf16.msra.mxu0 %v2877
        %2894 = vmatmul.bf16.gmra.mxu0 %v2884
        %v2895 = vpop.f32.mrf.mxu0
        %v2896 = vadd.f32 0.0, %v2895
        %v2897 = vpop.f32.mrf.mxu0
        %v2898 = vadd.f32 0.0, %v2897
        %2899 = vdwg.mxu0
        %v2900 = vadd.f32 %v2866, %v2896
        %v2901 = vadd.f32 %v2867, %v2898
        %2902 = vrot.lane.b32.xlu0 %v2672, 120
        %v2903 = vpop.permute.xlu0 %2902
        %2904 = vrot.lane.b32.xlu0 %v2673, 120
        %v2905 = vpop.permute.xlu0 %2904
        %v2906 = vmul.f32 %v2903, %v2585
        %v2907 = vmul.f32 %v2905, %v2585
        %s2908 = scalar_lea.vmem [#allocation15], 56
        %v2909 = vld [vmem:[%s2908] sm:$0xf]
        %v2910 = vld [vmem:[%s2908 + $0x4] sm:$0xf]
        %v2911 = vpack.c.bf16 %v2907, %v2906
        %v2914 = vunpack.c.l.b16 %v2909
        %v2915 = vunpack.c.l.b16 %v2910
        %v2916 = vpack.c.b16 %v2915, %v2914
        %v2918 = vsel %vm2698, %v2916, 0
        %2920 = vmatpush.bf16.msra.mxu0 0
        %2921 = vmatpush.bf16.msra.mxu0 0
        %2922 = vmatpush.bf16.msra.mxu0 0
        %2923 = vmatpush.bf16.msra.mxu0 0
        %2924 = vmatpush.bf16.msra.mxu0 0
        %2925 = vmatpush.bf16.msra.mxu0 0
        %2926 = vmatpush.bf16.msra.mxu0 0
        %2927 = vmatpush.bf16.msra.mxu0 %v2911
        %2928 = vmatmul.bf16.gmra.mxu0 %v2918
        %v2929 = vpop.f32.mrf.mxu0
        %v2930 = vadd.f32 0.0, %v2929
        %v2931 = vpop.f32.mrf.mxu0
        %v2932 = vadd.f32 0.0, %v2931
        %2933 = vdwg.mxu0
        %v2934 = vadd.f32 %v2900, %v2930
        %v2935 = vadd.f32 %v2901, %v2932
        %2936 = vrot.lane.b32.xlu0 %v2672, 119
        %v2937 = vpop.permute.xlu0 %2936
        %2938 = vrot.lane.b32.xlu0 %v2673, 119
        %v2939 = vpop.permute.xlu0 %2938
        %v2940 = vmul.f32 %v2937, %v2624
        %v2941 = vmul.f32 %v2939, %v2624
        %s2942 = scalar_lea.vmem [#allocation15], 64
        %v2943 = vld [vmem:[%s2942] sm:$0xf]
        %v2944 = vld [vmem:[%s2942 + $0x4] sm:$0xf]
        %v2945 = vpack.c.bf16 %v2941, %v2940
        %v2948 = vunpack.c.l.b16 %v2943
        %v2949 = vunpack.c.l.b16 %v2944
        %v2950 = vpack.c.b16 %v2949, %v2948
        %v2952 = vsel %vm2698, %v2950, 0
        %2954 = vmatpush.bf16.msra.mxu0 0
        %2955 = vmatpush.bf16.msra.mxu0 0
        %2956 = vmatpush.bf16.msra.mxu0 0
        %2957 = vmatpush.bf16.msra.mxu0 0
        %2958 = vmatpush.bf16.msra.mxu0 0
        %2959 = vmatpush.bf16.msra.mxu0 0
        %2960 = vmatpush.bf16.msra.mxu0 0
        %2961 = vmatpush.bf16.msra.mxu0 %v2945
        %2962 = vmatmul.bf16.gmra.mxu0 %v2952
        %v2963 = vpop.f32.mrf.mxu0
        %v2964 = vadd.f32 0.0, %v2963
        %v2965 = vpop.f32.mrf.mxu0
        %v2966 = vadd.f32 0.0, %v2965
        %2967 = vdwg.mxu0
        %v2968 = vadd.f32 %v2934, %v2964
        %v2969 = vadd.f32 %v2935, %v2966
        %v2970 = vld [vmem:[%s59] sm:$0xff]
        %v2971 = vld [vmem:[%s59 + $0x8] sm:$0xff]
        %2973 = vset.pattern.permute.xlu0 0
        %2974 = vperm.xlu0 %2973, %v2970
        %v2975 = vpop.permute.xlu0 %2974
        %2978 = vset.pattern.permute.xlu0 0
        %2979 = vperm.xlu0 %2978, %v2971
        %v2980 = vpop.permute.xlu0 %2979
        %v2982 = vadd.f32 %v2968, %v2975
        %v2983 = vadd.f32 %v2969, %v2980
        %v2984 = vmax.f32 %v2982, 0.0
        %v2985 = vmax.f32 %v2983, 0.0
        %2986 = vrot.lane.b32.xlu0 %v2984, 127
        %v2987 = vpop.permute.xlu0 %2986
        %2988 = vrot.lane.b32.xlu0 %v2985, 127
        %v2989 = vpop.permute.xlu0 %2988
        %v2990 = vmax.f32 %v2984, %v2987
        %v2991 = vmax.f32 %v2985, %v2989
        %2992 = vrot.lane.b32.xlu0 %v2984, 120
        %v2993 = vpop.permute.xlu0 %2992
        %2994 = vrot.lane.b32.xlu0 %v2985, 120
        %v2995 = vpop.permute.xlu0 %2994
        %v2996 = vmax.f32 %v2990, %v2993
        %v2997 = vmax.f32 %v2991, %v2995
        %2998 = vrot.lane.b32.xlu0 %v2984, 119
        %v2999 = vpop.permute.xlu0 %2998
        %3000 = vrot.lane.b32.xlu0 %v2985, 119
        %v3001 = vpop.permute.xlu0 %3000
        %v3002 = vmax.f32 %v2996, %v2999
        %v3003 = vmax.f32 %v2997, %v3001
        %v3004 = vld [vmem:[#allocation7] sm:$0xf]
        %v3005 = vld [vmem:[#allocation7 + $0x4] sm:$0xf]
        %v3006 = vld [vmem:[#allocation7 + $0x8] sm:$0xf]
        %v3007 = vld [vmem:[#allocation7 + $0xc] sm:$0xf]
        %v3008 = vld [vmem:[#allocation7 + $0x10] sm:$0xf]
        %v3009 = vld [vmem:[#allocation7 + $0x14] sm:$0xf]
        %v3010 = vld [vmem:[#allocation7 + $0x18] sm:$0xf]
        %v3011 = vld [vmem:[#allocation7 + $0x1c] sm:$0xf]
        %v3012 = vld [vmem:[#allocation7 + $0x20] sm:$0xf]
        %v3013 = vld [vmem:[#allocation7 + $0x24] sm:$0xf]
        %v3014 = vld [vmem:[#allocation7 + $0x28] sm:$0xf]
        %v3015 = vld [vmem:[#allocation7 + $0x2c] sm:$0xf]
        %v3016 = vld [vmem:[#allocation7 + $0x30] sm:$0xf]
        %v3017 = vld [vmem:[#allocation7 + $0x34] sm:$0xf]
        %v3018 = vld [vmem:[#allocation7 + $0x38] sm:$0xf]
        %v3019 = vld [vmem:[#allocation7 + $0x3c] sm:$0xf]
        %v3020 = vpack.c.bf16 %v3003, %v3002
        %v3037 = vunpack.c.l.b16 %v3004
        %v3038 = vunpack.c.l.b16 %v3005
        %v3039 = vunpack.c.l.b16 %v3006
        %v3040 = vunpack.c.l.b16 %v3007
        %v3041 = vunpack.c.l.b16 %v3008
        %v3042 = vunpack.c.l.b16 %v3009
        %v3043 = vunpack.c.l.b16 %v3010
        %v3044 = vunpack.c.l.b16 %v3011
        %v3045 = vunpack.c.l.b16 %v3012
        %v3046 = vunpack.c.l.b16 %v3013
        %v3047 = vunpack.c.l.b16 %v3014
        %v3048 = vunpack.c.l.b16 %v3015
        %v3049 = vunpack.c.l.b16 %v3016
        %v3050 = vunpack.c.l.b16 %v3017
        %v3051 = vunpack.c.l.b16 %v3018
        %v3052 = vunpack.c.l.b16 %v3019
        %v3053 = vpack.c.b16 %v3038, %v3037
        %v3054 = vpack.c.b16 %v3040, %v3039
        %v3055 = vpack.c.b16 %v3042, %v3041
        %v3056 = vpack.c.b16 %v3044, %v3043
        %v3057 = vpack.c.b16 %v3046, %v3045
        %v3058 = vpack.c.b16 %v3048, %v3047
        %v3059 = vpack.c.b16 %v3050, %v3049
        %v3060 = vpack.c.b16 %v3052, %v3051
        %3069 = vmatpush.bf16.msra.mxu0 %v3060
        %3070 = vmatpush.bf16.msra.mxu0 %v3059
        %3071 = vmatpush.bf16.msra.mxu0 %v3058
        %3072 = vmatpush.bf16.msra.mxu0 %v3057
        %3073 = vmatpush.bf16.msra.mxu0 %v3056
        %3074 = vmatpush.bf16.msra.mxu0 %v3055
        %3075 = vmatpush.bf16.msra.mxu0 %v3054
        %3076 = vmatpush.bf16.msra.mxu0 %v3053
        %3077 = vmatmul.bf16.gmra.mxu0 %v3020
        %v3078 = vpop.f32.mrf.mxu0
        %v3079 = vadd.f32 0.0, %v3078
        %v3080 = vpop.f32.mrf.mxu0
        %v3081 = vadd.f32 0.0, %v3080
        %3082 = vdwg.mxu0
        %3083 = vrot.lane.b32.xlu0 %v3079, 5
        %v3084 = vpop.permute.xlu0 %3083
        %3085 = vrot.lane.b32.xlu0 %v3081, 5
        %v3086 = vpop.permute.xlu0 %3085
        %v3087 = vld [vmem:[%s7] sm:$0x1]
        %v3089 = vperm.slane %v3087, 0
        %v3091 = vmul.f32 %v3084, %v3089
        %v3092 = vmul.f32 %v3086, %v3089
        %v3093 = vld [vmem:[%s21] sm:$0xf]
        %v3094 = vld [vmem:[%s21 + $0x4] sm:$0xf]
        %v3095 = vld [vmem:[%s21 + $0x8] sm:$0xf]
        %v3096 = vld [vmem:[%s21 + $0xc] sm:$0xf]
        %v3097 = vpack.c.bf16 %v3092, %v3091
        %3098 = vrot.lane.b32.xlu0 %v3079, 4
        %v3099 = vpop.permute.xlu0 %3098
        %3100 = vrot.lane.b32.xlu0 %v3081, 4
        %v3101 = vpop.permute.xlu0 %3100
        %s3102 = scalar_lea.vmem %s7, 1
        %v3103 = vld [vmem:[%s3102] sm:$0x1]
        %v3105 = vperm.slane %v3103, 0
        %v3107 = vmul.f32 %v3099, %v3105
        %v3108 = vmul.f32 %v3101, %v3105
        %s3109 = scalar_lea.vmem %s21, 16
        %v3110 = vld [vmem:[%s3109] sm:$0xf]
        %v3111 = vld [vmem:[%s3109 + $0x4] sm:$0xf]
        %v3112 = vld [vmem:[%s3109 + $0x8] sm:$0xf]
        %v3113 = vld [vmem:[%s3109 + $0xc] sm:$0xf]
        %v3114 = vpack.c.bf16 %v3108, %v3107
        %v3119 = vunpack.c.l.b16 %v3110
        %v3120 = vunpack.c.l.b16 %v3111
        %v3121 = vunpack.c.l.b16 %v3112
        %v3122 = vunpack.c.l.b16 %v3113
        %v3123 = vpack.c.b16 %v3120, %v3119
        %v3124 = vpack.c.b16 %v3122, %v3121
        %v3126 = vsel %vm2698, %v3123, 0
        %v3129 = vsel %vm2698, %v3124, 0
        %3131 = vmatpush.bf16.msra.mxu0 0
        %3132 = vmatpush.bf16.msra.mxu0 0
        %3133 = vmatpush.bf16.msra.mxu0 0
        %3134 = vmatpush.bf16.msra.mxu0 0
        %3135 = vmatpush.bf16.msra.mxu0 0
        %3136 = vmatpush.bf16.msra.mxu0 0
        %3137 = vmatpush.bf16.msra.mxu0 0
        %3138 = vmatpush.bf16.msra.mxu0 %v3114
        %3139 = vmatmul.bf16.gmra.mxu0 %v3126
        %v3140 = vpop.f32.mrf.mxu0
        %v3141 = vadd.f32 0.0, %v3140
        %v3142 = vpop.f32.mrf.mxu0
        %v3143 = vadd.f32 0.0, %v3142
        %3144 = vmatmul.bf16.gmra.mxu0 %v3129
        %v3145 = vpop.f32.mrf.mxu0
        %v3146 = vadd.f32 0.0, %v3145
        %v3147 = vpop.f32.mrf.mxu0
        %v3148 = vadd.f32 0.0, %v3147
        %3149 = vdwg.mxu0
        %v3154 = vunpack.c.l.b16 %v3093
        %v3155 = vunpack.c.l.b16 %v3094
        %v3156 = vunpack.c.l.b16 %v3095
        %v3157 = vunpack.c.l.b16 %v3096
        %v3158 = vpack.c.b16 %v3155, %v3154
        %v3159 = vpack.c.b16 %v3157, %v3156
        %v3161 = vsel %vm2698, %v3158, 0
        %v3164 = vsel %vm2698, %v3159, 0
        %3166 = vmatpush.bf16.msra.mxu0 0
        %3167 = vmatpush.bf16.msra.mxu0 0
        %3168 = vmatpush.bf16.msra.mxu0 0
        %3169 = vmatpush.bf16.msra.mxu0 0
        %3170 = vmatpush.bf16.msra.mxu0 0
        %3171 = vmatpush.bf16.msra.mxu0 0
        %3172 = vmatpush.bf16.msra.mxu0 0
        %3173 = vmatpush.bf16.msra.mxu0 %v3097
        %3174 = vmatmul.bf16.gmra.mxu0 %v3161
        %v3175 = vpop.f32.mrf.mxu0
        %v3176 = vadd.f32 %v3141, %v3175
        %v3177 = vpop.f32.mrf.mxu0
        %v3178 = vadd.f32 %v3143, %v3177
        %3179 = vmatmul.bf16.gmra.mxu0 %v3164
        %v3180 = vpop.f32.mrf.mxu0
        %v3181 = vadd.f32 %v3146, %v3180
        %v3182 = vpop.f32.mrf.mxu0
        %v3183 = vadd.f32 %v3148, %v3182
        %3184 = vdwg.mxu0
        %3185 = vrot.lane.b32.xlu0 %v3079, 3
        %v3186 = vpop.permute.xlu0 %3185
        %3187 = vrot.lane.b32.xlu0 %v3081, 3
        %v3188 = vpop.permute.xlu0 %3187
        %s3189 = scalar_lea.vmem %s7, 2
        %v3190 = vld [vmem:[%s3189] sm:$0x1]
        %v3192 = vperm.slane %v3190, 0
        %v3194 = vmul.f32 %v3186, %v3192
        %v3195 = vmul.f32 %v3188, %v3192
        %s3196 = scalar_lea.vmem %s21, 32
        %v3197 = vld [vmem:[%s3196] sm:$0xf]
        %v3198 = vld [vmem:[%s3196 + $0x4] sm:$0xf]
        %v3199 = vld [vmem:[%s3196 + $0x8] sm:$0xf]
        %v3200 = vld [vmem:[%s3196 + $0xc] sm:$0xf]
        %v3201 = vpack.c.bf16 %v3195, %v3194
        %v3206 = vunpack.c.l.b16 %v3197
        %v3207 = vunpack.c.l.b16 %v3198
        %v3208 = vunpack.c.l.b16 %v3199
        %v3209 = vunpack.c.l.b16 %v3200
        %v3210 = vpack.c.b16 %v3207, %v3206
        %v3211 = vpack.c.b16 %v3209, %v3208
        %v3213 = vsel %vm2698, %v3210, 0
        %v3216 = vsel %vm2698, %v3211, 0
        %3218 = vmatpush.bf16.msra.mxu0 0
        %3219 = vmatpush.bf16.msra.mxu0 0
        %3220 = vmatpush.bf16.msra.mxu0 0
        %3221 = vmatpush.bf16.msra.mxu0 0
        %3222 = vmatpush.bf16.msra.mxu0 0
        %3223 = vmatpush.bf16.msra.mxu0 0
        %3224 = vmatpush.bf16.msra.mxu0 0
        %3225 = vmatpush.bf16.msra.mxu0 %v3201
        %3226 = vmatmul.bf16.gmra.mxu0 %v3213
        %v3227 = vpop.f32.mrf.mxu0
        %v3228 = vadd.f32 0.0, %v3227
        %v3229 = vpop.f32.mrf.mxu0
        %v3230 = vadd.f32 0.0, %v3229
        %3231 = vmatmul.bf16.gmra.mxu0 %v3216
        %v3232 = vpop.f32.mrf.mxu0
        %v3233 = vadd.f32 0.0, %v3232
        %v3234 = vpop.f32.mrf.mxu0
        %v3235 = vadd.f32 0.0, %v3234
        %3236 = vdwg.mxu0
        %v3237 = vadd.f32 %v3176, %v3228
        %v3238 = vadd.f32 %v3178, %v3230
        %v3239 = vadd.f32 %v3181, %v3233
        %v3240 = vadd.f32 %v3183, %v3235
        %3241 = vrot.lane.b32.xlu0 %v3079, 1
        %v3242 = vpop.permute.xlu0 %3241
        %3243 = vrot.lane.b32.xlu0 %v3081, 1
        %v3244 = vpop.permute.xlu0 %3243
        %s3245 = scalar_lea.vmem %s7, 3
        %v3246 = vld [vmem:[%s3245] sm:$0x1]
        %v3248 = vperm.slane %v3246, 0
        %v3250 = vmul.f32 %v3242, %v3248
        %v3251 = vmul.f32 %v3244, %v3248
        %s3252 = scalar_lea.vmem %s21, 48
        %v3253 = vld [vmem:[%s3252] sm:$0xf]
        %v3254 = vld [vmem:[%s3252 + $0x4] sm:$0xf]
        %v3255 = vld [vmem:[%s3252 + $0x8] sm:$0xf]
        %v3256 = vld [vmem:[%s3252 + $0xc] sm:$0xf]
        %v3257 = vpack.c.bf16 %v3251, %v3250
        %v3262 = vunpack.c.l.b16 %v3253
        %v3263 = vunpack.c.l.b16 %v3254
        %v3264 = vunpack.c.l.b16 %v3255
        %v3265 = vunpack.c.l.b16 %v3256
        %v3266 = vpack.c.b16 %v3263, %v3262
        %v3267 = vpack.c.b16 %v3265, %v3264
        %v3269 = vsel %vm2698, %v3266, 0
        %v3272 = vsel %vm2698, %v3267, 0
        %3274 = vmatpush.bf16.msra.mxu0 0
        %3275 = vmatpush.bf16.msra.mxu0 0
        %3276 = vmatpush.bf16.msra.mxu0 0
        %3277 = vmatpush.bf16.msra.mxu0 0
        %3278 = vmatpush.bf16.msra.mxu0 0
        %3279 = vmatpush.bf16.msra.mxu0 0
        %3280 = vmatpush.bf16.msra.mxu0 0
        %3281 = vmatpush.bf16.msra.mxu0 %v3257
        %3282 = vmatmul.bf16.gmra.mxu0 %v3269
        %v3283 = vpop.f32.mrf.mxu0
        %v3284 = vadd.f32 0.0, %v3283
        %v3285 = vpop.f32.mrf.mxu0
        %v3286 = vadd.f32 0.0, %v3285
        %3287 = vmatmul.bf16.gmra.mxu0 %v3272
        %v3288 = vpop.f32.mrf.mxu0
        %v3289 = vadd.f32 0.0, %v3288
        %v3290 = vpop.f32.mrf.mxu0
        %v3291 = vadd.f32 0.0, %v3290
        %3292 = vdwg.mxu0
        %v3293 = vadd.f32 %v3237, %v3284
        %v3294 = vadd.f32 %v3238, %v3286
        %v3295 = vadd.f32 %v3239, %v3289
        %v3296 = vadd.f32 %v3240, %v3291
        %s3297 = scalar_lea.vmem %s21, 64
        %v3298 = vld [vmem:[%s3297] sm:$0xf]
        %v3299 = vld [vmem:[%s3297 + $0x4] sm:$0xf]
        %v3300 = vld [vmem:[%s3297 + $0x8] sm:$0xf]
        %v3301 = vld [vmem:[%s3297 + $0xc] sm:$0xf]
        %v3302 = vpack.c.bf16 %v3081, %v3079
        %v3307 = vunpack.c.l.b16 %v3298
        %v3308 = vunpack.c.l.b16 %v3299
        %v3309 = vunpack.c.l.b16 %v3300
        %v3310 = vunpack.c.l.b16 %v3301
        %v3311 = vpack.c.b16 %v3308, %v3307
        %v3312 = vpack.c.b16 %v3310, %v3309
        %v3314 = vsel %vm2698, %v3311, 0
        %v3317 = vsel %vm2698, %v3312, 0
        %3319 = vmatpush.bf16.msra.mxu0 0
        %3320 = vmatpush.bf16.msra.mxu0 0
        %3321 = vmatpush.bf16.msra.mxu0 0
        %3322 = vmatpush.bf16.msra.mxu0 0
        %3323 = vmatpush.bf16.msra.mxu0 0
        %3324 = vmatpush.bf16.msra.mxu0 0
        %3325 = vmatpush.bf16.msra.mxu0 0
        %3326 = vmatpush.bf16.msra.mxu0 %v3302
        %3327 = vmatmul.bf16.gmra.mxu0 %v3314
        %v3328 = vpop.f32.mrf.mxu0
        %v3329 = vadd.f32 0.0, %v3328
        %v3330 = vpop.f32.mrf.mxu0
        %v3331 = vadd.f32 0.0, %v3330
        %3332 = vmatmul.bf16.gmra.mxu0 %v3317
        %v3333 = vpop.f32.mrf.mxu0
        %v3334 = vadd.f32 0.0, %v3333
        %v3335 = vpop.f32.mrf.mxu0
        %v3336 = vadd.f32 0.0, %v3335
        %3337 = vdwg.mxu0
        %v3338 = vadd.f32 %v3293, %v3329
        %v3339 = vadd.f32 %v3294, %v3331
        %v3340 = vadd.f32 %v3295, %v3334
        %v3341 = vadd.f32 %v3296, %v3336
        %3342 = vrot.lane.b32.xlu0 %v3079, 127
        %v3343 = vpop.permute.xlu0 %3342
        %3344 = vrot.lane.b32.xlu0 %v3081, 127
        %v3345 = vpop.permute.xlu0 %3344
        %s3346 = scalar_lea.vmem %s7, 4
        %v3347 = vld [vmem:[%s3346] sm:$0x1]
        %v3349 = vperm.slane %v3347, 0
        %v3351 = vmul.f32 %v3343, %v3349
        %v3352 = vmul.f32 %v3345, %v3349
        %s3353 = scalar_lea.vmem %s21, 80
        %v3354 = vld [vmem:[%s3353] sm:$0xf]
        %v3355 = vld [vmem:[%s3353 + $0x4] sm:$0xf]
        %v3356 = vld [vmem:[%s3353 + $0x8] sm:$0xf]
        %v3357 = vld [vmem:[%s3353 + $0xc] sm:$0xf]
        %v3358 = vpack.c.bf16 %v3352, %v3351
        %v3363 = vunpack.c.l.b16 %v3354
        %v3364 = vunpack.c.l.b16 %v3355
        %v3365 = vunpack.c.l.b16 %v3356
        %v3366 = vunpack.c.l.b16 %v3357
        %v3367 = vpack.c.b16 %v3364, %v3363
        %v3368 = vpack.c.b16 %v3366, %v3365
        %v3370 = vsel %vm2698, %v3367, 0
        %v3373 = vsel %vm2698, %v3368, 0
        %3375 = vmatpush.bf16.msra.mxu0 0
        %3376 = vmatpush.bf16.msra.mxu0 0
        %3377 = vmatpush.bf16.msra.mxu0 0
        %3378 = vmatpush.bf16.msra.mxu0 0
        %3379 = vmatpush.bf16.msra.mxu0 0
        %3380 = vmatpush.bf16.msra.mxu0 0
        %3381 = vmatpush.bf16.msra.mxu0 0
        %3382 = vmatpush.bf16.msra.mxu0 %v3358
        %3383 = vmatmul.bf16.gmra.mxu0 %v3370
        %v3384 = vpop.f32.mrf.mxu0
        %v3385 = vadd.f32 0.0, %v3384
        %v3386 = vpop.f32.mrf.mxu0
        %v3387 = vadd.f32 0.0, %v3386
        %3388 = vmatmul.bf16.gmra.mxu0 %v3373
        %v3389 = vpop.f32.mrf.mxu0
        %v3390 = vadd.f32 0.0, %v3389
        %v3391 = vpop.f32.mrf.mxu0
        %v3392 = vadd.f32 0.0, %v3391
        %3393 = vdwg.mxu0
        %v3394 = vadd.f32 %v3338, %v3385
        %v3395 = vadd.f32 %v3339, %v3387
        %v3396 = vadd.f32 %v3340, %v3390
        %v3397 = vadd.f32 %v3341, %v3392
        %3398 = vrot.lane.b32.xlu0 %v3079, 125
        %v3399 = vpop.permute.xlu0 %3398
        %3400 = vrot.lane.b32.xlu0 %v3081, 125
        %v3401 = vpop.permute.xlu0 %3400
        %s3402 = scalar_lea.vmem %s7, 5
        %v3403 = vld [vmem:[%s3402] sm:$0x1]
        %v3405 = vperm.slane %v3403, 0
        %v3407 = vmul.f32 %v3399, %v3405
        %v3408 = vmul.f32 %v3401, %v3405
        %s3409 = scalar_lea.vmem %s21, 96
        %v3410 = vld [vmem:[%s3409] sm:$0xf]
        %v3411 = vld [vmem:[%s3409 + $0x4] sm:$0xf]
        %v3412 = vld [vmem:[%s3409 + $0x8] sm:$0xf]
        %v3413 = vld [vmem:[%s3409 + $0xc] sm:$0xf]
        %v3414 = vpack.c.bf16 %v3408, %v3407
        %v3419 = vunpack.c.l.b16 %v3410
        %v3420 = vunpack.c.l.b16 %v3411
        %v3421 = vunpack.c.l.b16 %v3412
        %v3422 = vunpack.c.l.b16 %v3413
        %v3423 = vpack.c.b16 %v3420, %v3419
        %v3424 = vpack.c.b16 %v3422, %v3421
        %v3426 = vsel %vm2698, %v3423, 0
        %v3429 = vsel %vm2698, %v3424, 0
        %3431 = vmatpush.bf16.msra.mxu0 0
        %3432 = vmatpush.bf16.msra.mxu0 0
        %3433 = vmatpush.bf16.msra.mxu0 0
        %3434 = vmatpush.bf16.msra.mxu0 0
        %3435 = vmatpush.bf16.msra.mxu0 0
        %3436 = vmatpush.bf16.msra.mxu0 0
        %3437 = vmatpush.bf16.msra.mxu0 0
        %3438 = vmatpush.bf16.msra.mxu0 %v3414
        %3439 = vmatmul.bf16.gmra.mxu0 %v3426
        %v3440 = vpop.f32.mrf.mxu0
        %v3441 = vadd.f32 0.0, %v3440
        %v3442 = vpop.f32.mrf.mxu0
        %v3443 = vadd.f32 0.0, %v3442
        %3444 = vmatmul.bf16.gmra.mxu0 %v3429
        %v3445 = vpop.f32.mrf.mxu0
        %v3446 = vadd.f32 0.0, %v3445
        %v3447 = vpop.f32.mrf.mxu0
        %v3448 = vadd.f32 0.0, %v3447
        %3449 = vdwg.mxu0
        %v3450 = vadd.f32 %v3394, %v3441
        %v3451 = vadd.f32 %v3395, %v3443
        %v3452 = vadd.f32 %v3396, %v3446
        %v3453 = vadd.f32 %v3397, %v3448
        %3454 = vrot.lane.b32.xlu0 %v3079, 124
        %v3455 = vpop.permute.xlu0 %3454
        %3456 = vrot.lane.b32.xlu0 %v3081, 124
        %v3457 = vpop.permute.xlu0 %3456
        %s3458 = scalar_lea.vmem %s7, 6
        %v3459 = vld [vmem:[%s3458] sm:$0x1]
        %v3461 = vperm.slane %v3459, 0
        %v3463 = vmul.f32 %v3455, %v3461
        %v3464 = vmul.f32 %v3457, %v3461
        %s3465 = scalar_lea.vmem %s21, 112
        %v3466 = vld [vmem:[%s3465] sm:$0xf]
        %v3467 = vld [vmem:[%s3465 + $0x4] sm:$0xf]
        %v3468 = vld [vmem:[%s3465 + $0x8] sm:$0xf]
        %v3469 = vld [vmem:[%s3465 + $0xc] sm:$0xf]
        %v3470 = vpack.c.bf16 %v3464, %v3463
        %v3475 = vunpack.c.l.b16 %v3466
        %v3476 = vunpack.c.l.b16 %v3467
        %v3477 = vunpack.c.l.b16 %v3468
        %v3478 = vunpack.c.l.b16 %v3469
        %v3479 = vpack.c.b16 %v3476, %v3475
        %v3480 = vpack.c.b16 %v3478, %v3477
        %v3482 = vsel %vm2698, %v3479, 0
        %v3485 = vsel %vm2698, %v3480, 0
        %3487 = vmatpush.bf16.msra.mxu0 0
        %3488 = vmatpush.bf16.msra.mxu0 0
        %3489 = vmatpush.bf16.msra.mxu0 0
        %3490 = vmatpush.bf16.msra.mxu0 0
        %3491 = vmatpush.bf16.msra.mxu0 0
        %3492 = vmatpush.bf16.msra.mxu0 0
        %3493 = vmatpush.bf16.msra.mxu0 0
        %3494 = vmatpush.bf16.msra.mxu0 %v3470
        %3495 = vmatmul.bf16.gmra.mxu0 %v3482
        %v3496 = vpop.f32.mrf.mxu0
        %v3497 = vadd.f32 0.0, %v3496
        %v3498 = vpop.f32.mrf.mxu0
        %v3499 = vadd.f32 0.0, %v3498
        %3500 = vmatmul.bf16.gmra.mxu0 %v3485
        %v3501 = vpop.f32.mrf.mxu0
        %v3502 = vadd.f32 0.0, %v3501
        %v3503 = vpop.f32.mrf.mxu0
        %v3504 = vadd.f32 0.0, %v3503
        %3505 = vdwg.mxu0
        %v3506 = vadd.f32 %v3450, %v3497
        %v3507 = vadd.f32 %v3451, %v3499
        %v3508 = vadd.f32 %v3452, %v3502
        %v3509 = vadd.f32 %v3453, %v3504
        %3510 = vrot.lane.b32.xlu0 %v3079, 123
        %v3511 = vpop.permute.xlu0 %3510
        %3512 = vrot.lane.b32.xlu0 %v3081, 123
        %v3513 = vpop.permute.xlu0 %3512
        %s3514 = scalar_lea.vmem %s7, 7
        %v3515 = vld [vmem:[%s3514] sm:$0x1]
        %v3517 = vperm.slane %v3515, 0
        %v3519 = vmul.f32 %v3511, %v3517
        %v3520 = vmul.f32 %v3513, %v3517
        %s3521 = scalar_lea.vmem %s21, 128
        %v3522 = vld [vmem:[%s3521] sm:$0xf]
        %v3523 = vld [vmem:[%s3521 + $0x4] sm:$0xf]
        %v3524 = vld [vmem:[%s3521 + $0x8] sm:$0xf]
        %v3525 = vld [vmem:[%s3521 + $0xc] sm:$0xf]
        %v3526 = vpack.c.bf16 %v3520, %v3519
        %v3531 = vunpack.c.l.b16 %v3522
        %v3532 = vunpack.c.l.b16 %v3523
        %v3533 = vunpack.c.l.b16 %v3524
        %v3534 = vunpack.c.l.b16 %v3525
        %v3535 = vpack.c.b16 %v3532, %v3531
        %v3536 = vpack.c.b16 %v3534, %v3533
        %v3538 = vsel %vm2698, %v3535, 0
        %v3541 = vsel %vm2698, %v3536, 0
        %3543 = vmatpush.bf16.msra.mxu0 0
        %3544 = vmatpush.bf16.msra.mxu0 0
        %3545 = vmatpush.bf16.msra.mxu0 0
        %3546 = vmatpush.bf16.msra.mxu0 0
        %3547 = vmatpush.bf16.msra.mxu0 0
        %3548 = vmatpush.bf16.msra.mxu0 0
        %3549 = vmatpush.bf16.msra.mxu0 0
        %3550 = vmatpush.bf16.msra.mxu0 %v3526
        %3551 = vmatmul.bf16.gmra.mxu0 %v3538
        %v3552 = vpop.f32.mrf.mxu0
        %v3553 = vadd.f32 0.0, %v3552
        %v3554 = vpop.f32.mrf.mxu0
        %v3555 = vadd.f32 0.0, %v3554
        %3556 = vmatmul.bf16.gmra.mxu0 %v3541
        %v3557 = vpop.f32.mrf.mxu0
        %v3558 = vadd.f32 0.0, %v3557
        %v3559 = vpop.f32.mrf.mxu0
        %v3560 = vadd.f32 0.0, %v3559
        %3561 = vdwg.mxu0
        %v3562 = vadd.f32 %v3506, %v3553
        %v3563 = vadd.f32 %v3507, %v3555
        %v3564 = vadd.f32 %v3508, %v3558
        %v3565 = vadd.f32 %v3509, %v3560
        %v3566 = vld [vmem:[%s17] sm:$0xff]
        %v3567 = vld [vmem:[%s17 + $0x8] sm:$0xff]
        %v3568 = vld [vmem:[%s17 + $0x10] sm:$0xff]
        %v3569 = vld [vmem:[%s17 + $0x18] sm:$0xff]
        %3571 = vset.pattern.permute.xlu0 0
        %3572 = vperm.xlu0 %3571, %v3566
        %v3573 = vpop.permute.xlu0 %3572
        %3576 = vset.pattern.permute.xlu0 0
        %3577 = vperm.xlu0 %3576, %v3567
        %v3578 = vpop.permute.xlu0 %3577
        %3581 = vset.pattern.permute.xlu0 0
        %3582 = vperm.xlu0 %3581, %v3568
        %v3583 = vpop.permute.xlu0 %3582
        %3586 = vset.pattern.permute.xlu0 0
        %3587 = vperm.xlu0 %3586, %v3569
        %v3588 = vpop.permute.xlu0 %3587
        %v3590 = vadd.f32 %v3562, %v3573
        %v3591 = vadd.f32 %v3563, %v3578
        %v3592 = vadd.f32 %v3564, %v3583
        %v3593 = vadd.f32 %v3565, %v3588
        %v3594 = vmax.f32 %v3590, 0.0
        %v3595 = vmax.f32 %v3591, 0.0
        %v3596 = vmax.f32 %v3592, 0.0
        %v3597 = vmax.f32 %v3593, 0.0
        %3598 = vrot.lane.b32.xlu0 %v3594, 5
        %v3599 = vpop.permute.xlu0 %3598
        %3600 = vrot.lane.b32.xlu0 %v3595, 5
        %v3601 = vpop.permute.xlu0 %3600
        %3602 = vrot.lane.b32.xlu0 %v3596, 5
        %v3603 = vpop.permute.xlu0 %3602
        %3604 = vrot.lane.b32.xlu0 %v3597, 5
        %v3605 = vpop.permute.xlu0 %3604
        %v3606 = vmul.f32 %v3599, %v3089
        %v3607 = vmul.f32 %v3601, %v3089
        %v3608 = vmul.f32 %v3603, %v3089
        %v3609 = vmul.f32 %v3605, %v3089
        %v3610 = vld [vmem:[%s23] sm:$0xf]
        %v3611 = vld [vmem:[%s23 + $0x4] sm:$0xf]
        %v3612 = vld [vmem:[%s23 + $0x8] sm:$0xf]
        %v3613 = vld [vmem:[%s23 + $0xc] sm:$0xf]
        %v3614 = vpack.c.bf16 %v3607, %v3606
        %v3615 = vpack.c.bf16 %v3609, %v3608
        %3616 = vrot.lane.b32.xlu0 %v3594, 4
        %v3617 = vpop.permute.xlu0 %3616
        %3618 = vrot.lane.b32.xlu0 %v3595, 4
        %v3619 = vpop.permute.xlu0 %3618
        %3620 = vrot.lane.b32.xlu0 %v3596, 4
        %v3621 = vpop.permute.xlu0 %3620
        %3622 = vrot.lane.b32.xlu0 %v3597, 4
        %v3623 = vpop.permute.xlu0 %3622
        %v3624 = vmul.f32 %v3617, %v3105
        %v3625 = vmul.f32 %v3619, %v3105
        %v3626 = vmul.f32 %v3621, %v3105
        %v3627 = vmul.f32 %v3623, %v3105
        %s3628 = scalar_lea.vmem %s23, 16
        %v3629 = vld [vmem:[%s3628] sm:$0xf]
        %v3630 = vld [vmem:[%s3628 + $0x4] sm:$0xf]
        %v3631 = vld [vmem:[%s3628 + $0x8] sm:$0xf]
        %v3632 = vld [vmem:[%s3628 + $0xc] sm:$0xf]
        %v3633 = vpack.c.bf16 %v3625, %v3624
        %v3634 = vpack.c.bf16 %v3627, %v3626
        %v3639 = vunpack.c.l.b16 %v3629
        %v3640 = vunpack.c.l.b16 %v3630
        %v3641 = vunpack.c.l.b16 %v3631
        %v3642 = vunpack.c.l.b16 %v3632
        %v3643 = vpack.c.b16 %v3640, %v3639
        %v3644 = vpack.c.b16 %v3642, %v3641
        %vm3645 = vcmask 261120
        %v3647 = vsel %vm3645, %v3643, 0
        %v3650 = vsel %vm3645, %v3644, 0
        %3652 = vmatpush.bf16.msra.mxu0 0
        %3653 = vmatpush.bf16.msra.mxu0 0
        %3654 = vmatpush.bf16.msra.mxu0 0
        %3655 = vmatpush.bf16.msra.mxu0 0
        %3656 = vmatpush.bf16.msra.mxu0 0
        %3657 = vmatpush.bf16.msra.mxu0 0
        %3658 = vmatpush.bf16.msra.mxu0 %v3634
        %3659 = vmatpush.bf16.msra.mxu0 %v3633
        %3660 = vmatmul.bf16.gmra.mxu0 %v3647
        %v3661 = vpop.f32.mrf.mxu0
        %v3662 = vadd.f32 0.0, %v3661
        %v3663 = vpop.f32.mrf.mxu0
        %v3664 = vadd.f32 0.0, %v3663
        %3665 = vmatmul.bf16.gmra.mxu0 %v3650
        %v3666 = vpop.f32.mrf.mxu0
        %v3667 = vadd.f32 0.0, %v3666
        %v3668 = vpop.f32.mrf.mxu0
        %v3669 = vadd.f32 0.0, %v3668
        %3670 = vdwg.mxu0
        %v3675 = vunpack.c.l.b16 %v3610
        %v3676 = vunpack.c.l.b16 %v3611
        %v3677 = vunpack.c.l.b16 %v3612
        %v3678 = vunpack.c.l.b16 %v3613
        %v3679 = vpack.c.b16 %v3676, %v3675
        %v3680 = vpack.c.b16 %v3678, %v3677
        %v3682 = vsel %vm3645, %v3679, 0
        %v3685 = vsel %vm3645, %v3680, 0
        %3687 = vmatpush.bf16.msra.mxu0 0
        %3688 = vmatpush.bf16.msra.mxu0 0
        %3689 = vmatpush.bf16.msra.mxu0 0
        %3690 = vmatpush.bf16.msra.mxu0 0
        %3691 = vmatpush.bf16.msra.mxu0 0
        %3692 = vmatpush.bf16.msra.mxu0 0
        %3693 = vmatpush.bf16.msra.mxu0 %v3615
        %3694 = vmatpush.bf16.msra.mxu0 %v3614
        %3695 = vmatmul.bf16.gmra.mxu0 %v3682
        %v3696 = vpop.f32.mrf.mxu0
        %v3697 = vadd.f32 %v3662, %v3696
        %v3698 = vpop.f32.mrf.mxu0
        %v3699 = vadd.f32 %v3664, %v3698
        %3700 = vmatmul.bf16.gmra.mxu0 %v3685
        %v3701 = vpop.f32.mrf.mxu0
        %v3702 = vadd.f32 %v3667, %v3701
        %v3703 = vpop.f32.mrf.mxu0
        %v3704 = vadd.f32 %v3669, %v3703
        %3705 = vdwg.mxu0
        %3706 = vrot.lane.b32.xlu0 %v3594, 3
        %v3707 = vpop.permute.xlu0 %3706
        %3708 = vrot.lane.b32.xlu0 %v3595, 3
        %v3709 = vpop.permute.xlu0 %3708
        %3710 = vrot.lane.b32.xlu0 %v3596, 3
        %v3711 = vpop.permute.xlu0 %3710
        %3712 = vrot.lane.b32.xlu0 %v3597, 3
        %v3713 = vpop.permute.xlu0 %3712
        %v3714 = vmul.f32 %v3707, %v3192
        %v3715 = vmul.f32 %v3709, %v3192
        %v3716 = vmul.f32 %v3711, %v3192
        %v3717 = vmul.f32 %v3713, %v3192
        %s3718 = scalar_lea.vmem %s23, 32
        %v3719 = vld [vmem:[%s3718] sm:$0xf]
        %v3720 = vld [vmem:[%s3718 + $0x4] sm:$0xf]
        %v3721 = vld [vmem:[%s3718 + $0x8] sm:$0xf]
        %v3722 = vld [vmem:[%s3718 + $0xc] sm:$0xf]
        %v3723 = vpack.c.bf16 %v3715, %v3714
        %v3724 = vpack.c.bf16 %v3717, %v3716
        %v3729 = vunpack.c.l.b16 %v3719
        %v3730 = vunpack.c.l.b16 %v3720
        %v3731 = vunpack.c.l.b16 %v3721
        %v3732 = vunpack.c.l.b16 %v3722
        %v3733 = vpack.c.b16 %v3730, %v3729
        %v3734 = vpack.c.b16 %v3732, %v3731
        %v3736 = vsel %vm3645, %v3733, 0
        %v3739 = vsel %vm3645, %v3734, 0
        %3741 = vmatpush.bf16.msra.mxu0 0
        %3742 = vmatpush.bf16.msra.mxu0 0
        %3743 = vmatpush.bf16.msra.mxu0 0
        %3744 = vmatpush.bf16.msra.mxu0 0
        %3745 = vmatpush.bf16.msra.mxu0 0
        %3746 = vmatpush.bf16.msra.mxu0 0
        %3747 = vmatpush.bf16.msra.mxu0 %v3724
        %3748 = vmatpush.bf16.msra.mxu0 %v3723
        %3749 = vmatmul.bf16.gmra.mxu0 %v3736
        %v3750 = vpop.f32.mrf.mxu0
        %v3751 = vadd.f32 0.0, %v3750
        %v3752 = vpop.f32.mrf.mxu0
        %v3753 = vadd.f32 0.0, %v3752
        %3754 = vmatmul.bf16.gmra.mxu0 %v3739
        %v3755 = vpop.f32.mrf.mxu0
        %v3756 = vadd.f32 0.0, %v3755
        %v3757 = vpop.f32.mrf.mxu0
        %v3758 = vadd.f32 0.0, %v3757
        %3759 = vdwg.mxu0
        %v3760 = vadd.f32 %v3697, %v3751
        %v3761 = vadd.f32 %v3699, %v3753
        %v3762 = vadd.f32 %v3702, %v3756
        %v3763 = vadd.f32 %v3704, %v3758
        %3764 = vrot.lane.b32.xlu0 %v3594, 1
        %v3765 = vpop.permute.xlu0 %3764
        %3766 = vrot.lane.b32.xlu0 %v3595, 1
        %v3767 = vpop.permute.xlu0 %3766
        %3768 = vrot.lane.b32.xlu0 %v3596, 1
        %v3769 = vpop.permute.xlu0 %3768
        %3770 = vrot.lane.b32.xlu0 %v3597, 1
        %v3771 = vpop.permute.xlu0 %3770
        %v3772 = vmul.f32 %v3765, %v3248
        %v3773 = vmul.f32 %v3767, %v3248
        %v3774 = vmul.f32 %v3769, %v3248
        %v3775 = vmul.f32 %v3771, %v3248
        %s3776 = scalar_lea.vmem %s23, 48
        %v3777 = vld [vmem:[%s3776] sm:$0xf]
        %v3778 = vld [vmem:[%s3776 + $0x4] sm:$0xf]
        %v3779 = vld [vmem:[%s3776 + $0x8] sm:$0xf]
        %v3780 = vld [vmem:[%s3776 + $0xc] sm:$0xf]
        %v3781 = vpack.c.bf16 %v3773, %v3772
        %v3782 = vpack.c.bf16 %v3775, %v3774
        %v3787 = vunpack.c.l.b16 %v3777
        %v3788 = vunpack.c.l.b16 %v3778
        %v3789 = vunpack.c.l.b16 %v3779
        %v3790 = vunpack.c.l.b16 %v3780
        %v3791 = vpack.c.b16 %v3788, %v3787
        %v3792 = vpack.c.b16 %v3790, %v3789
        %v3794 = vsel %vm3645, %v3791, 0
        %v3797 = vsel %vm3645, %v3792, 0
        %3799 = vmatpush.bf16.msra.mxu0 0
        %3800 = vmatpush.bf16.msra.mxu0 0
        %3801 = vmatpush.bf16.msra.mxu0 0
        %3802 = vmatpush.bf16.msra.mxu0 0
        %3803 = vmatpush.bf16.msra.mxu0 0
        %3804 = vmatpush.bf16.msra.mxu0 0
        %3805 = vmatpush.bf16.msra.mxu0 %v3782
        %3806 = vmatpush.bf16.msra.mxu0 %v3781
        %3807 = vmatmul.bf16.gmra.mxu0 %v3794
        %v3808 = vpop.f32.mrf.mxu0
        %v3809 = vadd.f32 0.0, %v3808
        %v3810 = vpop.f32.mrf.mxu0
        %v3811 = vadd.f32 0.0, %v3810
        %3812 = vmatmul.bf16.gmra.mxu0 %v3797
        %v3813 = vpop.f32.mrf.mxu0
        %v3814 = vadd.f32 0.0, %v3813
        %v3815 = vpop.f32.mrf.mxu0
        %v3816 = vadd.f32 0.0, %v3815
        %3817 = vdwg.mxu0
        %v3818 = vadd.f32 %v3760, %v3809
        %v3819 = vadd.f32 %v3761, %v3811
        %v3820 = vadd.f32 %v3762, %v3814
        %v3821 = vadd.f32 %v3763, %v3816
        %s3822 = scalar_lea.vmem %s23, 64
        %v3823 = vld [vmem:[%s3822] sm:$0xf]
        %v3824 = vld [vmem:[%s3822 + $0x4] sm:$0xf]
        %v3825 = vld [vmem:[%s3822 + $0x8] sm:$0xf]
        %v3826 = vld [vmem:[%s3822 + $0xc] sm:$0xf]
        %v3827 = vpack.c.bf16 %v3595, %v3594
        %v3828 = vpack.c.bf16 %v3597, %v3596
        %v3833 = vunpack.c.l.b16 %v3823
        %v3834 = vunpack.c.l.b16 %v3824
        %v3835 = vunpack.c.l.b16 %v3825
        %v3836 = vunpack.c.l.b16 %v3826
        %v3837 = vpack.c.b16 %v3834, %v3833
        %v3838 = vpack.c.b16 %v3836, %v3835
        %v3840 = vsel %vm3645, %v3837, 0
        %v3843 = vsel %vm3645, %v3838, 0
        %3845 = vmatpush.bf16.msra.mxu0 0
        %3846 = vmatpush.bf16.msra.mxu0 0
        %3847 = vmatpush.bf16.msra.mxu0 0
        %3848 = vmatpush.bf16.msra.mxu0 0
        %3849 = vmatpush.bf16.msra.mxu0 0
        %3850 = vmatpush.bf16.msra.mxu0 0
        %3851 = vmatpush.bf16.msra.mxu0 %v3828
        %3852 = vmatpush.bf16.msra.mxu0 %v3827
        %3853 = vmatmul.bf16.gmra.mxu0 %v3840
        %v3854 = vpop.f32.mrf.mxu0
        %v3855 = vadd.f32 0.0, %v3854
        %v3856 = vpop.f32.mrf.mxu0
        %v3857 = vadd.f32 0.0, %v3856
        %3858 = vmatmul.bf16.gmra.mxu0 %v3843
        %v3859 = vpop.f32.mrf.mxu0
        %v3860 = vadd.f32 0.0, %v3859
        %v3861 = vpop.f32.mrf.mxu0
        %v3862 = vadd.f32 0.0, %v3861
        %3863 = vdwg.mxu0
        %v3864 = vadd.f32 %v3818, %v3855
        %v3865 = vadd.f32 %v3819, %v3857
        %v3866 = vadd.f32 %v3820, %v3860
        %v3867 = vadd.f32 %v3821, %v3862
        %3868 = vrot.lane.b32.xlu0 %v3594, 127
        %v3869 = vpop.permute.xlu0 %3868
        %3870 = vrot.lane.b32.xlu0 %v3595, 127
        %v3871 = vpop.permute.xlu0 %3870
        %3872 = vrot.lane.b32.xlu0 %v3596, 127
        %v3873 = vpop.permute.xlu0 %3872
        %3874 = vrot.lane.b32.xlu0 %v3597, 127
        %v3875 = vpop.permute.xlu0 %3874
        %v3876 = vmul.f32 %v3869, %v3349
        %v3877 = vmul.f32 %v3871, %v3349
        %v3878 = vmul.f32 %v3873, %v3349
        %v3879 = vmul.f32 %v3875, %v3349
        %s3880 = scalar_lea.vmem %s23, 80
        %v3881 = vld [vmem:[%s3880] sm:$0xf]
        %v3882 = vld [vmem:[%s3880 + $0x4] sm:$0xf]
        %v3883 = vld [vmem:[%s3880 + $0x8] sm:$0xf]
        %v3884 = vld [vmem:[%s3880 + $0xc] sm:$0xf]
        %v3885 = vpack.c.bf16 %v3877, %v3876
        %v3886 = vpack.c.bf16 %v3879, %v3878
        %v3891 = vunpack.c.l.b16 %v3881
        %v3892 = vunpack.c.l.b16 %v3882
        %v3893 = vunpack.c.l.b16 %v3883
        %v3894 = vunpack.c.l.b16 %v3884
        %v3895 = vpack.c.b16 %v3892, %v3891
        %v3896 = vpack.c.b16 %v3894, %v3893
        %v3898 = vsel %vm3645, %v3895, 0
        %v3901 = vsel %vm3645, %v3896, 0
        %3903 = vmatpush.bf16.msra.mxu0 0
        %3904 = vmatpush.bf16.msra.mxu0 0
        %3905 = vmatpush.bf16.msra.mxu0 0
        %3906 = vmatpush.bf16.msra.mxu0 0
        %3907 = vmatpush.bf16.msra.mxu0 0
        %3908 = vmatpush.bf16.msra.mxu0 0
        %3909 = vmatpush.bf16.msra.mxu0 %v3886
        %3910 = vmatpush.bf16.msra.mxu0 %v3885
        %3911 = vmatmul.bf16.gmra.mxu0 %v3898
        %v3912 = vpop.f32.mrf.mxu0
        %v3913 = vadd.f32 0.0, %v3912
        %v3914 = vpop.f32.mrf.mxu0
        %v3915 = vadd.f32 0.0, %v3914
        %3916 = vmatmul.bf16.gmra.mxu0 %v3901
        %v3917 = vpop.f32.mrf.mxu0
        %v3918 = vadd.f32 0.0, %v3917
        %v3919 = vpop.f32.mrf.mxu0
        %v3920 = vadd.f32 0.0, %v3919
        %3921 = vdwg.mxu0
        %v3922 = vadd.f32 %v3864, %v3913
        %v3923 = vadd.f32 %v3865, %v3915
        %v3924 = vadd.f32 %v3866, %v3918
        %v3925 = vadd.f32 %v3867, %v3920
        %3926 = vrot.lane.b32.xlu0 %v3594, 125
        %v3927 = vpop.permute.xlu0 %3926
        %3928 = vrot.lane.b32.xlu0 %v3595, 125
        %v3929 = vpop.permute.xlu0 %3928
        %3930 = vrot.lane.b32.xlu0 %v3596, 125
        %v3931 = vpop.permute.xlu0 %3930
        %3932 = vrot.lane.b32.xlu0 %v3597, 125
        %v3933 = vpop.permute.xlu0 %3932
        %v3934 = vmul.f32 %v3927, %v3405
        %v3935 = vmul.f32 %v3929, %v3405
        %v3936 = vmul.f32 %v3931, %v3405
        %v3937 = vmul.f32 %v3933, %v3405
        %s3938 = scalar_lea.vmem %s23, 96
        %v3939 = vld [vmem:[%s3938] sm:$0xf]
        %v3940 = vld [vmem:[%s3938 + $0x4] sm:$0xf]
        %v3941 = vld [vmem:[%s3938 + $0x8] sm:$0xf]
        %v3942 = vld [vmem:[%s3938 + $0xc] sm:$0xf]
        %v3943 = vpack.c.bf16 %v3935, %v3934
        %v3944 = vpack.c.bf16 %v3937, %v3936
        %v3949 = vunpack.c.l.b16 %v3939
        %v3950 = vunpack.c.l.b16 %v3940
        %v3951 = vunpack.c.l.b16 %v3941
        %v3952 = vunpack.c.l.b16 %v3942
        %v3953 = vpack.c.b16 %v3950, %v3949
        %v3954 = vpack.c.b16 %v3952, %v3951
        %v3956 = vsel %vm3645, %v3953, 0
        %v3959 = vsel %vm3645, %v3954, 0
        %3961 = vmatpush.bf16.msra.mxu0 0
        %3962 = vmatpush.bf16.msra.mxu0 0
        %3963 = vmatpush.bf16.msra.mxu0 0
        %3964 = vmatpush.bf16.msra.mxu0 0
        %3965 = vmatpush.bf16.msra.mxu0 0
        %3966 = vmatpush.bf16.msra.mxu0 0
        %3967 = vmatpush.bf16.msra.mxu0 %v3944
        %3968 = vmatpush.bf16.msra.mxu0 %v3943
        %3969 = vmatmul.bf16.gmra.mxu0 %v3956
        %v3970 = vpop.f32.mrf.mxu0
        %v3971 = vadd.f32 0.0, %v3970
        %v3972 = vpop.f32.mrf.mxu0
        %v3973 = vadd.f32 0.0, %v3972
        %3974 = vmatmul.bf16.gmra.mxu0 %v3959
        %v3975 = vpop.f32.mrf.mxu0
        %v3976 = vadd.f32 0.0, %v3975
        %v3977 = vpop.f32.mrf.mxu0
        %v3978 = vadd.f32 0.0, %v3977
        %3979 = vdwg.mxu0
        %v3980 = vadd.f32 %v3922, %v3971
        %v3981 = vadd.f32 %v3923, %v3973
        %v3982 = vadd.f32 %v3924, %v3976
        %v3983 = vadd.f32 %v3925, %v3978
        %3984 = vrot.lane.b32.xlu0 %v3594, 124
        %v3985 = vpop.permute.xlu0 %3984
        %3986 = vrot.lane.b32.xlu0 %v3595, 124
        %v3987 = vpop.permute.xlu0 %3986
        %3988 = vrot.lane.b32.xlu0 %v3596, 124
        %v3989 = vpop.permute.xlu0 %3988
        %3990 = vrot.lane.b32.xlu0 %v3597, 124
        %v3991 = vpop.permute.xlu0 %3990
        %v3992 = vmul.f32 %v3985, %v3461
        %v3993 = vmul.f32 %v3987, %v3461
        %v3994 = vmul.f32 %v3989, %v3461
        %v3995 = vmul.f32 %v3991, %v3461
        %s3996 = scalar_lea.vmem %s23, 112
        %v3997 = vld [vmem:[%s3996] sm:$0xf]
        %v3998 = vld [vmem:[%s3996 + $0x4] sm:$0xf]
        %v3999 = vld [vmem:[%s3996 + $0x8] sm:$0xf]
        %v4000 = vld [vmem:[%s3996 + $0xc] sm:$0xf]
        %v4001 = vpack.c.bf16 %v3993, %v3992
        %v4002 = vpack.c.bf16 %v3995, %v3994
        %v4007 = vunpack.c.l.b16 %v3997
        %v4008 = vunpack.c.l.b16 %v3998
        %v4009 = vunpack.c.l.b16 %v3999
        %v4010 = vunpack.c.l.b16 %v4000
        %v4011 = vpack.c.b16 %v4008, %v4007
        %v4012 = vpack.c.b16 %v4010, %v4009
        %v4014 = vsel %vm3645, %v4011, 0
        %v4017 = vsel %vm3645, %v4012, 0
        %4019 = vmatpush.bf16.msra.mxu0 0
        %4020 = vmatpush.bf16.msra.mxu0 0
        %4021 = vmatpush.bf16.msra.mxu0 0
        %4022 = vmatpush.bf16.msra.mxu0 0
        %4023 = vmatpush.bf16.msra.mxu0 0
        %4024 = vmatpush.bf16.msra.mxu0 0
        %4025 = vmatpush.bf16.msra.mxu0 %v4002
        %4026 = vmatpush.bf16.msra.mxu0 %v4001
        %4027 = vmatmul.bf16.gmra.mxu0 %v4014
        %v4028 = vpop.f32.mrf.mxu0
        %v4029 = vadd.f32 0.0, %v4028
        %v4030 = vpop.f32.mrf.mxu0
        %v4031 = vadd.f32 0.0, %v4030
        %4032 = vmatmul.bf16.gmra.mxu0 %v4017
        %v4033 = vpop.f32.mrf.mxu0
        %v4034 = vadd.f32 0.0, %v4033
        %v4035 = vpop.f32.mrf.mxu0
        %v4036 = vadd.f32 0.0, %v4035
        %4037 = vdwg.mxu0
        %v4038 = vadd.f32 %v3980, %v4029
        %v4039 = vadd.f32 %v3981, %v4031
        %v4040 = vadd.f32 %v3982, %v4034
        %v4041 = vadd.f32 %v3983, %v4036
        %4042 = vrot.lane.b32.xlu0 %v3594, 123
        %v4043 = vpop.permute.xlu0 %4042
        %4044 = vrot.lane.b32.xlu0 %v3595, 123
        %v4045 = vpop.permute.xlu0 %4044
        %4046 = vrot.lane.b32.xlu0 %v3596, 123
        %v4047 = vpop.permute.xlu0 %4046
        %4048 = vrot.lane.b32.xlu0 %v3597, 123
        %v4049 = vpop.permute.xlu0 %4048
        %v4050 = vmul.f32 %v4043, %v3517
        %v4051 = vmul.f32 %v4045, %v3517
        %v4052 = vmul.f32 %v4047, %v3517
        %v4053 = vmul.f32 %v4049, %v3517
        %s4054 = scalar_lea.vmem %s23, 128
        %v4055 = vld [vmem:[%s4054] sm:$0xf]
        %v4056 = vld [vmem:[%s4054 + $0x4] sm:$0xf]
        %v4057 = vld [vmem:[%s4054 + $0x8] sm:$0xf]
        %v4058 = vld [vmem:[%s4054 + $0xc] sm:$0xf]
        %v4059 = vpack.c.bf16 %v4051, %v4050
        %v4060 = vpack.c.bf16 %v4053, %v4052
        %v4065 = vunpack.c.l.b16 %v4055
        %v4066 = vunpack.c.l.b16 %v4056
        %v4067 = vunpack.c.l.b16 %v4057
        %v4068 = vunpack.c.l.b16 %v4058
        %v4069 = vpack.c.b16 %v4066, %v4065
        %v4070 = vpack.c.b16 %v4068, %v4067
        %v4072 = vsel %vm3645, %v4069, 0
        %v4075 = vsel %vm3645, %v4070, 0
        %4077 = vmatpush.bf16.msra.mxu0 0
        %4078 = vmatpush.bf16.msra.mxu0 0
        %4079 = vmatpush.bf16.msra.mxu0 0
        %4080 = vmatpush.bf16.msra.mxu0 0
        %4081 = vmatpush.bf16.msra.mxu0 0
        %4082 = vmatpush.bf16.msra.mxu0 0
        %4083 = vmatpush.bf16.msra.mxu0 %v4060
        %4084 = vmatpush.bf16.msra.mxu0 %v4059
        %4085 = vmatmul.bf16.gmra.mxu0 %v4072
        %v4086 = vpop.f32.mrf.mxu0
        %v4087 = vadd.f32 0.0, %v4086
        %v4088 = vpop.f32.mrf.mxu0
        %v4089 = vadd.f32 0.0, %v4088
        %4090 = vmatmul.bf16.gmra.mxu0 %v4075
        %v4091 = vpop.f32.mrf.mxu0
        %v4092 = vadd.f32 0.0, %v4091
        %v4093 = vpop.f32.mrf.mxu0
        %v4094 = vadd.f32 0.0, %v4093
        %4095 = vdwg.mxu0
        %v4096 = vadd.f32 %v4038, %v4087
        %v4097 = vadd.f32 %v4039, %v4089
        %v4098 = vadd.f32 %v4040, %v4092
        %v4099 = vadd.f32 %v4041, %v4094
        %v4100 = vld [vmem:[%s19] sm:$0xff]
        %v4101 = vld [vmem:[%s19 + $0x8] sm:$0xff]
        %v4102 = vld [vmem:[%s19 + $0x10] sm:$0xff]
        %v4103 = vld [vmem:[%s19 + $0x18] sm:$0xff]
        %4105 = vset.pattern.permute.xlu0 0
        %4106 = vperm.xlu0 %4105, %v4100
        %v4107 = vpop.permute.xlu0 %4106
        %4110 = vset.pattern.permute.xlu0 0
        %4111 = vperm.xlu0 %4110, %v4101
        %v4112 = vpop.permute.xlu0 %4111
        %4115 = vset.pattern.permute.xlu0 0
        %4116 = vperm.xlu0 %4115, %v4102
        %v4117 = vpop.permute.xlu0 %4116
        %4120 = vset.pattern.permute.xlu0 0
        %4121 = vperm.xlu0 %4120, %v4103
        %v4122 = vpop.permute.xlu0 %4121
        %v4124 = vadd.f32 %v4096, %v4107
        %v4125 = vadd.f32 %v4097, %v4112
        %v4126 = vadd.f32 %v4098, %v4117
        %v4127 = vadd.f32 %v4099, %v4122
        %v4128 = vmax.f32 %v4124, 0.0
        %v4129 = vmax.f32 %v4125, 0.0
        %v4130 = vmax.f32 %v4126, 0.0
        %v4131 = vmax.f32 %v4127, 0.0
        %v4132 = vpack.c.bf16 %v4129, %v4128
        %v4133 = vpack.c.bf16 %v4131, %v4130
        %v4134 = vld [vmem:[#allocation9] sm:$0xf]
        %v4135 = vld [vmem:[#allocation9 + $0x4] sm:$0xf]
        %v4138 = vunpack.c.l.b16 %v4134
        %v4139 = vunpack.c.l.b16 %v4135
        %v4140 = vpack.c.b16 %v4139, %v4138
        %v4142 = vsel %vm3645, %v4140, 0
        %4144 = vmatpush.bf16.msra.mxu0 0
        %4145 = vmatpush.bf16.msra.mxu0 0
        %4146 = vmatpush.bf16.msra.mxu0 0
        %4147 = vmatpush.bf16.msra.mxu0 0
        %4148 = vmatpush.bf16.msra.mxu0 0
        %4149 = vmatpush.bf16.msra.mxu0 0
        %4150 = vmatpush.bf16.msra.mxu0 %v4133
        %4151 = vmatpush.bf16.msra.mxu0 %v4132
        %4152 = vmatmul.bf16.gmra.mxu0 %v4142
        %v4153 = vpop.f32.mrf.mxu0
        %v4154 = vadd.f32 0.0, %v4153
        %v4155 = vpop.f32.mrf.mxu0
        %v4156 = vadd.f32 0.0, %v4155
        %4157 = vdwg.mxu0
        %v4158 = vpack.c.bf16 %v4156, %v4154
        %v4159 = vld [vmem:[%s13] sm:$0xf]
        %v4160 = vld [vmem:[%s13 + $0x4] sm:$0xf]
        %v4161 = vld [vmem:[%s13 + $0x8] sm:$0xf]
        %v4162 = vld [vmem:[%s13 + $0xc] sm:$0xf]
        %v4163 = vld [vmem:[%s13 + $0x10] sm:$0xf]
        %v4164 = vld [vmem:[%s13 + $0x14] sm:$0xf]
        %v4165 = vld [vmem:[%s13 + $0x18] sm:$0xf]
        %v4166 = vld [vmem:[%s13 + $0x1c] sm:$0xf]
        %v4167 = vld [vmem:[%s13 + $0x20] sm:$0xf]
        %v4168 = vld [vmem:[%s13 + $0x24] sm:$0xf]
        %v4169 = vld [vmem:[%s13 + $0x28] sm:$0xf]
        %v4170 = vld [vmem:[%s13 + $0x2c] sm:$0xf]
        %v4171 = vld [vmem:[%s13 + $0x30] sm:$0xf]
        %v4172 = vld [vmem:[%s13 + $0x34] sm:$0xf]
        %v4173 = vld [vmem:[%s13 + $0x38] sm:$0xf]
        %v4174 = vld [vmem:[%s13 + $0x3c] sm:$0xf]
        %s4175 = scalar_lea.vmem [#allocation9], 8
        %v4176 = vld [vmem:[%s4175] sm:$0xf]
        %v4177 = vld [vmem:[%s4175 + $0x4] sm:$0xf]
        %v4180 = vunpack.c.l.b16 %v4176
        %v4181 = vunpack.c.l.b16 %v4177
        %v4182 = vpack.c.b16 %v4181, %v4180
        %v4184 = vsel %vm3645, %v4182, 0
        %4186 = vmatpush.bf16.msra.mxu0 0
        %4187 = vmatpush.bf16.msra.mxu0 0
        %4188 = vmatpush.bf16.msra.mxu0 0
        %4189 = vmatpush.bf16.msra.mxu0 0
        %4190 = vmatpush.bf16.msra.mxu0 0
        %4191 = vmatpush.bf16.msra.mxu0 0
        %4192 = vmatpush.bf16.msra.mxu0 %v4133
        %4193 = vmatpush.bf16.msra.mxu0 %v4132
        %4194 = vmatmul.bf16.gmra.mxu0 %v4184
        %v4195 = vpop.f32.mrf.mxu0
        %v4196 = vadd.f32 0.0, %v4195
        %v4197 = vpop.f32.mrf.mxu0
        %v4198 = vadd.f32 0.0, %v4197
        %4199 = vdwg.mxu0
        %v4200 = vpack.c.bf16 %v4198, %v4196
        %s4201 = scalar_lea.vmem %s13, 64
        %v4202 = vld [vmem:[%s4201] sm:$0xf]
        %v4203 = vld [vmem:[%s4201 + $0x4] sm:$0xf]
        %v4204 = vld [vmem:[%s4201 + $0x8] sm:$0xf]
        %v4205 = vld [vmem:[%s4201 + $0xc] sm:$0xf]
        %v4206 = vld [vmem:[%s4201 + $0x10] sm:$0xf]
        %v4207 = vld [vmem:[%s4201 + $0x14] sm:$0xf]
        %v4208 = vld [vmem:[%s4201 + $0x18] sm:$0xf]
        %v4209 = vld [vmem:[%s4201 + $0x1c] sm:$0xf]
        %v4210 = vld [vmem:[%s4201 + $0x20] sm:$0xf]
        %v4211 = vld [vmem:[%s4201 + $0x24] sm:$0xf]
        %v4212 = vld [vmem:[%s4201 + $0x28] sm:$0xf]
        %v4213 = vld [vmem:[%s4201 + $0x2c] sm:$0xf]
        %v4214 = vld [vmem:[%s4201 + $0x30] sm:$0xf]
        %v4215 = vld [vmem:[%s4201 + $0x34] sm:$0xf]
        %v4216 = vld [vmem:[%s4201 + $0x38] sm:$0xf]
        %v4217 = vld [vmem:[%s4201 + $0x3c] sm:$0xf]
        %v4234 = vunpack.c.l.b16 %v4202
        %v4235 = vunpack.c.l.b16 %v4203
        %v4236 = vunpack.c.l.b16 %v4204
        %v4237 = vunpack.c.l.b16 %v4205
        %v4238 = vunpack.c.l.b16 %v4206
        %v4239 = vunpack.c.l.b16 %v4207
        %v4240 = vunpack.c.l.b16 %v4208
        %v4241 = vunpack.c.l.b16 %v4209
        %v4242 = vunpack.c.l.b16 %v4210
        %v4243 = vunpack.c.l.b16 %v4211
        %v4244 = vunpack.c.l.b16 %v4212
        %v4245 = vunpack.c.l.b16 %v4213
        %v4246 = vunpack.c.l.b16 %v4214
        %v4247 = vunpack.c.l.b16 %v4215
        %v4248 = vunpack.c.l.b16 %v4216
        %v4249 = vunpack.c.l.b16 %v4217
        %v4250 = vpack.c.b16 %v4235, %v4234
        %v4251 = vpack.c.b16 %v4237, %v4236
        %v4252 = vpack.c.b16 %v4239, %v4238
        %v4253 = vpack.c.b16 %v4241, %v4240
        %v4254 = vpack.c.b16 %v4243, %v4242
        %v4255 = vpack.c.b16 %v4245, %v4244
        %v4256 = vpack.c.b16 %v4247, %v4246
        %v4257 = vpack.c.b16 %v4249, %v4248
        %4266 = vmatpush.bf16.msra.mxu0 %v4257
        %4267 = vmatpush.bf16.msra.mxu0 %v4256
        %4268 = vmatpush.bf16.msra.mxu0 %v4255
        %4269 = vmatpush.bf16.msra.mxu0 %v4254
        %4270 = vmatpush.bf16.msra.mxu0 %v4253
        %4271 = vmatpush.bf16.msra.mxu0 %v4252
        %4272 = vmatpush.bf16.msra.mxu0 %v4251
        %4273 = vmatpush.bf16.msra.mxu0 %v4250
        %4274 = vmatmul.bf16.gmra.mxu0 %v4200
        %v4275 = vpop.f32.mrf.mxu0
        %v4276 = vadd.f32 0.0, %v4275
        %v4277 = vpop.f32.mrf.mxu0
        %v4278 = vadd.f32 0.0, %v4277
        %4279 = vdwg.mxu0
        %v4296 = vunpack.c.l.b16 %v4159
        %v4297 = vunpack.c.l.b16 %v4160
        %v4298 = vunpack.c.l.b16 %v4161
        %v4299 = vunpack.c.l.b16 %v4162
        %v4300 = vunpack.c.l.b16 %v4163
        %v4301 = vunpack.c.l.b16 %v4164
        %v4302 = vunpack.c.l.b16 %v4165
        %v4303 = vunpack.c.l.b16 %v4166
        %v4304 = vunpack.c.l.b16 %v4167
        %v4305 = vunpack.c.l.b16 %v4168
        %v4306 = vunpack.c.l.b16 %v4169
        %v4307 = vunpack.c.l.b16 %v4170
        %v4308 = vunpack.c.l.b16 %v4171
        %v4309 = vunpack.c.l.b16 %v4172
        %v4310 = vunpack.c.l.b16 %v4173
        %v4311 = vunpack.c.l.b16 %v4174
        %v4312 = vpack.c.b16 %v4297, %v4296
        %v4313 = vpack.c.b16 %v4299, %v4298
        %v4314 = vpack.c.b16 %v4301, %v4300
        %v4315 = vpack.c.b16 %v4303, %v4302
        %v4316 = vpack.c.b16 %v4305, %v4304
        %v4317 = vpack.c.b16 %v4307, %v4306
        %v4318 = vpack.c.b16 %v4309, %v4308
        %v4319 = vpack.c.b16 %v4311, %v4310
        %4328 = vmatpush.bf16.msra.mxu0 %v4319
        %4329 = vmatpush.bf16.msra.mxu0 %v4318
        %4330 = vmatpush.bf16.msra.mxu0 %v4317
        %4331 = vmatpush.bf16.msra.mxu0 %v4316
        %4332 = vmatpush.bf16.msra.mxu0 %v4315
        %4333 = vmatpush.bf16.msra.mxu0 %v4314
        %4334 = vmatpush.bf16.msra.mxu0 %v4313
        %4335 = vmatpush.bf16.msra.mxu0 %v4312
        %4336 = vmatmul.bf16.gmra.mxu0 %v4158
        %v4337 = vpop.f32.mrf.mxu0
        %v4338 = vadd.f32 %v4276, %v4337
        %v4339 = vpop.f32.mrf.mxu0
        %v4340 = vadd.f32 %v4278, %v4339
        %4341 = vdwg.mxu0
        %s4342 = scalar_lea.vmem [#allocation9], 16
        %v4343 = vld [vmem:[%s4342] sm:$0xf]
        %v4344 = vld [vmem:[%s4342 + $0x4] sm:$0xf]
        %v4347 = vunpack.c.l.b16 %v4343
        %v4348 = vunpack.c.l.b16 %v4344
        %v4349 = vpack.c.b16 %v4348, %v4347
        %v4351 = vsel %vm3645, %v4349, 0
        %4353 = vmatpush.bf16.msra.mxu0 0
        %4354 = vmatpush.bf16.msra.mxu0 0
        %4355 = vmatpush.bf16.msra.mxu0 0
        %4356 = vmatpush.bf16.msra.mxu0 0
        %4357 = vmatpush.bf16.msra.mxu0 0
        %4358 = vmatpush.bf16.msra.mxu0 0
        %4359 = vmatpush.bf16.msra.mxu0 %v4133
        %4360 = vmatpush.bf16.msra.mxu0 %v4132
        %4361 = vmatmul.bf16.gmra.mxu0 %v4351
        %v4362 = vpop.f32.mrf.mxu0
        %v4363 = vadd.f32 0.0, %v4362
        %v4364 = vpop.f32.mrf.mxu0
        %v4365 = vadd.f32 0.0, %v4364
        %4366 = vdwg.mxu0
        %v4367 = vpack.c.bf16 %v4365, %v4363
        %s4368 = scalar_lea.vmem %s13, 128
        %v4369 = vld [vmem:[%s4368] sm:$0xf]
        %v4370 = vld [vmem:[%s4368 + $0x4] sm:$0xf]
        %v4371 = vld [vmem:[%s4368 + $0x8] sm:$0xf]
        %v4372 = vld [vmem:[%s4368 + $0xc] sm:$0xf]
        %v4373 = vld [vmem:[%s4368 + $0x10] sm:$0xf]
        %v4374 = vld [vmem:[%s4368 + $0x14] sm:$0xf]
        %v4375 = vld [vmem:[%s4368 + $0x18] sm:$0xf]
        %v4376 = vld [vmem:[%s4368 + $0x1c] sm:$0xf]
        %v4377 = vld [vmem:[%s4368 + $0x20] sm:$0xf]
        %v4378 = vld [vmem:[%s4368 + $0x24] sm:$0xf]
        %v4379 = vld [vmem:[%s4368 + $0x28] sm:$0xf]
        %v4380 = vld [vmem:[%s4368 + $0x2c] sm:$0xf]
        %v4381 = vld [vmem:[%s4368 + $0x30] sm:$0xf]
        %v4382 = vld [vmem:[%s4368 + $0x34] sm:$0xf]
        %v4383 = vld [vmem:[%s4368 + $0x38] sm:$0xf]
        %v4384 = vld [vmem:[%s4368 + $0x3c] sm:$0xf]
        %v4401 = vunpack.c.l.b16 %v4369
        %v4402 = vunpack.c.l.b16 %v4370
        %v4403 = vunpack.c.l.b16 %v4371
        %v4404 = vunpack.c.l.b16 %v4372
        %v4405 = vunpack.c.l.b16 %v4373
        %v4406 = vunpack.c.l.b16 %v4374
        %v4407 = vunpack.c.l.b16 %v4375
        %v4408 = vunpack.c.l.b16 %v4376
        %v4409 = vunpack.c.l.b16 %v4377
        %v4410 = vunpack.c.l.b16 %v4378
        %v4411 = vunpack.c.l.b16 %v4379
        %v4412 = vunpack.c.l.b16 %v4380
        %v4413 = vunpack.c.l.b16 %v4381
        %v4414 = vunpack.c.l.b16 %v4382
        %v4415 = vunpack.c.l.b16 %v4383
        %v4416 = vunpack.c.l.b16 %v4384
        %v4417 = vpack.c.b16 %v4402, %v4401
        %v4418 = vpack.c.b16 %v4404, %v4403
        %v4419 = vpack.c.b16 %v4406, %v4405
        %v4420 = vpack.c.b16 %v4408, %v4407
        %v4421 = vpack.c.b16 %v4410, %v4409
        %v4422 = vpack.c.b16 %v4412, %v4411
        %v4423 = vpack.c.b16 %v4414, %v4413
        %v4424 = vpack.c.b16 %v4416, %v4415
        %4433 = vmatpush.bf16.msra.mxu0 %v4424
        %4434 = vmatpush.bf16.msra.mxu0 %v4423
        %4435 = vmatpush.bf16.msra.mxu0 %v4422
        %4436 = vmatpush.bf16.msra.mxu0 %v4421
        %4437 = vmatpush.bf16.msra.mxu0 %v4420
        %4438 = vmatpush.bf16.msra.mxu0 %v4419
        %4439 = vmatpush.bf16.msra.mxu0 %v4418
        %4440 = vmatpush.bf16.msra.mxu0 %v4417
        %4441 = vmatmul.bf16.gmra.mxu0 %v4367
        %v4442 = vpop.f32.mrf.mxu0
        %v4443 = vadd.f32 0.0, %v4442
        %v4444 = vpop.f32.mrf.mxu0
        %v4445 = vadd.f32 0.0, %v4444
        %4446 = vdwg.mxu0
        %v4447 = vadd.f32 %v4338, %v4443
        %v4448 = vadd.f32 %v4340, %v4445
        %s4449 = scalar_lea.vmem [#allocation9], 24
        %v4450 = vld [vmem:[%s4449] sm:$0xf]
        %v4451 = vld [vmem:[%s4449 + $0x4] sm:$0xf]
        %v4454 = vunpack.c.l.b16 %v4450
        %v4455 = vunpack.c.l.b16 %v4451
        %v4456 = vpack.c.b16 %v4455, %v4454
        %v4458 = vsel %vm3645, %v4456, 0
        %4460 = vmatpush.bf16.msra.mxu0 0
        %4461 = vmatpush.bf16.msra.mxu0 0
        %4462 = vmatpush.bf16.msra.mxu0 0
        %4463 = vmatpush.bf16.msra.mxu0 0
        %4464 = vmatpush.bf16.msra.mxu0 0
        %4465 = vmatpush.bf16.msra.mxu0 0
        %4466 = vmatpush.bf16.msra.mxu0 %v4133
        %4467 = vmatpush.bf16.msra.mxu0 %v4132
        %4468 = vmatmul.bf16.gmra.mxu0 %v4458
        %v4469 = vpop.f32.mrf.mxu0
        %v4470 = vadd.f32 0.0, %v4469
        %v4471 = vpop.f32.mrf.mxu0
        %v4472 = vadd.f32 0.0, %v4471
        %4473 = vdwg.mxu0
        %v4474 = vpack.c.bf16 %v4472, %v4470
        %s4475 = scalar_lea.vmem %s13, 192
        %v4476 = vld [vmem:[%s4475] sm:$0xf]
        %v4477 = vld [vmem:[%s4475 + $0x4] sm:$0xf]
        %v4478 = vld [vmem:[%s4475 + $0x8] sm:$0xf]
        %v4479 = vld [vmem:[%s4475 + $0xc] sm:$0xf]
        %v4480 = vld [vmem:[%s4475 + $0x10] sm:$0xf]
        %v4481 = vld [vmem:[%s4475 + $0x14] sm:$0xf]
        %v4482 = vld [vmem:[%s4475 + $0x18] sm:$0xf]
        %v4483 = vld [vmem:[%s4475 + $0x1c] sm:$0xf]
        %v4484 = vld [vmem:[%s4475 + $0x20] sm:$0xf]
        %v4485 = vld [vmem:[%s4475 + $0x24] sm:$0xf]
        %v4486 = vld [vmem:[%s4475 + $0x28] sm:$0xf]
        %v4487 = vld [vmem:[%s4475 + $0x2c] sm:$0xf]
        %v4488 = vld [vmem:[%s4475 + $0x30] sm:$0xf]
        %v4489 = vld [vmem:[%s4475 + $0x34] sm:$0xf]
        %v4490 = vld [vmem:[%s4475 + $0x38] sm:$0xf]
        %v4491 = vld [vmem:[%s4475 + $0x3c] sm:$0xf]
        %v4508 = vunpack.c.l.b16 %v4476
        %v4509 = vunpack.c.l.b16 %v4477
        %v4510 = vunpack.c.l.b16 %v4478
        %v4511 = vunpack.c.l.b16 %v4479
        %v4512 = vunpack.c.l.b16 %v4480
        %v4513 = vunpack.c.l.b16 %v4481
        %v4514 = vunpack.c.l.b16 %v4482
        %v4515 = vunpack.c.l.b16 %v4483
        %v4516 = vunpack.c.l.b16 %v4484
        %v4517 = vunpack.c.l.b16 %v4485
        %v4518 = vunpack.c.l.b16 %v4486
        %v4519 = vunpack.c.l.b16 %v4487
        %v4520 = vunpack.c.l.b16 %v4488
        %v4521 = vunpack.c.l.b16 %v4489
        %v4522 = vunpack.c.l.b16 %v4490
        %v4523 = vunpack.c.l.b16 %v4491
        %v4524 = vpack.c.b16 %v4509, %v4508
        %v4525 = vpack.c.b16 %v4511, %v4510
        %v4526 = vpack.c.b16 %v4513, %v4512
        %v4527 = vpack.c.b16 %v4515, %v4514
        %v4528 = vpack.c.b16 %v4517, %v4516
        %v4529 = vpack.c.b16 %v4519, %v4518
        %v4530 = vpack.c.b16 %v4521, %v4520
        %v4531 = vpack.c.b16 %v4523, %v4522
        %4540 = vmatpush.bf16.msra.mxu0 %v4531
        %4541 = vmatpush.bf16.msra.mxu0 %v4530
        %4542 = vmatpush.bf16.msra.mxu0 %v4529
        %4543 = vmatpush.bf16.msra.mxu0 %v4528
        %4544 = vmatpush.bf16.msra.mxu0 %v4527
        %4545 = vmatpush.bf16.msra.mxu0 %v4526
        %4546 = vmatpush.bf16.msra.mxu0 %v4525
        %4547 = vmatpush.bf16.msra.mxu0 %v4524
        %4548 = vmatmul.bf16.gmra.mxu0 %v4474
        %v4549 = vpop.f32.mrf.mxu0
        %v4550 = vadd.f32 0.0, %v4549
        %v4551 = vpop.f32.mrf.mxu0
        %v4552 = vadd.f32 0.0, %v4551
        %4553 = vdwg.mxu0
        %v4554 = vadd.f32 %v4447, %v4550
        %v4555 = vadd.f32 %v4448, %v4552
        %v4556 = vld [vmem:[%s29] sm:$0xff]
        %v4557 = vld [vmem:[%s29 + $0x8] sm:$0xff]
        %4559 = vset.pattern.permute.xlu0 0
        %4560 = vperm.xlu0 %4559, %v4556
        %v4561 = vpop.permute.xlu0 %4560
        %4564 = vset.pattern.permute.xlu0 0
        %4565 = vperm.xlu0 %4564, %v4557
        %v4566 = vpop.permute.xlu0 %4565
        %v4568 = vadd.f32 %v4554, %v4561
        %v4569 = vadd.f32 %v4555, %v4566
        %4570 = vrot.lane.b32.xlu0 %v2984, 9
        %v4571 = vpop.permute.xlu0 %4570
        %4572 = vrot.lane.b32.xlu0 %v2985, 9
        %v4573 = vpop.permute.xlu0 %4572
        %4574 = vrot.lane.b32.xlu0 %v4568, 9
        %v4575 = vpop.permute.xlu0 %4574
        %4576 = vrot.lane.b32.xlu0 %v4569, 9
        %v4577 = vpop.permute.xlu0 %4576
        %v4578 = vmul.f32 %v4571, %v2325
        %v4579 = vmul.f32 %v4573, %v2325
        %v4580 = vmul.f32 %v4575, %v2325
        %v4581 = vmul.f32 %v4577, %v2325
        %v4582 = vld [vmem:[#allocation10] sm:$0xf]
        %v4583 = vld [vmem:[#allocation10 + $0x4] sm:$0xf]
        %v4584 = vpack.c.bf16 %v4579, %v4578
        %v4585 = vpack.c.bf16 %v4581, %v4580
        %4586 = vrot.lane.b32.xlu0 %v2984, 8
        %v4587 = vpop.permute.xlu0 %4586
        %4588 = vrot.lane.b32.xlu0 %v2985, 8
        %v4589 = vpop.permute.xlu0 %4588
        %4590 = vrot.lane.b32.xlu0 %v4568, 8
        %v4591 = vpop.permute.xlu0 %4590
        %4592 = vrot.lane.b32.xlu0 %v4569, 8
        %v4593 = vpop.permute.xlu0 %4592
        %v4594 = vmul.f32 %v4587, %v2336
        %v4595 = vmul.f32 %v4589, %v2336
        %v4596 = vmul.f32 %v4591, %v2336
        %v4597 = vmul.f32 %v4593, %v2336
        %s4598 = scalar_lea.vmem [#allocation10], 8
        %v4599 = vld [vmem:[%s4598] sm:$0xf]
        %v4600 = vld [vmem:[%s4598 + $0x4] sm:$0xf]
        %v4601 = vpack.c.bf16 %v4595, %v4594
        %v4602 = vpack.c.bf16 %v4597, %v4596
        %v4605 = vunpack.c.l.b16 %v4599
        %v4606 = vunpack.c.l.b16 %v4600
        %v4607 = vpack.c.b16 %v4606, %v4605
        %v4609 = vsel %vm3645, %v4607, 0
        %4611 = vmatpush.bf16.msra.mxu0 0
        %4612 = vmatpush.bf16.msra.mxu0 0
        %4613 = vmatpush.bf16.msra.mxu0 0
        %4614 = vmatpush.bf16.msra.mxu0 0
        %4615 = vmatpush.bf16.msra.mxu0 0
        %4616 = vmatpush.bf16.msra.mxu0 0
        %4617 = vmatpush.bf16.msra.mxu0 %v4602
        %4618 = vmatpush.bf16.msra.mxu0 %v4601
        %4619 = vmatmul.bf16.gmra.mxu0 %v4609
        %v4620 = vpop.f32.mrf.mxu0
        %v4621 = vadd.f32 0.0, %v4620
        %v4622 = vpop.f32.mrf.mxu0
        %v4623 = vadd.f32 0.0, %v4622
        %4624 = vdwg.mxu0
        %v4627 = vunpack.c.l.b16 %v4582
        %v4628 = vunpack.c.l.b16 %v4583
        %v4629 = vpack.c.b16 %v4628, %v4627
        %v4631 = vsel %vm3645, %v4629, 0
        %4633 = vmatpush.bf16.msra.mxu0 0
        %4634 = vmatpush.bf16.msra.mxu0 0
        %4635 = vmatpush.bf16.msra.mxu0 0
        %4636 = vmatpush.bf16.msra.mxu0 0
        %4637 = vmatpush.bf16.msra.mxu0 0
        %4638 = vmatpush.bf16.msra.mxu0 0
        %4639 = vmatpush.bf16.msra.mxu0 %v4585
        %4640 = vmatpush.bf16.msra.mxu0 %v4584
        %4641 = vmatmul.bf16.gmra.mxu0 %v4631
        %v4642 = vpop.f32.mrf.mxu0
        %v4643 = vadd.f32 %v4621, %v4642
        %v4644 = vpop.f32.mrf.mxu0
        %v4645 = vadd.f32 %v4623, %v4644
        %4646 = vdwg.mxu0
        %4647 = vrot.lane.b32.xlu0 %v2984, 7
        %v4648 = vpop.permute.xlu0 %4647
        %4649 = vrot.lane.b32.xlu0 %v2985, 7
        %v4650 = vpop.permute.xlu0 %4649
        %4651 = vrot.lane.b32.xlu0 %v4568, 7
        %v4652 = vpop.permute.xlu0 %4651
        %4653 = vrot.lane.b32.xlu0 %v4569, 7
        %v4654 = vpop.permute.xlu0 %4653
        %v4655 = vmul.f32 %v4648, %v2398
        %v4656 = vmul.f32 %v4650, %v2398
        %v4657 = vmul.f32 %v4652, %v2398
        %v4658 = vmul.f32 %v4654, %v2398
        %s4659 = scalar_lea.vmem [#allocation10], 16
        %v4660 = vld [vmem:[%s4659] sm:$0xf]
        %v4661 = vld [vmem:[%s4659 + $0x4] sm:$0xf]
        %v4662 = vpack.c.bf16 %v4656, %v4655
        %v4663 = vpack.c.bf16 %v4658, %v4657
        %v4666 = vunpack.c.l.b16 %v4660
        %v4667 = vunpack.c.l.b16 %v4661
        %v4668 = vpack.c.b16 %v4667, %v4666
        %v4670 = vsel %vm3645, %v4668, 0
        %4672 = vmatpush.bf16.msra.mxu0 0
        %4673 = vmatpush.bf16.msra.mxu0 0
        %4674 = vmatpush.bf16.msra.mxu0 0
        %4675 = vmatpush.bf16.msra.mxu0 0
        %4676 = vmatpush.bf16.msra.mxu0 0
        %4677 = vmatpush.bf16.msra.mxu0 0
        %4678 = vmatpush.bf16.msra.mxu0 %v4663
        %4679 = vmatpush.bf16.msra.mxu0 %v4662
        %4680 = vmatmul.bf16.gmra.mxu0 %v4670
        %v4681 = vpop.f32.mrf.mxu0
        %v4682 = vadd.f32 0.0, %v4681
        %v4683 = vpop.f32.mrf.mxu0
        %v4684 = vadd.f32 0.0, %v4683
        %4685 = vdwg.mxu0
        %v4686 = vadd.f32 %v4643, %v4682
        %v4687 = vadd.f32 %v4645, %v4684
        %4688 = vrot.lane.b32.xlu0 %v2984, 1
        %v4689 = vpop.permute.xlu0 %4688
        %4690 = vrot.lane.b32.xlu0 %v2985, 1
        %v4691 = vpop.permute.xlu0 %4690
        %4692 = vrot.lane.b32.xlu0 %v4568, 1
        %v4693 = vpop.permute.xlu0 %4692
        %4694 = vrot.lane.b32.xlu0 %v4569, 1
        %v4695 = vpop.permute.xlu0 %4694
        %v4696 = vmul.f32 %v4689, %v2437
        %v4697 = vmul.f32 %v4691, %v2437
        %v4698 = vmul.f32 %v4693, %v2437
        %v4699 = vmul.f32 %v4695, %v2437
        %s4700 = scalar_lea.vmem [#allocation10], 24
        %v4701 = vld [vmem:[%s4700] sm:$0xf]
        %v4702 = vld [vmem:[%s4700 + $0x4] sm:$0xf]
        %v4703 = vpack.c.bf16 %v4697, %v4696
        %v4704 = vpack.c.bf16 %v4699, %v4698
        %v4707 = vunpack.c.l.b16 %v4701
        %v4708 = vunpack.c.l.b16 %v4702
        %v4709 = vpack.c.b16 %v4708, %v4707
        %v4711 = vsel %vm3645, %v4709, 0
        %4713 = vmatpush.bf16.msra.mxu0 0
        %4714 = vmatpush.bf16.msra.mxu0 0
        %4715 = vmatpush.bf16.msra.mxu0 0
        %4716 = vmatpush.bf16.msra.mxu0 0
        %4717 = vmatpush.bf16.msra.mxu0 0
        %4718 = vmatpush.bf16.msra.mxu0 0
        %4719 = vmatpush.bf16.msra.mxu0 %v4704
        %4720 = vmatpush.bf16.msra.mxu0 %v4703
        %4721 = vmatmul.bf16.gmra.mxu0 %v4711
        %v4722 = vpop.f32.mrf.mxu0
        %v4723 = vadd.f32 0.0, %v4722
        %v4724 = vpop.f32.mrf.mxu0
        %v4725 = vadd.f32 0.0, %v4724
        %4726 = vdwg.mxu0
        %v4727 = vadd.f32 %v4686, %v4723
        %v4728 = vadd.f32 %v4687, %v4725
        %s4729 = scalar_lea.vmem [#allocation10], 32
        %v4730 = vld [vmem:[%s4729] sm:$0xf]
        %v4731 = vld [vmem:[%s4729 + $0x4] sm:$0xf]
        %v4732 = vpack.c.bf16 %v2985, %v2984
        %v4733 = vpack.c.bf16 %v4569, %v4568
        %v4736 = vunpack.c.l.b16 %v4730
        %v4737 = vunpack.c.l.b16 %v4731
        %v4738 = vpack.c.b16 %v4737, %v4736
        %v4740 = vsel %vm3645, %v4738, 0
        %4742 = vmatpush.bf16.msra.mxu0 0
        %4743 = vmatpush.bf16.msra.mxu0 0
        %4744 = vmatpush.bf16.msra.mxu0 0
        %4745 = vmatpush.bf16.msra.mxu0 0
        %4746 = vmatpush.bf16.msra.mxu0 0
        %4747 = vmatpush.bf16.msra.mxu0 0
        %4748 = vmatpush.bf16.msra.mxu0 %v4733
        %4749 = vmatpush.bf16.msra.mxu0 %v4732
        %4750 = vmatmul.bf16.gmra.mxu0 %v4740
        %v4751 = vpop.f32.mrf.mxu0
        %v4752 = vadd.f32 0.0, %v4751
        %v4753 = vpop.f32.mrf.mxu0
        %v4754 = vadd.f32 0.0, %v4753
        %4755 = vdwg.mxu0
        %v4756 = vadd.f32 %v4727, %v4752
        %v4757 = vadd.f32 %v4728, %v4754
        %4758 = vrot.lane.b32.xlu0 %v4568, 127
        %v4759 = vpop.permute.xlu0 %4758
        %4760 = vrot.lane.b32.xlu0 %v4569, 127
        %v4761 = vpop.permute.xlu0 %4760
        %v4762 = vmul.f32 %v2987, %v2507
        %v4763 = vmul.f32 %v2989, %v2507
        %v4764 = vmul.f32 %v4759, %v2507
        %v4765 = vmul.f32 %v4761, %v2507
        %s4766 = scalar_lea.vmem [#allocation10], 40
        %v4767 = vld [vmem:[%s4766] sm:$0xf]
        %v4768 = vld [vmem:[%s4766 + $0x4] sm:$0xf]
        %v4769 = vpack.c.bf16 %v4763, %v4762
        %v4770 = vpack.c.bf16 %v4765, %v4764
        %v4773 = vunpack.c.l.b16 %v4767
        %v4774 = vunpack.c.l.b16 %v4768
        %v4775 = vpack.c.b16 %v4774, %v4773
        %v4777 = vsel %vm3645, %v4775, 0
        %4779 = vmatpush.bf16.msra.mxu0 0
        %4780 = vmatpush.bf16.msra.mxu0 0
        %4781 = vmatpush.bf16.msra.mxu0 0
        %4782 = vmatpush.bf16.msra.mxu0 0
        %4783 = vmatpush.bf16.msra.mxu0 0
        %4784 = vmatpush.bf16.msra.mxu0 0
        %4785 = vmatpush.bf16.msra.mxu0 %v4770
        %4786 = vmatpush.bf16.msra.mxu0 %v4769
        %4787 = vmatmul.bf16.gmra.mxu0 %v4777
        %v4788 = vpop.f32.mrf.mxu0
        %v4789 = vadd.f32 0.0, %v4788
        %v4790 = vpop.f32.mrf.mxu0
        %v4791 = vadd.f32 0.0, %v4790
        %4792 = vdwg.mxu0
        %v4793 = vadd.f32 %v4756, %v4789
        %v4794 = vadd.f32 %v4757, %v4791
        %4795 = vrot.lane.b32.xlu0 %v2984, 121
        %v4796 = vpop.permute.xlu0 %4795
        %4797 = vrot.lane.b32.xlu0 %v2985, 121
        %v4798 = vpop.permute.xlu0 %4797
        %4799 = vrot.lane.b32.xlu0 %v4568, 121
        %v4800 = vpop.permute.xlu0 %4799
        %4801 = vrot.lane.b32.xlu0 %v4569, 121
        %v4802 = vpop.permute.xlu0 %4801
        %v4803 = vmul.f32 %v4796, %v2546
        %v4804 = vmul.f32 %v4798, %v2546
        %v4805 = vmul.f32 %v4800, %v2546
        %v4806 = vmul.f32 %v4802, %v2546
        %s4807 = scalar_lea.vmem [#allocation10], 48
        %v4808 = vld [vmem:[%s4807] sm:$0xf]
        %v4809 = vld [vmem:[%s4807 + $0x4] sm:$0xf]
        %v4810 = vpack.c.bf16 %v4804, %v4803
        %v4811 = vpack.c.bf16 %v4806, %v4805
        %v4814 = vunpack.c.l.b16 %v4808
        %v4815 = vunpack.c.l.b16 %v4809
        %v4816 = vpack.c.b16 %v4815, %v4814
        %v4818 = vsel %vm3645, %v4816, 0
        %4820 = vmatpush.bf16.msra.mxu0 0
        %4821 = vmatpush.bf16.msra.mxu0 0
        %4822 = vmatpush.bf16.msra.mxu0 0
        %4823 = vmatpush.bf16.msra.mxu0 0
        %4824 = vmatpush.bf16.msra.mxu0 0
        %4825 = vmatpush.bf16.msra.mxu0 0
        %4826 = vmatpush.bf16.msra.mxu0 %v4811
        %4827 = vmatpush.bf16.msra.mxu0 %v4810
        %4828 = vmatmul.bf16.gmra.mxu0 %v4818
        %v4829 = vpop.f32.mrf.mxu0
        %v4830 = vadd.f32 0.0, %v4829
        %v4831 = vpop.f32.mrf.mxu0
        %v4832 = vadd.f32 0.0, %v4831
        %4833 = vdwg.mxu0
        %v4834 = vadd.f32 %v4793, %v4830
        %v4835 = vadd.f32 %v4794, %v4832
        %4836 = vrot.lane.b32.xlu0 %v4568, 120
        %v4837 = vpop.permute.xlu0 %4836
        %4838 = vrot.lane.b32.xlu0 %v4569, 120
        %v4839 = vpop.permute.xlu0 %4838
        %v4840 = vmul.f32 %v2993, %v2585
        %v4841 = vmul.f32 %v2995, %v2585
        %v4842 = vmul.f32 %v4837, %v2585
        %v4843 = vmul.f32 %v4839, %v2585
        %s4844 = scalar_lea.vmem [#allocation10], 56
        %v4845 = vld [vmem:[%s4844] sm:$0xf]
        %v4846 = vld [vmem:[%s4844 + $0x4] sm:$0xf]
        %v4847 = vpack.c.bf16 %v4841, %v4840
        %v4848 = vpack.c.bf16 %v4843, %v4842
        %v4851 = vunpack.c.l.b16 %v4845
        %v4852 = vunpack.c.l.b16 %v4846
        %v4853 = vpack.c.b16 %v4852, %v4851
        %v4855 = vsel %vm3645, %v4853, 0
        %4857 = vmatpush.bf16.msra.mxu0 0
        %4858 = vmatpush.bf16.msra.mxu0 0
        %4859 = vmatpush.bf16.msra.mxu0 0
        %4860 = vmatpush.bf16.msra.mxu0 0
        %4861 = vmatpush.bf16.msra.mxu0 0
        %4862 = vmatpush.bf16.msra.mxu0 0
        %4863 = vmatpush.bf16.msra.mxu0 %v4848
        %4864 = vmatpush.bf16.msra.mxu0 %v4847
        %4865 = vmatmul.bf16.gmra.mxu0 %v4855
        %v4866 = vpop.f32.mrf.mxu0
        %v4867 = vadd.f32 0.0, %v4866
        %v4868 = vpop.f32.mrf.mxu0
        %v4869 = vadd.f32 0.0, %v4868
        %4870 = vdwg.mxu0
        %v4871 = vadd.f32 %v4834, %v4867
        %v4872 = vadd.f32 %v4835, %v4869
        %4873 = vrot.lane.b32.xlu0 %v4568, 119
        %v4874 = vpop.permute.xlu0 %4873
        %4875 = vrot.lane.b32.xlu0 %v4569, 119
        %v4876 = vpop.permute.xlu0 %4875
        %v4877 = vmul.f32 %v2999, %v2624
        %v4878 = vmul.f32 %v3001, %v2624
        %v4879 = vmul.f32 %v4874, %v2624
        %v4880 = vmul.f32 %v4876, %v2624
        %s4881 = scalar_lea.vmem [#allocation10], 64
        %v4882 = vld [vmem:[%s4881] sm:$0xf]
        %v4883 = vld [vmem:[%s4881 + $0x4] sm:$0xf]
        %v4884 = vpack.c.bf16 %v4878, %v4877
        %v4885 = vpack.c.bf16 %v4880, %v4879
        %v4888 = vunpack.c.l.b16 %v4882
        %v4889 = vunpack.c.l.b16 %v4883
        %v4890 = vpack.c.b16 %v4889, %v4888
        %v4892 = vsel %vm3645, %v4890, 0
        %4894 = vmatpush.bf16.msra.mxu0 0
        %4895 = vmatpush.bf16.msra.mxu0 0
        %4896 = vmatpush.bf16.msra.mxu0 0
        %4897 = vmatpush.bf16.msra.mxu0 0
        %4898 = vmatpush.bf16.msra.mxu0 0
        %4899 = vmatpush.bf16.msra.mxu0 0
        %4900 = vmatpush.bf16.msra.mxu0 %v4885
        %4901 = vmatpush.bf16.msra.mxu0 %v4884
        %4902 = vmatmul.bf16.gmra.mxu0 %v4892
        %v4903 = vpop.f32.mrf.mxu0
        %v4904 = vadd.f32 0.0, %v4903
        %v4905 = vpop.f32.mrf.mxu0
        %v4906 = vadd.f32 0.0, %v4905
        %4907 = vdwg.mxu0
        %v4908 = vadd.f32 %v4871, %v4904
        %v4909 = vadd.f32 %v4872, %v4906
        %v4910 = vld [vmem:[%s25] sm:$0xff]
        %v4911 = vld [vmem:[%s25 + $0x8] sm:$0xff]
        %4913 = vset.pattern.permute.xlu0 0
        %4914 = vperm.xlu0 %4913, %v4910
        %v4915 = vpop.permute.xlu0 %4914
        %4918 = vset.pattern.permute.xlu0 0
        %4919 = vperm.xlu0 %4918, %v4911
        %v4920 = vpop.permute.xlu0 %4919
        %v4922 = vadd.f32 %v4908, %v4915
        %v4923 = vadd.f32 %v4909, %v4920
        %v4924 = vmax.f32 %v4922, 0.0
        %v4925 = vmax.f32 %v4923, 0.0
        %4926 = vrot.lane.b32.xlu0 %v4924, 9
        %v4927 = vpop.permute.xlu0 %4926
        %4928 = vrot.lane.b32.xlu0 %v4925, 9
        %v4929 = vpop.permute.xlu0 %4928
        %v4930 = vmul.f32 %v4927, %v2325
        %v4931 = vmul.f32 %v4929, %v2325
        %v4932 = vld [vmem:[#allocation12] sm:$0xf]
        %v4933 = vld [vmem:[#allocation12 + $0x4] sm:$0xf]
        %v4934 = vpack.c.bf16 %v4931, %v4930
        %4935 = vrot.lane.b32.xlu0 %v4924, 8
        %v4936 = vpop.permute.xlu0 %4935
        %4937 = vrot.lane.b32.xlu0 %v4925, 8
        %v4938 = vpop.permute.xlu0 %4937
        %v4939 = vmul.f32 %v4936, %v2336
        %v4940 = vmul.f32 %v4938, %v2336
        %s4941 = scalar_lea.vmem [#allocation12], 8
        %v4942 = vld [vmem:[%s4941] sm:$0xf]
        %v4943 = vld [vmem:[%s4941 + $0x4] sm:$0xf]
        %v4944 = vpack.c.bf16 %v4940, %v4939
        %v4947 = vunpack.c.l.b16 %v4942
        %v4948 = vunpack.c.l.b16 %v4943
        %v4949 = vpack.c.b16 %v4948, %v4947
        %v4951 = vsel %vm2698, %v4949, 0
        %4953 = vmatpush.bf16.msra.mxu0 0
        %4954 = vmatpush.bf16.msra.mxu0 0
        %4955 = vmatpush.bf16.msra.mxu0 0
        %4956 = vmatpush.bf16.msra.mxu0 0
        %4957 = vmatpush.bf16.msra.mxu0 0
        %4958 = vmatpush.bf16.msra.mxu0 0
        %4959 = vmatpush.bf16.msra.mxu0 0
        %4960 = vmatpush.bf16.msra.mxu0 %v4944
        %4961 = vmatmul.bf16.gmra.mxu0 %v4951
        %v4962 = vpop.f32.mrf.mxu0
        %v4963 = vadd.f32 0.0, %v4962
        %v4964 = vpop.f32.mrf.mxu0
        %v4965 = vadd.f32 0.0, %v4964
        %4966 = vdwg.mxu0
        %v4969 = vunpack.c.l.b16 %v4932
        %v4970 = vunpack.c.l.b16 %v4933
        %v4971 = vpack.c.b16 %v4970, %v4969
        %v4973 = vsel %vm2698, %v4971, 0
        %4975 = vmatpush.bf16.msra.mxu0 0
        %4976 = vmatpush.bf16.msra.mxu0 0
        %4977 = vmatpush.bf16.msra.mxu0 0
        %4978 = vmatpush.bf16.msra.mxu0 0
        %4979 = vmatpush.bf16.msra.mxu0 0
        %4980 = vmatpush.bf16.msra.mxu0 0
        %4981 = vmatpush.bf16.msra.mxu0 0
        %4982 = vmatpush.bf16.msra.mxu0 %v4934
        %4983 = vmatmul.bf16.gmra.mxu0 %v4973
        %v4984 = vpop.f32.mrf.mxu0
        %v4985 = vadd.f32 %v4963, %v4984
        %v4986 = vpop.f32.mrf.mxu0
        %v4987 = vadd.f32 %v4965, %v4986
        %4988 = vdwg.mxu0
        %4989 = vrot.lane.b32.xlu0 %v4924, 7
        %v4990 = vpop.permute.xlu0 %4989
        %4991 = vrot.lane.b32.xlu0 %v4925, 7
        %v4992 = vpop.permute.xlu0 %4991
        %v4993 = vmul.f32 %v4990, %v2398
        %v4994 = vmul.f32 %v4992, %v2398
        %s4995 = scalar_lea.vmem [#allocation12], 16
        %v4996 = vld [vmem:[%s4995] sm:$0xf]
        %v4997 = vld [vmem:[%s4995 + $0x4] sm:$0xf]
        %v4998 = vpack.c.bf16 %v4994, %v4993
        %v5001 = vunpack.c.l.b16 %v4996
        %v5002 = vunpack.c.l.b16 %v4997
        %v5003 = vpack.c.b16 %v5002, %v5001
        %v5005 = vsel %vm2698, %v5003, 0
        %5007 = vmatpush.bf16.msra.mxu0 0
        %5008 = vmatpush.bf16.msra.mxu0 0
        %5009 = vmatpush.bf16.msra.mxu0 0
        %5010 = vmatpush.bf16.msra.mxu0 0
        %5011 = vmatpush.bf16.msra.mxu0 0
        %5012 = vmatpush.bf16.msra.mxu0 0
        %5013 = vmatpush.bf16.msra.mxu0 0
        %5014 = vmatpush.bf16.msra.mxu0 %v4998
        %5015 = vmatmul.bf16.gmra.mxu0 %v5005
        %v5016 = vpop.f32.mrf.mxu0
        %v5017 = vadd.f32 0.0, %v5016
        %v5018 = vpop.f32.mrf.mxu0
        %v5019 = vadd.f32 0.0, %v5018
        %5020 = vdwg.mxu0
        %v5021 = vadd.f32 %v4985, %v5017
        %v5022 = vadd.f32 %v4987, %v5019
        %5023 = vrot.lane.b32.xlu0 %v4924, 1
        %v5024 = vpop.permute.xlu0 %5023
        %5025 = vrot.lane.b32.xlu0 %v4925, 1
        %v5026 = vpop.permute.xlu0 %5025
        %v5027 = vmul.f32 %v5024, %v2437
        %v5028 = vmul.f32 %v5026, %v2437
        %s5029 = scalar_lea.vmem [#allocation12], 24
        %v5030 = vld [vmem:[%s5029] sm:$0xf]
        %v5031 = vld [vmem:[%s5029 + $0x4] sm:$0xf]
        %v5032 = vpack.c.bf16 %v5028, %v5027
        %v5035 = vunpack.c.l.b16 %v5030
        %v5036 = vunpack.c.l.b16 %v5031
        %v5037 = vpack.c.b16 %v5036, %v5035
        %v5039 = vsel %vm2698, %v5037, 0
        %5041 = vmatpush.bf16.msra.mxu0 0
        %5042 = vmatpush.bf16.msra.mxu0 0
        %5043 = vmatpush.bf16.msra.mxu0 0
        %5044 = vmatpush.bf16.msra.mxu0 0
        %5045 = vmatpush.bf16.msra.mxu0 0
        %5046 = vmatpush.bf16.msra.mxu0 0
        %5047 = vmatpush.bf16.msra.mxu0 0
        %5048 = vmatpush.bf16.msra.mxu0 %v5032
        %5049 = vmatmul.bf16.gmra.mxu0 %v5039
        %v5050 = vpop.f32.mrf.mxu0
        %v5051 = vadd.f32 0.0, %v5050
        %v5052 = vpop.f32.mrf.mxu0
        %v5053 = vadd.f32 0.0, %v5052
        %5054 = vdwg.mxu0
        %v5055 = vadd.f32 %v5021, %v5051
        %v5056 = vadd.f32 %v5022, %v5053
        %s5057 = scalar_lea.vmem [#allocation12], 32
        %v5058 = vld [vmem:[%s5057] sm:$0xf]
        %v5059 = vld [vmem:[%s5057 + $0x4] sm:$0xf]
        %v5060 = vpack.c.bf16 %v4925, %v4924
        %v5063 = vunpack.c.l.b16 %v5058
        %v5064 = vunpack.c.l.b16 %v5059
        %v5065 = vpack.c.b16 %v5064, %v5063
        %v5067 = vsel %vm2698, %v5065, 0
        %5069 = vmatpush.bf16.msra.mxu0 0
        %5070 = vmatpush.bf16.msra.mxu0 0
        %5071 = vmatpush.bf16.msra.mxu0 0
        %5072 = vmatpush.bf16.msra.mxu0 0
        %5073 = vmatpush.bf16.msra.mxu0 0
        %5074 = vmatpush.bf16.msra.mxu0 0
        %5075 = vmatpush.bf16.msra.mxu0 0
        %5076 = vmatpush.bf16.msra.mxu0 %v5060
        %5077 = vmatmul.bf16.gmra.mxu0 %v5067
        %v5078 = vpop.f32.mrf.mxu0
        %v5079 = vadd.f32 0.0, %v5078
        %v5080 = vpop.f32.mrf.mxu0
        %v5081 = vadd.f32 0.0, %v5080
        %5082 = vdwg.mxu0
        %v5083 = vadd.f32 %v5055, %v5079
        %v5084 = vadd.f32 %v5056, %v5081
        %5085 = vrot.lane.b32.xlu0 %v4924, 127
        %v5086 = vpop.permute.xlu0 %5085
        %5087 = vrot.lane.b32.xlu0 %v4925, 127
        %v5088 = vpop.permute.xlu0 %5087
        %v5089 = vmul.f32 %v5086, %v2507
        %v5090 = vmul.f32 %v5088, %v2507
        %s5091 = scalar_lea.vmem [#allocation12], 40
        %v5092 = vld [vmem:[%s5091] sm:$0xf]
        %v5093 = vld [vmem:[%s5091 + $0x4] sm:$0xf]
        %v5094 = vpack.c.bf16 %v5090, %v5089
        %v5097 = vunpack.c.l.b16 %v5092
        %v5098 = vunpack.c.l.b16 %v5093
        %v5099 = vpack.c.b16 %v5098, %v5097
        %v5101 = vsel %vm2698, %v5099, 0
        %5103 = vmatpush.bf16.msra.mxu0 0
        %5104 = vmatpush.bf16.msra.mxu0 0
        %5105 = vmatpush.bf16.msra.mxu0 0
        %5106 = vmatpush.bf16.msra.mxu0 0
        %5107 = vmatpush.bf16.msra.mxu0 0
        %5108 = vmatpush.bf16.msra.mxu0 0
        %5109 = vmatpush.bf16.msra.mxu0 0
        %5110 = vmatpush.bf16.msra.mxu0 %v5094
        %5111 = vmatmul.bf16.gmra.mxu0 %v5101
        %v5112 = vpop.f32.mrf.mxu0
        %v5113 = vadd.f32 0.0, %v5112
        %v5114 = vpop.f32.mrf.mxu0
        %v5115 = vadd.f32 0.0, %v5114
        %5116 = vdwg.mxu0
        %v5117 = vadd.f32 %v5083, %v5113
        %v5118 = vadd.f32 %v5084, %v5115
        %5119 = vrot.lane.b32.xlu0 %v4924, 121
        %v5120 = vpop.permute.xlu0 %5119
        %5121 = vrot.lane.b32.xlu0 %v4925, 121
        %v5122 = vpop.permute.xlu0 %5121
        %v5123 = vmul.f32 %v5120, %v2546
        %v5124 = vmul.f32 %v5122, %v2546
        %s5125 = scalar_lea.vmem [#allocation12], 48
        %v5126 = vld [vmem:[%s5125] sm:$0xf]
        %v5127 = vld [vmem:[%s5125 + $0x4] sm:$0xf]
        %v5128 = vpack.c.bf16 %v5124, %v5123
        %v5131 = vunpack.c.l.b16 %v5126
        %v5132 = vunpack.c.l.b16 %v5127
        %v5133 = vpack.c.b16 %v5132, %v5131
        %v5135 = vsel %vm2698, %v5133, 0
        %5137 = vmatpush.bf16.msra.mxu0 0
        %5138 = vmatpush.bf16.msra.mxu0 0
        %5139 = vmatpush.bf16.msra.mxu0 0
        %5140 = vmatpush.bf16.msra.mxu0 0
        %5141 = vmatpush.bf16.msra.mxu0 0
        %5142 = vmatpush.bf16.msra.mxu0 0
        %5143 = vmatpush.bf16.msra.mxu0 0
        %5144 = vmatpush.bf16.msra.mxu0 %v5128
        %5145 = vmatmul.bf16.gmra.mxu0 %v5135
        %v5146 = vpop.f32.mrf.mxu0
        %v5147 = vadd.f32 0.0, %v5146
        %v5148 = vpop.f32.mrf.mxu0
        %v5149 = vadd.f32 0.0, %v5148
        %5150 = vdwg.mxu0
        %v5151 = vadd.f32 %v5117, %v5147
        %v5152 = vadd.f32 %v5118, %v5149
        %5153 = vrot.lane.b32.xlu0 %v4924, 120
        %v5154 = vpop.permute.xlu0 %5153
        %5155 = vrot.lane.b32.xlu0 %v4925, 120
        %v5156 = vpop.permute.xlu0 %5155
        %v5157 = vmul.f32 %v5154, %v2585
        %v5158 = vmul.f32 %v5156, %v2585
        %s5159 = scalar_lea.vmem [#allocation12], 56
        %v5160 = vld [vmem:[%s5159] sm:$0xf]
        %v5161 = vld [vmem:[%s5159 + $0x4] sm:$0xf]
        %v5162 = vpack.c.bf16 %v5158, %v5157
        %v5165 = vunpack.c.l.b16 %v5160
        %v5166 = vunpack.c.l.b16 %v5161
        %v5167 = vpack.c.b16 %v5166, %v5165
        %v5169 = vsel %vm2698, %v5167, 0
        %5171 = vmatpush.bf16.msra.mxu0 0
        %5172 = vmatpush.bf16.msra.mxu0 0
        %5173 = vmatpush.bf16.msra.mxu0 0
        %5174 = vmatpush.bf16.msra.mxu0 0
        %5175 = vmatpush.bf16.msra.mxu0 0
        %5176 = vmatpush.bf16.msra.mxu0 0
        %5177 = vmatpush.bf16.msra.mxu0 0
        %5178 = vmatpush.bf16.msra.mxu0 %v5162
        %5179 = vmatmul.bf16.gmra.mxu0 %v5169
        %v5180 = vpop.f32.mrf.mxu0
        %v5181 = vadd.f32 0.0, %v5180
        %v5182 = vpop.f32.mrf.mxu0
        %v5183 = vadd.f32 0.0, %v5182
        %5184 = vdwg.mxu0
        %v5185 = vadd.f32 %v5151, %v5181
        %v5186 = vadd.f32 %v5152, %v5183
        %5187 = vrot.lane.b32.xlu0 %v4924, 119
        %v5188 = vpop.permute.xlu0 %5187
        %5189 = vrot.lane.b32.xlu0 %v4925, 119
        %v5190 = vpop.permute.xlu0 %5189
        %v5191 = vmul.f32 %v5188, %v2624
        %v5192 = vmul.f32 %v5190, %v2624
        %s5193 = scalar_lea.vmem [#allocation12], 64
        %v5194 = vld [vmem:[%s5193] sm:$0xf]
        %v5195 = vld [vmem:[%s5193 + $0x4] sm:$0xf]
        %v5196 = vpack.c.bf16 %v5192, %v5191
        %v5199 = vunpack.c.l.b16 %v5194
        %v5200 = vunpack.c.l.b16 %v5195
        %v5201 = vpack.c.b16 %v5200, %v5199
        %v5203 = vsel %vm2698, %v5201, 0
        %5205 = vmatpush.bf16.msra.mxu0 0
        %5206 = vmatpush.bf16.msra.mxu0 0
        %5207 = vmatpush.bf16.msra.mxu0 0
        %5208 = vmatpush.bf16.msra.mxu0 0
        %5209 = vmatpush.bf16.msra.mxu0 0
        %5210 = vmatpush.bf16.msra.mxu0 0
        %5211 = vmatpush.bf16.msra.mxu0 0
        %5212 = vmatpush.bf16.msra.mxu0 %v5196
        %5213 = vmatmul.bf16.gmra.mxu0 %v5203
        %v5214 = vpop.f32.mrf.mxu0
        %v5215 = vadd.f32 0.0, %v5214
        %v5216 = vpop.f32.mrf.mxu0
        %v5217 = vadd.f32 0.0, %v5216
        %5218 = vdwg.mxu0
        %v5219 = vadd.f32 %v5185, %v5215
        %v5220 = vadd.f32 %v5186, %v5217
        %v5221 = vld [vmem:[%s27] sm:$0xff]
        %v5222 = vld [vmem:[%s27 + $0x8] sm:$0xff]
        %5224 = vset.pattern.permute.xlu0 0
        %5225 = vperm.xlu0 %5224, %v5221
        %v5226 = vpop.permute.xlu0 %5225
        %5229 = vset.pattern.permute.xlu0 0
        %5230 = vperm.xlu0 %5229, %v5222
        %v5231 = vpop.permute.xlu0 %5230
        %v5233 = vadd.f32 %v5219, %v5226
        %v5234 = vadd.f32 %v5220, %v5231
        %v5235 = vmax.f32 %v5233, 0.0
        %v5236 = vmax.f32 %v5234, 0.0
        %v5237 = vpack.c.bf16 %v5236, %v5235
        %v5238 = vld [vmem:[%s43] sm:$0xf]
        %v5240 = vsel %vm2698, %v5238, 0
        %5242 = vmatpush.bf16.msra.mxu0 0
        %5243 = vmatpush.bf16.msra.mxu0 0
        %5244 = vmatpush.bf16.msra.mxu0 0
        %5245 = vmatpush.bf16.msra.mxu0 0
        %5246 = vmatpush.bf16.msra.mxu0 0
        %5247 = vmatpush.bf16.msra.mxu0 0
        %5248 = vmatpush.bf16.msra.mxu0 0
        %5249 = vmatpush.bf16.msra.mxu0 %v5237
        %5250 = vmatmul.bf16.gmra.mxu0 %v5240
        %v5251 = vpop.f32.mrf.mxu0
        %v5252 = vadd.f32 0.0, %v5251
        %v5253 = vpop.f32.mrf.mxu0
        %5254 = vdwg.mxu0
        %v5255 = vpack.c.bf16 %v5252, %v5252
        %v5256 = vld [vmem:[%s15] sm:$0xff]
        %v5257 = vld [vmem:[%s15 + $0x8] sm:$0xff]
        %v5258 = vld [vmem:[%s15 + $0x10] sm:$0xff]
        %v5259 = vld [vmem:[%s15 + $0x18] sm:$0xff]
        %v5260 = vld [vmem:[%s15 + $0x20] sm:$0xff]
        %v5261 = vld [vmem:[%s15 + $0x28] sm:$0xff]
        %v5262 = vld [vmem:[%s15 + $0x30] sm:$0xff]
        %v5263 = vld [vmem:[%s15 + $0x38] sm:$0xff]
        %v5264 = vld [vmem:[%s15 + $0x40] sm:$0xff]
        %v5265 = vld [vmem:[%s15 + $0x48] sm:$0xff]
        %v5266 = vld [vmem:[%s15 + $0x50] sm:$0xff]
        %v5267 = vld [vmem:[%s15 + $0x58] sm:$0xff]
        %v5268 = vld [vmem:[%s15 + $0x60] sm:$0xff]
        %v5269 = vld [vmem:[%s15 + $0x68] sm:$0xff]
        %v5270 = vld [vmem:[%s15 + $0x70] sm:$0xff]
        %v5271 = vld [vmem:[%s15 + $0x78] sm:$0xff]
        %s5272 = scalar_lea.vmem %s43, 4
        %v5273 = vld [vmem:[%s5272] sm:$0xf]
        %v5275 = vsel %vm2698, %v5273, 0
        %5277 = vmatpush.bf16.msra.mxu0 0
        %5278 = vmatpush.bf16.msra.mxu0 0
        %5279 = vmatpush.bf16.msra.mxu0 0
        %5280 = vmatpush.bf16.msra.mxu0 0
        %5281 = vmatpush.bf16.msra.mxu0 0
        %5282 = vmatpush.bf16.msra.mxu0 0
        %5283 = vmatpush.bf16.msra.mxu0 0
        %5284 = vmatpush.bf16.msra.mxu0 %v5237
        %5285 = vmatmul.bf16.gmra.mxu0 %v5275
        %v5286 = vpop.f32.mrf.mxu0
        %v5287 = vadd.f32 0.0, %v5286
        %v5288 = vpop.f32.mrf.mxu0
        %5289 = vdwg.mxu0
        %v5290 = vpack.c.bf16 %v5287, %v5287
        %s5291 = scalar_lea.vmem %s15, 128
        %v5292 = vld [vmem:[%s5291] sm:$0xff]
        %v5293 = vld [vmem:[%s5291 + $0x8] sm:$0xff]
        %v5294 = vld [vmem:[%s5291 + $0x10] sm:$0xff]
        %v5295 = vld [vmem:[%s5291 + $0x18] sm:$0xff]
        %v5296 = vld [vmem:[%s5291 + $0x20] sm:$0xff]
        %v5297 = vld [vmem:[%s5291 + $0x28] sm:$0xff]
        %v5298 = vld [vmem:[%s5291 + $0x30] sm:$0xff]
        %v5299 = vld [vmem:[%s5291 + $0x38] sm:$0xff]
        %v5300 = vld [vmem:[%s5291 + $0x40] sm:$0xff]
        %v5301 = vld [vmem:[%s5291 + $0x48] sm:$0xff]
        %v5302 = vld [vmem:[%s5291 + $0x50] sm:$0xff]
        %v5303 = vld [vmem:[%s5291 + $0x58] sm:$0xff]
        %v5304 = vld [vmem:[%s5291 + $0x60] sm:$0xff]
        %v5305 = vld [vmem:[%s5291 + $0x68] sm:$0xff]
        %v5306 = vld [vmem:[%s5291 + $0x70] sm:$0xff]
        %v5307 = vld [vmem:[%s5291 + $0x78] sm:$0xff]
        %v5324 = vunpack.c.l.b16 %v5292
        %v5325 = vunpack.c.h.b16 %v5292
        %v5326 = vunpack.c.l.b16 %v5293
        %v5327 = vunpack.c.h.b16 %v5293
        %v5328 = vunpack.c.l.b16 %v5294
        %v5329 = vunpack.c.h.b16 %v5294
        %v5330 = vunpack.c.l.b16 %v5295
        %v5331 = vunpack.c.h.b16 %v5295
        %v5332 = vunpack.c.l.b16 %v5296
        %v5333 = vunpack.c.h.b16 %v5296
        %v5334 = vunpack.c.l.b16 %v5297
        %v5335 = vunpack.c.h.b16 %v5297
        %v5336 = vunpack.c.l.b16 %v5298
        %v5337 = vunpack.c.h.b16 %v5298
        %v5338 = vunpack.c.l.b16 %v5299
        %v5339 = vunpack.c.h.b16 %v5299
        %v5340 = vunpack.c.l.b16 %v5300
        %v5341 = vunpack.c.h.b16 %v5300
        %v5342 = vunpack.c.l.b16 %v5301
        %v5343 = vunpack.c.h.b16 %v5301
        %v5344 = vunpack.c.l.b16 %v5302
        %v5345 = vunpack.c.h.b16 %v5302
        %v5346 = vunpack.c.l.b16 %v5303
        %v5347 = vunpack.c.h.b16 %v5303
        %v5348 = vunpack.c.l.b16 %v5304
        %v5349 = vunpack.c.h.b16 %v5304
        %v5350 = vunpack.c.l.b16 %v5305
        %v5351 = vunpack.c.h.b16 %v5305
        %v5352 = vunpack.c.l.b16 %v5306
        %v5353 = vunpack.c.h.b16 %v5306
        %v5354 = vunpack.c.l.b16 %v5307
        %v5355 = vunpack.c.h.b16 %v5307
        %v5356 = vpack.c.b16 %v5326, %v5324
        %v5357 = vpack.c.b16 %v5327, %v5325
        %v5358 = vpack.c.b16 %v5330, %v5328
        %v5359 = vpack.c.b16 %v5331, %v5329
        %v5360 = vpack.c.b16 %v5334, %v5332
        %v5361 = vpack.c.b16 %v5335, %v5333
        %v5362 = vpack.c.b16 %v5338, %v5336
        %v5363 = vpack.c.b16 %v5339, %v5337
        %v5364 = vpack.c.b16 %v5342, %v5340
        %v5365 = vpack.c.b16 %v5343, %v5341
        %v5366 = vpack.c.b16 %v5346, %v5344
        %v5367 = vpack.c.b16 %v5347, %v5345
        %v5368 = vpack.c.b16 %v5350, %v5348
        %v5369 = vpack.c.b16 %v5351, %v5349
        %v5370 = vpack.c.b16 %v5354, %v5352
        %v5371 = vpack.c.b16 %v5355, %v5353
        %5388 = vmatpush.bf16.msra.mxu0 %v5370
        %5389 = vmatpush.bf16.msra.mxu0 %v5368
        %5390 = vmatpush.bf16.msra.mxu0 %v5366
        %5391 = vmatpush.bf16.msra.mxu0 %v5364
        %5392 = vmatpush.bf16.msra.mxu0 %v5362
        %5393 = vmatpush.bf16.msra.mxu0 %v5360
        %5394 = vmatpush.bf16.msra.mxu0 %v5358
        %5395 = vmatpush.bf16.msra.mxu0 %v5356
        %5396 = vmatmul.bf16.gmra.mxu0 %v5290
        %v5397 = vpop.f32.mrf.mxu0
        %v5398 = vadd.f32 0.0, %v5397
        %v5399 = vpop.f32.mrf.mxu0
        %5400 = vdwg.mxu0
        %5401 = vmatpush.bf16.msra.mxu0 %v5371
        %5402 = vmatpush.bf16.msra.mxu0 %v5369
        %5403 = vmatpush.bf16.msra.mxu0 %v5367
        %5404 = vmatpush.bf16.msra.mxu0 %v5365
        %5405 = vmatpush.bf16.msra.mxu0 %v5363
        %5406 = vmatpush.bf16.msra.mxu0 %v5361
        %5407 = vmatpush.bf16.msra.mxu0 %v5359
        %5408 = vmatpush.bf16.msra.mxu0 %v5357
        %5409 = vmatmul.bf16.gmra.mxu0 %v5290
        %v5410 = vpop.f32.mrf.mxu0
        %v5411 = vadd.f32 0.0, %v5410
        %v5412 = vpop.f32.mrf.mxu0
        %5413 = vdwg.mxu0
        %v5430 = vunpack.c.l.b16 %v5256
        %v5431 = vunpack.c.h.b16 %v5256
        %v5432 = vunpack.c.l.b16 %v5257
        %v5433 = vunpack.c.h.b16 %v5257
        %v5434 = vunpack.c.l.b16 %v5258
        %v5435 = vunpack.c.h.b16 %v5258
        %v5436 = vunpack.c.l.b16 %v5259
        %v5437 = vunpack.c.h.b16 %v5259
        %v5438 = vunpack.c.l.b16 %v5260
        %v5439 = vunpack.c.h.b16 %v5260
        %v5440 = vunpack.c.l.b16 %v5261
        %v5441 = vunpack.c.h.b16 %v5261
        %v5442 = vunpack.c.l.b16 %v5262
        %v5443 = vunpack.c.h.b16 %v5262
        %v5444 = vunpack.c.l.b16 %v5263
        %v5445 = vunpack.c.h.b16 %v5263
        %v5446 = vunpack.c.l.b16 %v5264
        %v5447 = vunpack.c.h.b16 %v5264
        %v5448 = vunpack.c.l.b16 %v5265
        %v5449 = vunpack.c.h.b16 %v5265
        %v5450 = vunpack.c.l.b16 %v5266
        %v5451 = vunpack.c.h.b16 %v5266
        %v5452 = vunpack.c.l.b16 %v5267
        %v5453 = vunpack.c.h.b16 %v5267
        %v5454 = vunpack.c.l.b16 %v5268
        %v5455 = vunpack.c.h.b16 %v5268
        %v5456 = vunpack.c.l.b16 %v5269
        %v5457 = vunpack.c.h.b16 %v5269
        %v5458 = vunpack.c.l.b16 %v5270
        %v5459 = vunpack.c.h.b16 %v5270
        %v5460 = vunpack.c.l.b16 %v5271
        %v5461 = vunpack.c.h.b16 %v5271
        %v5462 = vpack.c.b16 %v5432, %v5430
        %v5463 = vpack.c.b16 %v5433, %v5431
        %v5464 = vpack.c.b16 %v5436, %v5434
        %v5465 = vpack.c.b16 %v5437, %v5435
        %v5466 = vpack.c.b16 %v5440, %v5438
        %v5467 = vpack.c.b16 %v5441, %v5439
        %v5468 = vpack.c.b16 %v5444, %v5442
        %v5469 = vpack.c.b16 %v5445, %v5443
        %v5470 = vpack.c.b16 %v5448, %v5446
        %v5471 = vpack.c.b16 %v5449, %v5447
        %v5472 = vpack.c.b16 %v5452, %v5450
        %v5473 = vpack.c.b16 %v5453, %v5451
        %v5474 = vpack.c.b16 %v5456, %v5454
        %v5475 = vpack.c.b16 %v5457, %v5455
        %v5476 = vpack.c.b16 %v5460, %v5458
        %v5477 = vpack.c.b16 %v5461, %v5459
        %5494 = vmatpush.bf16.msra.mxu0 %v5476
        %5495 = vmatpush.bf16.msra.mxu0 %v5474
        %5496 = vmatpush.bf16.msra.mxu0 %v5472
        %5497 = vmatpush.bf16.msra.mxu0 %v5470
        %5498 = vmatpush.bf16.msra.mxu0 %v5468
        %5499 = vmatpush.bf16.msra.mxu0 %v5466
        %5500 = vmatpush.bf16.msra.mxu0 %v5464
        %5501 = vmatpush.bf16.msra.mxu0 %v5462
        %5502 = vmatmul.bf16.gmra.mxu0 %v5255
        %v5503 = vpop.f32.mrf.mxu0
        %v5504 = vadd.f32 %v5398, %v5503
        %v5505 = vpop.f32.mrf.mxu0
        %5506 = vdwg.mxu0
        %5507 = vmatpush.bf16.msra.mxu0 %v5477
        %5508 = vmatpush.bf16.msra.mxu0 %v5475
        %5509 = vmatpush.bf16.msra.mxu0 %v5473
        %5510 = vmatpush.bf16.msra.mxu0 %v5471
        %5511 = vmatpush.bf16.msra.mxu0 %v5469
        %5512 = vmatpush.bf16.msra.mxu0 %v5467
        %5513 = vmatpush.bf16.msra.mxu0 %v5465
        %5514 = vmatpush.bf16.msra.mxu0 %v5463
        %5515 = vmatmul.bf16.gmra.mxu0 %v5255
        %v5516 = vpop.f32.mrf.mxu0
        %v5517 = vadd.f32 %v5411, %v5516
        %v5518 = vpop.f32.mrf.mxu0
        %5519 = vdwg.mxu0
        %s5520 = scalar_lea.vmem %s43, 8
        %v5521 = vld [vmem:[%s5520] sm:$0xf]
        %v5523 = vsel %vm2698, %v5521, 0
        %5525 = vmatpush.bf16.msra.mxu0 0
        %5526 = vmatpush.bf16.msra.mxu0 0
        %5527 = vmatpush.bf16.msra.mxu0 0
        %5528 = vmatpush.bf16.msra.mxu0 0
        %5529 = vmatpush.bf16.msra.mxu0 0
        %5530 = vmatpush.bf16.msra.mxu0 0
        %5531 = vmatpush.bf16.msra.mxu0 0
        %5532 = vmatpush.bf16.msra.mxu0 %v5237
        %5533 = vmatmul.bf16.gmra.mxu0 %v5523
        %v5534 = vpop.f32.mrf.mxu0
        %v5535 = vadd.f32 0.0, %v5534
        %v5536 = vpop.f32.mrf.mxu0
        %5537 = vdwg.mxu0
        %v5538 = vpack.c.bf16 %v5535, %v5535
        %s5539 = scalar_lea.vmem %s15, 256
        %v5540 = vld [vmem:[%s5539] sm:$0xff]
        %v5541 = vld [vmem:[%s5539 + $0x8] sm:$0xff]
        %v5542 = vld [vmem:[%s5539 + $0x10] sm:$0xff]
        %v5543 = vld [vmem:[%s5539 + $0x18] sm:$0xff]
        %v5544 = vld [vmem:[%s5539 + $0x20] sm:$0xff]
        %v5545 = vld [vmem:[%s5539 + $0x28] sm:$0xff]
        %v5546 = vld [vmem:[%s5539 + $0x30] sm:$0xff]
        %v5547 = vld [vmem:[%s5539 + $0x38] sm:$0xff]
        %v5548 = vld [vmem:[%s5539 + $0x40] sm:$0xff]
        %v5549 = vld [vmem:[%s5539 + $0x48] sm:$0xff]
        %v5550 = vld [vmem:[%s5539 + $0x50] sm:$0xff]
        %v5551 = vld [vmem:[%s5539 + $0x58] sm:$0xff]
        %v5552 = vld [vmem:[%s5539 + $0x60] sm:$0xff]
        %v5553 = vld [vmem:[%s5539 + $0x68] sm:$0xff]
        %v5554 = vld [vmem:[%s5539 + $0x70] sm:$0xff]
        %v5555 = vld [vmem:[%s5539 + $0x78] sm:$0xff]
        %v5572 = vunpack.c.l.b16 %v5540
        %v5573 = vunpack.c.h.b16 %v5540
        %v5574 = vunpack.c.l.b16 %v5541
        %v5575 = vunpack.c.h.b16 %v5541
        %v5576 = vunpack.c.l.b16 %v5542
        %v5577 = vunpack.c.h.b16 %v5542
        %v5578 = vunpack.c.l.b16 %v5543
        %v5579 = vunpack.c.h.b16 %v5543
        %v5580 = vunpack.c.l.b16 %v5544
        %v5581 = vunpack.c.h.b16 %v5544
        %v5582 = vunpack.c.l.b16 %v5545
        %v5583 = vunpack.c.h.b16 %v5545
        %v5584 = vunpack.c.l.b16 %v5546
        %v5585 = vunpack.c.h.b16 %v5546
        %v5586 = vunpack.c.l.b16 %v5547
        %v5587 = vunpack.c.h.b16 %v5547
        %v5588 = vunpack.c.l.b16 %v5548
        %v5589 = vunpack.c.h.b16 %v5548
        %v5590 = vunpack.c.l.b16 %v5549
        %v5591 = vunpack.c.h.b16 %v5549
        %v5592 = vunpack.c.l.b16 %v5550
        %v5593 = vunpack.c.h.b16 %v5550
        %v5594 = vunpack.c.l.b16 %v5551
        %v5595 = vunpack.c.h.b16 %v5551
        %v5596 = vunpack.c.l.b16 %v5552
        %v5597 = vunpack.c.h.b16 %v5552
        %v5598 = vunpack.c.l.b16 %v5553
        %v5599 = vunpack.c.h.b16 %v5553
        %v5600 = vunpack.c.l.b16 %v5554
        %v5601 = vunpack.c.h.b16 %v5554
        %v5602 = vunpack.c.l.b16 %v5555
        %v5603 = vunpack.c.h.b16 %v5555
        %v5604 = vpack.c.b16 %v5574, %v5572
        %v5605 = vpack.c.b16 %v5575, %v5573
        %v5606 = vpack.c.b16 %v5578, %v5576
        %v5607 = vpack.c.b16 %v5579, %v5577
        %v5608 = vpack.c.b16 %v5582, %v5580
        %v5609 = vpack.c.b16 %v5583, %v5581
        %v5610 = vpack.c.b16 %v5586, %v5584
        %v5611 = vpack.c.b16 %v5587, %v5585
        %v5612 = vpack.c.b16 %v5590, %v5588
        %v5613 = vpack.c.b16 %v5591, %v5589
        %v5614 = vpack.c.b16 %v5594, %v5592
        %v5615 = vpack.c.b16 %v5595, %v5593
        %v5616 = vpack.c.b16 %v5598, %v5596
        %v5617 = vpack.c.b16 %v5599, %v5597
        %v5618 = vpack.c.b16 %v5602, %v5600
        %v5619 = vpack.c.b16 %v5603, %v5601
        %5636 = vmatpush.bf16.msra.mxu0 %v5618
        %5637 = vmatpush.bf16.msra.mxu0 %v5616
        %5638 = vmatpush.bf16.msra.mxu0 %v5614
        %5639 = vmatpush.bf16.msra.mxu0 %v5612
        %5640 = vmatpush.bf16.msra.mxu0 %v5610
        %5641 = vmatpush.bf16.msra.mxu0 %v5608
        %5642 = vmatpush.bf16.msra.mxu0 %v5606
        %5643 = vmatpush.bf16.msra.mxu0 %v5604
        %5644 = vmatmul.bf16.gmra.mxu0 %v5538
        %v5645 = vpop.f32.mrf.mxu0
        %v5646 = vadd.f32 0.0, %v5645
        %v5647 = vpop.f32.mrf.mxu0
        %5648 = vdwg.mxu0
        %5649 = vmatpush.bf16.msra.mxu0 %v5619
        %5650 = vmatpush.bf16.msra.mxu0 %v5617
        %5651 = vmatpush.bf16.msra.mxu0 %v5615
        %5652 = vmatpush.bf16.msra.mxu0 %v5613
        %5653 = vmatpush.bf16.msra.mxu0 %v5611
        %5654 = vmatpush.bf16.msra.mxu0 %v5609
        %5655 = vmatpush.bf16.msra.mxu0 %v5607
        %5656 = vmatpush.bf16.msra.mxu0 %v5605
        %5657 = vmatmul.bf16.gmra.mxu0 %v5538
        %v5658 = vpop.f32.mrf.mxu0
        %v5659 = vadd.f32 0.0, %v5658
        %v5660 = vpop.f32.mrf.mxu0
        %5661 = vdwg.mxu0
        %v5662 = vadd.f32 %v5504, %v5646
        %v5663 = vadd.f32 %v5517, %v5659
        %s5664 = scalar_lea.vmem %s43, 12
        %v5665 = vld [vmem:[%s5664] sm:$0xf]
        %v5667 = vsel %vm2698, %v5665, 0
        %5669 = vmatpush.bf16.msra.mxu0 0
        %5670 = vmatpush.bf16.msra.mxu0 0
        %5671 = vmatpush.bf16.msra.mxu0 0
        %5672 = vmatpush.bf16.msra.mxu0 0
        %5673 = vmatpush.bf16.msra.mxu0 0
        %5674 = vmatpush.bf16.msra.mxu0 0
        %5675 = vmatpush.bf16.msra.mxu0 0
        %5676 = vmatpush.bf16.msra.mxu0 %v5237
        %5677 = vmatmul.bf16.gmra.mxu0 %v5667
        %v5678 = vpop.f32.mrf.mxu0
        %v5679 = vadd.f32 0.0, %v5678
        %v5680 = vpop.f32.mrf.mxu0
        %5681 = vdwg.mxu0
        %v5682 = vpack.c.bf16 %v5679, %v5679
        %s5683 = scalar_lea.vmem %s15, 384
        %v5684 = vld [vmem:[%s5683] sm:$0xff]
        %v5685 = vld [vmem:[%s5683 + $0x8] sm:$0xff]
        %v5686 = vld [vmem:[%s5683 + $0x10] sm:$0xff]
        %v5687 = vld [vmem:[%s5683 + $0x18] sm:$0xff]
        %v5688 = vld [vmem:[%s5683 + $0x20] sm:$0xff]
        %v5689 = vld [vmem:[%s5683 + $0x28] sm:$0xff]
        %v5690 = vld [vmem:[%s5683 + $0x30] sm:$0xff]
        %v5691 = vld [vmem:[%s5683 + $0x38] sm:$0xff]
        %v5692 = vld [vmem:[%s5683 + $0x40] sm:$0xff]
        %v5693 = vld [vmem:[%s5683 + $0x48] sm:$0xff]
        %v5694 = vld [vmem:[%s5683 + $0x50] sm:$0xff]
        %v5695 = vld [vmem:[%s5683 + $0x58] sm:$0xff]
        %v5696 = vld [vmem:[%s5683 + $0x60] sm:$0xff]
        %v5697 = vld [vmem:[%s5683 + $0x68] sm:$0xff]
        %v5698 = vld [vmem:[%s5683 + $0x70] sm:$0xff]
        %v5699 = vld [vmem:[%s5683 + $0x78] sm:$0xff]
        %v5716 = vunpack.c.l.b16 %v5684
        %v5717 = vunpack.c.h.b16 %v5684
        %v5718 = vunpack.c.l.b16 %v5685
        %v5719 = vunpack.c.h.b16 %v5685
        %v5720 = vunpack.c.l.b16 %v5686
        %v5721 = vunpack.c.h.b16 %v5686
        %v5722 = vunpack.c.l.b16 %v5687
        %v5723 = vunpack.c.h.b16 %v5687
        %v5724 = vunpack.c.l.b16 %v5688
        %v5725 = vunpack.c.h.b16 %v5688
        %v5726 = vunpack.c.l.b16 %v5689
        %v5727 = vunpack.c.h.b16 %v5689
        %v5728 = vunpack.c.l.b16 %v5690
        %v5729 = vunpack.c.h.b16 %v5690
        %v5730 = vunpack.c.l.b16 %v5691
        %v5731 = vunpack.c.h.b16 %v5691
        %v5732 = vunpack.c.l.b16 %v5692
        %v5733 = vunpack.c.h.b16 %v5692
        %v5734 = vunpack.c.l.b16 %v5693
        %v5735 = vunpack.c.h.b16 %v5693
        %v5736 = vunpack.c.l.b16 %v5694
        %v5737 = vunpack.c.h.b16 %v5694
        %v5738 = vunpack.c.l.b16 %v5695
        %v5739 = vunpack.c.h.b16 %v5695
        %v5740 = vunpack.c.l.b16 %v5696
        %v5741 = vunpack.c.h.b16 %v5696
        %v5742 = vunpack.c.l.b16 %v5697
        %v5743 = vunpack.c.h.b16 %v5697
        %v5744 = vunpack.c.l.b16 %v5698
        %v5745 = vunpack.c.h.b16 %v5698
        %v5746 = vunpack.c.l.b16 %v5699
        %v5747 = vunpack.c.h.b16 %v5699
        %v5748 = vpack.c.b16 %v5718, %v5716
        %v5749 = vpack.c.b16 %v5719, %v5717
        %v5750 = vpack.c.b16 %v5722, %v5720
        %v5751 = vpack.c.b16 %v5723, %v5721
        %v5752 = vpack.c.b16 %v5726, %v5724
        %v5753 = vpack.c.b16 %v5727, %v5725
        %v5754 = vpack.c.b16 %v5730, %v5728
        %v5755 = vpack.c.b16 %v5731, %v5729
        %v5756 = vpack.c.b16 %v5734, %v5732
        %v5757 = vpack.c.b16 %v5735, %v5733
        %v5758 = vpack.c.b16 %v5738, %v5736
        %v5759 = vpack.c.b16 %v5739, %v5737
        %v5760 = vpack.c.b16 %v5742, %v5740
        %v5761 = vpack.c.b16 %v5743, %v5741
        %v5762 = vpack.c.b16 %v5746, %v5744
        %v5763 = vpack.c.b16 %v5747, %v5745
        %5780 = vmatpush.bf16.msra.mxu0 %v5762
        %5781 = vmatpush.bf16.msra.mxu0 %v5760
        %5782 = vmatpush.bf16.msra.mxu0 %v5758
        %5783 = vmatpush.bf16.msra.mxu0 %v5756
        %5784 = vmatpush.bf16.msra.mxu0 %v5754
        %5785 = vmatpush.bf16.msra.mxu0 %v5752
        %5786 = vmatpush.bf16.msra.mxu0 %v5750
        %5787 = vmatpush.bf16.msra.mxu0 %v5748
        %5788 = vmatmul.bf16.gmra.mxu0 %v5682
        %v5789 = vpop.f32.mrf.mxu0
        %v5790 = vadd.f32 0.0, %v5789
        %v5791 = vpop.f32.mrf.mxu0
        %5792 = vdwg.mxu0
        %5793 = vmatpush.bf16.msra.mxu0 %v5763
        %5794 = vmatpush.bf16.msra.mxu0 %v5761
        %5795 = vmatpush.bf16.msra.mxu0 %v5759
        %5796 = vmatpush.bf16.msra.mxu0 %v5757
        %5797 = vmatpush.bf16.msra.mxu0 %v5755
        %5798 = vmatpush.bf16.msra.mxu0 %v5753
        %5799 = vmatpush.bf16.msra.mxu0 %v5751
        %5800 = vmatpush.bf16.msra.mxu0 %v5749
        %5801 = vmatmul.bf16.gmra.mxu0 %v5682
        %v5802 = vpop.f32.mrf.mxu0
        %v5803 = vadd.f32 0.0, %v5802
        %v5804 = vpop.f32.mrf.mxu0
        %5805 = vdwg.mxu0
        %v5806 = vadd.f32 %v5662, %v5790
        %v5807 = vadd.f32 %v5663, %v5803
        %v5808 = vld [vmem:[%s41] sm:$0xff]
        %5810 = vset.pattern.permute.xlu0 0
        %5811 = vperm.xlu0 %5810, %v5808
        %v5812 = vpop.permute.xlu0 %5811
        %v5814 = vadd.f32 %v5806, %v5812
        %v5815 = vadd.f32 %v5807, %v5812
        %5816 = vrot.lane.b32.xlu0 %v2139, 17
        %v5817 = vpop.permute.xlu0 %5816
        %5818 = vrot.lane.b32.xlu0 %v5814, 17
        %v5819 = vpop.permute.xlu0 %5818
        %5820 = vrot.lane.b32.xlu0 %v2140, 17
        %v5821 = vpop.permute.xlu0 %5820
        %5822 = vrot.lane.b32.xlu0 %v5815, 17
        %v5823 = vpop.permute.xlu0 %5822
        %v5824 = vsel %vm1204, %v5817, %v5821
        %v5825 = vsel %vm1204, %v5819, %v5823
        %v5826 = vsel %vm1204, %v5821, %v5817
        %v5827 = vsel %vm1204, %v5823, %v5819
        %v5828 = vmul.f32 %v5826, %v1209
        %v5829 = vmul.f32 %v5824, %v1210
        %v5830 = vmul.f32 %v5827, %v1209
        %v5831 = vmul.f32 %v5825, %v1210
        %v5832 = vld [vmem:[#allocation13] sm:$0xf]
        %v5833 = vpack.c.bf16 %v5830, %v5828
        %v5834 = vpack.c.bf16 %v5831, %v5829
        %5835 = vrot.lane.b32.xlu0 %v2139, 16
        %v5836 = vpop.permute.xlu0 %5835
        %5837 = vrot.lane.b32.xlu0 %v5814, 16
        %v5838 = vpop.permute.xlu0 %5837
        %5839 = vrot.lane.b32.xlu0 %v2140, 16
        %v5840 = vpop.permute.xlu0 %5839
        %5841 = vrot.lane.b32.xlu0 %v5815, 16
        %v5842 = vpop.permute.xlu0 %5841
        %v5843 = vsel %vm1222, %v5836, %v5840
        %v5844 = vsel %vm1222, %v5838, %v5842
        %v5845 = vsel %vm1222, %v5840, %v5836
        %v5846 = vsel %vm1222, %v5842, %v5838
        %v5847 = vmul.f32 %v5845, %v1228
        %v5848 = vmul.f32 %v5843, %v1229
        %v5849 = vmul.f32 %v5846, %v1228
        %v5850 = vmul.f32 %v5844, %v1229
        %s5851 = scalar_lea.vmem [#allocation13], 4
        %v5852 = vld [vmem:[%s5851] sm:$0xf]
        %v5853 = vpack.c.bf16 %v5849, %v5847
        %v5854 = vpack.c.bf16 %v5850, %v5848
        %v5856 = vsel %vm2698, %v5852, 0
        %5858 = vmatpush.bf16.msra.mxu0 0
        %5859 = vmatpush.bf16.msra.mxu0 0
        %5860 = vmatpush.bf16.msra.mxu0 0
        %5861 = vmatpush.bf16.msra.mxu0 0
        %5862 = vmatpush.bf16.msra.mxu0 0
        %5863 = vmatpush.bf16.msra.mxu0 0
        %5864 = vmatpush.bf16.msra.mxu0 0
        %5865 = vmatpush.bf16.msra.mxu0 %v5853
        %5866 = vmatmul.bf16.gmra.mxu0 %v5856
        %v5867 = vpop.f32.mrf.mxu0
        %v5868 = vadd.f32 0.0, %v5867
        %v5869 = vpop.f32.mrf.mxu0
        %5870 = vdwg.mxu0
        %5871 = vmatpush.bf16.msra.mxu0 0
        %5872 = vmatpush.bf16.msra.mxu0 0
        %5873 = vmatpush.bf16.msra.mxu0 0
        %5874 = vmatpush.bf16.msra.mxu0 0
        %5875 = vmatpush.bf16.msra.mxu0 0
        %5876 = vmatpush.bf16.msra.mxu0 0
        %5877 = vmatpush.bf16.msra.mxu0 0
        %5878 = vmatpush.bf16.msra.mxu0 %v5854
        %5879 = vmatmul.bf16.gmra.mxu0 %v5856
        %v5880 = vpop.f32.mrf.mxu0
        %v5881 = vadd.f32 0.0, %v5880
        %v5882 = vpop.f32.mrf.mxu0
        %5883 = vdwg.mxu0
        %v5885 = vsel %vm2698, %v5832, 0
        %5887 = vmatpush.bf16.msra.mxu0 0
        %5888 = vmatpush.bf16.msra.mxu0 0
        %5889 = vmatpush.bf16.msra.mxu0 0
        %5890 = vmatpush.bf16.msra.mxu0 0
        %5891 = vmatpush.bf16.msra.mxu0 0
        %5892 = vmatpush.bf16.msra.mxu0 0
        %5893 = vmatpush.bf16.msra.mxu0 0
        %5894 = vmatpush.bf16.msra.mxu0 %v5833
        %5895 = vmatmul.bf16.gmra.mxu0 %v5885
        %v5896 = vpop.f32.mrf.mxu0
        %v5897 = vadd.f32 %v5868, %v5896
        %v5898 = vpop.f32.mrf.mxu0
        %5899 = vdwg.mxu0
        %5900 = vmatpush.bf16.msra.mxu0 0
        %5901 = vmatpush.bf16.msra.mxu0 0
        %5902 = vmatpush.bf16.msra.mxu0 0
        %5903 = vmatpush.bf16.msra.mxu0 0
        %5904 = vmatpush.bf16.msra.mxu0 0
        %5905 = vmatpush.bf16.msra.mxu0 0
        %5906 = vmatpush.bf16.msra.mxu0 0
        %5907 = vmatpush.bf16.msra.mxu0 %v5834
        %5908 = vmatmul.bf16.gmra.mxu0 %v5885
        %v5909 = vpop.f32.mrf.mxu0
        %v5910 = vadd.f32 %v5881, %v5909
        %v5911 = vpop.f32.mrf.mxu0
        %5912 = vdwg.mxu0
        %5913 = vrot.lane.b32.xlu0 %v2139, 15
        %v5914 = vpop.permute.xlu0 %5913
        %5915 = vrot.lane.b32.xlu0 %v5814, 15
        %v5916 = vpop.permute.xlu0 %5915
        %5917 = vrot.lane.b32.xlu0 %v2140, 15
        %v5918 = vpop.permute.xlu0 %5917
        %5919 = vrot.lane.b32.xlu0 %v5815, 15
        %v5920 = vpop.permute.xlu0 %5919
        %v5921 = vsel %vm1314, %v5914, %v5918
        %v5922 = vsel %vm1314, %v5916, %v5920
        %v5923 = vsel %vm1314, %v5918, %v5914
        %v5924 = vsel %vm1314, %v5920, %v5916
        %v5925 = vmul.f32 %v5923, %v1320
        %v5926 = vmul.f32 %v5921, %v1321
        %v5927 = vmul.f32 %v5924, %v1320
        %v5928 = vmul.f32 %v5922, %v1321
        %s5929 = scalar_lea.vmem [#allocation13], 8
        %v5930 = vld [vmem:[%s5929] sm:$0xf]
        %v5931 = vpack.c.bf16 %v5927, %v5925
        %v5932 = vpack.c.bf16 %v5928, %v5926
        %v5934 = vsel %vm2698, %v5930, 0
        %5936 = vmatpush.bf16.msra.mxu0 0
        %5937 = vmatpush.bf16.msra.mxu0 0
        %5938 = vmatpush.bf16.msra.mxu0 0
        %5939 = vmatpush.bf16.msra.mxu0 0
        %5940 = vmatpush.bf16.msra.mxu0 0
        %5941 = vmatpush.bf16.msra.mxu0 0
        %5942 = vmatpush.bf16.msra.mxu0 0
        %5943 = vmatpush.bf16.msra.mxu0 %v5931
        %5944 = vmatmul.bf16.gmra.mxu0 %v5934
        %v5945 = vpop.f32.mrf.mxu0
        %v5946 = vadd.f32 0.0, %v5945
        %v5947 = vpop.f32.mrf.mxu0
        %5948 = vdwg.mxu0
        %5949 = vmatpush.bf16.msra.mxu0 0
        %5950 = vmatpush.bf16.msra.mxu0 0
        %5951 = vmatpush.bf16.msra.mxu0 0
        %5952 = vmatpush.bf16.msra.mxu0 0
        %5953 = vmatpush.bf16.msra.mxu0 0
        %5954 = vmatpush.bf16.msra.mxu0 0
        %5955 = vmatpush.bf16.msra.mxu0 0
        %5956 = vmatpush.bf16.msra.mxu0 %v5932
        %5957 = vmatmul.bf16.gmra.mxu0 %v5934
        %v5958 = vpop.f32.mrf.mxu0
        %v5959 = vadd.f32 0.0, %v5958
        %v5960 = vpop.f32.mrf.mxu0
        %5961 = vdwg.mxu0
        %v5962 = vadd.f32 %v5897, %v5946
        %v5963 = vadd.f32 %v5910, %v5959
        %5964 = vrot.lane.b32.xlu0 %v2139, 1
        %v5965 = vpop.permute.xlu0 %5964
        %5966 = vrot.lane.b32.xlu0 %v5814, 1
        %v5967 = vpop.permute.xlu0 %5966
        %5968 = vrot.lane.b32.xlu0 %v2140, 1
        %v5969 = vpop.permute.xlu0 %5968
        %5970 = vrot.lane.b32.xlu0 %v5815, 1
        %v5971 = vpop.permute.xlu0 %5970
        %v5972 = vsel %vm1371, %v5965, %v5969
        %v5973 = vsel %vm1371, %v5967, %v5971
        %v5974 = vsel %vm1371, %v5969, %v5965
        %v5975 = vsel %vm1371, %v5971, %v5967
        %v5976 = vmul.f32 %v5974, %v1377
        %v5977 = vmul.f32 %v5972, %v1378
        %v5978 = vmul.f32 %v5975, %v1377
        %v5979 = vmul.f32 %v5973, %v1378
        %s5980 = scalar_lea.vmem [#allocation13], 12
        %v5981 = vld [vmem:[%s5980] sm:$0xf]
        %v5982 = vpack.c.bf16 %v5978, %v5976
        %v5983 = vpack.c.bf16 %v5979, %v5977
        %v5985 = vsel %vm2698, %v5981, 0
        %5987 = vmatpush.bf16.msra.mxu0 0
        %5988 = vmatpush.bf16.msra.mxu0 0
        %5989 = vmatpush.bf16.msra.mxu0 0
        %5990 = vmatpush.bf16.msra.mxu0 0
        %5991 = vmatpush.bf16.msra.mxu0 0
        %5992 = vmatpush.bf16.msra.mxu0 0
        %5993 = vmatpush.bf16.msra.mxu0 0
        %5994 = vmatpush.bf16.msra.mxu0 %v5982
        %5995 = vmatmul.bf16.gmra.mxu0 %v5985
        %v5996 = vpop.f32.mrf.mxu0
        %v5997 = vadd.f32 0.0, %v5996
        %v5998 = vpop.f32.mrf.mxu0
        %5999 = vdwg.mxu0
        %6000 = vmatpush.bf16.msra.mxu0 0
        %6001 = vmatpush.bf16.msra.mxu0 0
        %6002 = vmatpush.bf16.msra.mxu0 0
        %6003 = vmatpush.bf16.msra.mxu0 0
        %6004 = vmatpush.bf16.msra.mxu0 0
        %6005 = vmatpush.bf16.msra.mxu0 0
        %6006 = vmatpush.bf16.msra.mxu0 0
        %6007 = vmatpush.bf16.msra.mxu0 %v5983
        %6008 = vmatmul.bf16.gmra.mxu0 %v5985
        %v6009 = vpop.f32.mrf.mxu0
        %v6010 = vadd.f32 0.0, %v6009
        %v6011 = vpop.f32.mrf.mxu0
        %6012 = vdwg.mxu0
        %v6013 = vadd.f32 %v5962, %v5997
        %v6014 = vadd.f32 %v5963, %v6010
        %s6015 = scalar_lea.vmem [#allocation13], 16
        %v6016 = vld [vmem:[%s6015] sm:$0xf]
        %v6017 = vpack.c.bf16 %v5814, %v2139
        %v6018 = vpack.c.bf16 %v5815, %v2140
        %v6020 = vsel %vm2698, %v6016, 0
        %6022 = vmatpush.bf16.msra.mxu0 0
        %6023 = vmatpush.bf16.msra.mxu0 0
        %6024 = vmatpush.bf16.msra.mxu0 0
        %6025 = vmatpush.bf16.msra.mxu0 0
        %6026 = vmatpush.bf16.msra.mxu0 0
        %6027 = vmatpush.bf16.msra.mxu0 0
        %6028 = vmatpush.bf16.msra.mxu0 0
        %6029 = vmatpush.bf16.msra.mxu0 %v6017
        %6030 = vmatmul.bf16.gmra.mxu0 %v6020
        %v6031 = vpop.f32.mrf.mxu0
        %v6032 = vadd.f32 0.0, %v6031
        %v6033 = vpop.f32.mrf.mxu0
        %6034 = vdwg.mxu0
        %6035 = vmatpush.bf16.msra.mxu0 0
        %6036 = vmatpush.bf16.msra.mxu0 0
        %6037 = vmatpush.bf16.msra.mxu0 0
        %6038 = vmatpush.bf16.msra.mxu0 0
        %6039 = vmatpush.bf16.msra.mxu0 0
        %6040 = vmatpush.bf16.msra.mxu0 0
        %6041 = vmatpush.bf16.msra.mxu0 0
        %6042 = vmatpush.bf16.msra.mxu0 %v6018
        %6043 = vmatmul.bf16.gmra.mxu0 %v6020
        %v6044 = vpop.f32.mrf.mxu0
        %v6045 = vadd.f32 0.0, %v6044
        %v6046 = vpop.f32.mrf.mxu0
        %6047 = vdwg.mxu0
        %v6048 = vadd.f32 %v6013, %v6032
        %v6049 = vadd.f32 %v6014, %v6045
        %6050 = vrot.lane.b32.xlu0 %v5814, 127
        %v6051 = vpop.permute.xlu0 %6050
        %6052 = vrot.lane.b32.xlu0 %v5815, 127
        %v6053 = vpop.permute.xlu0 %6052
        %v6054 = vsel %vm1469, %v6051, %v6053
        %v6055 = vsel %vm1469, %v6053, %v6051
        %v6056 = vmul.f32 %v2145, %v1475
        %v6057 = vmul.f32 %v2146, %v1476
        %v6058 = vmul.f32 %v6054, %v1475
        %v6059 = vmul.f32 %v6055, %v1476
        %s6060 = scalar_lea.vmem [#allocation13], 20
        %v6061 = vld [vmem:[%s6060] sm:$0xf]
        %v6062 = vpack.c.bf16 %v6058, %v6056
        %v6063 = vpack.c.bf16 %v6059, %v6057
        %v6065 = vsel %vm2698, %v6061, 0
        %6067 = vmatpush.bf16.msra.mxu0 0
        %6068 = vmatpush.bf16.msra.mxu0 0
        %6069 = vmatpush.bf16.msra.mxu0 0
        %6070 = vmatpush.bf16.msra.mxu0 0
        %6071 = vmatpush.bf16.msra.mxu0 0
        %6072 = vmatpush.bf16.msra.mxu0 0
        %6073 = vmatpush.bf16.msra.mxu0 0
        %6074 = vmatpush.bf16.msra.mxu0 %v6062
        %6075 = vmatmul.bf16.gmra.mxu0 %v6065
        %v6076 = vpop.f32.mrf.mxu0
        %v6077 = vadd.f32 0.0, %v6076
        %v6078 = vpop.f32.mrf.mxu0
        %6079 = vdwg.mxu0
        %6080 = vmatpush.bf16.msra.mxu0 0
        %6081 = vmatpush.bf16.msra.mxu0 0
        %6082 = vmatpush.bf16.msra.mxu0 0
        %6083 = vmatpush.bf16.msra.mxu0 0
        %6084 = vmatpush.bf16.msra.mxu0 0
        %6085 = vmatpush.bf16.msra.mxu0 0
        %6086 = vmatpush.bf16.msra.mxu0 0
        %6087 = vmatpush.bf16.msra.mxu0 %v6063
        %6088 = vmatmul.bf16.gmra.mxu0 %v6065
        %v6089 = vpop.f32.mrf.mxu0
        %v6090 = vadd.f32 0.0, %v6089
        %v6091 = vpop.f32.mrf.mxu0
        %6092 = vdwg.mxu0
        %v6093 = vadd.f32 %v6048, %v6077
        %v6094 = vadd.f32 %v6049, %v6090
        %6095 = vrot.lane.b32.xlu0 %v2139, 113
        %v6096 = vpop.permute.xlu0 %6095
        %6097 = vrot.lane.b32.xlu0 %v5814, 113
        %v6098 = vpop.permute.xlu0 %6097
        %6099 = vrot.lane.b32.xlu0 %v2140, 113
        %v6100 = vpop.permute.xlu0 %6099
        %6101 = vrot.lane.b32.xlu0 %v5815, 113
        %v6102 = vpop.permute.xlu0 %6101
        %v6103 = vsel %vm1526, %v6096, %v6100
        %v6104 = vsel %vm1526, %v6098, %v6102
        %v6105 = vsel %vm1526, %v6100, %v6096
        %v6106 = vsel %vm1526, %v6102, %v6098
        %v6107 = vmul.f32 %v6103, %v1532
        %v6108 = vmul.f32 %v6105, %v1533
        %v6109 = vmul.f32 %v6104, %v1532
        %v6110 = vmul.f32 %v6106, %v1533
        %s6111 = scalar_lea.vmem [#allocation13], 24
        %v6112 = vld [vmem:[%s6111] sm:$0xf]
        %v6113 = vpack.c.bf16 %v6109, %v6107
        %v6114 = vpack.c.bf16 %v6110, %v6108
        %v6116 = vsel %vm2698, %v6112, 0
        %6118 = vmatpush.bf16.msra.mxu0 0
        %6119 = vmatpush.bf16.msra.mxu0 0
        %6120 = vmatpush.bf16.msra.mxu0 0
        %6121 = vmatpush.bf16.msra.mxu0 0
        %6122 = vmatpush.bf16.msra.mxu0 0
        %6123 = vmatpush.bf16.msra.mxu0 0
        %6124 = vmatpush.bf16.msra.mxu0 0
        %6125 = vmatpush.bf16.msra.mxu0 %v6113
        %6126 = vmatmul.bf16.gmra.mxu0 %v6116
        %v6127 = vpop.f32.mrf.mxu0
        %v6128 = vadd.f32 0.0, %v6127
        %v6129 = vpop.f32.mrf.mxu0
        %6130 = vdwg.mxu0
        %6131 = vmatpush.bf16.msra.mxu0 0
        %6132 = vmatpush.bf16.msra.mxu0 0
        %6133 = vmatpush.bf16.msra.mxu0 0
        %6134 = vmatpush.bf16.msra.mxu0 0
        %6135 = vmatpush.bf16.msra.mxu0 0
        %6136 = vmatpush.bf16.msra.mxu0 0
        %6137 = vmatpush.bf16.msra.mxu0 0
        %6138 = vmatpush.bf16.msra.mxu0 %v6114
        %6139 = vmatmul.bf16.gmra.mxu0 %v6116
        %v6140 = vpop.f32.mrf.mxu0
        %v6141 = vadd.f32 0.0, %v6140
        %v6142 = vpop.f32.mrf.mxu0
        %6143 = vdwg.mxu0
        %v6144 = vadd.f32 %v6093, %v6128
        %v6145 = vadd.f32 %v6094, %v6141
        %6146 = vrot.lane.b32.xlu0 %v5814, 112
        %v6147 = vpop.permute.xlu0 %6146
        %6148 = vrot.lane.b32.xlu0 %v5815, 112
        %v6149 = vpop.permute.xlu0 %6148
        %v6150 = vsel %vm1583, %v6147, %v6149
        %v6151 = vsel %vm1583, %v6149, %v6147
        %v6152 = vmul.f32 %v2153, %v1589
        %v6153 = vmul.f32 %v2154, %v1590
        %v6154 = vmul.f32 %v6150, %v1589
        %v6155 = vmul.f32 %v6151, %v1590
        %s6156 = scalar_lea.vmem [#allocation13], 28
        %v6157 = vld [vmem:[%s6156] sm:$0xf]
        %v6158 = vpack.c.bf16 %v6154, %v6152
        %v6159 = vpack.c.bf16 %v6155, %v6153
        %v6161 = vsel %vm2698, %v6157, 0
        %6163 = vmatpush.bf16.msra.mxu0 0
        %6164 = vmatpush.bf16.msra.mxu0 0
        %6165 = vmatpush.bf16.msra.mxu0 0
        %6166 = vmatpush.bf16.msra.mxu0 0
        %6167 = vmatpush.bf16.msra.mxu0 0
        %6168 = vmatpush.bf16.msra.mxu0 0
        %6169 = vmatpush.bf16.msra.mxu0 0
        %6170 = vmatpush.bf16.msra.mxu0 %v6158
        %6171 = vmatmul.bf16.gmra.mxu0 %v6161
        %v6172 = vpop.f32.mrf.mxu0
        %v6173 = vadd.f32 0.0, %v6172
        %v6174 = vpop.f32.mrf.mxu0
        %6175 = vdwg.mxu0
        %6176 = vmatpush.bf16.msra.mxu0 0
        %6177 = vmatpush.bf16.msra.mxu0 0
        %6178 = vmatpush.bf16.msra.mxu0 0
        %6179 = vmatpush.bf16.msra.mxu0 0
        %6180 = vmatpush.bf16.msra.mxu0 0
        %6181 = vmatpush.bf16.msra.mxu0 0
        %6182 = vmatpush.bf16.msra.mxu0 0
        %6183 = vmatpush.bf16.msra.mxu0 %v6159
        %6184 = vmatmul.bf16.gmra.mxu0 %v6161
        %v6185 = vpop.f32.mrf.mxu0
        %v6186 = vadd.f32 0.0, %v6185
        %v6187 = vpop.f32.mrf.mxu0
        %6188 = vdwg.mxu0
        %v6189 = vadd.f32 %v6144, %v6173
        %v6190 = vadd.f32 %v6145, %v6186
        %6191 = vrot.lane.b32.xlu0 %v5814, 111
        %v6192 = vpop.permute.xlu0 %6191
        %6193 = vrot.lane.b32.xlu0 %v5815, 111
        %v6194 = vpop.permute.xlu0 %6193
        %v6195 = vsel %vm1640, %v6192, %v6194
        %v6196 = vsel %vm1640, %v6194, %v6192
        %v6197 = vmul.f32 %v2161, %v1646
        %v6198 = vmul.f32 %v2162, %v1647
        %v6199 = vmul.f32 %v6195, %v1646
        %v6200 = vmul.f32 %v6196, %v1647
        %s6201 = scalar_lea.vmem [#allocation13], 32
        %v6202 = vld [vmem:[%s6201] sm:$0xf]
        %v6203 = vpack.c.bf16 %v6199, %v6197
        %v6204 = vpack.c.bf16 %v6200, %v6198
        %v6206 = vsel %vm2698, %v6202, 0
        %6208 = vmatpush.bf16.msra.mxu0 0
        %6209 = vmatpush.bf16.msra.mxu0 0
        %6210 = vmatpush.bf16.msra.mxu0 0
        %6211 = vmatpush.bf16.msra.mxu0 0
        %6212 = vmatpush.bf16.msra.mxu0 0
        %6213 = vmatpush.bf16.msra.mxu0 0
        %6214 = vmatpush.bf16.msra.mxu0 0
        %6215 = vmatpush.bf16.msra.mxu0 %v6203
        %6216 = vmatmul.bf16.gmra.mxu0 %v6206
        %v6217 = vpop.f32.mrf.mxu0
        %v6218 = vadd.f32 0.0, %v6217
        %v6219 = vpop.f32.mrf.mxu0
        %6220 = vdwg.mxu0
        %6221 = vmatpush.bf16.msra.mxu0 0
        %6222 = vmatpush.bf16.msra.mxu0 0
        %6223 = vmatpush.bf16.msra.mxu0 0
        %6224 = vmatpush.bf16.msra.mxu0 0
        %6225 = vmatpush.bf16.msra.mxu0 0
        %6226 = vmatpush.bf16.msra.mxu0 0
        %6227 = vmatpush.bf16.msra.mxu0 0
        %6228 = vmatpush.bf16.msra.mxu0 %v6204
        %6229 = vmatmul.bf16.gmra.mxu0 %v6206
        %v6230 = vpop.f32.mrf.mxu0
        %v6231 = vadd.f32 0.0, %v6230
        %v6232 = vpop.f32.mrf.mxu0
        %6233 = vdwg.mxu0
        %v6234 = vadd.f32 %v6189, %v6218
        %v6235 = vadd.f32 %v6190, %v6231
        %v6236 = vld [vmem:[%s37] sm:$0xff]
        %6238 = vset.pattern.permute.xlu0 0
        %6239 = vperm.xlu0 %6238, %v6236
        %v6240 = vpop.permute.xlu0 %6239
        %v6242 = vadd.f32 %v6234, %v6240
        %v6243 = vadd.f32 %v6235, %v6240
        %v6244 = vmax.f32 %v6242, 0.0
        %v6245 = vmax.f32 %v6243, 0.0
        %6246 = vrot.lane.b32.xlu0 %v6244, 17
        %v6247 = vpop.permute.xlu0 %6246
        %6248 = vrot.lane.b32.xlu0 %v6245, 17
        %v6249 = vpop.permute.xlu0 %6248
        %v6250 = vsel %vm1204, %v6247, %v6249
        %v6251 = vsel %vm1204, %v6249, %v6247
        %v6252 = vmul.f32 %v6251, %v1209
        %v6253 = vmul.f32 %v6250, %v1210
        %v6254 = vld [vmem:[%s47] sm:$0xf]
        %v6255 = vpack.c.bf16 %v6252, %v6252
        %v6256 = vpack.c.bf16 %v6253, %v6253
        %6257 = vrot.lane.b32.xlu0 %v6244, 16
        %v6258 = vpop.permute.xlu0 %6257
        %6259 = vrot.lane.b32.xlu0 %v6245, 16
        %v6260 = vpop.permute.xlu0 %6259
        %v6261 = vsel %vm1222, %v6258, %v6260
        %v6262 = vsel %vm1222, %v6260, %v6258
        %v6263 = vmul.f32 %v6262, %v1228
        %v6264 = vmul.f32 %v6261, %v1229
        %s6265 = scalar_lea.vmem %s47, 4
        %v6266 = vld [vmem:[%s6265] sm:$0xf]
        %v6267 = vpack.c.bf16 %v6263, %v6263
        %v6268 = vpack.c.bf16 %v6264, %v6264
        %v6270 = vsel %vm1238, %v6266, 0
        %v6273 = vsel %vm1242, %v6267, 0
        %v6276 = vsel %vm1242, %v6268, 0
        %6278 = vmatpush.bf16.msra.mxu0 0
        %6279 = vmatpush.bf16.msra.mxu0 0
        %6280 = vmatpush.bf16.msra.mxu0 0
        %6281 = vmatpush.bf16.msra.mxu0 0
        %6282 = vmatpush.bf16.msra.mxu0 0
        %6283 = vmatpush.bf16.msra.mxu0 0
        %6284 = vmatpush.bf16.msra.mxu0 0
        %6285 = vmatpush.bf16.msra.mxu0 %v6273
        %6286 = vmatmul.bf16.gmra.mxu0 %v6270
        %v6287 = vpop.f32.mrf.mxu0
        %v6288 = vadd.f32 0.0, %v6287
        %v6289 = vpop.f32.mrf.mxu0
        %6290 = vdwg.mxu0
        %6291 = vmatpush.bf16.msra.mxu0 0
        %6292 = vmatpush.bf16.msra.mxu0 0
        %6293 = vmatpush.bf16.msra.mxu0 0
        %6294 = vmatpush.bf16.msra.mxu0 0
        %6295 = vmatpush.bf16.msra.mxu0 0
        %6296 = vmatpush.bf16.msra.mxu0 0
        %6297 = vmatpush.bf16.msra.mxu0 0
        %6298 = vmatpush.bf16.msra.mxu0 %v6276
        %6299 = vmatmul.bf16.gmra.mxu0 %v6270
        %v6300 = vpop.f32.mrf.mxu0
        %v6301 = vadd.f32 0.0, %v6300
        %v6302 = vpop.f32.mrf.mxu0
        %6303 = vdwg.mxu0
        %v6305 = vsel %vm1238, %v6254, 0
        %v6308 = vsel %vm1242, %v6255, 0
        %v6311 = vsel %vm1242, %v6256, 0
        %6313 = vmatpush.bf16.msra.mxu0 0
        %6314 = vmatpush.bf16.msra.mxu0 0
        %6315 = vmatpush.bf16.msra.mxu0 0
        %6316 = vmatpush.bf16.msra.mxu0 0
        %6317 = vmatpush.bf16.msra.mxu0 0
        %6318 = vmatpush.bf16.msra.mxu0 0
        %6319 = vmatpush.bf16.msra.mxu0 0
        %6320 = vmatpush.bf16.msra.mxu0 %v6308
        %6321 = vmatmul.bf16.gmra.mxu0 %v6305
        %v6322 = vpop.f32.mrf.mxu0
        %v6323 = vadd.f32 %v6288, %v6322
        %v6324 = vpop.f32.mrf.mxu0
        %6325 = vdwg.mxu0
        %6326 = vmatpush.bf16.msra.mxu0 0
        %6327 = vmatpush.bf16.msra.mxu0 0
        %6328 = vmatpush.bf16.msra.mxu0 0
        %6329 = vmatpush.bf16.msra.mxu0 0
        %6330 = vmatpush.bf16.msra.mxu0 0
        %6331 = vmatpush.bf16.msra.mxu0 0
        %6332 = vmatpush.bf16.msra.mxu0 0
        %6333 = vmatpush.bf16.msra.mxu0 %v6311
        %6334 = vmatmul.bf16.gmra.mxu0 %v6305
        %v6335 = vpop.f32.mrf.mxu0
        %v6336 = vadd.f32 %v6301, %v6335
        %v6337 = vpop.f32.mrf.mxu0
        %6338 = vdwg.mxu0
        %6339 = vrot.lane.b32.xlu0 %v6244, 15
        %v6340 = vpop.permute.xlu0 %6339
        %6341 = vrot.lane.b32.xlu0 %v6245, 15
        %v6342 = vpop.permute.xlu0 %6341
        %v6343 = vsel %vm1314, %v6340, %v6342
        %v6344 = vsel %vm1314, %v6342, %v6340
        %v6345 = vmul.f32 %v6344, %v1320
        %v6346 = vmul.f32 %v6343, %v1321
        %s6347 = scalar_lea.vmem %s47, 8
        %v6348 = vld [vmem:[%s6347] sm:$0xf]
        %v6349 = vpack.c.bf16 %v6345, %v6345
        %v6350 = vpack.c.bf16 %v6346, %v6346
        %v6352 = vsel %vm1238, %v6348, 0
        %v6355 = vsel %vm1242, %v6349, 0
        %v6358 = vsel %vm1242, %v6350, 0
        %6360 = vmatpush.bf16.msra.mxu0 0
        %6361 = vmatpush.bf16.msra.mxu0 0
        %6362 = vmatpush.bf16.msra.mxu0 0
        %6363 = vmatpush.bf16.msra.mxu0 0
        %6364 = vmatpush.bf16.msra.mxu0 0
        %6365 = vmatpush.bf16.msra.mxu0 0
        %6366 = vmatpush.bf16.msra.mxu0 0
        %6367 = vmatpush.bf16.msra.mxu0 %v6355
        %6368 = vmatmul.bf16.gmra.mxu0 %v6352
        %v6369 = vpop.f32.mrf.mxu0
        %v6370 = vadd.f32 0.0, %v6369
        %v6371 = vpop.f32.mrf.mxu0
        %6372 = vdwg.mxu0
        %6373 = vmatpush.bf16.msra.mxu0 0
        %6374 = vmatpush.bf16.msra.mxu0 0
        %6375 = vmatpush.bf16.msra.mxu0 0
        %6376 = vmatpush.bf16.msra.mxu0 0
        %6377 = vmatpush.bf16.msra.mxu0 0
        %6378 = vmatpush.bf16.msra.mxu0 0
        %6379 = vmatpush.bf16.msra.mxu0 0
        %6380 = vmatpush.bf16.msra.mxu0 %v6358
        %6381 = vmatmul.bf16.gmra.mxu0 %v6352
        %v6382 = vpop.f32.mrf.mxu0
        %v6383 = vadd.f32 0.0, %v6382
        %v6384 = vpop.f32.mrf.mxu0
        %6385 = vdwg.mxu0
        %v6386 = vadd.f32 %v6323, %v6370
        %v6387 = vadd.f32 %v6336, %v6383
        %6388 = vrot.lane.b32.xlu0 %v6244, 1
        %v6389 = vpop.permute.xlu0 %6388
        %6390 = vrot.lane.b32.xlu0 %v6245, 1
        %v6391 = vpop.permute.xlu0 %6390
        %v6392 = vsel %vm1371, %v6389, %v6391
        %v6393 = vsel %vm1371, %v6391, %v6389
        %v6394 = vmul.f32 %v6393, %v1377
        %v6395 = vmul.f32 %v6392, %v1378
        %s6396 = scalar_lea.vmem %s47, 12
        %v6397 = vld [vmem:[%s6396] sm:$0xf]
        %v6398 = vpack.c.bf16 %v6394, %v6394
        %v6399 = vpack.c.bf16 %v6395, %v6395
        %v6401 = vsel %vm1238, %v6397, 0
        %v6404 = vsel %vm1242, %v6398, 0
        %v6407 = vsel %vm1242, %v6399, 0
        %6409 = vmatpush.bf16.msra.mxu0 0
        %6410 = vmatpush.bf16.msra.mxu0 0
        %6411 = vmatpush.bf16.msra.mxu0 0
        %6412 = vmatpush.bf16.msra.mxu0 0
        %6413 = vmatpush.bf16.msra.mxu0 0
        %6414 = vmatpush.bf16.msra.mxu0 0
        %6415 = vmatpush.bf16.msra.mxu0 0
        %6416 = vmatpush.bf16.msra.mxu0 %v6404
        %6417 = vmatmul.bf16.gmra.mxu0 %v6401
        %v6418 = vpop.f32.mrf.mxu0
        %v6419 = vadd.f32 0.0, %v6418
        %v6420 = vpop.f32.mrf.mxu0
        %6421 = vdwg.mxu0
        %6422 = vmatpush.bf16.msra.mxu0 0
        %6423 = vmatpush.bf16.msra.mxu0 0
        %6424 = vmatpush.bf16.msra.mxu0 0
        %6425 = vmatpush.bf16.msra.mxu0 0
        %6426 = vmatpush.bf16.msra.mxu0 0
        %6427 = vmatpush.bf16.msra.mxu0 0
        %6428 = vmatpush.bf16.msra.mxu0 0
        %6429 = vmatpush.bf16.msra.mxu0 %v6407
        %6430 = vmatmul.bf16.gmra.mxu0 %v6401
        %v6431 = vpop.f32.mrf.mxu0
        %v6432 = vadd.f32 0.0, %v6431
        %v6433 = vpop.f32.mrf.mxu0
        %6434 = vdwg.mxu0
        %v6435 = vadd.f32 %v6386, %v6419
        %v6436 = vadd.f32 %v6387, %v6432
        %s6437 = scalar_lea.vmem %s47, 16
        %v6438 = vld [vmem:[%s6437] sm:$0xf]
        %v6439 = vpack.c.bf16 %v6244, %v6244
        %v6440 = vpack.c.bf16 %v6245, %v6245
        %v6442 = vsel %vm1238, %v6438, 0
        %v6445 = vsel %vm1242, %v6439, 0
        %v6448 = vsel %vm1242, %v6440, 0
        %6450 = vmatpush.bf16.msra.mxu0 0
        %6451 = vmatpush.bf16.msra.mxu0 0
        %6452 = vmatpush.bf16.msra.mxu0 0
        %6453 = vmatpush.bf16.msra.mxu0 0
        %6454 = vmatpush.bf16.msra.mxu0 0
        %6455 = vmatpush.bf16.msra.mxu0 0
        %6456 = vmatpush.bf16.msra.mxu0 0
        %6457 = vmatpush.bf16.msra.mxu0 %v6445
        %6458 = vmatmul.bf16.gmra.mxu0 %v6442
        %v6459 = vpop.f32.mrf.mxu0
        %v6460 = vadd.f32 0.0, %v6459
        %v6461 = vpop.f32.mrf.mxu0
        %6462 = vdwg.mxu0
        %6463 = vmatpush.bf16.msra.mxu0 0
        %6464 = vmatpush.bf16.msra.mxu0 0
        %6465 = vmatpush.bf16.msra.mxu0 0
        %6466 = vmatpush.bf16.msra.mxu0 0
        %6467 = vmatpush.bf16.msra.mxu0 0
        %6468 = vmatpush.bf16.msra.mxu0 0
        %6469 = vmatpush.bf16.msra.mxu0 0
        %6470 = vmatpush.bf16.msra.mxu0 %v6448
        %6471 = vmatmul.bf16.gmra.mxu0 %v6442
        %v6472 = vpop.f32.mrf.mxu0
        %v6473 = vadd.f32 0.0, %v6472
        %v6474 = vpop.f32.mrf.mxu0
        %6475 = vdwg.mxu0
        %v6476 = vadd.f32 %v6435, %v6460
        %v6477 = vadd.f32 %v6436, %v6473
        %6478 = vrot.lane.b32.xlu0 %v6244, 127
        %v6479 = vpop.permute.xlu0 %6478
        %6480 = vrot.lane.b32.xlu0 %v6245, 127
        %v6481 = vpop.permute.xlu0 %6480
        %v6482 = vsel %vm1469, %v6479, %v6481
        %v6483 = vsel %vm1469, %v6481, %v6479
        %v6484 = vmul.f32 %v6482, %v1475
        %v6485 = vmul.f32 %v6483, %v1476
        %s6486 = scalar_lea.vmem %s47, 20
        %v6487 = vld [vmem:[%s6486] sm:$0xf]
        %v6488 = vpack.c.bf16 %v6484, %v6484
        %v6489 = vpack.c.bf16 %v6485, %v6485
        %v6491 = vsel %vm1238, %v6487, 0
        %v6494 = vsel %vm1242, %v6488, 0
        %v6497 = vsel %vm1242, %v6489, 0
        %6499 = vmatpush.bf16.msra.mxu0 0
        %6500 = vmatpush.bf16.msra.mxu0 0
        %6501 = vmatpush.bf16.msra.mxu0 0
        %6502 = vmatpush.bf16.msra.mxu0 0
        %6503 = vmatpush.bf16.msra.mxu0 0
        %6504 = vmatpush.bf16.msra.mxu0 0
        %6505 = vmatpush.bf16.msra.mxu0 0
        %6506 = vmatpush.bf16.msra.mxu0 %v6494
        %6507 = vmatmul.bf16.gmra.mxu0 %v6491
        %v6508 = vpop.f32.mrf.mxu0
        %v6509 = vadd.f32 0.0, %v6508
        %v6510 = vpop.f32.mrf.mxu0
        %6511 = vdwg.mxu0
        %6512 = vmatpush.bf16.msra.mxu0 0
        %6513 = vmatpush.bf16.msra.mxu0 0
        %6514 = vmatpush.bf16.msra.mxu0 0
        %6515 = vmatpush.bf16.msra.mxu0 0
        %6516 = vmatpush.bf16.msra.mxu0 0
        %6517 = vmatpush.bf16.msra.mxu0 0
        %6518 = vmatpush.bf16.msra.mxu0 0
        %6519 = vmatpush.bf16.msra.mxu0 %v6497
        %6520 = vmatmul.bf16.gmra.mxu0 %v6491
        %v6521 = vpop.f32.mrf.mxu0
        %v6522 = vadd.f32 0.0, %v6521
        %v6523 = vpop.f32.mrf.mxu0
        %6524 = vdwg.mxu0
        %v6525 = vadd.f32 %v6476, %v6509
        %v6526 = vadd.f32 %v6477, %v6522
        %6527 = vrot.lane.b32.xlu0 %v6244, 113
        %v6528 = vpop.permute.xlu0 %6527
        %6529 = vrot.lane.b32.xlu0 %v6245, 113
        %v6530 = vpop.permute.xlu0 %6529
        %v6531 = vsel %vm1526, %v6528, %v6530
        %v6532 = vsel %vm1526, %v6530, %v6528
        %v6533 = vmul.f32 %v6531, %v1532
        %v6534 = vmul.f32 %v6532, %v1533
        %s6535 = scalar_lea.vmem %s47, 24
        %v6536 = vld [vmem:[%s6535] sm:$0xf]
        %v6537 = vpack.c.bf16 %v6533, %v6533
        %v6538 = vpack.c.bf16 %v6534, %v6534
        %v6540 = vsel %vm1238, %v6536, 0
        %v6543 = vsel %vm1242, %v6537, 0
        %v6546 = vsel %vm1242, %v6538, 0
        %6548 = vmatpush.bf16.msra.mxu0 0
        %6549 = vmatpush.bf16.msra.mxu0 0
        %6550 = vmatpush.bf16.msra.mxu0 0
        %6551 = vmatpush.bf16.msra.mxu0 0
        %6552 = vmatpush.bf16.msra.mxu0 0
        %6553 = vmatpush.bf16.msra.mxu0 0
        %6554 = vmatpush.bf16.msra.mxu0 0
        %6555 = vmatpush.bf16.msra.mxu0 %v6543
        %6556 = vmatmul.bf16.gmra.mxu0 %v6540
        %v6557 = vpop.f32.mrf.mxu0
        %v6558 = vadd.f32 0.0, %v6557
        %v6559 = vpop.f32.mrf.mxu0
        %6560 = vdwg.mxu0
        %6561 = vmatpush.bf16.msra.mxu0 0
        %6562 = vmatpush.bf16.msra.mxu0 0
        %6563 = vmatpush.bf16.msra.mxu0 0
        %6564 = vmatpush.bf16.msra.mxu0 0
        %6565 = vmatpush.bf16.msra.mxu0 0
        %6566 = vmatpush.bf16.msra.mxu0 0
        %6567 = vmatpush.bf16.msra.mxu0 0
        %6568 = vmatpush.bf16.msra.mxu0 %v6546
        %6569 = vmatmul.bf16.gmra.mxu0 %v6540
        %v6570 = vpop.f32.mrf.mxu0
        %v6571 = vadd.f32 0.0, %v6570
        %v6572 = vpop.f32.mrf.mxu0
        %6573 = vdwg.mxu0
        %v6574 = vadd.f32 %v6525, %v6558
        %v6575 = vadd.f32 %v6526, %v6571
        %6576 = vrot.lane.b32.xlu0 %v6244, 112
        %v6577 = vpop.permute.xlu0 %6576
        %6578 = vrot.lane.b32.xlu0 %v6245, 112
        %v6579 = vpop.permute.xlu0 %6578
        %v6580 = vsel %vm1583, %v6577, %v6579
        %v6581 = vsel %vm1583, %v6579, %v6577
        %v6582 = vmul.f32 %v6580, %v1589
        %v6583 = vmul.f32 %v6581, %v1590
        %s6584 = scalar_lea.vmem %s47, 28
        %v6585 = vld [vmem:[%s6584] sm:$0xf]
        %v6586 = vpack.c.bf16 %v6582, %v6582
        %v6587 = vpack.c.bf16 %v6583, %v6583
        %v6589 = vsel %vm1238, %v6585, 0
        %v6592 = vsel %vm1242, %v6586, 0
        %v6595 = vsel %vm1242, %v6587, 0
        %6597 = vmatpush.bf16.msra.mxu0 0
        %6598 = vmatpush.bf16.msra.mxu0 0
        %6599 = vmatpush.bf16.msra.mxu0 0
        %6600 = vmatpush.bf16.msra.mxu0 0
        %6601 = vmatpush.bf16.msra.mxu0 0
        %6602 = vmatpush.bf16.msra.mxu0 0
        %6603 = vmatpush.bf16.msra.mxu0 0
        %6604 = vmatpush.bf16.msra.mxu0 %v6592
        %6605 = vmatmul.bf16.gmra.mxu0 %v6589
        %v6606 = vpop.f32.mrf.mxu0
        %v6607 = vadd.f32 0.0, %v6606
        %v6608 = vpop.f32.mrf.mxu0
        %6609 = vdwg.mxu0
        %6610 = vmatpush.bf16.msra.mxu0 0
        %6611 = vmatpush.bf16.msra.mxu0 0
        %6612 = vmatpush.bf16.msra.mxu0 0
        %6613 = vmatpush.bf16.msra.mxu0 0
        %6614 = vmatpush.bf16.msra.mxu0 0
        %6615 = vmatpush.bf16.msra.mxu0 0
        %6616 = vmatpush.bf16.msra.mxu0 0
        %6617 = vmatpush.bf16.msra.mxu0 %v6595
        %6618 = vmatmul.bf16.gmra.mxu0 %v6589
        %v6619 = vpop.f32.mrf.mxu0
        %v6620 = vadd.f32 0.0, %v6619
        %v6621 = vpop.f32.mrf.mxu0
        %6622 = vdwg.mxu0
        %v6623 = vadd.f32 %v6574, %v6607
        %v6624 = vadd.f32 %v6575, %v6620
        %6625 = vrot.lane.b32.xlu0 %v6244, 111
        %v6626 = vpop.permute.xlu0 %6625
        %6627 = vrot.lane.b32.xlu0 %v6245, 111
        %v6628 = vpop.permute.xlu0 %6627
        %v6629 = vsel %vm1640, %v6626, %v6628
        %v6630 = vsel %vm1640, %v6628, %v6626
        %v6631 = vmul.f32 %v6629, %v1646
        %v6632 = vmul.f32 %v6630, %v1647
        %s6633 = scalar_lea.vmem %s47, 32
        %v6634 = vld [vmem:[%s6633] sm:$0xf]
        %v6635 = vpack.c.bf16 %v6631, %v6631
        %v6636 = vpack.c.bf16 %v6632, %v6632
        %v6638 = vsel %vm1238, %v6634, 0
        %v6641 = vsel %vm1242, %v6635, 0
        %v6644 = vsel %vm1242, %v6636, 0
        %6646 = vmatpush.bf16.msra.mxu0 0
        %6647 = vmatpush.bf16.msra.mxu0 0
        %6648 = vmatpush.bf16.msra.mxu0 0
        %6649 = vmatpush.bf16.msra.mxu0 0
        %6650 = vmatpush.bf16.msra.mxu0 0
        %6651 = vmatpush.bf16.msra.mxu0 0
        %6652 = vmatpush.bf16.msra.mxu0 0
        %6653 = vmatpush.bf16.msra.mxu0 %v6641
        %6654 = vmatmul.bf16.gmra.mxu0 %v6638
        %v6655 = vpop.f32.mrf.mxu0
        %v6656 = vadd.f32 0.0, %v6655
        %v6657 = vpop.f32.mrf.mxu0
        %6658 = vdwg.mxu0
        %6659 = vmatpush.bf16.msra.mxu0 0
        %6660 = vmatpush.bf16.msra.mxu0 0
        %6661 = vmatpush.bf16.msra.mxu0 0
        %6662 = vmatpush.bf16.msra.mxu0 0
        %6663 = vmatpush.bf16.msra.mxu0 0
        %6664 = vmatpush.bf16.msra.mxu0 0
        %6665 = vmatpush.bf16.msra.mxu0 0
        %6666 = vmatpush.bf16.msra.mxu0 %v6644
        %6667 = vmatmul.bf16.gmra.mxu0 %v6638
        %v6668 = vpop.f32.mrf.mxu0
        %v6669 = vadd.f32 0.0, %v6668
        %v6670 = vpop.f32.mrf.mxu0
        %6671 = vdwg.mxu0
        %v6672 = vadd.f32 %v6623, %v6656
        %v6673 = vadd.f32 %v6624, %v6669
        %v6674 = vld [vmem:[%s39] sm:$0xff]
        %6676 = vset.pattern.permute.xlu0 0
        %6677 = vperm.xlu0 %6676, %v6674
        %v6678 = vpop.permute.xlu0 %6677
        %v6680 = vadd.f32 %v6672, %v6678
        %v6681 = vadd.f32 %v6673, %v6678
        %v6682 = vmax.f32 %v6680, 0.0
        %v6683 = vmax.f32 %v6681, 0.0
        %v6684 = vld [vmem:[%s67] sm:$0xf]
        %v6685 = vpack.c.bf16 %v6682, %v6682
        %v6686 = vpack.c.bf16 %v6683, %v6683
        %v6687 = vld [vmem:[%s65] sm:$0xff]
        %6689 = vset.pattern.permute.xlu0 0
        %6690 = vperm.xlu0 %6689, %v6687
        %v6691 = vpop.permute.xlu0 %6690
        %v6694 = vsel %vm1238, %v6684, 0
        %v6697 = vsel %vm1242, %v6685, 0
        %v6700 = vsel %vm1242, %v6686, 0
        %6702 = vmatpush.bf16.msra.mxu0 0
        %6703 = vmatpush.bf16.msra.mxu0 0
        %6704 = vmatpush.bf16.msra.mxu0 0
        %6705 = vmatpush.bf16.msra.mxu0 0
        %6706 = vmatpush.bf16.msra.mxu0 0
        %6707 = vmatpush.bf16.msra.mxu0 0
        %6708 = vmatpush.bf16.msra.mxu0 0
        %6709 = vmatpush.bf16.msra.mxu0 %v6697
        %6710 = vmatmul.bf16.gmra.mxu0 %v6694
        %v6711 = vpop.f32.mrf.mxu0
        %v6712 = vadd.f32 %v6691, %v6711
        %v6713 = vpop.f32.mrf.mxu0
        %6714 = vdwg.mxu0
        %6715 = vmatpush.bf16.msra.mxu0 0
        %6716 = vmatpush.bf16.msra.mxu0 0
        %6717 = vmatpush.bf16.msra.mxu0 0
        %6718 = vmatpush.bf16.msra.mxu0 0
        %6719 = vmatpush.bf16.msra.mxu0 0
        %6720 = vmatpush.bf16.msra.mxu0 0
        %6721 = vmatpush.bf16.msra.mxu0 0
        %6722 = vmatpush.bf16.msra.mxu0 %v6700
        %6723 = vmatmul.bf16.gmra.mxu0 %v6694
        %v6724 = vpop.f32.mrf.mxu0
        %v6725 = vadd.f32 %v6691, %v6724
        %v6726 = vpop.f32.mrf.mxu0
        %6727 = vdwg.mxu0
        %6728 = vst [vmem:[%s1193] sm:$0xff] %v6712
        %6729 = vst [vmem:[%s1193 + $0x8] sm:$0xff] %v6725
        %s6730 = smul.u32 2, %s85
        %p6731 = scmp.lt.s32.totalorder %s6730, 3
        %s6732 = scalar_select %p6731, %s6730, 3
        %s6733 = smul.addr %s6732, 8
        %s6734 = scalar_lea.vmem %s69, %s6733
        // Predicated region
        $region193: #{unet_cae_forward.1} parent=155 // pred_check
          %p6735 = pneg %p822
        $region194: #{unet_cae_forward.1} parent=155 // pred_check_branch
          %6737 = sbr.rel (%p6735) target = $region196
        $region195: #{unet_cae_forward.1} parent=155 // pred_region
          %s6738 = smul.u32 2, %s85
        $region196: #{unet_cae_forward.1} parent=155 // pred_fallthru
          _
      $region156: #{unet_cae_forward.1} parent=5 // pred_fallthru
        _
      %p6739 = scmp.le.s32.totalorder 2, %s80
      // Predicated region
      $region197: #{unet_cae_forward.1} parent=5 // pred_check
        %p6740 = pneg %p6739
      $region198: #{unet_cae_forward.1} parent=5 // pred_check_branch
        %6742 = sbr.rel (%p6740) target = $region200
      $region199: #{unet_cae_forward.1} parent=5 // pred_region
        %s6743 = ssub.s32 %s80, 2
        // Predicated region
        $region201: #{unet_cae_forward.1} parent=199 // pred_check
          %p6744 = pneg %p828
        $region202: #{unet_cae_forward.1} parent=199 // pred_check_branch
          %6746 = sbr.rel (%p6744) target = $region204
        $region203: #{unet_cae_forward.1} parent=199 // pred_region
          %s6747 = smul.u32 2, %s86
          %p6748 = scmp.lt.s32.totalorder %s6747, 3
          %s6749 = scalar_select %p6748, %s6747, 3
          %s6750 = smul.addr %s6749, 8
          %s6751 = scalar_lea.vmem %s69, %s6750
        $region204: #{unet_cae_forward.1} parent=199 // pred_fallthru
          _
      $region200: #{unet_cae_forward.1} parent=5 // pred_fallthru
        _
    $region6: #{unet_cae_forward.1} parent=1 // loop_footer
      %s84 = sadd.s32 1, %s80
    $region7: #{unet_cae_forward.1} parent=1 // loop_footer_branch
      %79 = sbr.rel target = $region3
    $region8: #{unet_cae_forward.1} parent=1 // loop_exit
      _
    %6752 = vsyncpa [#allocation3], 1
    %s6753 = scalar_lea.sflag [#allocation3], 1
    %6754 = vsyncpa %s6753, 1
    %6755 = vsyncpa [#allocation5], 1
    %6756 = vsyncpa [#allocation8], 1
    %6757 = vsyncpa [#allocation11], 1
    %6758 = vsyncpa [#allocation14], 1

</llo_original>
